<compile_context>
chip_gen: v7x
topology: tpu7x:2x2x1
jax: 0.10.0
libtpu: 0.0.40
codegen_flags: <defaults>
</compile_context>

<pallas_src>
import math

import numpy as np
import jax
import jax.numpy as jnp
from jax.experimental import pallas as pl
from jax.experimental.pallas import tpu as pltpu

_TWO_PI = 2.0 * math.pi


def _round_up(x, m):
    return ((x + m - 1) // m) * m


# ----------------------------- Pallas kernel -----------------------------

def _ppe_add_kernel(x_ref, ppe_ref, freq_ref, o_ref):
    # x_ref:    (B, C, ts)   in the caller's dtype
    # ppe_ref:  (1, ts)      f32
    # freq_ref: (C//2, 1)    f32, exact 2^k ladder (k = -1 .. C/2 - 2)
    # Phase built with the same multiply ordering as the reference: (ppe * 2^k) * 2pi.
    ph = ppe_ref[...] * freq_ref[...] * _TWO_PI                  # (C/2, ts) f32
    emb = jnp.concatenate([jnp.sin(ph), jnp.cos(ph)], axis=0)    # (C, ts) shared across B
    o_ref[...] = (x_ref[...].astype(jnp.float32) + emb[None, :, :]).astype(o_ref.dtype)


# ----------------------------- tiling heuristic -----------------------------

def _choose_tile(B, C, S, elem_bytes):
    """Lane-tile (multiple of 128, or == S) and grid-step count for the (B,C,S) view."""
    lane_bytes = B * C * elem_bytes
    # Working set per grid step: double-buffered x + out blocks, one f32 add temp,
    # phase/sin/cos temporaries, double-buffered ppe tile.
    ws_per_lane = 4 * lane_bytes + B * C * 4 + 4 * C * 4 + 2 * 4
    vmem_budget = 28 << 20                      # leaves headroom under the 48 MiB limit
    ts_vmem = (vmem_budget // ws_per_lane) // 128 * 128
    ts_tgt = ((4 << 20) // lane_bytes) // 128 * 128   # ~4 MiB x-block: step overhead <10%
    ts = max(128, min(ts_vmem, ts_tgt))
    # TODO(synk): if B*C is so large that even ts=128 blows the VMEM budget, add a second
    # "parallel" grid axis over C (block (B, tc, ts)) instead of shrinking the lane tile.
    if ts >= S:
        if B * C * S * elem_bytes >= (1 << 20) and S >= 256:
            ts = _round_up(pl.cdiv(S, 2), 128)  # 2 tiles -> both v7x TensorCores busy
        else:
            return S, 1                         # single full-extent block
    n = pl.cdiv(S, ts)
    if n > 1 and n % 2 == 1:                    # prefer an even step count (dual-TC balance)
        ts2 = _round_up(pl.cdiv(S, n + 1), 128)
        if ts2 >= 128 and pl.cdiv(S, ts2) % 2 == 0:
            ts = ts2
            n = pl.cdiv(S, ts)
    return ts, n


# ----------------------------- wrapper -----------------------------

def ppe_forward(ppe, x, scaling_factor=100.0):
    """out = x + sin/cos positional embedding of `ppe`.  x: (B,C,H,W,D)."""
    del scaling_factor                          # stored but unused in the reference forward
    x = jnp.asarray(x)
    ppe = jnp.asarray(ppe, jnp.float32)
    if ppe.ndim == 3:
        ppe = ppe[None, None]                   # -> (1, 1, H, W, D)

    B, C, H, W, D = x.shape
    assert C % 2 == 0, "embed_dim (C) must be even"
    assert ppe.shape[-3:] == (H, W, D), "ppe spatial dims must match x"
    S = H * W * D
    half = C // 2

    # Exact 2^k ladder (k = -1 .. C/2 - 2), identical to the reference construction.
    freqs = jnp.asarray((2.0 ** np.arange(-1, half - 1)).astype(np.float32)).reshape(half, 1)

    elem_bytes = jnp.dtype(x.dtype).itemsize
    ts, n_tiles = _choose_tile(B, C, S, elem_bytes)

    x3 = x.reshape(B, C, S)                     # contiguous collapse: free, no HBM copy
    p2 = ppe.reshape(1, S)

    out = pl.pallas_call(
        _ppe_add_kernel,
        out_shape=jax.ShapeDtypeStruct((B, C, S), x.dtype),
        grid=(n_tiles,),
        in_specs=[
            pl.BlockSpec((B, C, ts), lambda i: (0, 0, i)),
            pl.BlockSpec((1, ts), lambda i: (0, i)),
            pl.BlockSpec((half, 1), lambda i: (0, 0)),
        ],
        out_specs=pl.BlockSpec((B, C, ts), lambda i: (0, 0, i)),
        compiler_params=pltpu.CompilerParams(
            dimension_semantics=("parallel",),
            vmem_limit_bytes=48 << 20,
        ),
    )(x3, p2, freqs)

    return out.reshape(B, C, H, W, D)


# ----------------------------- pure-JAX reference -----------------------------

def _ppe_forward_ref(ppe, x):
    x = jnp.asarray(x)
    ppe = jnp.asarray(ppe, jnp.float32)
    if ppe.ndim == 3:
        ppe = ppe[None, None]
    C = x.shape[1]
    half = C // 2
    freqs = jnp.asarray((2.0 ** np.arange(-1, half - 1)).astype(np.float32))
    ph = ppe * freqs.reshape(1, -1, 1, 1, 1) * (2.0 * math.pi)
    emb = jnp.concatenate([jnp.sin(ph), jnp.cos(ph)], axis=1)
    return (x.astype(jnp.float32) + emb).astype(x.dtype)


# ----------------------------- test -----------------------------

if __name__ == "__main__":
    key = jax.random.PRNGKey(0)
    kx, kp = jax.random.split(key)

    B, C, H, W, D = 2, 16, 16, 16, 32                 # embed_dim = C = 16
    x = jax.random.normal(kx, (B, C, H, W, D), jnp.float32)
    ppe = jax.random.uniform(kp, (H, W, D), jnp.float32)

    fwd = jax.jit(ppe_forward)
    out = jax.block_until_ready(fwd(ppe, x))

    assert out.shape == (B, C, H, W, D), out.shape
    assert out.dtype == x.dtype, out.dtype
    assert bool(jnp.all(jnp.isfinite(out)))

    ref = _ppe_forward_ref(ppe, x)
    max_err = float(jnp.max(jnp.abs(out - ref)))
    assert max_err < 5e-4, f"max abs error {max_err}"

    print("KERNEL_OK")
</pallas_src>

<mosaic_0001>
module attributes {stable_mosaic.version = 11 : i64} {
  func.func @_ppe_add_kernel(%arg0: i32, %arg1: memref<2x16x4096xf32, #tpu.memory_space<vmem>>, %arg2: memref<1x4096xf32, #tpu.memory_space<vmem>>, %arg3: memref<8x1xf32, #tpu.memory_space<vmem>>, %arg4: memref<2x16x4096xf32, #tpu.memory_space<vmem>>) attributes {dimension_semantics = [#tpu.dimension_semantics<parallel>], iteration_bounds = array<i64: 2>, scalar_prefetch = 0 : i64, scratch_operands = 0 : i64, tpu.core_type = #tpu.core_type<tc>, window_params = [{transform_indices = @transform_0, window_bounds = array<i64: 2, 16, 4096>}, {transform_indices = @transform_1, window_bounds = array<i64: 1, 4096>}, {pipeline_mode = #tpu.pipeline_mode<synchronous>, transform_indices = @transform_2, window_bounds = array<i64: 8, 1>}, {transform_indices = @transform_3, window_bounds = array<i64: 2, 16, 4096>}]} {
    %c0 = arith.constant 0 : index
    %c0_0 = arith.constant 0 : index
    %0 = vector.load %arg2[%c0, %c0_0] : memref<1x4096xf32, #tpu.memory_space<vmem>>, vector<1x4096xf32>
    %c0_1 = arith.constant 0 : index
    %c0_2 = arith.constant 0 : index
    %1 = vector.load %arg3[%c0_1, %c0_2] : memref<8x1xf32, #tpu.memory_space<vmem>>, vector<8x1xf32>
    %2 = vector.broadcast %0 : vector<1x4096xf32> to vector<8x4096xf32>
    %3 = vector.broadcast %1 : vector<8x1xf32> to vector<8x4096xf32>
    %4 = arith.mulf %2, %3 : vector<8x4096xf32>
    %cst = arith.constant 6.28318548 : f32
    %5 = vector.broadcast %cst : f32 to vector<8x4096xf32>
    %6 = arith.mulf %4, %5 : vector<8x4096xf32>
    %7 = math.sin %6 : vector<8x4096xf32>
    %8 = math.cos %6 : vector<8x4096xf32>
    %9 = tpu.concatenate %7, %8 in 0 : vector<8x4096xf32>, vector<8x4096xf32> -> vector<16x4096xf32>
    %c0_3 = arith.constant 0 : index
    %c0_4 = arith.constant 0 : index
    %c0_5 = arith.constant 0 : index
    %10 = vector.load %arg1[%c0_3, %c0_4, %c0_5] : memref<2x16x4096xf32, #tpu.memory_space<vmem>>, vector<2x16x4096xf32>
    %11 = vector.shape_cast %9 : vector<16x4096xf32> to vector<1x16x4096xf32>
    %12 = vector.broadcast %11 : vector<1x16x4096xf32> to vector<2x16x4096xf32>
    %13 = arith.addf %10, %12 : vector<2x16x4096xf32>
    %c0_6 = arith.constant 0 : index
    %c0_7 = arith.constant 0 : index
    %c0_8 = arith.constant 0 : index
    %14 = vector.load %arg4[%c0_6, %c0_7, %c0_8] : memref<2x16x4096xf32, #tpu.memory_space<vmem>>, vector<2x16x4096xf32>
    tpu.vector_store %arg4[%c0_6, %c0_7, %c0_8], %13 {strides = array<i32>} : memref<2x16x4096xf32, #tpu.memory_space<vmem>>, vector<2x16x4096xf32>,
    return
  }
  func.func @transform_0(%arg0: i32) -> (i32, i32, i32) {
    %c0_i32 = arith.constant 0 : i32
    %c0_i32_0 = arith.constant 0 : i32
    %c0_i32_1 = arith.constant 0 : i32
    return %c0_i32, %c0_i32_0, %arg0 : i32, i32, i32
  }
  func.func @transform_1(%arg0: i32) -> (i32, i32) {
    %c0_i32 = arith.constant 0 : i32
    %c0_i32_0 = arith.constant 0 : i32
    return %c0_i32, %arg0 : i32, i32
  }
  func.func @transform_2(%arg0: i32) -> (i32, i32) {
    %c0_i32 = arith.constant 0 : i32
    %c0_i32_0 = arith.constant 0 : i32
    %c0_i32_1 = arith.constant 0 : i32
    return %c0_i32, %c0_i32_0 : i32, i32
  }
  func.func @transform_3(%arg0: i32) -> (i32, i32, i32) {
    %c0_i32 = arith.constant 0 : i32
    %c0_i32_0 = arith.constant 0 : i32
    %c0_i32_1 = arith.constant 0 : i32
    return %c0_i32, %c0_i32_0, %arg0 : i32, i32, i32
  }
}

</mosaic_0001>

<llo_original>
// kernel: ppe_forward.1
$region0: #{ppe_forward.1}
  #allocation0 [shape = 'u32[]', space=smem, size = 0x4, offset = 0x4, fixed_abs, tag = 'smem constant byte address 0x4 - core index']
  #allocation1 [shape = 'u32[144,128]{1,0:T(1,128)}', space=vmem, size = 0x12000, scoped, tag = 'internal scratch']
  %s0 = inlined_call_operand.vmem [shape: f32[2,16,8192], index: 0, kind: input, shape index: {}]
  %s1 = inlined_call_operand.vmem [shape: f32[1,8192], index: 1, kind: input, shape index: {}]
  %s2 = inlined_call_operand.vmem [shape: f32[8,1], index: 2, kind: input, shape index: {}]
  %s3 = inlined_call_operand.vmem [shape: f32[2,16,8192], index: 3, kind: output, shape index: {}]
  %s4 = sld [smem:[#allocation0]]
  $region87: #{ppe_forward.1} parent=0
    _
  %s6 = ssub.s32 1, %s4
  %s7 = scalar_select 0, %s6, %s4
  $region1: #{ppe_forward.1} parent=0
    #allocation2 [shape = 'u8[1048576]{0}', space=vmem, size = 0x100000, scoped, tag = 'input window, operand 0']
    #allocation3 [shape = 'u8[1048576]{0}', space=vmem, size = 0x100000, scoped, tag = 'output window, operand 0']
    loop: start=0, step=1, limit=4
    $region2: #{ppe_forward.1} parent=1 // loop_pre_header
      _
    $region3: #{ppe_forward.1} parent=1 // loop_header
      %s9 = sphi 0, %s13
      %p10 = scmp.ge.s32.totalorder %s9, 4
      %s19 = sphi 0, %s21
      %s22 = sphi 0, %s19
      %s23 = sphi 0, %s22
      %s39 = sphi 0, %s23
      %s45 = sphi 0, %s47
      %s48 = sphi 0, %s45
      %s49 = sphi 0, %s48
      %s65 = sphi 0, %s49
      %s69 = sphi 0, %s69
      %s71 = sphi 0, %s69
      %s72 = sphi 0, %s71
      %s86 = sphi 0, %s72
      %s92 = sphi 0, %s94
      %s95 = sphi 0, %s92
      %s96 = sphi 0, %s95
      %s112 = sphi 0, %s96
    $region4: #{ppe_forward.1} parent=1 // loop_header_branch
      %12 = sbr.rel (%p10) target = $region8
    $region5: #{ppe_forward.1} parent=1 // loop_body
      %s14 = ssub.s32 %s9, 1
      %s15 = ssub.s32 %s9, 2
      %s16 = sadd.s32 %s9, 1
      %s17 = ssub.s32 %s9, %s16
      %p18 = scmp.eq.s32.totalorder %s17, 0
      %s20 = sadd.s32 %s19, 1
      %s21 = scalar_select %p18, %s19, %s20
      %p24 = pneg %p18
      %p25 = scmp.eq.s32.totalorder %s9, 1
      %p26 = por %p24, %p25
      %p27 = scmp.ne.s32.totalorder %s19, %s22
      %p28 = scmp.eq.s32.totalorder %s9, 0
      %p29 = por %p27, %p28
      %p30 = scmp.ne.s32.totalorder %s19, %s22
      %p31 = scmp.eq.s32.totalorder %s14, 1
      %p32 = por %p30, %p31
      %p33 = scmp.ne.s32.totalorder %s22, %s23
      %p34 = scmp.eq.s32.totalorder %s14, 0
      %p35 = por %p33, %p34
      %p36 = scmp.ne.s32.totalorder %s22, %s23
      %p37 = scmp.eq.s32.totalorder %s15, 1
      %p38 = por %p36, %p37
      %p40 = scmp.ne.s32.totalorder %s23, %s39
      %p41 = scmp.eq.s32.totalorder %s15, 0
      %p42 = por %p40, %p41
      %s43 = ssub.s32 %s9, %s16
      %p44 = scmp.eq.s32.totalorder %s43, 0
      %s46 = sadd.s32 %s45, 1
      %s47 = scalar_select %p44, %s45, %s46
      %p50 = pneg %p44
      %p51 = scmp.eq.s32.totalorder %s9, 1
      %p52 = por %p50, %p51
      %p53 = scmp.ne.s32.totalorder %s45, %s48
      %p54 = scmp.eq.s32.totalorder %s9, 0
      %p55 = por %p53, %p54
      %p56 = scmp.ne.s32.totalorder %s45, %s48
      %p57 = scmp.eq.s32.totalorder %s14, 1
      %p58 = por %p56, %p57
      %p59 = scmp.ne.s32.totalorder %s48, %s49
      %p60 = scmp.eq.s32.totalorder %s14, 0
      %p61 = por %p59, %p60
      %p62 = scmp.ne.s32.totalorder %s48, %s49
      %p63 = scmp.eq.s32.totalorder %s15, 1
      %p64 = por %p62, %p63
      %p66 = scmp.ne.s32.totalorder %s49, %s65
      %p67 = scmp.eq.s32.totalorder %s15, 0
      %p68 = por %p66, %p67
      %s70 = sadd.s32 %s69, 1
      %p73 = scmp.eq.s32.totalorder %s9, 1
      %p74 = scmp.ne.s32.totalorder %s69, %s71
      %p75 = scmp.eq.s32.totalorder %s9, 0
      %p76 = por %p74, %p75
      %p77 = scmp.ne.s32.totalorder %s69, %s71
      %p78 = scmp.eq.s32.totalorder %s14, 1
      %p79 = por %p77, %p78
      %p80 = scmp.ne.s32.totalorder %s71, %s72
      %p81 = scmp.eq.s32.totalorder %s14, 0
      %p82 = por %p80, %p81
      %p83 = scmp.ne.s32.totalorder %s71, %s72
      %p84 = scmp.eq.s32.totalorder %s15, 1
      %p85 = por %p83, %p84
      %p87 = scmp.ne.s32.totalorder %s72, %s86
      %p88 = scmp.eq.s32.totalorder %s15, 0
      %p89 = por %p87, %p88
      %s90 = ssub.s32 %s9, %s16
      %p91 = scmp.eq.s32.totalorder %s90, 0
      %s93 = sadd.s32 %s92, 1
      %s94 = scalar_select %p91, %s92, %s93
      %p97 = pneg %p91
      %p98 = scmp.eq.s32.totalorder %s9, 1
      %p99 = por %p97, %p98
      %p100 = scmp.ne.s32.totalorder %s92, %s95
      %p101 = scmp.eq.s32.totalorder %s9, 0
      %p102 = por %p100, %p101
      %p103 = scmp.ne.s32.totalorder %s92, %s95
      %p104 = scmp.eq.s32.totalorder %s14, 1
      %p105 = por %p103, %p104
      %p106 = scmp.ne.s32.totalorder %s95, %s96
      %p107 = scmp.eq.s32.totalorder %s14, 0
      %p108 = por %p106, %p107
      %p109 = scmp.ne.s32.totalorder %s95, %s96
      %p110 = scmp.eq.s32.totalorder %s15, 1
      %p111 = por %p109, %p110
      %p113 = scmp.ne.s32.totalorder %s96, %s112
      %p114 = scmp.eq.s32.totalorder %s15, 0
      %p115 = por %p113, %p114
      %p116 = scmp.le.s32.totalorder 1, %s9
      %p117 = scmp.lt.s32.totalorder %s9, 3
      %p118 = pnand %p116, %p117
      %p119 = pneg %p118
      // Predicated region
      $region9: #{ppe_forward.1} parent=5 // pred_check
        _
      $region10: #{ppe_forward.1} parent=5 // pred_check_branch
        %121 = sbr.rel (%p118) target = $region12
      $region11: #{ppe_forward.1} parent=5 // pred_region
        %s122 = ssub.s32 %s9, 1
        // Predicated region
        $region13: #{ppe_forward.1} parent=11 // pred_check
          %p123 = pneg %p82
        $region14: #{ppe_forward.1} parent=11 // pred_check_branch
          %125 = sbr.rel (%p123) target = $region16
        $region15: #{ppe_forward.1} parent=11 // pred_region
          _
        $region16: #{ppe_forward.1} parent=11 // pred_fallthru
          _
      $region12: #{ppe_forward.1} parent=5 // pred_fallthru
        _
      %p126 = scmp.lt.s32.totalorder %s9, 2
      // Predicated region
      $region17: #{ppe_forward.1} parent=5 // pred_check
        %p127 = pneg %p126
      $region18: #{ppe_forward.1} parent=5 // pred_check_branch
        %129 = sbr.rel (%p127) target = $region20
      $region19: #{ppe_forward.1} parent=5 // pred_region
        // Predicated region
        $region21: #{ppe_forward.1} parent=19 // pred_check
          %p130 = pneg %p29
        $region22: #{ppe_forward.1} parent=19 // pred_check_branch
          %132 = sbr.rel (%p130) target = $region24
        $region23: #{ppe_forward.1} parent=19 // pred_region
          %s133 = sand.u32 %s19, 1
          %s134 = sand.u32 %s19, 1
          %s135 = smul.addr %s134, 1024
          %s136 = scalar_lea.vmem [#allocation2], %s135
          %s137 = smul.u32 32, %s9
          %s138 = smul.addr %s137, 8
          %s139 = scalar_lea.vmem %s0, %s138
          // Predicated region
          $region25: #{ppe_forward.1} parent=23 // pred_check
            _
          $region26: #{ppe_forward.1} parent=23 // pred_check_branch
            %141 = sbr.rel (0) target = $region28
          $region27: #{ppe_forward.1} parent=23 // pred_region
            // Predicated region
            $region29: #{ppe_forward.1} parent=27 // pred_check
              _
            $region30: #{ppe_forward.1} parent=27 // pred_check_branch
              %143 = sbr.rel (0) target = $region32
            $region31: #{ppe_forward.1} parent=27 // pred_region
              loop: start=0, step=1, limit=1
              $region33: #{ppe_forward.1} parent=31 // loop_pre_header
                _
              $region34: #{ppe_forward.1} parent=31 // loop_header
                %s145 = sphi 0, %s149
                %p146 = scmp.ge.s32.totalorder %s145, 1
                %s150 = sphi %s139, %s139
                %s151 = sphi %s136, %s136
              $region35: #{ppe_forward.1} parent=31 // loop_header_branch
                %148 = sbr.rel (%p146) target = $region39
              $region36: #{ppe_forward.1} parent=31 // loop_body
                %v152 = vld [vmem:[%s150] sm:$0xff]
                %153 = vst [vmem:[%s151] sm:$0xff] %v152
                %v154 = vld [vmem:[%s150 + $0x8] sm:$0xff]
                %155 = vst [vmem:[%s151 + $0x8] sm:$0xff] %v154
                %v156 = vld [vmem:[%s150 + $0x10] sm:$0xff]
                %157 = vst [vmem:[%s151 + $0x10] sm:$0xff] %v156
                %v158 = vld [vmem:[%s150 + $0x18] sm:$0xff]
                %159 = vst [vmem:[%s151 + $0x18] sm:$0xff] %v158
                %v160 = vld [vmem:[%s150 + $0x20] sm:$0xff]
                %161 = vst [vmem:[%s151 + $0x20] sm:$0xff] %v160
                %v162 = vld [vmem:[%s150 + $0x28] sm:$0xff]
                %163 = vst [vmem:[%s151 + $0x28] sm:$0xff] %v162
                %v164 = vld [vmem:[%s150 + $0x30] sm:$0xff]
                %165 = vst [vmem:[%s151 + $0x30] sm:$0xff] %v164
                %v166 = vld [vmem:[%s150 + $0x38] sm:$0xff]
                %167 = vst [vmem:[%s151 + $0x38] sm:$0xff] %v166
                %v168 = vld [vmem:[%s150 + $0x40] sm:$0xff]
                %169 = vst [vmem:[%s151 + $0x40] sm:$0xff] %v168
                %v170 = vld [vmem:[%s150 + $0x48] sm:$0xff]
                %171 = vst [vmem:[%s151 + $0x48] sm:$0xff] %v170
                %v172 = vld [vmem:[%s150 + $0x50] sm:$0xff]
                %173 = vst [vmem:[%s151 + $0x50] sm:$0xff] %v172
                %v174 = vld [vmem:[%s150 + $0x58] sm:$0xff]
                %175 = vst [vmem:[%s151 + $0x58] sm:$0xff] %v174
                %v176 = vld [vmem:[%s150 + $0x60] sm:$0xff]
                %177 = vst [vmem:[%s151 + $0x60] sm:$0xff] %v176
                %v178 = vld [vmem:[%s150 + $0x68] sm:$0xff]
                %179 = vst [vmem:[%s151 + $0x68] sm:$0xff] %v178
                %v180 = vld [vmem:[%s150 + $0x70] sm:$0xff]
                %181 = vst [vmem:[%s151 + $0x70] sm:$0xff] %v180
                %v182 = vld [vmem:[%s150 + $0x78] sm:$0xff]
                %183 = vst [vmem:[%s151 + $0x78] sm:$0xff] %v182
                %v184 = vld [vmem:[%s150 + $0x80] sm:$0xff]
                %185 = vst [vmem:[%s151 + $0x80] sm:$0xff] %v184
                %v186 = vld [vmem:[%s150 + $0x88] sm:$0xff]
                %187 = vst [vmem:[%s151 + $0x88] sm:$0xff] %v186
                %v188 = vld [vmem:[%s150 + $0x90] sm:$0xff]
                %189 = vst [vmem:[%s151 + $0x90] sm:$0xff] %v188
                %v190 = vld [vmem:[%s150 + $0x98] sm:$0xff]
                %191 = vst [vmem:[%s151 + $0x98] sm:$0xff] %v190
                %v192 = vld [vmem:[%s150 + $0xa0] sm:$0xff]
                %193 = vst [vmem:[%s151 + $0xa0] sm:$0xff] %v192
                %v194 = vld [vmem:[%s150 + $0xa8] sm:$0xff]
                %195 = vst [vmem:[%s151 + $0xa8] sm:$0xff] %v194
                %v196 = vld [vmem:[%s150 + $0xb0] sm:$0xff]
                %197 = vst [vmem:[%s151 + $0xb0] sm:$0xff] %v196
                %v198 = vld [vmem:[%s150 + $0xb8] sm:$0xff]
                %199 = vst [vmem:[%s151 + $0xb8] sm:$0xff] %v198
                %v200 = vld [vmem:[%s150 + $0xc0] sm:$0xff]
                %201 = vst [vmem:[%s151 + $0xc0] sm:$0xff] %v200
                %v202 = vld [vmem:[%s150 + $0xc8] sm:$0xff]
                %203 = vst [vmem:[%s151 + $0xc8] sm:$0xff] %v202
                %v204 = vld [vmem:[%s150 + $0xd0] sm:$0xff]
                %205 = vst [vmem:[%s151 + $0xd0] sm:$0xff] %v204
                %v206 = vld [vmem:[%s150 + $0xd8] sm:$0xff]
                %207 = vst [vmem:[%s151 + $0xd8] sm:$0xff] %v206
                %v208 = vld [vmem:[%s150 + $0xe0] sm:$0xff]
                %209 = vst [vmem:[%s151 + $0xe0] sm:$0xff] %v208
                %v210 = vld [vmem:[%s150 + $0xe8] sm:$0xff]
                %211 = vst [vmem:[%s151 + $0xe8] sm:$0xff] %v210
                %v212 = vld [vmem:[%s150 + $0xf0] sm:$0xff]
                %213 = vst [vmem:[%s151 + $0xf0] sm:$0xff] %v212
                %v214 = vld [vmem:[%s150 + $0xf8] sm:$0xff]
                %215 = vst [vmem:[%s151 + $0xf8] sm:$0xff] %v214
                %v216 = vld [vmem:[%s150 + $0x200] sm:$0xff]
                %217 = vst [vmem:[%s151 + $0x100] sm:$0xff] %v216
                %v218 = vld [vmem:[%s150 + $0x208] sm:$0xff]
                %219 = vst [vmem:[%s151 + $0x108] sm:$0xff] %v218
                %v220 = vld [vmem:[%s150 + $0x210] sm:$0xff]
                %221 = vst [vmem:[%s151 + $0x110] sm:$0xff] %v220
                %v222 = vld [vmem:[%s150 + $0x218] sm:$0xff]
                %223 = vst [vmem:[%s151 + $0x118] sm:$0xff] %v222
                %v224 = vld [vmem:[%s150 + $0x220] sm:$0xff]
                %225 = vst [vmem:[%s151 + $0x120] sm:$0xff] %v224
                %v226 = vld [vmem:[%s150 + $0x228] sm:$0xff]
                %227 = vst [vmem:[%s151 + $0x128] sm:$0xff] %v226
                %v228 = vld [vmem:[%s150 + $0x230] sm:$0xff]
                %229 = vst [vmem:[%s151 + $0x130] sm:$0xff] %v228
                %v230 = vld [vmem:[%s150 + $0x238] sm:$0xff]
                %231 = vst [vmem:[%s151 + $0x138] sm:$0xff] %v230
                %v232 = vld [vmem:[%s150 + $0x240] sm:$0xff]
                %233 = vst [vmem:[%s151 + $0x140] sm:$0xff] %v232
                %v234 = vld [vmem:[%s150 + $0x248] sm:$0xff]
                %235 = vst [vmem:[%s151 + $0x148] sm:$0xff] %v234
                %v236 = vld [vmem:[%s150 + $0x250] sm:$0xff]
                %237 = vst [vmem:[%s151 + $0x150] sm:$0xff] %v236
                %v238 = vld [vmem:[%s150 + $0x258] sm:$0xff]
                %239 = vst [vmem:[%s151 + $0x158] sm:$0xff] %v238
                %v240 = vld [vmem:[%s150 + $0x260] sm:$0xff]
                %241 = vst [vmem:[%s151 + $0x160] sm:$0xff] %v240
                %v242 = vld [vmem:[%s150 + $0x268] sm:$0xff]
                %243 = vst [vmem:[%s151 + $0x168] sm:$0xff] %v242
                %v244 = vld [vmem:[%s150 + $0x270] sm:$0xff]
                %245 = vst [vmem:[%s151 + $0x170] sm:$0xff] %v244
                %v246 = vld [vmem:[%s150 + $0x278] sm:$0xff]
                %247 = vst [vmem:[%s151 + $0x178] sm:$0xff] %v246
                %v248 = vld [vmem:[%s150 + $0x280] sm:$0xff]
                %249 = vst [vmem:[%s151 + $0x180] sm:$0xff] %v248
                %v250 = vld [vmem:[%s150 + $0x288] sm:$0xff]
                %251 = vst [vmem:[%s151 + $0x188] sm:$0xff] %v250
                %v252 = vld [vmem:[%s150 + $0x290] sm:$0xff]
                %253 = vst [vmem:[%s151 + $0x190] sm:$0xff] %v252
                %v254 = vld [vmem:[%s150 + $0x298] sm:$0xff]
                %255 = vst [vmem:[%s151 + $0x198] sm:$0xff] %v254
                %v256 = vld [vmem:[%s150 + $0x2a0] sm:$0xff]
                %257 = vst [vmem:[%s151 + $0x1a0] sm:$0xff] %v256
                %v258 = vld [vmem:[%s150 + $0x2a8] sm:$0xff]
                %259 = vst [vmem:[%s151 + $0x1a8] sm:$0xff] %v258
                %v260 = vld [vmem:[%s150 + $0x2b0] sm:$0xff]
                %261 = vst [vmem:[%s151 + $0x1b0] sm:$0xff] %v260
                %v262 = vld [vmem:[%s150 + $0x2b8] sm:$0xff]
                %263 = vst [vmem:[%s151 + $0x1b8] sm:$0xff] %v262
                %v264 = vld [vmem:[%s150 + $0x2c0] sm:$0xff]
                %265 = vst [vmem:[%s151 + $0x1c0] sm:$0xff] %v264
                %v266 = vld [vmem:[%s150 + $0x2c8] sm:$0xff]
                %267 = vst [vmem:[%s151 + $0x1c8] sm:$0xff] %v266
                %v268 = vld [vmem:[%s150 + $0x2d0] sm:$0xff]
                %269 = vst [vmem:[%s151 + $0x1d0] sm:$0xff] %v268
                %v270 = vld [vmem:[%s150 + $0x2d8] sm:$0xff]
                %271 = vst [vmem:[%s151 + $0x1d8] sm:$0xff] %v270
                %v272 = vld [vmem:[%s150 + $0x2e0] sm:$0xff]
                %273 = vst [vmem:[%s151 + $0x1e0] sm:$0xff] %v272
                %v274 = vld [vmem:[%s150 + $0x2e8] sm:$0xff]
                %275 = vst [vmem:[%s151 + $0x1e8] sm:$0xff] %v274
                %v276 = vld [vmem:[%s150 + $0x2f0] sm:$0xff]
                %277 = vst [vmem:[%s151 + $0x1f0] sm:$0xff] %v276
                %v278 = vld [vmem:[%s150 + $0x2f8] sm:$0xff]
                %279 = vst [vmem:[%s151 + $0x1f8] sm:$0xff] %v278
                %v280 = vld [vmem:[%s150 + $0x400] sm:$0xff]
                %281 = vst [vmem:[%s151 + $0x200] sm:$0xff] %v280
                %v282 = vld [vmem:[%s150 + $0x408] sm:$0xff]
                %283 = vst [vmem:[%s151 + $0x208] sm:$0xff] %v282
                %v284 = vld [vmem:[%s150 + $0x410] sm:$0xff]
                %285 = vst [vmem:[%s151 + $0x210] sm:$0xff] %v284
                %v286 = vld [vmem:[%s150 + $0x418] sm:$0xff]
                %287 = vst [vmem:[%s151 + $0x218] sm:$0xff] %v286
                %v288 = vld [vmem:[%s150 + $0x420] sm:$0xff]
                %289 = vst [vmem:[%s151 + $0x220] sm:$0xff] %v288
                %v290 = vld [vmem:[%s150 + $0x428] sm:$0xff]
                %291 = vst [vmem:[%s151 + $0x228] sm:$0xff] %v290
                %v292 = vld [vmem:[%s150 + $0x430] sm:$0xff]
                %293 = vst [vmem:[%s151 + $0x230] sm:$0xff] %v292
                %v294 = vld [vmem:[%s150 + $0x438] sm:$0xff]
                %295 = vst [vmem:[%s151 + $0x238] sm:$0xff] %v294
                %v296 = vld [vmem:[%s150 + $0x440] sm:$0xff]
                %297 = vst [vmem:[%s151 + $0x240] sm:$0xff] %v296
                %v298 = vld [vmem:[%s150 + $0x448] sm:$0xff]
                %299 = vst [vmem:[%s151 + $0x248] sm:$0xff] %v298
                %v300 = vld [vmem:[%s150 + $0x450] sm:$0xff]
                %301 = vst [vmem:[%s151 + $0x250] sm:$0xff] %v300
                %v302 = vld [vmem:[%s150 + $0x458] sm:$0xff]
                %303 = vst [vmem:[%s151 + $0x258] sm:$0xff] %v302
                %v304 = vld [vmem:[%s150 + $0x460] sm:$0xff]
                %305 = vst [vmem:[%s151 + $0x260] sm:$0xff] %v304
                %v306 = vld [vmem:[%s150 + $0x468] sm:$0xff]
                %307 = vst [vmem:[%s151 + $0x268] sm:$0xff] %v306
                %v308 = vld [vmem:[%s150 + $0x470] sm:$0xff]
                %309 = vst [vmem:[%s151 + $0x270] sm:$0xff] %v308
                %v310 = vld [vmem:[%s150 + $0x478] sm:$0xff]
                %311 = vst [vmem:[%s151 + $0x278] sm:$0xff] %v310
                %v312 = vld [vmem:[%s150 + $0x480] sm:$0xff]
                %313 = vst [vmem:[%s151 + $0x280] sm:$0xff] %v312
                %v314 = vld [vmem:[%s150 + $0x488] sm:$0xff]
                %315 = vst [vmem:[%s151 + $0x288] sm:$0xff] %v314
                %v316 = vld [vmem:[%s150 + $0x490] sm:$0xff]
                %317 = vst [vmem:[%s151 + $0x290] sm:$0xff] %v316
                %v318 = vld [vmem:[%s150 + $0x498] sm:$0xff]
                %319 = vst [vmem:[%s151 + $0x298] sm:$0xff] %v318
                %v320 = vld [vmem:[%s150 + $0x4a0] sm:$0xff]
                %321 = vst [vmem:[%s151 + $0x2a0] sm:$0xff] %v320
                %v322 = vld [vmem:[%s150 + $0x4a8] sm:$0xff]
                %323 = vst [vmem:[%s151 + $0x2a8] sm:$0xff] %v322
                %v324 = vld [vmem:[%s150 + $0x4b0] sm:$0xff]
                %325 = vst [vmem:[%s151 + $0x2b0] sm:$0xff] %v324
                %v326 = vld [vmem:[%s150 + $0x4b8] sm:$0xff]
                %327 = vst [vmem:[%s151 + $0x2b8] sm:$0xff] %v326
                %v328 = vld [vmem:[%s150 + $0x4c0] sm:$0xff]
                %329 = vst [vmem:[%s151 + $0x2c0] sm:$0xff] %v328
                %v330 = vld [vmem:[%s150 + $0x4c8] sm:$0xff]
                %331 = vst [vmem:[%s151 + $0x2c8] sm:$0xff] %v330
                %v332 = vld [vmem:[%s150 + $0x4d0] sm:$0xff]
                %333 = vst [vmem:[%s151 + $0x2d0] sm:$0xff] %v332
                %v334 = vld [vmem:[%s150 + $0x4d8] sm:$0xff]
                %335 = vst [vmem:[%s151 + $0x2d8] sm:$0xff] %v334
                %v336 = vld [vmem:[%s150 + $0x4e0] sm:$0xff]
                %337 = vst [vmem:[%s151 + $0x2e0] sm:$0xff] %v336
                %v338 = vld [vmem:[%s150 + $0x4e8] sm:$0xff]
                %339 = vst [vmem:[%s151 + $0x2e8] sm:$0xff] %v338
                %v340 = vld [vmem:[%s150 + $0x4f0] sm:$0xff]
                %341 = vst [vmem:[%s151 + $0x2f0] sm:$0xff] %v340
                %v342 = vld [vmem:[%s150 + $0x4f8] sm:$0xff]
                %343 = vst [vmem:[%s151 + $0x2f8] sm:$0xff] %v342
                %v344 = vld [vmem:[%s150 + $0x600] sm:$0xff]
                %345 = vst [vmem:[%s151 + $0x300] sm:$0xff] %v344
                %v346 = vld [vmem:[%s150 + $0x608] sm:$0xff]
                %347 = vst [vmem:[%s151 + $0x308] sm:$0xff] %v346
                %v348 = vld [vmem:[%s150 + $0x610] sm:$0xff]
                %349 = vst [vmem:[%s151 + $0x310] sm:$0xff] %v348
                %v350 = vld [vmem:[%s150 + $0x618] sm:$0xff]
                %351 = vst [vmem:[%s151 + $0x318] sm:$0xff] %v350
                %v352 = vld [vmem:[%s150 + $0x620] sm:$0xff]
                %353 = vst [vmem:[%s151 + $0x320] sm:$0xff] %v352
                %v354 = vld [vmem:[%s150 + $0x628] sm:$0xff]
                %355 = vst [vmem:[%s151 + $0x328] sm:$0xff] %v354
                %v356 = vld [vmem:[%s150 + $0x630] sm:$0xff]
                %357 = vst [vmem:[%s151 + $0x330] sm:$0xff] %v356
                %v358 = vld [vmem:[%s150 + $0x638] sm:$0xff]
                %359 = vst [vmem:[%s151 + $0x338] sm:$0xff] %v358
                %v360 = vld [vmem:[%s150 + $0x640] sm:$0xff]
                %361 = vst [vmem:[%s151 + $0x340] sm:$0xff] %v360
                %v362 = vld [vmem:[%s150 + $0x648] sm:$0xff]
                %363 = vst [vmem:[%s151 + $0x348] sm:$0xff] %v362
                %v364 = vld [vmem:[%s150 + $0x650] sm:$0xff]
                %365 = vst [vmem:[%s151 + $0x350] sm:$0xff] %v364
                %v366 = vld [vmem:[%s150 + $0x658] sm:$0xff]
                %367 = vst [vmem:[%s151 + $0x358] sm:$0xff] %v366
                %v368 = vld [vmem:[%s150 + $0x660] sm:$0xff]
                %369 = vst [vmem:[%s151 + $0x360] sm:$0xff] %v368
                %v370 = vld [vmem:[%s150 + $0x668] sm:$0xff]
                %371 = vst [vmem:[%s151 + $0x368] sm:$0xff] %v370
                %v372 = vld [vmem:[%s150 + $0x670] sm:$0xff]
                %373 = vst [vmem:[%s151 + $0x370] sm:$0xff] %v372
                %v374 = vld [vmem:[%s150 + $0x678] sm:$0xff]
                %375 = vst [vmem:[%s151 + $0x378] sm:$0xff] %v374
                %v376 = vld [vmem:[%s150 + $0x680] sm:$0xff]
                %377 = vst [vmem:[%s151 + $0x380] sm:$0xff] %v376
                %v378 = vld [vmem:[%s150 + $0x688] sm:$0xff]
                %379 = vst [vmem:[%s151 + $0x388] sm:$0xff] %v378
                %v380 = vld [vmem:[%s150 + $0x690] sm:$0xff]
                %381 = vst [vmem:[%s151 + $0x390] sm:$0xff] %v380
                %v382 = vld [vmem:[%s150 + $0x698] sm:$0xff]
                %383 = vst [vmem:[%s151 + $0x398] sm:$0xff] %v382
                %v384 = vld [vmem:[%s150 + $0x6a0] sm:$0xff]
                %385 = vst [vmem:[%s151 + $0x3a0] sm:$0xff] %v384
                %v386 = vld [vmem:[%s150 + $0x6a8] sm:$0xff]
                %387 = vst [vmem:[%s151 + $0x3a8] sm:$0xff] %v386
                %v388 = vld [vmem:[%s150 + $0x6b0] sm:$0xff]
                %389 = vst [vmem:[%s151 + $0x3b0] sm:$0xff] %v388
                %v390 = vld [vmem:[%s150 + $0x6b8] sm:$0xff]
                %391 = vst [vmem:[%s151 + $0x3b8] sm:$0xff] %v390
                %v392 = vld [vmem:[%s150 + $0x6c0] sm:$0xff]
                %393 = vst [vmem:[%s151 + $0x3c0] sm:$0xff] %v392
                %v394 = vld [vmem:[%s150 + $0x6c8] sm:$0xff]
                %395 = vst [vmem:[%s151 + $0x3c8] sm:$0xff] %v394
                %v396 = vld [vmem:[%s150 + $0x6d0] sm:$0xff]
                %397 = vst [vmem:[%s151 + $0x3d0] sm:$0xff] %v396
                %v398 = vld [vmem:[%s150 + $0x6d8] sm:$0xff]
                %399 = vst [vmem:[%s151 + $0x3d8] sm:$0xff] %v398
                %v400 = vld [vmem:[%s150 + $0x6e0] sm:$0xff]
                %401 = vst [vmem:[%s151 + $0x3e0] sm:$0xff] %v400
                %v402 = vld [vmem:[%s150 + $0x6e8] sm:$0xff]
                %403 = vst [vmem:[%s151 + $0x3e8] sm:$0xff] %v402
                %v404 = vld [vmem:[%s150 + $0x6f0] sm:$0xff]
                %405 = vst [vmem:[%s151 + $0x3f0] sm:$0xff] %v404
                %v406 = vld [vmem:[%s150 + $0x6f8] sm:$0xff]
                %407 = vst [vmem:[%s151 + $0x3f8] sm:$0xff] %v406
              $region37: #{ppe_forward.1} parent=31 // loop_footer
                %s149 = sadd.s32 1, %s145
              $region38: #{ppe_forward.1} parent=31 // loop_footer_branch
                %144 = sbr.rel target = $region34
              $region39: #{ppe_forward.1} parent=31 // loop_exit
                _
            $region32: #{ppe_forward.1} parent=27 // pred_fallthru
              _
            // Predicated region
            $region40: #{ppe_forward.1} parent=27 // pred_check
              _
            $region41: #{ppe_forward.1} parent=27 // pred_check_branch
              %409 = sbr.rel target = $region43
            $region42: #{ppe_forward.1} parent=27 // pred_region
              _
            $region43: #{ppe_forward.1} parent=27 // pred_fallthru
              _
          $region28: #{ppe_forward.1} parent=23 // pred_fallthru
            _
          %410 = vnop
        $region24: #{ppe_forward.1} parent=19 // pred_fallthru
          _
        // Predicated region
        $region44: #{ppe_forward.1} parent=19 // pred_check
          %p411 = pneg %p55
        $region45: #{ppe_forward.1} parent=19 // pred_check_branch
          %413 = sbr.rel (%p411) target = $region47
        $region46: #{ppe_forward.1} parent=19 // pred_region
          %s414 = smul.u32 32, %s9
          %p415 = scmp.lt.s32.totalorder %s414, 63
          %s416 = scalar_select %p415, %s414, 63
          %s417 = scalar_lea.vmem %s1, %s416
          %s418 = smul.u32 32, %s9
        $region47: #{ppe_forward.1} parent=19 // pred_fallthru
          _
      $region20: #{ppe_forward.1} parent=5 // pred_fallthru
        _
      %p419 = scmp.le.s32.totalorder 1, %s9
      %p420 = scmp.lt.s32.totalorder %s9, 3
      %p421 = pnand %p419, %p420
      %p422 = pneg %p421
      // Predicated region
      $region48: #{ppe_forward.1} parent=5 // pred_check
        _
      $region49: #{ppe_forward.1} parent=5 // pred_check_branch
        %424 = sbr.rel (%p421) target = $region51
      $region50: #{ppe_forward.1} parent=5 // pred_region
        %s425 = ssub.s32 %s9, 1
        %s426 = sand.u32 %s22, 1
        %s427 = sand.u32 %s22, 1
        %s428 = smul.addr %s427, 1024
        %s429 = scalar_lea.vmem [#allocation2], %s428
        // Predicated region
        $region52: #{ppe_forward.1} parent=50 // pred_check
          %p430 = pneg %p35
        $region53: #{ppe_forward.1} parent=50 // pred_check_branch
          %432 = sbr.rel (%p430) target = $region55
        $region54: #{ppe_forward.1} parent=50 // pred_region
          _
        $region55: #{ppe_forward.1} parent=50 // pred_fallthru
          _
        %s433 = sand.u32 %s22, 1
        %s434 = sand.u32 %s22, 1
        %s435 = smul.addr %s434, 1024
        %s436 = scalar_lea.vmem [#allocation2], %s435
        %p437 = pneg %p35
        %p438 = pneg %p32
        %s439 = smul.u32 32, %s14
        %p440 = scmp.lt.s32.totalorder %s439, 63
        %s441 = scalar_select %p440, %s439, 63
        %s442 = scalar_lea.vmem %s1, %s441
        %p443 = pneg %p61
        %p444 = pneg %p58
        %p445 = pneg %p82
        %p446 = pneg %p79
        %p447 = pneg %p108
        %p448 = pneg %p105
        %s449 = sand.u32 %s95, 1
        %s450 = sand.u32 %s95, 1
        %s451 = smul.addr %s450, 1024
        %s452 = scalar_lea.vmem [#allocation3], %s451
        %s453 = smul.u32 32, %s14
        %s454 = smul.u32 32, %s14
        %p455 = scmp.lt.s32.totalorder %s454, 63
        %s456 = scalar_select %p455, %s454, 63
        %s457 = scalar_lea.vmem %s1, %s456
        %s458 = smul.u32 32, %s14
        %s459 = smul.u32 32, %s14
        %v460 = vld [vmem:[%s457] sm:$0xff]
        %v461 = vld [vmem:[%s457 + $0x8] sm:$0xff]
        %v462 = vld [vmem:[%s457 + $0x10] sm:$0xff]
        %v463 = vld [vmem:[%s457 + $0x18] sm:$0xff]
        %v464 = vld [vmem:[%s2] sm:$0xff]
        %v469 = vlaneseq
        %v470 = vshrl.u32 %v469, 7
        %v471 = vsub.s32 0, %v470
        %v472 = vrot.slane %v460, %v471
        %v473 = vlaneseq
        %v474 = vshrl.u32 %v473, 7
        %v475 = vsub.s32 1, %v474
        %v476 = vrot.slane %v460, %v475
        %v477 = vlaneseq
        %v478 = vshrl.u32 %v477, 7
        %v479 = vsub.s32 2, %v478
        %v480 = vrot.slane %v460, %v479
        %v481 = vlaneseq
        %v482 = vshrl.u32 %v481, 7
        %v483 = vsub.s32 3, %v482
        %v484 = vrot.slane %v460, %v483
        %v485 = vlaneseq
        %v486 = vshrl.u32 %v485, 7
        %v487 = vsub.s32 4, %v486
        %v488 = vrot.slane %v460, %v487
        %v489 = vlaneseq
        %v490 = vshrl.u32 %v489, 7
        %v491 = vsub.s32 5, %v490
        %v492 = vrot.slane %v460, %v491
        %v493 = vlaneseq
        %v494 = vshrl.u32 %v493, 7
        %v495 = vsub.s32 6, %v494
        %v496 = vrot.slane %v460, %v495
        %v497 = vlaneseq
        %v498 = vshrl.u32 %v497, 7
        %v499 = vsub.s32 7, %v498
        %v500 = vrot.slane %v460, %v499
        %v501 = vlaneseq
        %v502 = vshrl.u32 %v501, 7
        %v503 = vsub.s32 0, %v502
        %v504 = vrot.slane %v461, %v503
        %v505 = vlaneseq
        %v506 = vshrl.u32 %v505, 7
        %v507 = vsub.s32 1, %v506
        %v508 = vrot.slane %v461, %v507
        %v509 = vlaneseq
        %v510 = vshrl.u32 %v509, 7
        %v511 = vsub.s32 2, %v510
        %v512 = vrot.slane %v461, %v511
        %v513 = vlaneseq
        %v514 = vshrl.u32 %v513, 7
        %v515 = vsub.s32 3, %v514
        %v516 = vrot.slane %v461, %v515
        %v517 = vlaneseq
        %v518 = vshrl.u32 %v517, 7
        %v519 = vsub.s32 4, %v518
        %v520 = vrot.slane %v461, %v519
        %v521 = vlaneseq
        %v522 = vshrl.u32 %v521, 7
        %v523 = vsub.s32 5, %v522
        %v524 = vrot.slane %v461, %v523
        %v525 = vlaneseq
        %v526 = vshrl.u32 %v525, 7
        %v527 = vsub.s32 6, %v526
        %v528 = vrot.slane %v461, %v527
        %v529 = vlaneseq
        %v530 = vshrl.u32 %v529, 7
        %v531 = vsub.s32 7, %v530
        %v532 = vrot.slane %v461, %v531
        %v533 = vlaneseq
        %v534 = vshrl.u32 %v533, 7
        %v535 = vsub.s32 0, %v534
        %v536 = vrot.slane %v462, %v535
        %v537 = vlaneseq
        %v538 = vshrl.u32 %v537, 7
        %v539 = vsub.s32 1, %v538
        %v540 = vrot.slane %v462, %v539
        %v541 = vlaneseq
        %v542 = vshrl.u32 %v541, 7
        %v543 = vsub.s32 2, %v542
        %v544 = vrot.slane %v462, %v543
        %v545 = vlaneseq
        %v546 = vshrl.u32 %v545, 7
        %v547 = vsub.s32 3, %v546
        %v548 = vrot.slane %v462, %v547
        %v549 = vlaneseq
        %v550 = vshrl.u32 %v549, 7
        %v551 = vsub.s32 4, %v550
        %v552 = vrot.slane %v462, %v551
        %v553 = vlaneseq
        %v554 = vshrl.u32 %v553, 7
        %v555 = vsub.s32 5, %v554
        %v556 = vrot.slane %v462, %v555
        %v557 = vlaneseq
        %v558 = vshrl.u32 %v557, 7
        %v559 = vsub.s32 6, %v558
        %v560 = vrot.slane %v462, %v559
        %v561 = vlaneseq
        %v562 = vshrl.u32 %v561, 7
        %v563 = vsub.s32 7, %v562
        %v564 = vrot.slane %v462, %v563
        %v565 = vlaneseq
        %v566 = vshrl.u32 %v565, 7
        %v567 = vsub.s32 0, %v566
        %v568 = vrot.slane %v463, %v567
        %v569 = vlaneseq
        %v570 = vshrl.u32 %v569, 7
        %v571 = vsub.s32 1, %v570
        %v572 = vrot.slane %v463, %v571
        %v573 = vlaneseq
        %v574 = vshrl.u32 %v573, 7
        %v575 = vsub.s32 2, %v574
        %v576 = vrot.slane %v463, %v575
        %v577 = vlaneseq
        %v578 = vshrl.u32 %v577, 7
        %v579 = vsub.s32 3, %v578
        %v580 = vrot.slane %v463, %v579
        %v581 = vlaneseq
        %v582 = vshrl.u32 %v581, 7
        %v583 = vsub.s32 4, %v582
        %v584 = vrot.slane %v463, %v583
        %v585 = vlaneseq
        %v586 = vshrl.u32 %v585, 7
        %v587 = vsub.s32 5, %v586
        %v588 = vrot.slane %v463, %v587
        %v589 = vlaneseq
        %v590 = vshrl.u32 %v589, 7
        %v591 = vsub.s32 6, %v590
        %v592 = vrot.slane %v463, %v591
        %v593 = vlaneseq
        %v594 = vshrl.u32 %v593, 7
        %v595 = vsub.s32 7, %v594
        %v596 = vrot.slane %v463, %v595
        %630 = vset.pattern.permute.xlu0 0
        %631 = vperm.xlu0 %630, %v464
        %v632 = vpop.permute.xlu0 %631
        %v634 = vmul.f32 %v472, %v632
        %v635 = vmul.f32 %v476, %v632
        %v636 = vmul.f32 %v480, %v632
        %v637 = vmul.f32 %v484, %v632
        %v638 = vmul.f32 %v488, %v632
        %v639 = vmul.f32 %v492, %v632
        %v640 = vmul.f32 %v496, %v632
        %v641 = vmul.f32 %v500, %v632
        %v642 = vmul.f32 %v504, %v632
        %v643 = vmul.f32 %v508, %v632
        %v644 = vmul.f32 %v512, %v632
        %v645 = vmul.f32 %v516, %v632
        %v646 = vmul.f32 %v520, %v632
        %v647 = vmul.f32 %v524, %v632
        %v648 = vmul.f32 %v528, %v632
        %v649 = vmul.f32 %v532, %v632
        %v650 = vmul.f32 %v536, %v632
        %v651 = vmul.f32 %v540, %v632
        %v652 = vmul.f32 %v544, %v632
        %v653 = vmul.f32 %v548, %v632
        %v654 = vmul.f32 %v552, %v632
        %v655 = vmul.f32 %v556, %v632
        %v656 = vmul.f32 %v560, %v632
        %v657 = vmul.f32 %v564, %v632
        %v658 = vmul.f32 %v568, %v632
        %v659 = vmul.f32 %v572, %v632
        %v660 = vmul.f32 %v576, %v632
        %v661 = vmul.f32 %v580, %v632
        %v662 = vmul.f32 %v584, %v632
        %v663 = vmul.f32 %v588, %v632
        %v664 = vmul.f32 %v592, %v632
        %v665 = vmul.f32 %v596, %v632
        %v666 = vmul.f32 %v634, 6.2831855
        %v667 = vmul.f32 %v635, 6.2831855
        %v668 = vmul.f32 %v636, 6.2831855
        %v669 = vmul.f32 %v637, 6.2831855
        %v670 = vmul.f32 %v638, 6.2831855
        %v671 = vmul.f32 %v639, 6.2831855
        %v672 = vmul.f32 %v640, 6.2831855
        %v673 = vmul.f32 %v641, 6.2831855
        %v674 = vmul.f32 %v642, 6.2831855
        %v675 = vmul.f32 %v643, 6.2831855
        %v676 = vmul.f32 %v644, 6.2831855
        %v677 = vmul.f32 %v645, 6.2831855
        %v678 = vmul.f32 %v646, 6.2831855
        %v679 = vmul.f32 %v647, 6.2831855
        %v680 = vmul.f32 %v648, 6.2831855
        %v681 = vmul.f32 %v649, 6.2831855
        %v682 = vmul.f32 %v650, 6.2831855
        %v683 = vmul.f32 %v651, 6.2831855
        %v684 = vmul.f32 %v652, 6.2831855
        %v685 = vmul.f32 %v653, 6.2831855
        %v686 = vmul.f32 %v654, 6.2831855
        %v687 = vmul.f32 %v655, 6.2831855
        %v688 = vmul.f32 %v656, 6.2831855
        %v689 = vmul.f32 %v657, 6.2831855
        %v690 = vmul.f32 %v658, 6.2831855
        %v691 = vmul.f32 %v659, 6.2831855
        %v692 = vmul.f32 %v660, 6.2831855
        %v693 = vmul.f32 %v661, 6.2831855
        %v694 = vmul.f32 %v662, 6.2831855
        %v695 = vmul.f32 %v663, 6.2831855
        %v696 = vmul.f32 %v664, 6.2831855
        %v697 = vmul.f32 %v665, 6.2831855
        %v698 = vand.u32 2147483647, %v666
        %vm699 = vcmp.le.f32.partialorder %v698, 0.7853982
        %vm700 = vcmp.lt.s32.totalorder %v666, 0
        %v701 = vand.u32 %v666, 2139095040
        %v702 = vshrl.u32 %v701, 23
        %v703 = vsub.s32 %v702, 127
        %v704 = vand.u32 2147483647, %v666
        %v705 = vand.u32 %v704, 8388607
        %v706 = vor.u32 %v705, 8388608
        %v707 = vsub.s32 0, %v706
        %v708 = vadd.s32 %v703, 1
        %vm709 = vcmp.gt.s32.totalorder %v708, 0
        %v710 = vsel %vm709, %v708, 0
        %v711 = vshrl.u32 %v710, 5
        %v712 = vand.u32 %v710, 31
        %v713 = vsub.s32 32, %v712
        %v714 = vshrl.u32 683565275, %v713
        %v715 = vshll.u32 683565275, %v712
        %v716 = vshrl.u32 2475754826, %v713
        %v717 = vor.u32 %v715, %v716
        %v718 = vshll.u32 2475754826, %v712
        %v719 = vshrl.u32 2131351028, %v713
        %v720 = vor.u32 %v718, %v719
        %v721 = vshll.u32 2131351028, %v712
        %v722 = vshrl.u32 2102212464, %v713
        %v723 = vor.u32 %v721, %v722
        %v724 = vshll.u32 2102212464, %v712
        %v725 = vshrl.u32 920167782, %v713
        %v726 = vor.u32 %v724, %v725
        %v727 = vshll.u32 920167782, %v712
        %v728 = vshrl.u32 1326507024, %v713
        %v729 = vor.u32 %v727, %v728
        %vm730 = vcmp.lt.s32.totalorder %v711, 1
        %vm731 = vcmp.lt.s32.totalorder %v711, 2
        %vm732 = vcmp.lt.s32.totalorder %v711, 3
        %vm733 = vcmp.lt.s32.totalorder %v711, 4
        %v734 = vsel %vm730, %v714, %v717
        %v735 = vsel %vm733, %v723, 2102212464
        %v736 = vsel %vm732, %v720, %v735
        %v737 = vsel %vm731, %v734, %v736
        %v738 = vsel %vm730, %v717, %v720
        %v739 = vsel %vm733, %v726, 920167782
        %v740 = vsel %vm732, %v723, %v739
        %v741 = vsel %vm731, %v738, %v740
        %v742 = vsel %vm730, %v720, %v723
        %v743 = vsel %vm733, %v729, 1326507024
        %v744 = vsel %vm732, %v726, %v743
        %v745 = vsel %vm731, %v742, %v744
        %v746 = vshll.u32 %v706, 8
        %v747 = vmul.u32.u64.compose %v746, %v745
        %v748 = vextract.low.u32 %v747
        %v749 = vextract.high.u32 %v747
        %v750 = vmul.u32.u64.compose %v746, %v741
        %v751 = vextract.low.u32 %v750
        %v752 = vextract.high.u32 %v750
        %v753 = vmul.u32 %v746, %v737
        %v754 = vadd.s32 %v749, %v751
        %vm755 = vc.u32 %v749, %v751
        %v756 = vadd.s32 %v752, 1
        %v757 = vsel %vm755, %v756, %v752
        %v758 = vadd.s32 %v753, %v757
        %v759 = vadd.s32 %v758, 536870912
        %v760 = vshrl.u32 %v759, 30
        %v761 = vshll.u32 %v760, 30
        %v762 = vsub.s32 %v758, %v761
        %vm763 = vcmp.lt.s32.totalorder %v762, 0
        %v764 = vsub.s32 0, %v762
        %v765 = vsel %vm763, %v764, %v762
        %v766 = vclz %v765
        %v767 = vsub.s32 %v766, 2
        %vm768 = vcmp.gt.s32.totalorder 0, %v767
        %v769 = vsel %vm768, 0, %v767
        %v770 = vsub.s32 32, %v769
        %v771 = vshll.u32 %v762, %v769
        %v772 = vshrl.u32 %v754, %v770
        %v773 = vor.u32 %v771, %v772
        %v774 = vsub.s32 4294967266, %v769
        %v775 = vadd.s32 %v774, 127
        %v776 = vshll.u32 %v775, 23
        %v777 = vor.u32 4788187, %v776
        %v778 = vand.u32 2147483647, %v777
        %v780 = vcvt.s32.f32 %v773
        %v781 = vmul.f32 %v780, %v778
        %v782 = vxor.u32 %v781, 2147483648
        %v783 = vsel %vm700, %v782, %v781
        %v784 = vsub.s32 4, %v760
        %v785 = vsel %vm700, %v784, %v760
        %v786 = vsel %vm699, %v666, %v783
        %v787 = vsel %vm699, 0, %v785
        %v788 = vcosq.f32.pop %v786
        %v789 = vsinq.f32.pop %v786
        %vm790 = vweird.f32 %v666
        %v791 = vadd.s32 %v787, 3
        %v792 = vand.u32 %v791, 3
        %vm793 = vcmp.lt.s32.totalorder %v792, 2
        %vm794 = vcmp.eq.s32.totalorder %v792, 0
        %v795 = vxor.u32 %v789, 2147483648
        %v796 = vsel %vm794, %v788, %v795
        %vm797 = vcmp.eq.s32.totalorder %v792, 2
        %v798 = vxor.u32 %v788, 2147483648
        %v799 = vsel %vm797, %v798, %v789
        %v800 = vsel %vm793, %v796, %v799
        %v801 = vsel %vm790, nan, %v800
        %v802 = vand.u32 2147483647, %v667
        %vm803 = vcmp.le.f32.partialorder %v802, 0.7853982
        %vm804 = vcmp.lt.s32.totalorder %v667, 0
        %v805 = vand.u32 %v667, 2139095040
        %v806 = vshrl.u32 %v805, 23
        %v807 = vsub.s32 %v806, 127
        %v808 = vand.u32 2147483647, %v667
        %v809 = vand.u32 %v808, 8388607
        %v810 = vor.u32 %v809, 8388608
        %v811 = vsub.s32 0, %v810
        %v812 = vadd.s32 %v807, 1
        %vm813 = vcmp.gt.s32.totalorder %v812, 0
        %v814 = vsel %vm813, %v812, 0
        %v815 = vshrl.u32 %v814, 5
        %v816 = vand.u32 %v814, 31
        %v817 = vsub.s32 32, %v816
        %v818 = vshrl.u32 683565275, %v817
        %v819 = vshll.u32 683565275, %v816
        %v820 = vshrl.u32 2475754826, %v817
        %v821 = vor.u32 %v819, %v820
        %v822 = vshll.u32 2475754826, %v816
        %v823 = vshrl.u32 2131351028, %v817
        %v824 = vor.u32 %v822, %v823
        %v825 = vshll.u32 2131351028, %v816
        %v826 = vshrl.u32 2102212464, %v817
        %v827 = vor.u32 %v825, %v826
        %v828 = vshll.u32 2102212464, %v816
        %v829 = vshrl.u32 920167782, %v817
        %v830 = vor.u32 %v828, %v829
        %v831 = vshll.u32 920167782, %v816
        %v832 = vshrl.u32 1326507024, %v817
        %v833 = vor.u32 %v831, %v832
        %vm834 = vcmp.lt.s32.totalorder %v815, 1
        %vm835 = vcmp.lt.s32.totalorder %v815, 2
        %vm836 = vcmp.lt.s32.totalorder %v815, 3
        %vm837 = vcmp.lt.s32.totalorder %v815, 4
        %v838 = vsel %vm834, %v818, %v821
        %v839 = vsel %vm837, %v827, 2102212464
        %v840 = vsel %vm836, %v824, %v839
        %v841 = vsel %vm835, %v838, %v840
        %v842 = vsel %vm834, %v821, %v824
        %v843 = vsel %vm837, %v830, 920167782
        %v844 = vsel %vm836, %v827, %v843
        %v845 = vsel %vm835, %v842, %v844
        %v846 = vsel %vm834, %v824, %v827
        %v847 = vsel %vm837, %v833, 1326507024
        %v848 = vsel %vm836, %v830, %v847
        %v849 = vsel %vm835, %v846, %v848
        %v850 = vshll.u32 %v810, 8
        %v851 = vmul.u32.u64.compose %v850, %v849
        %v852 = vextract.low.u32 %v851
        %v853 = vextract.high.u32 %v851
        %v854 = vmul.u32.u64.compose %v850, %v845
        %v855 = vextract.low.u32 %v854
        %v856 = vextract.high.u32 %v854
        %v857 = vmul.u32 %v850, %v841
        %v858 = vadd.s32 %v853, %v855
        %vm859 = vc.u32 %v853, %v855
        %v860 = vadd.s32 %v856, 1
        %v861 = vsel %vm859, %v860, %v856
        %v862 = vadd.s32 %v857, %v861
        %v863 = vadd.s32 %v862, 536870912
        %v864 = vshrl.u32 %v863, 30
        %v865 = vshll.u32 %v864, 30
        %v866 = vsub.s32 %v862, %v865
        %vm867 = vcmp.lt.s32.totalorder %v866, 0
        %v868 = vsub.s32 0, %v866
        %v869 = vsel %vm867, %v868, %v866
        %v870 = vclz %v869
        %v871 = vsub.s32 %v870, 2
        %vm872 = vcmp.gt.s32.totalorder 0, %v871
        %v873 = vsel %vm872, 0, %v871
        %v874 = vsub.s32 32, %v873
        %v875 = vshll.u32 %v866, %v873
        %v876 = vshrl.u32 %v858, %v874
        %v877 = vor.u32 %v875, %v876
        %v878 = vsub.s32 4294967266, %v873
        %v879 = vadd.s32 %v878, 127
        %v880 = vshll.u32 %v879, 23
        %v881 = vor.u32 4788187, %v880
        %v882 = vand.u32 2147483647, %v881
        %v884 = vcvt.s32.f32 %v877
        %v885 = vmul.f32 %v884, %v882
        %v886 = vxor.u32 %v885, 2147483648
        %v887 = vsel %vm804, %v886, %v885
        %v888 = vsub.s32 4, %v864
        %v889 = vsel %vm804, %v888, %v864
        %v890 = vsel %vm803, %v667, %v887
        %v891 = vsel %vm803, 0, %v889
        %v892 = vcosq.f32.pop %v890
        %v893 = vsinq.f32.pop %v890
        %vm894 = vweird.f32 %v667
        %v895 = vadd.s32 %v891, 3
        %v896 = vand.u32 %v895, 3
        %vm897 = vcmp.lt.s32.totalorder %v896, 2
        %vm898 = vcmp.eq.s32.totalorder %v896, 0
        %v899 = vxor.u32 %v893, 2147483648
        %v900 = vsel %vm898, %v892, %v899
        %vm901 = vcmp.eq.s32.totalorder %v896, 2
        %v902 = vxor.u32 %v892, 2147483648
        %v903 = vsel %vm901, %v902, %v893
        %v904 = vsel %vm897, %v900, %v903
        %v905 = vsel %vm894, nan, %v904
        %v906 = vand.u32 2147483647, %v668
        %vm907 = vcmp.le.f32.partialorder %v906, 0.7853982
        %vm908 = vcmp.lt.s32.totalorder %v668, 0
        %v909 = vand.u32 %v668, 2139095040
        %v910 = vshrl.u32 %v909, 23
        %v911 = vsub.s32 %v910, 127
        %v912 = vand.u32 2147483647, %v668
        %v913 = vand.u32 %v912, 8388607
        %v914 = vor.u32 %v913, 8388608
        %v915 = vsub.s32 0, %v914
        %v916 = vadd.s32 %v911, 1
        %vm917 = vcmp.gt.s32.totalorder %v916, 0
        %v918 = vsel %vm917, %v916, 0
        %v919 = vshrl.u32 %v918, 5
        %v920 = vand.u32 %v918, 31
        %v921 = vsub.s32 32, %v920
        %v922 = vshrl.u32 683565275, %v921
        %v923 = vshll.u32 683565275, %v920
        %v924 = vshrl.u32 2475754826, %v921
        %v925 = vor.u32 %v923, %v924
        %v926 = vshll.u32 2475754826, %v920
        %v927 = vshrl.u32 2131351028, %v921
        %v928 = vor.u32 %v926, %v927
        %v929 = vshll.u32 2131351028, %v920
        %v930 = vshrl.u32 2102212464, %v921
        %v931 = vor.u32 %v929, %v930
        %v932 = vshll.u32 2102212464, %v920
        %v933 = vshrl.u32 920167782, %v921
        %v934 = vor.u32 %v932, %v933
        %v935 = vshll.u32 920167782, %v920
        %v936 = vshrl.u32 1326507024, %v921
        %v937 = vor.u32 %v935, %v936
        %vm938 = vcmp.lt.s32.totalorder %v919, 1
        %vm939 = vcmp.lt.s32.totalorder %v919, 2
        %vm940 = vcmp.lt.s32.totalorder %v919, 3
        %vm941 = vcmp.lt.s32.totalorder %v919, 4
        %v942 = vsel %vm938, %v922, %v925
        %v943 = vsel %vm941, %v931, 2102212464
        %v944 = vsel %vm940, %v928, %v943
        %v945 = vsel %vm939, %v942, %v944
        %v946 = vsel %vm938, %v925, %v928
        %v947 = vsel %vm941, %v934, 920167782
        %v948 = vsel %vm940, %v931, %v947
        %v949 = vsel %vm939, %v946, %v948
        %v950 = vsel %vm938, %v928, %v931
        %v951 = vsel %vm941, %v937, 1326507024
        %v952 = vsel %vm940, %v934, %v951
        %v953 = vsel %vm939, %v950, %v952
        %v954 = vshll.u32 %v914, 8
        %v955 = vmul.u32.u64.compose %v954, %v953
        %v956 = vextract.low.u32 %v955
        %v957 = vextract.high.u32 %v955
        %v958 = vmul.u32.u64.compose %v954, %v949
        %v959 = vextract.low.u32 %v958
        %v960 = vextract.high.u32 %v958
        %v961 = vmul.u32 %v954, %v945
        %v962 = vadd.s32 %v957, %v959
        %vm963 = vc.u32 %v957, %v959
        %v964 = vadd.s32 %v960, 1
        %v965 = vsel %vm963, %v964, %v960
        %v966 = vadd.s32 %v961, %v965
        %v967 = vadd.s32 %v966, 536870912
        %v968 = vshrl.u32 %v967, 30
        %v969 = vshll.u32 %v968, 30
        %v970 = vsub.s32 %v966, %v969
        %vm971 = vcmp.lt.s32.totalorder %v970, 0
        %v972 = vsub.s32 0, %v970
        %v973 = vsel %vm971, %v972, %v970
        %v974 = vclz %v973
        %v975 = vsub.s32 %v974, 2
        %vm976 = vcmp.gt.s32.totalorder 0, %v975
        %v977 = vsel %vm976, 0, %v975
        %v978 = vsub.s32 32, %v977
        %v979 = vshll.u32 %v970, %v977
        %v980 = vshrl.u32 %v962, %v978
        %v981 = vor.u32 %v979, %v980
        %v982 = vsub.s32 4294967266, %v977
        %v983 = vadd.s32 %v982, 127
        %v984 = vshll.u32 %v983, 23
        %v985 = vor.u32 4788187, %v984
        %v986 = vand.u32 2147483647, %v985
        %v988 = vcvt.s32.f32 %v981
        %v989 = vmul.f32 %v988, %v986
        %v990 = vxor.u32 %v989, 2147483648
        %v991 = vsel %vm908, %v990, %v989
        %v992 = vsub.s32 4, %v968
        %v993 = vsel %vm908, %v992, %v968
        %v994 = vsel %vm907, %v668, %v991
        %v995 = vsel %vm907, 0, %v993
        %v996 = vcosq.f32.pop %v994
        %v997 = vsinq.f32.pop %v994
        %vm998 = vweird.f32 %v668
        %v999 = vadd.s32 %v995, 3
        %v1000 = vand.u32 %v999, 3
        %vm1001 = vcmp.lt.s32.totalorder %v1000, 2
        %vm1002 = vcmp.eq.s32.totalorder %v1000, 0
        %v1003 = vxor.u32 %v997, 2147483648
        %v1004 = vsel %vm1002, %v996, %v1003
        %vm1005 = vcmp.eq.s32.totalorder %v1000, 2
        %v1006 = vxor.u32 %v996, 2147483648
        %v1007 = vsel %vm1005, %v1006, %v997
        %v1008 = vsel %vm1001, %v1004, %v1007
        %v1009 = vsel %vm998, nan, %v1008
        %v1010 = vand.u32 2147483647, %v669
        %vm1011 = vcmp.le.f32.partialorder %v1010, 0.7853982
        %vm1012 = vcmp.lt.s32.totalorder %v669, 0
        %v1013 = vand.u32 %v669, 2139095040
        %v1014 = vshrl.u32 %v1013, 23
        %v1015 = vsub.s32 %v1014, 127
        %v1016 = vand.u32 2147483647, %v669
        %v1017 = vand.u32 %v1016, 8388607
        %v1018 = vor.u32 %v1017, 8388608
        %v1019 = vsub.s32 0, %v1018
        %v1020 = vadd.s32 %v1015, 1
        %vm1021 = vcmp.gt.s32.totalorder %v1020, 0
        %v1022 = vsel %vm1021, %v1020, 0
        %v1023 = vshrl.u32 %v1022, 5
        %v1024 = vand.u32 %v1022, 31
        %v1025 = vsub.s32 32, %v1024
        %v1026 = vshrl.u32 683565275, %v1025
        %v1027 = vshll.u32 683565275, %v1024
        %v1028 = vshrl.u32 2475754826, %v1025
        %v1029 = vor.u32 %v1027, %v1028
        %v1030 = vshll.u32 2475754826, %v1024
        %v1031 = vshrl.u32 2131351028, %v1025
        %v1032 = vor.u32 %v1030, %v1031
        %v1033 = vshll.u32 2131351028, %v1024
        %v1034 = vshrl.u32 2102212464, %v1025
        %v1035 = vor.u32 %v1033, %v1034
        %v1036 = vshll.u32 2102212464, %v1024
        %v1037 = vshrl.u32 920167782, %v1025
        %v1038 = vor.u32 %v1036, %v1037
        %v1039 = vshll.u32 920167782, %v1024
        %v1040 = vshrl.u32 1326507024, %v1025
        %v1041 = vor.u32 %v1039, %v1040
        %vm1042 = vcmp.lt.s32.totalorder %v1023, 1
        %vm1043 = vcmp.lt.s32.totalorder %v1023, 2
        %vm1044 = vcmp.lt.s32.totalorder %v1023, 3
        %vm1045 = vcmp.lt.s32.totalorder %v1023, 4
        %v1046 = vsel %vm1042, %v1026, %v1029
        %v1047 = vsel %vm1045, %v1035, 2102212464
        %v1048 = vsel %vm1044, %v1032, %v1047
        %v1049 = vsel %vm1043, %v1046, %v1048
        %v1050 = vsel %vm1042, %v1029, %v1032
        %v1051 = vsel %vm1045, %v1038, 920167782
        %v1052 = vsel %vm1044, %v1035, %v1051
        %v1053 = vsel %vm1043, %v1050, %v1052
        %v1054 = vsel %vm1042, %v1032, %v1035
        %v1055 = vsel %vm1045, %v1041, 1326507024
        %v1056 = vsel %vm1044, %v1038, %v1055
        %v1057 = vsel %vm1043, %v1054, %v1056
        %v1058 = vshll.u32 %v1018, 8
        %v1059 = vmul.u32.u64.compose %v1058, %v1057
        %v1060 = vextract.low.u32 %v1059
        %v1061 = vextract.high.u32 %v1059
        %v1062 = vmul.u32.u64.compose %v1058, %v1053
        %v1063 = vextract.low.u32 %v1062
        %v1064 = vextract.high.u32 %v1062
        %v1065 = vmul.u32 %v1058, %v1049
        %v1066 = vadd.s32 %v1061, %v1063
        %vm1067 = vc.u32 %v1061, %v1063
        %v1068 = vadd.s32 %v1064, 1
        %v1069 = vsel %vm1067, %v1068, %v1064
        %v1070 = vadd.s32 %v1065, %v1069
        %v1071 = vadd.s32 %v1070, 536870912
        %v1072 = vshrl.u32 %v1071, 30
        %v1073 = vshll.u32 %v1072, 30
        %v1074 = vsub.s32 %v1070, %v1073
        %vm1075 = vcmp.lt.s32.totalorder %v1074, 0
        %v1076 = vsub.s32 0, %v1074
        %v1077 = vsel %vm1075, %v1076, %v1074
        %v1078 = vclz %v1077
        %v1079 = vsub.s32 %v1078, 2
        %vm1080 = vcmp.gt.s32.totalorder 0, %v1079
        %v1081 = vsel %vm1080, 0, %v1079
        %v1082 = vsub.s32 32, %v1081
        %v1083 = vshll.u32 %v1074, %v1081
        %v1084 = vshrl.u32 %v1066, %v1082
        %v1085 = vor.u32 %v1083, %v1084
        %v1086 = vsub.s32 4294967266, %v1081
        %v1087 = vadd.s32 %v1086, 127
        %v1088 = vshll.u32 %v1087, 23
        %v1089 = vor.u32 4788187, %v1088
        %v1090 = vand.u32 2147483647, %v1089
        %v1092 = vcvt.s32.f32 %v1085
        %v1093 = vmul.f32 %v1092, %v1090
        %v1094 = vxor.u32 %v1093, 2147483648
        %v1095 = vsel %vm1012, %v1094, %v1093
        %v1096 = vsub.s32 4, %v1072
        %v1097 = vsel %vm1012, %v1096, %v1072
        %v1098 = vsel %vm1011, %v669, %v1095
        %v1099 = vsel %vm1011, 0, %v1097
        %v1100 = vcosq.f32.pop %v1098
        %v1101 = vsinq.f32.pop %v1098
        %vm1102 = vweird.f32 %v669
        %v1103 = vadd.s32 %v1099, 3
        %v1104 = vand.u32 %v1103, 3
        %vm1105 = vcmp.lt.s32.totalorder %v1104, 2
        %vm1106 = vcmp.eq.s32.totalorder %v1104, 0
        %v1107 = vxor.u32 %v1101, 2147483648
        %v1108 = vsel %vm1106, %v1100, %v1107
        %vm1109 = vcmp.eq.s32.totalorder %v1104, 2
        %v1110 = vxor.u32 %v1100, 2147483648
        %v1111 = vsel %vm1109, %v1110, %v1101
        %v1112 = vsel %vm1105, %v1108, %v1111
        %v1113 = vsel %vm1102, nan, %v1112
        %v1114 = vand.u32 2147483647, %v670
        %vm1115 = vcmp.le.f32.partialorder %v1114, 0.7853982
        %vm1116 = vcmp.lt.s32.totalorder %v670, 0
        %v1117 = vand.u32 %v670, 2139095040
        %v1118 = vshrl.u32 %v1117, 23
        %v1119 = vsub.s32 %v1118, 127
        %v1120 = vand.u32 2147483647, %v670
        %v1121 = vand.u32 %v1120, 8388607
        %v1122 = vor.u32 %v1121, 8388608
        %v1123 = vsub.s32 0, %v1122
        %v1124 = vadd.s32 %v1119, 1
        %vm1125 = vcmp.gt.s32.totalorder %v1124, 0
        %v1126 = vsel %vm1125, %v1124, 0
        %v1127 = vshrl.u32 %v1126, 5
        %v1128 = vand.u32 %v1126, 31
        %v1129 = vsub.s32 32, %v1128
        %v1130 = vshrl.u32 683565275, %v1129
        %v1131 = vshll.u32 683565275, %v1128
        %v1132 = vshrl.u32 2475754826, %v1129
        %v1133 = vor.u32 %v1131, %v1132
        %v1134 = vshll.u32 2475754826, %v1128
        %v1135 = vshrl.u32 2131351028, %v1129
        %v1136 = vor.u32 %v1134, %v1135
        %v1137 = vshll.u32 2131351028, %v1128
        %v1138 = vshrl.u32 2102212464, %v1129
        %v1139 = vor.u32 %v1137, %v1138
        %v1140 = vshll.u32 2102212464, %v1128
        %v1141 = vshrl.u32 920167782, %v1129
        %v1142 = vor.u32 %v1140, %v1141
        %v1143 = vshll.u32 920167782, %v1128
        %v1144 = vshrl.u32 1326507024, %v1129
        %v1145 = vor.u32 %v1143, %v1144
        %vm1146 = vcmp.lt.s32.totalorder %v1127, 1
        %vm1147 = vcmp.lt.s32.totalorder %v1127, 2
        %vm1148 = vcmp.lt.s32.totalorder %v1127, 3
        %vm1149 = vcmp.lt.s32.totalorder %v1127, 4
        %v1150 = vsel %vm1146, %v1130, %v1133
        %v1151 = vsel %vm1149, %v1139, 2102212464
        %v1152 = vsel %vm1148, %v1136, %v1151
        %v1153 = vsel %vm1147, %v1150, %v1152
        %v1154 = vsel %vm1146, %v1133, %v1136
        %v1155 = vsel %vm1149, %v1142, 920167782
        %v1156 = vsel %vm1148, %v1139, %v1155
        %v1157 = vsel %vm1147, %v1154, %v1156
        %v1158 = vsel %vm1146, %v1136, %v1139
        %v1159 = vsel %vm1149, %v1145, 1326507024
        %v1160 = vsel %vm1148, %v1142, %v1159
        %v1161 = vsel %vm1147, %v1158, %v1160
        %v1162 = vshll.u32 %v1122, 8
        %v1163 = vmul.u32.u64.compose %v1162, %v1161
        %v1164 = vextract.low.u32 %v1163
        %v1165 = vextract.high.u32 %v1163
        %v1166 = vmul.u32.u64.compose %v1162, %v1157
        %v1167 = vextract.low.u32 %v1166
        %v1168 = vextract.high.u32 %v1166
        %v1169 = vmul.u32 %v1162, %v1153
        %v1170 = vadd.s32 %v1165, %v1167
        %vm1171 = vc.u32 %v1165, %v1167
        %v1172 = vadd.s32 %v1168, 1
        %v1173 = vsel %vm1171, %v1172, %v1168
        %v1174 = vadd.s32 %v1169, %v1173
        %v1175 = vadd.s32 %v1174, 536870912
        %v1176 = vshrl.u32 %v1175, 30
        %v1177 = vshll.u32 %v1176, 30
        %v1178 = vsub.s32 %v1174, %v1177
        %vm1179 = vcmp.lt.s32.totalorder %v1178, 0
        %v1180 = vsub.s32 0, %v1178
        %v1181 = vsel %vm1179, %v1180, %v1178
        %v1182 = vclz %v1181
        %v1183 = vsub.s32 %v1182, 2
        %vm1184 = vcmp.gt.s32.totalorder 0, %v1183
        %v1185 = vsel %vm1184, 0, %v1183
        %v1186 = vsub.s32 32, %v1185
        %v1187 = vshll.u32 %v1178, %v1185
        %v1188 = vshrl.u32 %v1170, %v1186
        %v1189 = vor.u32 %v1187, %v1188
        %v1190 = vsub.s32 4294967266, %v1185
        %v1191 = vadd.s32 %v1190, 127
        %v1192 = vshll.u32 %v1191, 23
        %v1193 = vor.u32 4788187, %v1192
        %v1194 = vand.u32 2147483647, %v1193
        %v1196 = vcvt.s32.f32 %v1189
        %v1197 = vmul.f32 %v1196, %v1194
        %v1198 = vxor.u32 %v1197, 2147483648
        %v1199 = vsel %vm1116, %v1198, %v1197
        %v1200 = vsub.s32 4, %v1176
        %v1201 = vsel %vm1116, %v1200, %v1176
        %v1202 = vsel %vm1115, %v670, %v1199
        %v1203 = vsel %vm1115, 0, %v1201
        %v1204 = vcosq.f32.pop %v1202
        %v1205 = vsinq.f32.pop %v1202
        %vm1206 = vweird.f32 %v670
        %v1207 = vadd.s32 %v1203, 3
        %v1208 = vand.u32 %v1207, 3
        %vm1209 = vcmp.lt.s32.totalorder %v1208, 2
        %vm1210 = vcmp.eq.s32.totalorder %v1208, 0
        %v1211 = vxor.u32 %v1205, 2147483648
        %v1212 = vsel %vm1210, %v1204, %v1211
        %vm1213 = vcmp.eq.s32.totalorder %v1208, 2
        %v1214 = vxor.u32 %v1204, 2147483648
        %v1215 = vsel %vm1213, %v1214, %v1205
        %v1216 = vsel %vm1209, %v1212, %v1215
        %v1217 = vsel %vm1206, nan, %v1216
        %v1218 = vand.u32 2147483647, %v671
        %vm1219 = vcmp.le.f32.partialorder %v1218, 0.7853982
        %vm1220 = vcmp.lt.s32.totalorder %v671, 0
        %v1221 = vand.u32 %v671, 2139095040
        %v1222 = vshrl.u32 %v1221, 23
        %v1223 = vsub.s32 %v1222, 127
        %v1224 = vand.u32 2147483647, %v671
        %v1225 = vand.u32 %v1224, 8388607
        %v1226 = vor.u32 %v1225, 8388608
        %v1227 = vsub.s32 0, %v1226
        %v1228 = vadd.s32 %v1223, 1
        %vm1229 = vcmp.gt.s32.totalorder %v1228, 0
        %v1230 = vsel %vm1229, %v1228, 0
        %v1231 = vshrl.u32 %v1230, 5
        %v1232 = vand.u32 %v1230, 31
        %v1233 = vsub.s32 32, %v1232
        %v1234 = vshrl.u32 683565275, %v1233
        %v1235 = vshll.u32 683565275, %v1232
        %v1236 = vshrl.u32 2475754826, %v1233
        %v1237 = vor.u32 %v1235, %v1236
        %v1238 = vshll.u32 2475754826, %v1232
        %v1239 = vshrl.u32 2131351028, %v1233
        %v1240 = vor.u32 %v1238, %v1239
        %v1241 = vshll.u32 2131351028, %v1232
        %v1242 = vshrl.u32 2102212464, %v1233
        %v1243 = vor.u32 %v1241, %v1242
        %v1244 = vshll.u32 2102212464, %v1232
        %v1245 = vshrl.u32 920167782, %v1233
        %v1246 = vor.u32 %v1244, %v1245
        %v1247 = vshll.u32 920167782, %v1232
        %v1248 = vshrl.u32 1326507024, %v1233
        %v1249 = vor.u32 %v1247, %v1248
        %vm1250 = vcmp.lt.s32.totalorder %v1231, 1
        %vm1251 = vcmp.lt.s32.totalorder %v1231, 2
        %vm1252 = vcmp.lt.s32.totalorder %v1231, 3
        %vm1253 = vcmp.lt.s32.totalorder %v1231, 4
        %v1254 = vsel %vm1250, %v1234, %v1237
        %v1255 = vsel %vm1253, %v1243, 2102212464
        %v1256 = vsel %vm1252, %v1240, %v1255
        %v1257 = vsel %vm1251, %v1254, %v1256
        %v1258 = vsel %vm1250, %v1237, %v1240
        %v1259 = vsel %vm1253, %v1246, 920167782
        %v1260 = vsel %vm1252, %v1243, %v1259
        %v1261 = vsel %vm1251, %v1258, %v1260
        %v1262 = vsel %vm1250, %v1240, %v1243
        %v1263 = vsel %vm1253, %v1249, 1326507024
        %v1264 = vsel %vm1252, %v1246, %v1263
        %v1265 = vsel %vm1251, %v1262, %v1264
        %v1266 = vshll.u32 %v1226, 8
        %v1267 = vmul.u32.u64.compose %v1266, %v1265
        %v1268 = vextract.low.u32 %v1267
        %v1269 = vextract.high.u32 %v1267
        %v1270 = vmul.u32.u64.compose %v1266, %v1261
        %v1271 = vextract.low.u32 %v1270
        %v1272 = vextract.high.u32 %v1270
        %v1273 = vmul.u32 %v1266, %v1257
        %v1274 = vadd.s32 %v1269, %v1271
        %vm1275 = vc.u32 %v1269, %v1271
        %v1276 = vadd.s32 %v1272, 1
        %v1277 = vsel %vm1275, %v1276, %v1272
        %v1278 = vadd.s32 %v1273, %v1277
        %v1279 = vadd.s32 %v1278, 536870912
        %v1280 = vshrl.u32 %v1279, 30
        %v1281 = vshll.u32 %v1280, 30
        %v1282 = vsub.s32 %v1278, %v1281
        %vm1283 = vcmp.lt.s32.totalorder %v1282, 0
        %v1284 = vsub.s32 0, %v1282
        %v1285 = vsel %vm1283, %v1284, %v1282
        %v1286 = vclz %v1285
        %v1287 = vsub.s32 %v1286, 2
        %vm1288 = vcmp.gt.s32.totalorder 0, %v1287
        %v1289 = vsel %vm1288, 0, %v1287
        %v1290 = vsub.s32 32, %v1289
        %v1291 = vshll.u32 %v1282, %v1289
        %v1292 = vshrl.u32 %v1274, %v1290
        %v1293 = vor.u32 %v1291, %v1292
        %v1294 = vsub.s32 4294967266, %v1289
        %v1295 = vadd.s32 %v1294, 127
        %v1296 = vshll.u32 %v1295, 23
        %v1297 = vor.u32 4788187, %v1296
        %v1298 = vand.u32 2147483647, %v1297
        %v1300 = vcvt.s32.f32 %v1293
        %v1301 = vmul.f32 %v1300, %v1298
        %v1302 = vxor.u32 %v1301, 2147483648
        %v1303 = vsel %vm1220, %v1302, %v1301
        %v1304 = vsub.s32 4, %v1280
        %v1305 = vsel %vm1220, %v1304, %v1280
        %v1306 = vsel %vm1219, %v671, %v1303
        %v1307 = vsel %vm1219, 0, %v1305
        %v1308 = vcosq.f32.pop %v1306
        %v1309 = vsinq.f32.pop %v1306
        %vm1310 = vweird.f32 %v671
        %v1311 = vadd.s32 %v1307, 3
        %v1312 = vand.u32 %v1311, 3
        %vm1313 = vcmp.lt.s32.totalorder %v1312, 2
        %vm1314 = vcmp.eq.s32.totalorder %v1312, 0
        %v1315 = vxor.u32 %v1309, 2147483648
        %v1316 = vsel %vm1314, %v1308, %v1315
        %vm1317 = vcmp.eq.s32.totalorder %v1312, 2
        %v1318 = vxor.u32 %v1308, 2147483648
        %v1319 = vsel %vm1317, %v1318, %v1309
        %v1320 = vsel %vm1313, %v1316, %v1319
        %v1321 = vsel %vm1310, nan, %v1320
        %v1322 = vand.u32 2147483647, %v672
        %vm1323 = vcmp.le.f32.partialorder %v1322, 0.7853982
        %vm1324 = vcmp.lt.s32.totalorder %v672, 0
        %v1325 = vand.u32 %v672, 2139095040
        %v1326 = vshrl.u32 %v1325, 23
        %v1327 = vsub.s32 %v1326, 127
        %v1328 = vand.u32 2147483647, %v672
        %v1329 = vand.u32 %v1328, 8388607
        %v1330 = vor.u32 %v1329, 8388608
        %v1331 = vsub.s32 0, %v1330
        %v1332 = vadd.s32 %v1327, 1
        %vm1333 = vcmp.gt.s32.totalorder %v1332, 0
        %v1334 = vsel %vm1333, %v1332, 0
        %v1335 = vshrl.u32 %v1334, 5
        %v1336 = vand.u32 %v1334, 31
        %v1337 = vsub.s32 32, %v1336
        %v1338 = vshrl.u32 683565275, %v1337
        %v1339 = vshll.u32 683565275, %v1336
        %v1340 = vshrl.u32 2475754826, %v1337
        %v1341 = vor.u32 %v1339, %v1340
        %v1342 = vshll.u32 2475754826, %v1336
        %v1343 = vshrl.u32 2131351028, %v1337
        %v1344 = vor.u32 %v1342, %v1343
        %v1345 = vshll.u32 2131351028, %v1336
        %v1346 = vshrl.u32 2102212464, %v1337
        %v1347 = vor.u32 %v1345, %v1346
        %v1348 = vshll.u32 2102212464, %v1336
        %v1349 = vshrl.u32 920167782, %v1337
        %v1350 = vor.u32 %v1348, %v1349
        %v1351 = vshll.u32 920167782, %v1336
        %v1352 = vshrl.u32 1326507024, %v1337
        %v1353 = vor.u32 %v1351, %v1352
        %vm1354 = vcmp.lt.s32.totalorder %v1335, 1
        %vm1355 = vcmp.lt.s32.totalorder %v1335, 2
        %vm1356 = vcmp.lt.s32.totalorder %v1335, 3
        %vm1357 = vcmp.lt.s32.totalorder %v1335, 4
        %v1358 = vsel %vm1354, %v1338, %v1341
        %v1359 = vsel %vm1357, %v1347, 2102212464
        %v1360 = vsel %vm1356, %v1344, %v1359
        %v1361 = vsel %vm1355, %v1358, %v1360
        %v1362 = vsel %vm1354, %v1341, %v1344
        %v1363 = vsel %vm1357, %v1350, 920167782
        %v1364 = vsel %vm1356, %v1347, %v1363
        %v1365 = vsel %vm1355, %v1362, %v1364
        %v1366 = vsel %vm1354, %v1344, %v1347
        %v1367 = vsel %vm1357, %v1353, 1326507024
        %v1368 = vsel %vm1356, %v1350, %v1367
        %v1369 = vsel %vm1355, %v1366, %v1368
        %v1370 = vshll.u32 %v1330, 8
        %v1371 = vmul.u32.u64.compose %v1370, %v1369
        %v1372 = vextract.low.u32 %v1371
        %v1373 = vextract.high.u32 %v1371
        %v1374 = vmul.u32.u64.compose %v1370, %v1365
        %v1375 = vextract.low.u32 %v1374
        %v1376 = vextract.high.u32 %v1374
        %v1377 = vmul.u32 %v1370, %v1361
        %v1378 = vadd.s32 %v1373, %v1375
        %vm1379 = vc.u32 %v1373, %v1375
        %v1380 = vadd.s32 %v1376, 1
        %v1381 = vsel %vm1379, %v1380, %v1376
        %v1382 = vadd.s32 %v1377, %v1381
        %v1383 = vadd.s32 %v1382, 536870912
        %v1384 = vshrl.u32 %v1383, 30
        %v1385 = vshll.u32 %v1384, 30
        %v1386 = vsub.s32 %v1382, %v1385
        %vm1387 = vcmp.lt.s32.totalorder %v1386, 0
        %v1388 = vsub.s32 0, %v1386
        %v1389 = vsel %vm1387, %v1388, %v1386
        %v1390 = vclz %v1389
        %v1391 = vsub.s32 %v1390, 2
        %vm1392 = vcmp.gt.s32.totalorder 0, %v1391
        %v1393 = vsel %vm1392, 0, %v1391
        %v1394 = vsub.s32 32, %v1393
        %v1395 = vshll.u32 %v1386, %v1393
        %v1396 = vshrl.u32 %v1378, %v1394
        %v1397 = vor.u32 %v1395, %v1396
        %v1398 = vsub.s32 4294967266, %v1393
        %v1399 = vadd.s32 %v1398, 127
        %v1400 = vshll.u32 %v1399, 23
        %v1401 = vor.u32 4788187, %v1400
        %v1402 = vand.u32 2147483647, %v1401
        %v1404 = vcvt.s32.f32 %v1397
        %v1405 = vmul.f32 %v1404, %v1402
        %v1406 = vxor.u32 %v1405, 2147483648
        %v1407 = vsel %vm1324, %v1406, %v1405
        %v1408 = vsub.s32 4, %v1384
        %v1409 = vsel %vm1324, %v1408, %v1384
        %v1410 = vsel %vm1323, %v672, %v1407
        %v1411 = vsel %vm1323, 0, %v1409
        %v1412 = vcosq.f32.pop %v1410
        %v1413 = vsinq.f32.pop %v1410
        %vm1414 = vweird.f32 %v672
        %v1415 = vadd.s32 %v1411, 3
        %v1416 = vand.u32 %v1415, 3
        %vm1417 = vcmp.lt.s32.totalorder %v1416, 2
        %vm1418 = vcmp.eq.s32.totalorder %v1416, 0
        %v1419 = vxor.u32 %v1413, 2147483648
        %v1420 = vsel %vm1418, %v1412, %v1419
        %vm1421 = vcmp.eq.s32.totalorder %v1416, 2
        %v1422 = vxor.u32 %v1412, 2147483648
        %v1423 = vsel %vm1421, %v1422, %v1413
        %v1424 = vsel %vm1417, %v1420, %v1423
        %v1425 = vsel %vm1414, nan, %v1424
        %v1426 = vand.u32 2147483647, %v673
        %vm1427 = vcmp.le.f32.partialorder %v1426, 0.7853982
        %vm1428 = vcmp.lt.s32.totalorder %v673, 0
        %v1429 = vand.u32 %v673, 2139095040
        %v1430 = vshrl.u32 %v1429, 23
        %v1431 = vsub.s32 %v1430, 127
        %v1432 = vand.u32 2147483647, %v673
        %v1433 = vand.u32 %v1432, 8388607
        %v1434 = vor.u32 %v1433, 8388608
        %v1435 = vsub.s32 0, %v1434
        %v1436 = vadd.s32 %v1431, 1
        %vm1437 = vcmp.gt.s32.totalorder %v1436, 0
        %v1438 = vsel %vm1437, %v1436, 0
        %v1439 = vshrl.u32 %v1438, 5
        %v1440 = vand.u32 %v1438, 31
        %v1441 = vsub.s32 32, %v1440
        %v1442 = vshrl.u32 683565275, %v1441
        %v1443 = vshll.u32 683565275, %v1440
        %v1444 = vshrl.u32 2475754826, %v1441
        %v1445 = vor.u32 %v1443, %v1444
        %v1446 = vshll.u32 2475754826, %v1440
        %v1447 = vshrl.u32 2131351028, %v1441
        %v1448 = vor.u32 %v1446, %v1447
        %v1449 = vshll.u32 2131351028, %v1440
        %v1450 = vshrl.u32 2102212464, %v1441
        %v1451 = vor.u32 %v1449, %v1450
        %v1452 = vshll.u32 2102212464, %v1440
        %v1453 = vshrl.u32 920167782, %v1441
        %v1454 = vor.u32 %v1452, %v1453
        %v1455 = vshll.u32 920167782, %v1440
        %v1456 = vshrl.u32 1326507024, %v1441
        %v1457 = vor.u32 %v1455, %v1456
        %vm1458 = vcmp.lt.s32.totalorder %v1439, 1
        %vm1459 = vcmp.lt.s32.totalorder %v1439, 2
        %vm1460 = vcmp.lt.s32.totalorder %v1439, 3
        %vm1461 = vcmp.lt.s32.totalorder %v1439, 4
        %v1462 = vsel %vm1458, %v1442, %v1445
        %v1463 = vsel %vm1461, %v1451, 2102212464
        %v1464 = vsel %vm1460, %v1448, %v1463
        %v1465 = vsel %vm1459, %v1462, %v1464
        %v1466 = vsel %vm1458, %v1445, %v1448
        %v1467 = vsel %vm1461, %v1454, 920167782
        %v1468 = vsel %vm1460, %v1451, %v1467
        %v1469 = vsel %vm1459, %v1466, %v1468
        %v1470 = vsel %vm1458, %v1448, %v1451
        %v1471 = vsel %vm1461, %v1457, 1326507024
        %v1472 = vsel %vm1460, %v1454, %v1471
        %v1473 = vsel %vm1459, %v1470, %v1472
        %v1474 = vshll.u32 %v1434, 8
        %v1475 = vmul.u32.u64.compose %v1474, %v1473
        %v1476 = vextract.low.u32 %v1475
        %v1477 = vextract.high.u32 %v1475
        %v1478 = vmul.u32.u64.compose %v1474, %v1469
        %v1479 = vextract.low.u32 %v1478
        %v1480 = vextract.high.u32 %v1478
        %v1481 = vmul.u32 %v1474, %v1465
        %v1482 = vadd.s32 %v1477, %v1479
        %vm1483 = vc.u32 %v1477, %v1479
        %v1484 = vadd.s32 %v1480, 1
        %v1485 = vsel %vm1483, %v1484, %v1480
        %v1486 = vadd.s32 %v1481, %v1485
        %v1487 = vadd.s32 %v1486, 536870912
        %v1488 = vshrl.u32 %v1487, 30
        %v1489 = vshll.u32 %v1488, 30
        %v1490 = vsub.s32 %v1486, %v1489
        %vm1491 = vcmp.lt.s32.totalorder %v1490, 0
        %v1492 = vsub.s32 0, %v1490
        %v1493 = vsel %vm1491, %v1492, %v1490
        %v1494 = vclz %v1493
        %v1495 = vsub.s32 %v1494, 2
        %vm1496 = vcmp.gt.s32.totalorder 0, %v1495
        %v1497 = vsel %vm1496, 0, %v1495
        %v1498 = vsub.s32 32, %v1497
        %v1499 = vshll.u32 %v1490, %v1497
        %v1500 = vshrl.u32 %v1482, %v1498
        %v1501 = vor.u32 %v1499, %v1500
        %v1502 = vsub.s32 4294967266, %v1497
        %v1503 = vadd.s32 %v1502, 127
        %v1504 = vshll.u32 %v1503, 23
        %v1505 = vor.u32 4788187, %v1504
        %v1506 = vand.u32 2147483647, %v1505
        %v1508 = vcvt.s32.f32 %v1501
        %v1509 = vmul.f32 %v1508, %v1506
        %v1510 = vxor.u32 %v1509, 2147483648
        %v1511 = vsel %vm1428, %v1510, %v1509
        %v1512 = vsub.s32 4, %v1488
        %v1513 = vsel %vm1428, %v1512, %v1488
        %v1514 = vsel %vm1427, %v673, %v1511
        %v1515 = vsel %vm1427, 0, %v1513
        %v1516 = vcosq.f32.pop %v1514
        %v1517 = vsinq.f32.pop %v1514
        %vm1518 = vweird.f32 %v673
        %v1519 = vadd.s32 %v1515, 3
        %v1520 = vand.u32 %v1519, 3
        %vm1521 = vcmp.lt.s32.totalorder %v1520, 2
        %vm1522 = vcmp.eq.s32.totalorder %v1520, 0
        %v1523 = vxor.u32 %v1517, 2147483648
        %v1524 = vsel %vm1522, %v1516, %v1523
        %vm1525 = vcmp.eq.s32.totalorder %v1520, 2
        %v1526 = vxor.u32 %v1516, 2147483648
        %v1527 = vsel %vm1525, %v1526, %v1517
        %v1528 = vsel %vm1521, %v1524, %v1527
        %v1529 = vsel %vm1518, nan, %v1528
        %v1530 = vand.u32 2147483647, %v674
        %vm1531 = vcmp.le.f32.partialorder %v1530, 0.7853982
        %vm1532 = vcmp.lt.s32.totalorder %v674, 0
        %v1533 = vand.u32 %v674, 2139095040
        %v1534 = vshrl.u32 %v1533, 23
        %v1535 = vsub.s32 %v1534, 127
        %v1536 = vand.u32 2147483647, %v674
        %v1537 = vand.u32 %v1536, 8388607
        %v1538 = vor.u32 %v1537, 8388608
        %v1539 = vsub.s32 0, %v1538
        %v1540 = vadd.s32 %v1535, 1
        %vm1541 = vcmp.gt.s32.totalorder %v1540, 0
        %v1542 = vsel %vm1541, %v1540, 0
        %v1543 = vshrl.u32 %v1542, 5
        %v1544 = vand.u32 %v1542, 31
        %v1545 = vsub.s32 32, %v1544
        %v1546 = vshrl.u32 683565275, %v1545
        %v1547 = vshll.u32 683565275, %v1544
        %v1548 = vshrl.u32 2475754826, %v1545
        %v1549 = vor.u32 %v1547, %v1548
        %v1550 = vshll.u32 2475754826, %v1544
        %v1551 = vshrl.u32 2131351028, %v1545
        %v1552 = vor.u32 %v1550, %v1551
        %v1553 = vshll.u32 2131351028, %v1544
        %v1554 = vshrl.u32 2102212464, %v1545
        %v1555 = vor.u32 %v1553, %v1554
        %v1556 = vshll.u32 2102212464, %v1544
        %v1557 = vshrl.u32 920167782, %v1545
        %v1558 = vor.u32 %v1556, %v1557
        %v1559 = vshll.u32 920167782, %v1544
        %v1560 = vshrl.u32 1326507024, %v1545
        %v1561 = vor.u32 %v1559, %v1560
        %vm1562 = vcmp.lt.s32.totalorder %v1543, 1
        %vm1563 = vcmp.lt.s32.totalorder %v1543, 2
        %vm1564 = vcmp.lt.s32.totalorder %v1543, 3
        %vm1565 = vcmp.lt.s32.totalorder %v1543, 4
        %v1566 = vsel %vm1562, %v1546, %v1549
        %v1567 = vsel %vm1565, %v1555, 2102212464
        %v1568 = vsel %vm1564, %v1552, %v1567
        %v1569 = vsel %vm1563, %v1566, %v1568
        %v1570 = vsel %vm1562, %v1549, %v1552
        %v1571 = vsel %vm1565, %v1558, 920167782
        %v1572 = vsel %vm1564, %v1555, %v1571
        %v1573 = vsel %vm1563, %v1570, %v1572
        %v1574 = vsel %vm1562, %v1552, %v1555
        %v1575 = vsel %vm1565, %v1561, 1326507024
        %v1576 = vsel %vm1564, %v1558, %v1575
        %v1577 = vsel %vm1563, %v1574, %v1576
        %v1578 = vshll.u32 %v1538, 8
        %v1579 = vmul.u32.u64.compose %v1578, %v1577
        %v1580 = vextract.low.u32 %v1579
        %v1581 = vextract.high.u32 %v1579
        %v1582 = vmul.u32.u64.compose %v1578, %v1573
        %v1583 = vextract.low.u32 %v1582
        %v1584 = vextract.high.u32 %v1582
        %v1585 = vmul.u32 %v1578, %v1569
        %v1586 = vadd.s32 %v1581, %v1583
        %vm1587 = vc.u32 %v1581, %v1583
        %v1588 = vadd.s32 %v1584, 1
        %v1589 = vsel %vm1587, %v1588, %v1584
        %v1590 = vadd.s32 %v1585, %v1589
        %v1591 = vadd.s32 %v1590, 536870912
        %v1592 = vshrl.u32 %v1591, 30
        %v1593 = vshll.u32 %v1592, 30
        %v1594 = vsub.s32 %v1590, %v1593
        %vm1595 = vcmp.lt.s32.totalorder %v1594, 0
        %v1596 = vsub.s32 0, %v1594
        %v1597 = vsel %vm1595, %v1596, %v1594
        %v1598 = vclz %v1597
        %v1599 = vsub.s32 %v1598, 2
        %vm1600 = vcmp.gt.s32.totalorder 0, %v1599
        %v1601 = vsel %vm1600, 0, %v1599
        %v1602 = vsub.s32 32, %v1601
        %v1603 = vshll.u32 %v1594, %v1601
        %v1604 = vshrl.u32 %v1586, %v1602
        %v1605 = vor.u32 %v1603, %v1604
        %v1606 = vsub.s32 4294967266, %v1601
        %v1607 = vadd.s32 %v1606, 127
        %v1608 = vshll.u32 %v1607, 23
        %v1609 = vor.u32 4788187, %v1608
        %v1610 = vand.u32 2147483647, %v1609
        %v1612 = vcvt.s32.f32 %v1605
        %v1613 = vmul.f32 %v1612, %v1610
        %v1614 = vxor.u32 %v1613, 2147483648
        %v1615 = vsel %vm1532, %v1614, %v1613
        %v1616 = vsub.s32 4, %v1592
        %v1617 = vsel %vm1532, %v1616, %v1592
        %v1618 = vsel %vm1531, %v674, %v1615
        %v1619 = vsel %vm1531, 0, %v1617
        %v1620 = vcosq.f32.pop %v1618
        %v1621 = vsinq.f32.pop %v1618
        %vm1622 = vweird.f32 %v674
        %v1623 = vadd.s32 %v1619, 3
        %v1624 = vand.u32 %v1623, 3
        %vm1625 = vcmp.lt.s32.totalorder %v1624, 2
        %vm1626 = vcmp.eq.s32.totalorder %v1624, 0
        %v1627 = vxor.u32 %v1621, 2147483648
        %v1628 = vsel %vm1626, %v1620, %v1627
        %vm1629 = vcmp.eq.s32.totalorder %v1624, 2
        %v1630 = vxor.u32 %v1620, 2147483648
        %v1631 = vsel %vm1629, %v1630, %v1621
        %v1632 = vsel %vm1625, %v1628, %v1631
        %v1633 = vsel %vm1622, nan, %v1632
        %v1634 = vand.u32 2147483647, %v675
        %vm1635 = vcmp.le.f32.partialorder %v1634, 0.7853982
        %vm1636 = vcmp.lt.s32.totalorder %v675, 0
        %v1637 = vand.u32 %v675, 2139095040
        %v1638 = vshrl.u32 %v1637, 23
        %v1639 = vsub.s32 %v1638, 127
        %v1640 = vand.u32 2147483647, %v675
        %v1641 = vand.u32 %v1640, 8388607
        %v1642 = vor.u32 %v1641, 8388608
        %v1643 = vsub.s32 0, %v1642
        %v1644 = vadd.s32 %v1639, 1
        %vm1645 = vcmp.gt.s32.totalorder %v1644, 0
        %v1646 = vsel %vm1645, %v1644, 0
        %v1647 = vshrl.u32 %v1646, 5
        %v1648 = vand.u32 %v1646, 31
        %v1649 = vsub.s32 32, %v1648
        %v1650 = vshrl.u32 683565275, %v1649
        %v1651 = vshll.u32 683565275, %v1648
        %v1652 = vshrl.u32 2475754826, %v1649
        %v1653 = vor.u32 %v1651, %v1652
        %v1654 = vshll.u32 2475754826, %v1648
        %v1655 = vshrl.u32 2131351028, %v1649
        %v1656 = vor.u32 %v1654, %v1655
        %v1657 = vshll.u32 2131351028, %v1648
        %v1658 = vshrl.u32 2102212464, %v1649
        %v1659 = vor.u32 %v1657, %v1658
        %v1660 = vshll.u32 2102212464, %v1648
        %v1661 = vshrl.u32 920167782, %v1649
        %v1662 = vor.u32 %v1660, %v1661
        %v1663 = vshll.u32 920167782, %v1648
        %v1664 = vshrl.u32 1326507024, %v1649
        %v1665 = vor.u32 %v1663, %v1664
        %vm1666 = vcmp.lt.s32.totalorder %v1647, 1
        %vm1667 = vcmp.lt.s32.totalorder %v1647, 2
        %vm1668 = vcmp.lt.s32.totalorder %v1647, 3
        %vm1669 = vcmp.lt.s32.totalorder %v1647, 4
        %v1670 = vsel %vm1666, %v1650, %v1653
        %v1671 = vsel %vm1669, %v1659, 2102212464
        %v1672 = vsel %vm1668, %v1656, %v1671
        %v1673 = vsel %vm1667, %v1670, %v1672
        %v1674 = vsel %vm1666, %v1653, %v1656
        %v1675 = vsel %vm1669, %v1662, 920167782
        %v1676 = vsel %vm1668, %v1659, %v1675
        %v1677 = vsel %vm1667, %v1674, %v1676
        %v1678 = vsel %vm1666, %v1656, %v1659
        %v1679 = vsel %vm1669, %v1665, 1326507024
        %v1680 = vsel %vm1668, %v1662, %v1679
        %v1681 = vsel %vm1667, %v1678, %v1680
        %v1682 = vshll.u32 %v1642, 8
        %v1683 = vmul.u32.u64.compose %v1682, %v1681
        %v1684 = vextract.low.u32 %v1683
        %v1685 = vextract.high.u32 %v1683
        %v1686 = vmul.u32.u64.compose %v1682, %v1677
        %v1687 = vextract.low.u32 %v1686
        %v1688 = vextract.high.u32 %v1686
        %v1689 = vmul.u32 %v1682, %v1673
        %v1690 = vadd.s32 %v1685, %v1687
        %vm1691 = vc.u32 %v1685, %v1687
        %v1692 = vadd.s32 %v1688, 1
        %v1693 = vsel %vm1691, %v1692, %v1688
        %v1694 = vadd.s32 %v1689, %v1693
        %v1695 = vadd.s32 %v1694, 536870912
        %v1696 = vshrl.u32 %v1695, 30
        %v1697 = vshll.u32 %v1696, 30
        %v1698 = vsub.s32 %v1694, %v1697
        %vm1699 = vcmp.lt.s32.totalorder %v1698, 0
        %v1700 = vsub.s32 0, %v1698
        %v1701 = vsel %vm1699, %v1700, %v1698
        %v1702 = vclz %v1701
        %v1703 = vsub.s32 %v1702, 2
        %vm1704 = vcmp.gt.s32.totalorder 0, %v1703
        %v1705 = vsel %vm1704, 0, %v1703
        %v1706 = vsub.s32 32, %v1705
        %v1707 = vshll.u32 %v1698, %v1705
        %v1708 = vshrl.u32 %v1690, %v1706
        %v1709 = vor.u32 %v1707, %v1708
        %v1710 = vsub.s32 4294967266, %v1705
        %v1711 = vadd.s32 %v1710, 127
        %v1712 = vshll.u32 %v1711, 23
        %v1713 = vor.u32 4788187, %v1712
        %v1714 = vand.u32 2147483647, %v1713
        %v1716 = vcvt.s32.f32 %v1709
        %v1717 = vmul.f32 %v1716, %v1714
        %v1718 = vxor.u32 %v1717, 2147483648
        %v1719 = vsel %vm1636, %v1718, %v1717
        %v1720 = vsub.s32 4, %v1696
        %v1721 = vsel %vm1636, %v1720, %v1696
        %v1722 = vsel %vm1635, %v675, %v1719
        %v1723 = vsel %vm1635, 0, %v1721
        %v1724 = vcosq.f32.pop %v1722
        %v1725 = vsinq.f32.pop %v1722
        %vm1726 = vweird.f32 %v675
        %v1727 = vadd.s32 %v1723, 3
        %v1728 = vand.u32 %v1727, 3
        %vm1729 = vcmp.lt.s32.totalorder %v1728, 2
        %vm1730 = vcmp.eq.s32.totalorder %v1728, 0
        %v1731 = vxor.u32 %v1725, 2147483648
        %v1732 = vsel %vm1730, %v1724, %v1731
        %vm1733 = vcmp.eq.s32.totalorder %v1728, 2
        %v1734 = vxor.u32 %v1724, 2147483648
        %v1735 = vsel %vm1733, %v1734, %v1725
        %v1736 = vsel %vm1729, %v1732, %v1735
        %v1737 = vsel %vm1726, nan, %v1736
        %v1738 = vand.u32 2147483647, %v676
        %vm1739 = vcmp.le.f32.partialorder %v1738, 0.7853982
        %vm1740 = vcmp.lt.s32.totalorder %v676, 0
        %v1741 = vand.u32 %v676, 2139095040
        %v1742 = vshrl.u32 %v1741, 23
        %v1743 = vsub.s32 %v1742, 127
        %v1744 = vand.u32 2147483647, %v676
        %v1745 = vand.u32 %v1744, 8388607
        %v1746 = vor.u32 %v1745, 8388608
        %v1747 = vsub.s32 0, %v1746
        %v1748 = vadd.s32 %v1743, 1
        %vm1749 = vcmp.gt.s32.totalorder %v1748, 0
        %v1750 = vsel %vm1749, %v1748, 0
        %v1751 = vshrl.u32 %v1750, 5
        %v1752 = vand.u32 %v1750, 31
        %v1753 = vsub.s32 32, %v1752
        %v1754 = vshrl.u32 683565275, %v1753
        %v1755 = vshll.u32 683565275, %v1752
        %v1756 = vshrl.u32 2475754826, %v1753
        %v1757 = vor.u32 %v1755, %v1756
        %v1758 = vshll.u32 2475754826, %v1752
        %v1759 = vshrl.u32 2131351028, %v1753
        %v1760 = vor.u32 %v1758, %v1759
        %v1761 = vshll.u32 2131351028, %v1752
        %v1762 = vshrl.u32 2102212464, %v1753
        %v1763 = vor.u32 %v1761, %v1762
        %v1764 = vshll.u32 2102212464, %v1752
        %v1765 = vshrl.u32 920167782, %v1753
        %v1766 = vor.u32 %v1764, %v1765
        %v1767 = vshll.u32 920167782, %v1752
        %v1768 = vshrl.u32 1326507024, %v1753
        %v1769 = vor.u32 %v1767, %v1768
        %vm1770 = vcmp.lt.s32.totalorder %v1751, 1
        %vm1771 = vcmp.lt.s32.totalorder %v1751, 2
        %vm1772 = vcmp.lt.s32.totalorder %v1751, 3
        %vm1773 = vcmp.lt.s32.totalorder %v1751, 4
        %v1774 = vsel %vm1770, %v1754, %v1757
        %v1775 = vsel %vm1773, %v1763, 2102212464
        %v1776 = vsel %vm1772, %v1760, %v1775
        %v1777 = vsel %vm1771, %v1774, %v1776
        %v1778 = vsel %vm1770, %v1757, %v1760
        %v1779 = vsel %vm1773, %v1766, 920167782
        %v1780 = vsel %vm1772, %v1763, %v1779
        %v1781 = vsel %vm1771, %v1778, %v1780
        %v1782 = vsel %vm1770, %v1760, %v1763
        %v1783 = vsel %vm1773, %v1769, 1326507024
        %v1784 = vsel %vm1772, %v1766, %v1783
        %v1785 = vsel %vm1771, %v1782, %v1784
        %v1786 = vshll.u32 %v1746, 8
        %v1787 = vmul.u32.u64.compose %v1786, %v1785
        %v1788 = vextract.low.u32 %v1787
        %v1789 = vextract.high.u32 %v1787
        %v1790 = vmul.u32.u64.compose %v1786, %v1781
        %v1791 = vextract.low.u32 %v1790
        %v1792 = vextract.high.u32 %v1790
        %v1793 = vmul.u32 %v1786, %v1777
        %v1794 = vadd.s32 %v1789, %v1791
        %vm1795 = vc.u32 %v1789, %v1791
        %v1796 = vadd.s32 %v1792, 1
        %v1797 = vsel %vm1795, %v1796, %v1792
        %v1798 = vadd.s32 %v1793, %v1797
        %v1799 = vadd.s32 %v1798, 536870912
        %v1800 = vshrl.u32 %v1799, 30
        %v1801 = vshll.u32 %v1800, 30
        %v1802 = vsub.s32 %v1798, %v1801
        %vm1803 = vcmp.lt.s32.totalorder %v1802, 0
        %v1804 = vsub.s32 0, %v1802
        %v1805 = vsel %vm1803, %v1804, %v1802
        %v1806 = vclz %v1805
        %v1807 = vsub.s32 %v1806, 2
        %vm1808 = vcmp.gt.s32.totalorder 0, %v1807
        %v1809 = vsel %vm1808, 0, %v1807
        %v1810 = vsub.s32 32, %v1809
        %v1811 = vshll.u32 %v1802, %v1809
        %v1812 = vshrl.u32 %v1794, %v1810
        %v1813 = vor.u32 %v1811, %v1812
        %v1814 = vsub.s32 4294967266, %v1809
        %v1815 = vadd.s32 %v1814, 127
        %v1816 = vshll.u32 %v1815, 23
        %v1817 = vor.u32 4788187, %v1816
        %v1818 = vand.u32 2147483647, %v1817
        %v1820 = vcvt.s32.f32 %v1813
        %v1821 = vmul.f32 %v1820, %v1818
        %v1822 = vxor.u32 %v1821, 2147483648
        %v1823 = vsel %vm1740, %v1822, %v1821
        %v1824 = vsub.s32 4, %v1800
        %v1825 = vsel %vm1740, %v1824, %v1800
        %v1826 = vsel %vm1739, %v676, %v1823
        %v1827 = vsel %vm1739, 0, %v1825
        %v1828 = vcosq.f32.pop %v1826
        %v1829 = vsinq.f32.pop %v1826
        %vm1830 = vweird.f32 %v676
        %v1831 = vadd.s32 %v1827, 3
        %v1832 = vand.u32 %v1831, 3
        %vm1833 = vcmp.lt.s32.totalorder %v1832, 2
        %vm1834 = vcmp.eq.s32.totalorder %v1832, 0
        %v1835 = vxor.u32 %v1829, 2147483648
        %v1836 = vsel %vm1834, %v1828, %v1835
        %vm1837 = vcmp.eq.s32.totalorder %v1832, 2
        %v1838 = vxor.u32 %v1828, 2147483648
        %v1839 = vsel %vm1837, %v1838, %v1829
        %v1840 = vsel %vm1833, %v1836, %v1839
        %v1841 = vsel %vm1830, nan, %v1840
        %v1842 = vand.u32 2147483647, %v677
        %vm1843 = vcmp.le.f32.partialorder %v1842, 0.7853982
        %vm1844 = vcmp.lt.s32.totalorder %v677, 0
        %v1845 = vand.u32 %v677, 2139095040
        %v1846 = vshrl.u32 %v1845, 23
        %v1847 = vsub.s32 %v1846, 127
        %v1848 = vand.u32 2147483647, %v677
        %v1849 = vand.u32 %v1848, 8388607
        %v1850 = vor.u32 %v1849, 8388608
        %v1851 = vsub.s32 0, %v1850
        %v1852 = vadd.s32 %v1847, 1
        %vm1853 = vcmp.gt.s32.totalorder %v1852, 0
        %v1854 = vsel %vm1853, %v1852, 0
        %v1855 = vshrl.u32 %v1854, 5
        %v1856 = vand.u32 %v1854, 31
        %v1857 = vsub.s32 32, %v1856
        %v1858 = vshrl.u32 683565275, %v1857
        %v1859 = vshll.u32 683565275, %v1856
        %v1860 = vshrl.u32 2475754826, %v1857
        %v1861 = vor.u32 %v1859, %v1860
        %v1862 = vshll.u32 2475754826, %v1856
        %v1863 = vshrl.u32 2131351028, %v1857
        %v1864 = vor.u32 %v1862, %v1863
        %v1865 = vshll.u32 2131351028, %v1856
        %v1866 = vshrl.u32 2102212464, %v1857
        %v1867 = vor.u32 %v1865, %v1866
        %v1868 = vshll.u32 2102212464, %v1856
        %v1869 = vshrl.u32 920167782, %v1857
        %v1870 = vor.u32 %v1868, %v1869
        %v1871 = vshll.u32 920167782, %v1856
        %v1872 = vshrl.u32 1326507024, %v1857
        %v1873 = vor.u32 %v1871, %v1872
        %vm1874 = vcmp.lt.s32.totalorder %v1855, 1
        %vm1875 = vcmp.lt.s32.totalorder %v1855, 2
        %vm1876 = vcmp.lt.s32.totalorder %v1855, 3
        %vm1877 = vcmp.lt.s32.totalorder %v1855, 4
        %v1878 = vsel %vm1874, %v1858, %v1861
        %v1879 = vsel %vm1877, %v1867, 2102212464
        %v1880 = vsel %vm1876, %v1864, %v1879
        %v1881 = vsel %vm1875, %v1878, %v1880
        %v1882 = vsel %vm1874, %v1861, %v1864
        %v1883 = vsel %vm1877, %v1870, 920167782
        %v1884 = vsel %vm1876, %v1867, %v1883
        %v1885 = vsel %vm1875, %v1882, %v1884
        %v1886 = vsel %vm1874, %v1864, %v1867
        %v1887 = vsel %vm1877, %v1873, 1326507024
        %v1888 = vsel %vm1876, %v1870, %v1887
        %v1889 = vsel %vm1875, %v1886, %v1888
        %v1890 = vshll.u32 %v1850, 8
        %v1891 = vmul.u32.u64.compose %v1890, %v1889
        %v1892 = vextract.low.u32 %v1891
        %v1893 = vextract.high.u32 %v1891
        %v1894 = vmul.u32.u64.compose %v1890, %v1885
        %v1895 = vextract.low.u32 %v1894
        %v1896 = vextract.high.u32 %v1894
        %v1897 = vmul.u32 %v1890, %v1881
        %v1898 = vadd.s32 %v1893, %v1895
        %vm1899 = vc.u32 %v1893, %v1895
        %v1900 = vadd.s32 %v1896, 1
        %v1901 = vsel %vm1899, %v1900, %v1896
        %v1902 = vadd.s32 %v1897, %v1901
        %v1903 = vadd.s32 %v1902, 536870912
        %v1904 = vshrl.u32 %v1903, 30
        %v1905 = vshll.u32 %v1904, 30
        %v1906 = vsub.s32 %v1902, %v1905
        %vm1907 = vcmp.lt.s32.totalorder %v1906, 0
        %v1908 = vsub.s32 0, %v1906
        %v1909 = vsel %vm1907, %v1908, %v1906
        %v1910 = vclz %v1909
        %v1911 = vsub.s32 %v1910, 2
        %vm1912 = vcmp.gt.s32.totalorder 0, %v1911
        %v1913 = vsel %vm1912, 0, %v1911
        %v1914 = vsub.s32 32, %v1913
        %v1915 = vshll.u32 %v1906, %v1913
        %v1916 = vshrl.u32 %v1898, %v1914
        %v1917 = vor.u32 %v1915, %v1916
        %v1918 = vsub.s32 4294967266, %v1913
        %v1919 = vadd.s32 %v1918, 127
        %v1920 = vshll.u32 %v1919, 23
        %v1921 = vor.u32 4788187, %v1920
        %v1922 = vand.u32 2147483647, %v1921
        %v1924 = vcvt.s32.f32 %v1917
        %v1925 = vmul.f32 %v1924, %v1922
        %v1926 = vxor.u32 %v1925, 2147483648
        %v1927 = vsel %vm1844, %v1926, %v1925
        %v1928 = vsub.s32 4, %v1904
        %v1929 = vsel %vm1844, %v1928, %v1904
        %v1930 = vsel %vm1843, %v677, %v1927
        %v1931 = vsel %vm1843, 0, %v1929
        %v1932 = vcosq.f32.pop %v1930
        %v1933 = vsinq.f32.pop %v1930
        %vm1934 = vweird.f32 %v677
        %v1935 = vadd.s32 %v1931, 3
        %v1936 = vand.u32 %v1935, 3
        %vm1937 = vcmp.lt.s32.totalorder %v1936, 2
        %vm1938 = vcmp.eq.s32.totalorder %v1936, 0
        %v1939 = vxor.u32 %v1933, 2147483648
        %v1940 = vsel %vm1938, %v1932, %v1939
        %vm1941 = vcmp.eq.s32.totalorder %v1936, 2
        %v1942 = vxor.u32 %v1932, 2147483648
        %v1943 = vsel %vm1941, %v1942, %v1933
        %v1944 = vsel %vm1937, %v1940, %v1943
        %v1945 = vsel %vm1934, nan, %v1944
        %v1946 = vand.u32 2147483647, %v678
        %vm1947 = vcmp.le.f32.partialorder %v1946, 0.7853982
        %vm1948 = vcmp.lt.s32.totalorder %v678, 0
        %v1949 = vand.u32 %v678, 2139095040
        %v1950 = vshrl.u32 %v1949, 23
        %v1951 = vsub.s32 %v1950, 127
        %v1952 = vand.u32 2147483647, %v678
        %v1953 = vand.u32 %v1952, 8388607
        %v1954 = vor.u32 %v1953, 8388608
        %v1955 = vsub.s32 0, %v1954
        %v1956 = vadd.s32 %v1951, 1
        %vm1957 = vcmp.gt.s32.totalorder %v1956, 0
        %v1958 = vsel %vm1957, %v1956, 0
        %v1959 = vshrl.u32 %v1958, 5
        %v1960 = vand.u32 %v1958, 31
        %v1961 = vsub.s32 32, %v1960
        %v1962 = vshrl.u32 683565275, %v1961
        %v1963 = vshll.u32 683565275, %v1960
        %v1964 = vshrl.u32 2475754826, %v1961
        %v1965 = vor.u32 %v1963, %v1964
        %v1966 = vshll.u32 2475754826, %v1960
        %v1967 = vshrl.u32 2131351028, %v1961
        %v1968 = vor.u32 %v1966, %v1967
        %v1969 = vshll.u32 2131351028, %v1960
        %v1970 = vshrl.u32 2102212464, %v1961
        %v1971 = vor.u32 %v1969, %v1970
        %v1972 = vshll.u32 2102212464, %v1960
        %v1973 = vshrl.u32 920167782, %v1961
        %v1974 = vor.u32 %v1972, %v1973
        %v1975 = vshll.u32 920167782, %v1960
        %v1976 = vshrl.u32 1326507024, %v1961
        %v1977 = vor.u32 %v1975, %v1976
        %vm1978 = vcmp.lt.s32.totalorder %v1959, 1
        %vm1979 = vcmp.lt.s32.totalorder %v1959, 2
        %vm1980 = vcmp.lt.s32.totalorder %v1959, 3
        %vm1981 = vcmp.lt.s32.totalorder %v1959, 4
        %v1982 = vsel %vm1978, %v1962, %v1965
        %v1983 = vsel %vm1981, %v1971, 2102212464
        %v1984 = vsel %vm1980, %v1968, %v1983
        %v1985 = vsel %vm1979, %v1982, %v1984
        %v1986 = vsel %vm1978, %v1965, %v1968
        %v1987 = vsel %vm1981, %v1974, 920167782
        %v1988 = vsel %vm1980, %v1971, %v1987
        %v1989 = vsel %vm1979, %v1986, %v1988
        %v1990 = vsel %vm1978, %v1968, %v1971
        %v1991 = vsel %vm1981, %v1977, 1326507024
        %v1992 = vsel %vm1980, %v1974, %v1991
        %v1993 = vsel %vm1979, %v1990, %v1992
        %v1994 = vshll.u32 %v1954, 8
        %v1995 = vmul.u32.u64.compose %v1994, %v1993
        %v1996 = vextract.low.u32 %v1995
        %v1997 = vextract.high.u32 %v1995
        %v1998 = vmul.u32.u64.compose %v1994, %v1989
        %v1999 = vextract.low.u32 %v1998
        %v2000 = vextract.high.u32 %v1998
        %v2001 = vmul.u32 %v1994, %v1985
        %v2002 = vadd.s32 %v1997, %v1999
        %vm2003 = vc.u32 %v1997, %v1999
        %v2004 = vadd.s32 %v2000, 1
        %v2005 = vsel %vm2003, %v2004, %v2000
        %v2006 = vadd.s32 %v2001, %v2005
        %v2007 = vadd.s32 %v2006, 536870912
        %v2008 = vshrl.u32 %v2007, 30
        %v2009 = vshll.u32 %v2008, 30
        %v2010 = vsub.s32 %v2006, %v2009
        %vm2011 = vcmp.lt.s32.totalorder %v2010, 0
        %v2012 = vsub.s32 0, %v2010
        %v2013 = vsel %vm2011, %v2012, %v2010
        %v2014 = vclz %v2013
        %v2015 = vsub.s32 %v2014, 2
        %vm2016 = vcmp.gt.s32.totalorder 0, %v2015
        %v2017 = vsel %vm2016, 0, %v2015
        %v2018 = vsub.s32 32, %v2017
        %v2019 = vshll.u32 %v2010, %v2017
        %v2020 = vshrl.u32 %v2002, %v2018
        %v2021 = vor.u32 %v2019, %v2020
        %v2022 = vsub.s32 4294967266, %v2017
        %v2023 = vadd.s32 %v2022, 127
        %v2024 = vshll.u32 %v2023, 23
        %v2025 = vor.u32 4788187, %v2024
        %v2026 = vand.u32 2147483647, %v2025
        %v2028 = vcvt.s32.f32 %v2021
        %v2029 = vmul.f32 %v2028, %v2026
        %v2030 = vxor.u32 %v2029, 2147483648
        %v2031 = vsel %vm1948, %v2030, %v2029
        %v2032 = vsub.s32 4, %v2008
        %v2033 = vsel %vm1948, %v2032, %v2008
        %v2034 = vsel %vm1947, %v678, %v2031
        %v2035 = vsel %vm1947, 0, %v2033
        %v2036 = vcosq.f32.pop %v2034
        %v2037 = vsinq.f32.pop %v2034
        %vm2038 = vweird.f32 %v678
        %v2039 = vadd.s32 %v2035, 3
        %v2040 = vand.u32 %v2039, 3
        %vm2041 = vcmp.lt.s32.totalorder %v2040, 2
        %vm2042 = vcmp.eq.s32.totalorder %v2040, 0
        %v2043 = vxor.u32 %v2037, 2147483648
        %v2044 = vsel %vm2042, %v2036, %v2043
        %vm2045 = vcmp.eq.s32.totalorder %v2040, 2
        %v2046 = vxor.u32 %v2036, 2147483648
        %v2047 = vsel %vm2045, %v2046, %v2037
        %v2048 = vsel %vm2041, %v2044, %v2047
        %v2049 = vsel %vm2038, nan, %v2048
        %v2050 = vand.u32 2147483647, %v679
        %vm2051 = vcmp.le.f32.partialorder %v2050, 0.7853982
        %vm2052 = vcmp.lt.s32.totalorder %v679, 0
        %v2053 = vand.u32 %v679, 2139095040
        %v2054 = vshrl.u32 %v2053, 23
        %v2055 = vsub.s32 %v2054, 127
        %v2056 = vand.u32 2147483647, %v679
        %v2057 = vand.u32 %v2056, 8388607
        %v2058 = vor.u32 %v2057, 8388608
        %v2059 = vsub.s32 0, %v2058
        %v2060 = vadd.s32 %v2055, 1
        %vm2061 = vcmp.gt.s32.totalorder %v2060, 0
        %v2062 = vsel %vm2061, %v2060, 0
        %v2063 = vshrl.u32 %v2062, 5
        %v2064 = vand.u32 %v2062, 31
        %v2065 = vsub.s32 32, %v2064
        %v2066 = vshrl.u32 683565275, %v2065
        %v2067 = vshll.u32 683565275, %v2064
        %v2068 = vshrl.u32 2475754826, %v2065
        %v2069 = vor.u32 %v2067, %v2068
        %v2070 = vshll.u32 2475754826, %v2064
        %v2071 = vshrl.u32 2131351028, %v2065
        %v2072 = vor.u32 %v2070, %v2071
        %v2073 = vshll.u32 2131351028, %v2064
        %v2074 = vshrl.u32 2102212464, %v2065
        %v2075 = vor.u32 %v2073, %v2074
        %v2076 = vshll.u32 2102212464, %v2064
        %v2077 = vshrl.u32 920167782, %v2065
        %v2078 = vor.u32 %v2076, %v2077
        %v2079 = vshll.u32 920167782, %v2064
        %v2080 = vshrl.u32 1326507024, %v2065
        %v2081 = vor.u32 %v2079, %v2080
        %vm2082 = vcmp.lt.s32.totalorder %v2063, 1
        %vm2083 = vcmp.lt.s32.totalorder %v2063, 2
        %vm2084 = vcmp.lt.s32.totalorder %v2063, 3
        %vm2085 = vcmp.lt.s32.totalorder %v2063, 4
        %v2086 = vsel %vm2082, %v2066, %v2069
        %v2087 = vsel %vm2085, %v2075, 2102212464
        %v2088 = vsel %vm2084, %v2072, %v2087
        %v2089 = vsel %vm2083, %v2086, %v2088
        %v2090 = vsel %vm2082, %v2069, %v2072
        %v2091 = vsel %vm2085, %v2078, 920167782
        %v2092 = vsel %vm2084, %v2075, %v2091
        %v2093 = vsel %vm2083, %v2090, %v2092
        %v2094 = vsel %vm2082, %v2072, %v2075
        %v2095 = vsel %vm2085, %v2081, 1326507024
        %v2096 = vsel %vm2084, %v2078, %v2095
        %v2097 = vsel %vm2083, %v2094, %v2096
        %v2098 = vshll.u32 %v2058, 8
        %v2099 = vmul.u32.u64.compose %v2098, %v2097
        %v2100 = vextract.low.u32 %v2099
        %v2101 = vextract.high.u32 %v2099
        %v2102 = vmul.u32.u64.compose %v2098, %v2093
        %v2103 = vextract.low.u32 %v2102
        %v2104 = vextract.high.u32 %v2102
        %v2105 = vmul.u32 %v2098, %v2089
        %v2106 = vadd.s32 %v2101, %v2103
        %vm2107 = vc.u32 %v2101, %v2103
        %v2108 = vadd.s32 %v2104, 1
        %v2109 = vsel %vm2107, %v2108, %v2104
        %v2110 = vadd.s32 %v2105, %v2109
        %v2111 = vadd.s32 %v2110, 536870912
        %v2112 = vshrl.u32 %v2111, 30
        %v2113 = vshll.u32 %v2112, 30
        %v2114 = vsub.s32 %v2110, %v2113
        %vm2115 = vcmp.lt.s32.totalorder %v2114, 0
        %v2116 = vsub.s32 0, %v2114
        %v2117 = vsel %vm2115, %v2116, %v2114
        %v2118 = vclz %v2117
        %v2119 = vsub.s32 %v2118, 2
        %vm2120 = vcmp.gt.s32.totalorder 0, %v2119
        %v2121 = vsel %vm2120, 0, %v2119
        %v2122 = vsub.s32 32, %v2121
        %v2123 = vshll.u32 %v2114, %v2121
        %v2124 = vshrl.u32 %v2106, %v2122
        %v2125 = vor.u32 %v2123, %v2124
        %v2126 = vsub.s32 4294967266, %v2121
        %v2127 = vadd.s32 %v2126, 127
        %v2128 = vshll.u32 %v2127, 23
        %v2129 = vor.u32 4788187, %v2128
        %v2130 = vand.u32 2147483647, %v2129
        %v2132 = vcvt.s32.f32 %v2125
        %v2133 = vmul.f32 %v2132, %v2130
        %v2134 = vxor.u32 %v2133, 2147483648
        %v2135 = vsel %vm2052, %v2134, %v2133
        %v2136 = vsub.s32 4, %v2112
        %v2137 = vsel %vm2052, %v2136, %v2112
        %v2138 = vsel %vm2051, %v679, %v2135
        %v2139 = vsel %vm2051, 0, %v2137
        %v2140 = vcosq.f32.pop %v2138
        %v2141 = vsinq.f32.pop %v2138
        %vm2142 = vweird.f32 %v679
        %v2143 = vadd.s32 %v2139, 3
        %v2144 = vand.u32 %v2143, 3
        %vm2145 = vcmp.lt.s32.totalorder %v2144, 2
        %vm2146 = vcmp.eq.s32.totalorder %v2144, 0
        %v2147 = vxor.u32 %v2141, 2147483648
        %v2148 = vsel %vm2146, %v2140, %v2147
        %vm2149 = vcmp.eq.s32.totalorder %v2144, 2
        %v2150 = vxor.u32 %v2140, 2147483648
        %v2151 = vsel %vm2149, %v2150, %v2141
        %v2152 = vsel %vm2145, %v2148, %v2151
        %v2153 = vsel %vm2142, nan, %v2152
        %v2154 = vand.u32 2147483647, %v680
        %vm2155 = vcmp.le.f32.partialorder %v2154, 0.7853982
        %vm2156 = vcmp.lt.s32.totalorder %v680, 0
        %v2157 = vand.u32 %v680, 2139095040
        %v2158 = vshrl.u32 %v2157, 23
        %v2159 = vsub.s32 %v2158, 127
        %v2160 = vand.u32 2147483647, %v680
        %v2161 = vand.u32 %v2160, 8388607
        %v2162 = vor.u32 %v2161, 8388608
        %v2163 = vsub.s32 0, %v2162
        %v2164 = vadd.s32 %v2159, 1
        %vm2165 = vcmp.gt.s32.totalorder %v2164, 0
        %v2166 = vsel %vm2165, %v2164, 0
        %v2167 = vshrl.u32 %v2166, 5
        %v2168 = vand.u32 %v2166, 31
        %v2169 = vsub.s32 32, %v2168
        %v2170 = vshrl.u32 683565275, %v2169
        %v2171 = vshll.u32 683565275, %v2168
        %v2172 = vshrl.u32 2475754826, %v2169
        %v2173 = vor.u32 %v2171, %v2172
        %v2174 = vshll.u32 2475754826, %v2168
        %v2175 = vshrl.u32 2131351028, %v2169
        %v2176 = vor.u32 %v2174, %v2175
        %v2177 = vshll.u32 2131351028, %v2168
        %v2178 = vshrl.u32 2102212464, %v2169
        %v2179 = vor.u32 %v2177, %v2178
        %v2180 = vshll.u32 2102212464, %v2168
        %v2181 = vshrl.u32 920167782, %v2169
        %v2182 = vor.u32 %v2180, %v2181
        %v2183 = vshll.u32 920167782, %v2168
        %v2184 = vshrl.u32 1326507024, %v2169
        %v2185 = vor.u32 %v2183, %v2184
        %vm2186 = vcmp.lt.s32.totalorder %v2167, 1
        %vm2187 = vcmp.lt.s32.totalorder %v2167, 2
        %vm2188 = vcmp.lt.s32.totalorder %v2167, 3
        %vm2189 = vcmp.lt.s32.totalorder %v2167, 4
        %v2190 = vsel %vm2186, %v2170, %v2173
        %v2191 = vsel %vm2189, %v2179, 2102212464
        %v2192 = vsel %vm2188, %v2176, %v2191
        %v2193 = vsel %vm2187, %v2190, %v2192
        %v2194 = vsel %vm2186, %v2173, %v2176
        %v2195 = vsel %vm2189, %v2182, 920167782
        %v2196 = vsel %vm2188, %v2179, %v2195
        %v2197 = vsel %vm2187, %v2194, %v2196
        %v2198 = vsel %vm2186, %v2176, %v2179
        %v2199 = vsel %vm2189, %v2185, 1326507024
        %v2200 = vsel %vm2188, %v2182, %v2199
        %v2201 = vsel %vm2187, %v2198, %v2200
        %v2202 = vshll.u32 %v2162, 8
        %v2203 = vmul.u32.u64.compose %v2202, %v2201
        %v2204 = vextract.low.u32 %v2203
        %v2205 = vextract.high.u32 %v2203
        %v2206 = vmul.u32.u64.compose %v2202, %v2197
        %v2207 = vextract.low.u32 %v2206
        %v2208 = vextract.high.u32 %v2206
        %v2209 = vmul.u32 %v2202, %v2193
        %v2210 = vadd.s32 %v2205, %v2207
        %vm2211 = vc.u32 %v2205, %v2207
        %v2212 = vadd.s32 %v2208, 1
        %v2213 = vsel %vm2211, %v2212, %v2208
        %v2214 = vadd.s32 %v2209, %v2213
        %v2215 = vadd.s32 %v2214, 536870912
        %v2216 = vshrl.u32 %v2215, 30
        %v2217 = vshll.u32 %v2216, 30
        %v2218 = vsub.s32 %v2214, %v2217
        %vm2219 = vcmp.lt.s32.totalorder %v2218, 0
        %v2220 = vsub.s32 0, %v2218
        %v2221 = vsel %vm2219, %v2220, %v2218
        %v2222 = vclz %v2221
        %v2223 = vsub.s32 %v2222, 2
        %vm2224 = vcmp.gt.s32.totalorder 0, %v2223
        %v2225 = vsel %vm2224, 0, %v2223
        %v2226 = vsub.s32 32, %v2225
        %v2227 = vshll.u32 %v2218, %v2225
        %v2228 = vshrl.u32 %v2210, %v2226
        %v2229 = vor.u32 %v2227, %v2228
        %v2230 = vsub.s32 4294967266, %v2225
        %v2231 = vadd.s32 %v2230, 127
        %v2232 = vshll.u32 %v2231, 23
        %v2233 = vor.u32 4788187, %v2232
        %v2234 = vand.u32 2147483647, %v2233
        %v2236 = vcvt.s32.f32 %v2229
        %v2237 = vmul.f32 %v2236, %v2234
        %v2238 = vxor.u32 %v2237, 2147483648
        %v2239 = vsel %vm2156, %v2238, %v2237
        %v2240 = vsub.s32 4, %v2216
        %v2241 = vsel %vm2156, %v2240, %v2216
        %v2242 = vsel %vm2155, %v680, %v2239
        %v2243 = vsel %vm2155, 0, %v2241
        %v2244 = vcosq.f32.pop %v2242
        %v2245 = vsinq.f32.pop %v2242
        %vm2246 = vweird.f32 %v680
        %v2247 = vadd.s32 %v2243, 3
        %v2248 = vand.u32 %v2247, 3
        %vm2249 = vcmp.lt.s32.totalorder %v2248, 2
        %vm2250 = vcmp.eq.s32.totalorder %v2248, 0
        %v2251 = vxor.u32 %v2245, 2147483648
        %v2252 = vsel %vm2250, %v2244, %v2251
        %vm2253 = vcmp.eq.s32.totalorder %v2248, 2
        %v2254 = vxor.u32 %v2244, 2147483648
        %v2255 = vsel %vm2253, %v2254, %v2245
        %v2256 = vsel %vm2249, %v2252, %v2255
        %v2257 = vsel %vm2246, nan, %v2256
        %v2258 = vand.u32 2147483647, %v681
        %vm2259 = vcmp.le.f32.partialorder %v2258, 0.7853982
        %vm2260 = vcmp.lt.s32.totalorder %v681, 0
        %v2261 = vand.u32 %v681, 2139095040
        %v2262 = vshrl.u32 %v2261, 23
        %v2263 = vsub.s32 %v2262, 127
        %v2264 = vand.u32 2147483647, %v681
        %v2265 = vand.u32 %v2264, 8388607
        %v2266 = vor.u32 %v2265, 8388608
        %v2267 = vsub.s32 0, %v2266
        %v2268 = vadd.s32 %v2263, 1
        %vm2269 = vcmp.gt.s32.totalorder %v2268, 0
        %v2270 = vsel %vm2269, %v2268, 0
        %v2271 = vshrl.u32 %v2270, 5
        %v2272 = vand.u32 %v2270, 31
        %v2273 = vsub.s32 32, %v2272
        %v2274 = vshrl.u32 683565275, %v2273
        %v2275 = vshll.u32 683565275, %v2272
        %v2276 = vshrl.u32 2475754826, %v2273
        %v2277 = vor.u32 %v2275, %v2276
        %v2278 = vshll.u32 2475754826, %v2272
        %v2279 = vshrl.u32 2131351028, %v2273
        %v2280 = vor.u32 %v2278, %v2279
        %v2281 = vshll.u32 2131351028, %v2272
        %v2282 = vshrl.u32 2102212464, %v2273
        %v2283 = vor.u32 %v2281, %v2282
        %v2284 = vshll.u32 2102212464, %v2272
        %v2285 = vshrl.u32 920167782, %v2273
        %v2286 = vor.u32 %v2284, %v2285
        %v2287 = vshll.u32 920167782, %v2272
        %v2288 = vshrl.u32 1326507024, %v2273
        %v2289 = vor.u32 %v2287, %v2288
        %vm2290 = vcmp.lt.s32.totalorder %v2271, 1
        %vm2291 = vcmp.lt.s32.totalorder %v2271, 2
        %vm2292 = vcmp.lt.s32.totalorder %v2271, 3
        %vm2293 = vcmp.lt.s32.totalorder %v2271, 4
        %v2294 = vsel %vm2290, %v2274, %v2277
        %v2295 = vsel %vm2293, %v2283, 2102212464
        %v2296 = vsel %vm2292, %v2280, %v2295
        %v2297 = vsel %vm2291, %v2294, %v2296
        %v2298 = vsel %vm2290, %v2277, %v2280
        %v2299 = vsel %vm2293, %v2286, 920167782
        %v2300 = vsel %vm2292, %v2283, %v2299
        %v2301 = vsel %vm2291, %v2298, %v2300
        %v2302 = vsel %vm2290, %v2280, %v2283
        %v2303 = vsel %vm2293, %v2289, 1326507024
        %v2304 = vsel %vm2292, %v2286, %v2303
        %v2305 = vsel %vm2291, %v2302, %v2304
        %v2306 = vshll.u32 %v2266, 8
        %v2307 = vmul.u32.u64.compose %v2306, %v2305
        %v2308 = vextract.low.u32 %v2307
        %v2309 = vextract.high.u32 %v2307
        %v2310 = vmul.u32.u64.compose %v2306, %v2301
        %v2311 = vextract.low.u32 %v2310
        %v2312 = vextract.high.u32 %v2310
        %v2313 = vmul.u32 %v2306, %v2297
        %v2314 = vadd.s32 %v2309, %v2311
        %vm2315 = vc.u32 %v2309, %v2311
        %v2316 = vadd.s32 %v2312, 1
        %v2317 = vsel %vm2315, %v2316, %v2312
        %v2318 = vadd.s32 %v2313, %v2317
        %v2319 = vadd.s32 %v2318, 536870912
        %v2320 = vshrl.u32 %v2319, 30
        %v2321 = vshll.u32 %v2320, 30
        %v2322 = vsub.s32 %v2318, %v2321
        %vm2323 = vcmp.lt.s32.totalorder %v2322, 0
        %v2324 = vsub.s32 0, %v2322
        %v2325 = vsel %vm2323, %v2324, %v2322
        %v2326 = vclz %v2325
        %v2327 = vsub.s32 %v2326, 2
        %vm2328 = vcmp.gt.s32.totalorder 0, %v2327
        %v2329 = vsel %vm2328, 0, %v2327
        %v2330 = vsub.s32 32, %v2329
        %v2331 = vshll.u32 %v2322, %v2329
        %v2332 = vshrl.u32 %v2314, %v2330
        %v2333 = vor.u32 %v2331, %v2332
        %v2334 = vsub.s32 4294967266, %v2329
        %v2335 = vadd.s32 %v2334, 127
        %v2336 = vshll.u32 %v2335, 23
        %v2337 = vor.u32 4788187, %v2336
        %v2338 = vand.u32 2147483647, %v2337
        %v2340 = vcvt.s32.f32 %v2333
        %v2341 = vmul.f32 %v2340, %v2338
        %v2342 = vxor.u32 %v2341, 2147483648
        %v2343 = vsel %vm2260, %v2342, %v2341
        %v2344 = vsub.s32 4, %v2320
        %v2345 = vsel %vm2260, %v2344, %v2320
        %v2346 = vsel %vm2259, %v681, %v2343
        %v2347 = vsel %vm2259, 0, %v2345
        %v2348 = vcosq.f32.pop %v2346
        %v2349 = vsinq.f32.pop %v2346
        %vm2350 = vweird.f32 %v681
        %v2351 = vadd.s32 %v2347, 3
        %v2352 = vand.u32 %v2351, 3
        %vm2353 = vcmp.lt.s32.totalorder %v2352, 2
        %vm2354 = vcmp.eq.s32.totalorder %v2352, 0
        %v2355 = vxor.u32 %v2349, 2147483648
        %v2356 = vsel %vm2354, %v2348, %v2355
        %vm2357 = vcmp.eq.s32.totalorder %v2352, 2
        %v2358 = vxor.u32 %v2348, 2147483648
        %v2359 = vsel %vm2357, %v2358, %v2349
        %v2360 = vsel %vm2353, %v2356, %v2359
        %v2361 = vsel %vm2350, nan, %v2360
        %v2362 = vand.u32 2147483647, %v682
        %vm2363 = vcmp.le.f32.partialorder %v2362, 0.7853982
        %vm2364 = vcmp.lt.s32.totalorder %v682, 0
        %v2365 = vand.u32 %v682, 2139095040
        %v2366 = vshrl.u32 %v2365, 23
        %v2367 = vsub.s32 %v2366, 127
        %v2368 = vand.u32 2147483647, %v682
        %v2369 = vand.u32 %v2368, 8388607
        %v2370 = vor.u32 %v2369, 8388608
        %v2371 = vsub.s32 0, %v2370
        %v2372 = vadd.s32 %v2367, 1
        %vm2373 = vcmp.gt.s32.totalorder %v2372, 0
        %v2374 = vsel %vm2373, %v2372, 0
        %v2375 = vshrl.u32 %v2374, 5
        %v2376 = vand.u32 %v2374, 31
        %v2377 = vsub.s32 32, %v2376
        %v2378 = vshrl.u32 683565275, %v2377
        %v2379 = vshll.u32 683565275, %v2376
        %v2380 = vshrl.u32 2475754826, %v2377
        %v2381 = vor.u32 %v2379, %v2380
        %v2382 = vshll.u32 2475754826, %v2376
        %v2383 = vshrl.u32 2131351028, %v2377
        %v2384 = vor.u32 %v2382, %v2383
        %v2385 = vshll.u32 2131351028, %v2376
        %v2386 = vshrl.u32 2102212464, %v2377
        %v2387 = vor.u32 %v2385, %v2386
        %v2388 = vshll.u32 2102212464, %v2376
        %v2389 = vshrl.u32 920167782, %v2377
        %v2390 = vor.u32 %v2388, %v2389
        %v2391 = vshll.u32 920167782, %v2376
        %v2392 = vshrl.u32 1326507024, %v2377
        %v2393 = vor.u32 %v2391, %v2392
        %vm2394 = vcmp.lt.s32.totalorder %v2375, 1
        %vm2395 = vcmp.lt.s32.totalorder %v2375, 2
        %vm2396 = vcmp.lt.s32.totalorder %v2375, 3
        %vm2397 = vcmp.lt.s32.totalorder %v2375, 4
        %v2398 = vsel %vm2394, %v2378, %v2381
        %v2399 = vsel %vm2397, %v2387, 2102212464
        %v2400 = vsel %vm2396, %v2384, %v2399
        %v2401 = vsel %vm2395, %v2398, %v2400
        %v2402 = vsel %vm2394, %v2381, %v2384
        %v2403 = vsel %vm2397, %v2390, 920167782
        %v2404 = vsel %vm2396, %v2387, %v2403
        %v2405 = vsel %vm2395, %v2402, %v2404
        %v2406 = vsel %vm2394, %v2384, %v2387
        %v2407 = vsel %vm2397, %v2393, 1326507024
        %v2408 = vsel %vm2396, %v2390, %v2407
        %v2409 = vsel %vm2395, %v2406, %v2408
        %v2410 = vshll.u32 %v2370, 8
        %v2411 = vmul.u32.u64.compose %v2410, %v2409
        %v2412 = vextract.low.u32 %v2411
        %v2413 = vextract.high.u32 %v2411
        %v2414 = vmul.u32.u64.compose %v2410, %v2405
        %v2415 = vextract.low.u32 %v2414
        %v2416 = vextract.high.u32 %v2414
        %v2417 = vmul.u32 %v2410, %v2401
        %v2418 = vadd.s32 %v2413, %v2415
        %vm2419 = vc.u32 %v2413, %v2415
        %v2420 = vadd.s32 %v2416, 1
        %v2421 = vsel %vm2419, %v2420, %v2416
        %v2422 = vadd.s32 %v2417, %v2421
        %v2423 = vadd.s32 %v2422, 536870912
        %v2424 = vshrl.u32 %v2423, 30
        %v2425 = vshll.u32 %v2424, 30
        %v2426 = vsub.s32 %v2422, %v2425
        %vm2427 = vcmp.lt.s32.totalorder %v2426, 0
        %v2428 = vsub.s32 0, %v2426
        %v2429 = vsel %vm2427, %v2428, %v2426
        %v2430 = vclz %v2429
        %v2431 = vsub.s32 %v2430, 2
        %vm2432 = vcmp.gt.s32.totalorder 0, %v2431
        %v2433 = vsel %vm2432, 0, %v2431
        %v2434 = vsub.s32 32, %v2433
        %v2435 = vshll.u32 %v2426, %v2433
        %v2436 = vshrl.u32 %v2418, %v2434
        %v2437 = vor.u32 %v2435, %v2436
        %v2438 = vsub.s32 4294967266, %v2433
        %v2439 = vadd.s32 %v2438, 127
        %v2440 = vshll.u32 %v2439, 23
        %v2441 = vor.u32 4788187, %v2440
        %v2442 = vand.u32 2147483647, %v2441
        %v2444 = vcvt.s32.f32 %v2437
        %v2445 = vmul.f32 %v2444, %v2442
        %v2446 = vxor.u32 %v2445, 2147483648
        %v2447 = vsel %vm2364, %v2446, %v2445
        %v2448 = vsub.s32 4, %v2424
        %v2449 = vsel %vm2364, %v2448, %v2424
        %v2450 = vsel %vm2363, %v682, %v2447
        %v2451 = vsel %vm2363, 0, %v2449
        %v2452 = vcosq.f32.pop %v2450
        %v2453 = vsinq.f32.pop %v2450
        %vm2454 = vweird.f32 %v682
        %v2455 = vadd.s32 %v2451, 3
        %v2456 = vand.u32 %v2455, 3
        %vm2457 = vcmp.lt.s32.totalorder %v2456, 2
        %vm2458 = vcmp.eq.s32.totalorder %v2456, 0
        %v2459 = vxor.u32 %v2453, 2147483648
        %v2460 = vsel %vm2458, %v2452, %v2459
        %vm2461 = vcmp.eq.s32.totalorder %v2456, 2
        %v2462 = vxor.u32 %v2452, 2147483648
        %v2463 = vsel %vm2461, %v2462, %v2453
        %v2464 = vsel %vm2457, %v2460, %v2463
        %v2465 = vsel %vm2454, nan, %v2464
        %v2466 = vand.u32 2147483647, %v683
        %vm2467 = vcmp.le.f32.partialorder %v2466, 0.7853982
        %vm2468 = vcmp.lt.s32.totalorder %v683, 0
        %v2469 = vand.u32 %v683, 2139095040
        %v2470 = vshrl.u32 %v2469, 23
        %v2471 = vsub.s32 %v2470, 127
        %v2472 = vand.u32 2147483647, %v683
        %v2473 = vand.u32 %v2472, 8388607
        %v2474 = vor.u32 %v2473, 8388608
        %v2475 = vsub.s32 0, %v2474
        %v2476 = vadd.s32 %v2471, 1
        %vm2477 = vcmp.gt.s32.totalorder %v2476, 0
        %v2478 = vsel %vm2477, %v2476, 0
        %v2479 = vshrl.u32 %v2478, 5
        %v2480 = vand.u32 %v2478, 31
        %v2481 = vsub.s32 32, %v2480
        %v2482 = vshrl.u32 683565275, %v2481
        %v2483 = vshll.u32 683565275, %v2480
        %v2484 = vshrl.u32 2475754826, %v2481
        %v2485 = vor.u32 %v2483, %v2484
        %v2486 = vshll.u32 2475754826, %v2480
        %v2487 = vshrl.u32 2131351028, %v2481
        %v2488 = vor.u32 %v2486, %v2487
        %v2489 = vshll.u32 2131351028, %v2480
        %v2490 = vshrl.u32 2102212464, %v2481
        %v2491 = vor.u32 %v2489, %v2490
        %v2492 = vshll.u32 2102212464, %v2480
        %v2493 = vshrl.u32 920167782, %v2481
        %v2494 = vor.u32 %v2492, %v2493
        %v2495 = vshll.u32 920167782, %v2480
        %v2496 = vshrl.u32 1326507024, %v2481
        %v2497 = vor.u32 %v2495, %v2496
        %vm2498 = vcmp.lt.s32.totalorder %v2479, 1
        %vm2499 = vcmp.lt.s32.totalorder %v2479, 2
        %vm2500 = vcmp.lt.s32.totalorder %v2479, 3
        %vm2501 = vcmp.lt.s32.totalorder %v2479, 4
        %v2502 = vsel %vm2498, %v2482, %v2485
        %v2503 = vsel %vm2501, %v2491, 2102212464
        %v2504 = vsel %vm2500, %v2488, %v2503
        %v2505 = vsel %vm2499, %v2502, %v2504
        %v2506 = vsel %vm2498, %v2485, %v2488
        %v2507 = vsel %vm2501, %v2494, 920167782
        %v2508 = vsel %vm2500, %v2491, %v2507
        %v2509 = vsel %vm2499, %v2506, %v2508
        %v2510 = vsel %vm2498, %v2488, %v2491
        %v2511 = vsel %vm2501, %v2497, 1326507024
        %v2512 = vsel %vm2500, %v2494, %v2511
        %v2513 = vsel %vm2499, %v2510, %v2512
        %v2514 = vshll.u32 %v2474, 8
        %v2515 = vmul.u32.u64.compose %v2514, %v2513
        %v2516 = vextract.low.u32 %v2515
        %v2517 = vextract.high.u32 %v2515
        %v2518 = vmul.u32.u64.compose %v2514, %v2509
        %v2519 = vextract.low.u32 %v2518
        %v2520 = vextract.high.u32 %v2518
        %v2521 = vmul.u32 %v2514, %v2505
        %v2522 = vadd.s32 %v2517, %v2519
        %vm2523 = vc.u32 %v2517, %v2519
        %v2524 = vadd.s32 %v2520, 1
        %v2525 = vsel %vm2523, %v2524, %v2520
        %v2526 = vadd.s32 %v2521, %v2525
        %v2527 = vadd.s32 %v2526, 536870912
        %v2528 = vshrl.u32 %v2527, 30
        %v2529 = vshll.u32 %v2528, 30
        %v2530 = vsub.s32 %v2526, %v2529
        %vm2531 = vcmp.lt.s32.totalorder %v2530, 0
        %v2532 = vsub.s32 0, %v2530
        %v2533 = vsel %vm2531, %v2532, %v2530
        %v2534 = vclz %v2533
        %v2535 = vsub.s32 %v2534, 2
        %vm2536 = vcmp.gt.s32.totalorder 0, %v2535
        %v2537 = vsel %vm2536, 0, %v2535
        %v2538 = vsub.s32 32, %v2537
        %v2539 = vshll.u32 %v2530, %v2537
        %v2540 = vshrl.u32 %v2522, %v2538
        %v2541 = vor.u32 %v2539, %v2540
        %v2542 = vsub.s32 4294967266, %v2537
        %v2543 = vadd.s32 %v2542, 127
        %v2544 = vshll.u32 %v2543, 23
        %v2545 = vor.u32 4788187, %v2544
        %v2546 = vand.u32 2147483647, %v2545
        %v2548 = vcvt.s32.f32 %v2541
        %v2549 = vmul.f32 %v2548, %v2546
        %v2550 = vxor.u32 %v2549, 2147483648
        %v2551 = vsel %vm2468, %v2550, %v2549
        %v2552 = vsub.s32 4, %v2528
        %v2553 = vsel %vm2468, %v2552, %v2528
        %v2554 = vsel %vm2467, %v683, %v2551
        %v2555 = vsel %vm2467, 0, %v2553
        %v2556 = vcosq.f32.pop %v2554
        %v2557 = vsinq.f32.pop %v2554
        %vm2558 = vweird.f32 %v683
        %v2559 = vadd.s32 %v2555, 3
        %v2560 = vand.u32 %v2559, 3
        %vm2561 = vcmp.lt.s32.totalorder %v2560, 2
        %vm2562 = vcmp.eq.s32.totalorder %v2560, 0
        %v2563 = vxor.u32 %v2557, 2147483648
        %v2564 = vsel %vm2562, %v2556, %v2563
        %vm2565 = vcmp.eq.s32.totalorder %v2560, 2
        %v2566 = vxor.u32 %v2556, 2147483648
        %v2567 = vsel %vm2565, %v2566, %v2557
        %v2568 = vsel %vm2561, %v2564, %v2567
        %v2569 = vsel %vm2558, nan, %v2568
        %v2570 = vand.u32 2147483647, %v684
        %vm2571 = vcmp.le.f32.partialorder %v2570, 0.7853982
        %vm2572 = vcmp.lt.s32.totalorder %v684, 0
        %v2573 = vand.u32 %v684, 2139095040
        %v2574 = vshrl.u32 %v2573, 23
        %v2575 = vsub.s32 %v2574, 127
        %v2576 = vand.u32 2147483647, %v684
        %v2577 = vand.u32 %v2576, 8388607
        %v2578 = vor.u32 %v2577, 8388608
        %v2579 = vsub.s32 0, %v2578
        %v2580 = vadd.s32 %v2575, 1
        %vm2581 = vcmp.gt.s32.totalorder %v2580, 0
        %v2582 = vsel %vm2581, %v2580, 0
        %v2583 = vshrl.u32 %v2582, 5
        %v2584 = vand.u32 %v2582, 31
        %v2585 = vsub.s32 32, %v2584
        %v2586 = vshrl.u32 683565275, %v2585
        %v2587 = vshll.u32 683565275, %v2584
        %v2588 = vshrl.u32 2475754826, %v2585
        %v2589 = vor.u32 %v2587, %v2588
        %v2590 = vshll.u32 2475754826, %v2584
        %v2591 = vshrl.u32 2131351028, %v2585
        %v2592 = vor.u32 %v2590, %v2591
        %v2593 = vshll.u32 2131351028, %v2584
        %v2594 = vshrl.u32 2102212464, %v2585
        %v2595 = vor.u32 %v2593, %v2594
        %v2596 = vshll.u32 2102212464, %v2584
        %v2597 = vshrl.u32 920167782, %v2585
        %v2598 = vor.u32 %v2596, %v2597
        %v2599 = vshll.u32 920167782, %v2584
        %v2600 = vshrl.u32 1326507024, %v2585
        %v2601 = vor.u32 %v2599, %v2600
        %vm2602 = vcmp.lt.s32.totalorder %v2583, 1
        %vm2603 = vcmp.lt.s32.totalorder %v2583, 2
        %vm2604 = vcmp.lt.s32.totalorder %v2583, 3
        %vm2605 = vcmp.lt.s32.totalorder %v2583, 4
        %v2606 = vsel %vm2602, %v2586, %v2589
        %v2607 = vsel %vm2605, %v2595, 2102212464
        %v2608 = vsel %vm2604, %v2592, %v2607
        %v2609 = vsel %vm2603, %v2606, %v2608
        %v2610 = vsel %vm2602, %v2589, %v2592
        %v2611 = vsel %vm2605, %v2598, 920167782
        %v2612 = vsel %vm2604, %v2595, %v2611
        %v2613 = vsel %vm2603, %v2610, %v2612
        %v2614 = vsel %vm2602, %v2592, %v2595
        %v2615 = vsel %vm2605, %v2601, 1326507024
        %v2616 = vsel %vm2604, %v2598, %v2615
        %v2617 = vsel %vm2603, %v2614, %v2616
        %v2618 = vshll.u32 %v2578, 8
        %v2619 = vmul.u32.u64.compose %v2618, %v2617
        %v2620 = vextract.low.u32 %v2619
        %v2621 = vextract.high.u32 %v2619
        %v2622 = vmul.u32.u64.compose %v2618, %v2613
        %v2623 = vextract.low.u32 %v2622
        %v2624 = vextract.high.u32 %v2622
        %v2625 = vmul.u32 %v2618, %v2609
        %v2626 = vadd.s32 %v2621, %v2623
        %vm2627 = vc.u32 %v2621, %v2623
        %v2628 = vadd.s32 %v2624, 1
        %v2629 = vsel %vm2627, %v2628, %v2624
        %v2630 = vadd.s32 %v2625, %v2629
        %v2631 = vadd.s32 %v2630, 536870912
        %v2632 = vshrl.u32 %v2631, 30
        %v2633 = vshll.u32 %v2632, 30
        %v2634 = vsub.s32 %v2630, %v2633
        %vm2635 = vcmp.lt.s32.totalorder %v2634, 0
        %v2636 = vsub.s32 0, %v2634
        %v2637 = vsel %vm2635, %v2636, %v2634
        %v2638 = vclz %v2637
        %v2639 = vsub.s32 %v2638, 2
        %vm2640 = vcmp.gt.s32.totalorder 0, %v2639
        %v2641 = vsel %vm2640, 0, %v2639
        %v2642 = vsub.s32 32, %v2641
        %v2643 = vshll.u32 %v2634, %v2641
        %v2644 = vshrl.u32 %v2626, %v2642
        %v2645 = vor.u32 %v2643, %v2644
        %v2646 = vsub.s32 4294967266, %v2641
        %v2647 = vadd.s32 %v2646, 127
        %v2648 = vshll.u32 %v2647, 23
        %v2649 = vor.u32 4788187, %v2648
        %v2650 = vand.u32 2147483647, %v2649
        %v2652 = vcvt.s32.f32 %v2645
        %v2653 = vmul.f32 %v2652, %v2650
        %v2654 = vxor.u32 %v2653, 2147483648
        %v2655 = vsel %vm2572, %v2654, %v2653
        %v2656 = vsub.s32 4, %v2632
        %v2657 = vsel %vm2572, %v2656, %v2632
        %v2658 = vsel %vm2571, %v684, %v2655
        %v2659 = vsel %vm2571, 0, %v2657
        %v2660 = vcosq.f32.pop %v2658
        %v2661 = vsinq.f32.pop %v2658
        %vm2662 = vweird.f32 %v684
        %v2663 = vadd.s32 %v2659, 3
        %v2664 = vand.u32 %v2663, 3
        %vm2665 = vcmp.lt.s32.totalorder %v2664, 2
        %vm2666 = vcmp.eq.s32.totalorder %v2664, 0
        %v2667 = vxor.u32 %v2661, 2147483648
        %v2668 = vsel %vm2666, %v2660, %v2667
        %vm2669 = vcmp.eq.s32.totalorder %v2664, 2
        %v2670 = vxor.u32 %v2660, 2147483648
        %v2671 = vsel %vm2669, %v2670, %v2661
        %v2672 = vsel %vm2665, %v2668, %v2671
        %v2673 = vsel %vm2662, nan, %v2672
        %v2674 = vand.u32 2147483647, %v685
        %vm2675 = vcmp.le.f32.partialorder %v2674, 0.7853982
        %vm2676 = vcmp.lt.s32.totalorder %v685, 0
        %v2677 = vand.u32 %v685, 2139095040
        %v2678 = vshrl.u32 %v2677, 23
        %v2679 = vsub.s32 %v2678, 127
        %v2680 = vand.u32 2147483647, %v685
        %v2681 = vand.u32 %v2680, 8388607
        %v2682 = vor.u32 %v2681, 8388608
        %v2683 = vsub.s32 0, %v2682
        %v2684 = vadd.s32 %v2679, 1
        %vm2685 = vcmp.gt.s32.totalorder %v2684, 0
        %v2686 = vsel %vm2685, %v2684, 0
        %v2687 = vshrl.u32 %v2686, 5
        %v2688 = vand.u32 %v2686, 31
        %v2689 = vsub.s32 32, %v2688
        %v2690 = vshrl.u32 683565275, %v2689
        %v2691 = vshll.u32 683565275, %v2688
        %v2692 = vshrl.u32 2475754826, %v2689
        %v2693 = vor.u32 %v2691, %v2692
        %v2694 = vshll.u32 2475754826, %v2688
        %v2695 = vshrl.u32 2131351028, %v2689
        %v2696 = vor.u32 %v2694, %v2695
        %v2697 = vshll.u32 2131351028, %v2688
        %v2698 = vshrl.u32 2102212464, %v2689
        %v2699 = vor.u32 %v2697, %v2698
        %v2700 = vshll.u32 2102212464, %v2688
        %v2701 = vshrl.u32 920167782, %v2689
        %v2702 = vor.u32 %v2700, %v2701
        %v2703 = vshll.u32 920167782, %v2688
        %v2704 = vshrl.u32 1326507024, %v2689
        %v2705 = vor.u32 %v2703, %v2704
        %vm2706 = vcmp.lt.s32.totalorder %v2687, 1
        %vm2707 = vcmp.lt.s32.totalorder %v2687, 2
        %vm2708 = vcmp.lt.s32.totalorder %v2687, 3
        %vm2709 = vcmp.lt.s32.totalorder %v2687, 4
        %v2710 = vsel %vm2706, %v2690, %v2693
        %v2711 = vsel %vm2709, %v2699, 2102212464
        %v2712 = vsel %vm2708, %v2696, %v2711
        %v2713 = vsel %vm2707, %v2710, %v2712
        %v2714 = vsel %vm2706, %v2693, %v2696
        %v2715 = vsel %vm2709, %v2702, 920167782
        %v2716 = vsel %vm2708, %v2699, %v2715
        %v2717 = vsel %vm2707, %v2714, %v2716
        %v2718 = vsel %vm2706, %v2696, %v2699
        %v2719 = vsel %vm2709, %v2705, 1326507024
        %v2720 = vsel %vm2708, %v2702, %v2719
        %v2721 = vsel %vm2707, %v2718, %v2720
        %v2722 = vshll.u32 %v2682, 8
        %v2723 = vmul.u32.u64.compose %v2722, %v2721
        %v2724 = vextract.low.u32 %v2723
        %v2725 = vextract.high.u32 %v2723
        %v2726 = vmul.u32.u64.compose %v2722, %v2717
        %v2727 = vextract.low.u32 %v2726
        %v2728 = vextract.high.u32 %v2726
        %v2729 = vmul.u32 %v2722, %v2713
        %v2730 = vadd.s32 %v2725, %v2727
        %vm2731 = vc.u32 %v2725, %v2727
        %v2732 = vadd.s32 %v2728, 1
        %v2733 = vsel %vm2731, %v2732, %v2728
        %v2734 = vadd.s32 %v2729, %v2733
        %v2735 = vadd.s32 %v2734, 536870912
        %v2736 = vshrl.u32 %v2735, 30
        %v2737 = vshll.u32 %v2736, 30
        %v2738 = vsub.s32 %v2734, %v2737
        %vm2739 = vcmp.lt.s32.totalorder %v2738, 0
        %v2740 = vsub.s32 0, %v2738
        %v2741 = vsel %vm2739, %v2740, %v2738
        %v2742 = vclz %v2741
        %v2743 = vsub.s32 %v2742, 2
        %vm2744 = vcmp.gt.s32.totalorder 0, %v2743
        %v2745 = vsel %vm2744, 0, %v2743
        %v2746 = vsub.s32 32, %v2745
        %v2747 = vshll.u32 %v2738, %v2745
        %v2748 = vshrl.u32 %v2730, %v2746
        %v2749 = vor.u32 %v2747, %v2748
        %v2750 = vsub.s32 4294967266, %v2745
        %v2751 = vadd.s32 %v2750, 127
        %v2752 = vshll.u32 %v2751, 23
        %v2753 = vor.u32 4788187, %v2752
        %v2754 = vand.u32 2147483647, %v2753
        %v2756 = vcvt.s32.f32 %v2749
        %v2757 = vmul.f32 %v2756, %v2754
        %v2758 = vxor.u32 %v2757, 2147483648
        %v2759 = vsel %vm2676, %v2758, %v2757
        %v2760 = vsub.s32 4, %v2736
        %v2761 = vsel %vm2676, %v2760, %v2736
        %v2762 = vsel %vm2675, %v685, %v2759
        %v2763 = vsel %vm2675, 0, %v2761
        %v2764 = vcosq.f32.pop %v2762
        %v2765 = vsinq.f32.pop %v2762
        %vm2766 = vweird.f32 %v685
        %v2767 = vadd.s32 %v2763, 3
        %v2768 = vand.u32 %v2767, 3
        %vm2769 = vcmp.lt.s32.totalorder %v2768, 2
        %vm2770 = vcmp.eq.s32.totalorder %v2768, 0
        %v2771 = vxor.u32 %v2765, 2147483648
        %v2772 = vsel %vm2770, %v2764, %v2771
        %vm2773 = vcmp.eq.s32.totalorder %v2768, 2
        %v2774 = vxor.u32 %v2764, 2147483648
        %v2775 = vsel %vm2773, %v2774, %v2765
        %v2776 = vsel %vm2769, %v2772, %v2775
        %v2777 = vsel %vm2766, nan, %v2776
        %v2778 = vand.u32 2147483647, %v686
        %vm2779 = vcmp.le.f32.partialorder %v2778, 0.7853982
        %vm2780 = vcmp.lt.s32.totalorder %v686, 0
        %v2781 = vand.u32 %v686, 2139095040
        %v2782 = vshrl.u32 %v2781, 23
        %v2783 = vsub.s32 %v2782, 127
        %v2784 = vand.u32 2147483647, %v686
        %v2785 = vand.u32 %v2784, 8388607
        %v2786 = vor.u32 %v2785, 8388608
        %v2787 = vsub.s32 0, %v2786
        %v2788 = vadd.s32 %v2783, 1
        %vm2789 = vcmp.gt.s32.totalorder %v2788, 0
        %v2790 = vsel %vm2789, %v2788, 0
        %v2791 = vshrl.u32 %v2790, 5
        %v2792 = vand.u32 %v2790, 31
        %v2793 = vsub.s32 32, %v2792
        %v2794 = vshrl.u32 683565275, %v2793
        %v2795 = vshll.u32 683565275, %v2792
        %v2796 = vshrl.u32 2475754826, %v2793
        %v2797 = vor.u32 %v2795, %v2796
        %v2798 = vshll.u32 2475754826, %v2792
        %v2799 = vshrl.u32 2131351028, %v2793
        %v2800 = vor.u32 %v2798, %v2799
        %v2801 = vshll.u32 2131351028, %v2792
        %v2802 = vshrl.u32 2102212464, %v2793
        %v2803 = vor.u32 %v2801, %v2802
        %v2804 = vshll.u32 2102212464, %v2792
        %v2805 = vshrl.u32 920167782, %v2793
        %v2806 = vor.u32 %v2804, %v2805
        %v2807 = vshll.u32 920167782, %v2792
        %v2808 = vshrl.u32 1326507024, %v2793
        %v2809 = vor.u32 %v2807, %v2808
        %vm2810 = vcmp.lt.s32.totalorder %v2791, 1
        %vm2811 = vcmp.lt.s32.totalorder %v2791, 2
        %vm2812 = vcmp.lt.s32.totalorder %v2791, 3
        %vm2813 = vcmp.lt.s32.totalorder %v2791, 4
        %v2814 = vsel %vm2810, %v2794, %v2797
        %v2815 = vsel %vm2813, %v2803, 2102212464
        %v2816 = vsel %vm2812, %v2800, %v2815
        %v2817 = vsel %vm2811, %v2814, %v2816
        %v2818 = vsel %vm2810, %v2797, %v2800
        %v2819 = vsel %vm2813, %v2806, 920167782
        %v2820 = vsel %vm2812, %v2803, %v2819
        %v2821 = vsel %vm2811, %v2818, %v2820
        %v2822 = vsel %vm2810, %v2800, %v2803
        %v2823 = vsel %vm2813, %v2809, 1326507024
        %v2824 = vsel %vm2812, %v2806, %v2823
        %v2825 = vsel %vm2811, %v2822, %v2824
        %v2826 = vshll.u32 %v2786, 8
        %v2827 = vmul.u32.u64.compose %v2826, %v2825
        %v2828 = vextract.low.u32 %v2827
        %v2829 = vextract.high.u32 %v2827
        %v2830 = vmul.u32.u64.compose %v2826, %v2821
        %v2831 = vextract.low.u32 %v2830
        %v2832 = vextract.high.u32 %v2830
        %v2833 = vmul.u32 %v2826, %v2817
        %v2834 = vadd.s32 %v2829, %v2831
        %vm2835 = vc.u32 %v2829, %v2831
        %v2836 = vadd.s32 %v2832, 1
        %v2837 = vsel %vm2835, %v2836, %v2832
        %v2838 = vadd.s32 %v2833, %v2837
        %v2839 = vadd.s32 %v2838, 536870912
        %v2840 = vshrl.u32 %v2839, 30
        %v2841 = vshll.u32 %v2840, 30
        %v2842 = vsub.s32 %v2838, %v2841
        %vm2843 = vcmp.lt.s32.totalorder %v2842, 0
        %v2844 = vsub.s32 0, %v2842
        %v2845 = vsel %vm2843, %v2844, %v2842
        %v2846 = vclz %v2845
        %v2847 = vsub.s32 %v2846, 2
        %vm2848 = vcmp.gt.s32.totalorder 0, %v2847
        %v2849 = vsel %vm2848, 0, %v2847
        %v2850 = vsub.s32 32, %v2849
        %v2851 = vshll.u32 %v2842, %v2849
        %v2852 = vshrl.u32 %v2834, %v2850
        %v2853 = vor.u32 %v2851, %v2852
        %v2854 = vsub.s32 4294967266, %v2849
        %v2855 = vadd.s32 %v2854, 127
        %v2856 = vshll.u32 %v2855, 23
        %v2857 = vor.u32 4788187, %v2856
        %v2858 = vand.u32 2147483647, %v2857
        %v2860 = vcvt.s32.f32 %v2853
        %v2861 = vmul.f32 %v2860, %v2858
        %v2862 = vxor.u32 %v2861, 2147483648
        %v2863 = vsel %vm2780, %v2862, %v2861
        %v2864 = vsub.s32 4, %v2840
        %v2865 = vsel %vm2780, %v2864, %v2840
        %v2866 = vsel %vm2779, %v686, %v2863
        %v2867 = vsel %vm2779, 0, %v2865
        %v2868 = vcosq.f32.pop %v2866
        %v2869 = vsinq.f32.pop %v2866
        %vm2870 = vweird.f32 %v686
        %v2871 = vadd.s32 %v2867, 3
        %v2872 = vand.u32 %v2871, 3
        %vm2873 = vcmp.lt.s32.totalorder %v2872, 2
        %vm2874 = vcmp.eq.s32.totalorder %v2872, 0
        %v2875 = vxor.u32 %v2869, 2147483648
        %v2876 = vsel %vm2874, %v2868, %v2875
        %vm2877 = vcmp.eq.s32.totalorder %v2872, 2
        %v2878 = vxor.u32 %v2868, 2147483648
        %v2879 = vsel %vm2877, %v2878, %v2869
        %v2880 = vsel %vm2873, %v2876, %v2879
        %v2881 = vsel %vm2870, nan, %v2880
        %v2882 = vand.u32 2147483647, %v687
        %vm2883 = vcmp.le.f32.partialorder %v2882, 0.7853982
        %vm2884 = vcmp.lt.s32.totalorder %v687, 0
        %v2885 = vand.u32 %v687, 2139095040
        %v2886 = vshrl.u32 %v2885, 23
        %v2887 = vsub.s32 %v2886, 127
        %v2888 = vand.u32 2147483647, %v687
        %v2889 = vand.u32 %v2888, 8388607
        %v2890 = vor.u32 %v2889, 8388608
        %v2891 = vsub.s32 0, %v2890
        %v2892 = vadd.s32 %v2887, 1
        %vm2893 = vcmp.gt.s32.totalorder %v2892, 0
        %v2894 = vsel %vm2893, %v2892, 0
        %v2895 = vshrl.u32 %v2894, 5
        %v2896 = vand.u32 %v2894, 31
        %v2897 = vsub.s32 32, %v2896
        %v2898 = vshrl.u32 683565275, %v2897
        %v2899 = vshll.u32 683565275, %v2896
        %v2900 = vshrl.u32 2475754826, %v2897
        %v2901 = vor.u32 %v2899, %v2900
        %v2902 = vshll.u32 2475754826, %v2896
        %v2903 = vshrl.u32 2131351028, %v2897
        %v2904 = vor.u32 %v2902, %v2903
        %v2905 = vshll.u32 2131351028, %v2896
        %v2906 = vshrl.u32 2102212464, %v2897
        %v2907 = vor.u32 %v2905, %v2906
        %v2908 = vshll.u32 2102212464, %v2896
        %v2909 = vshrl.u32 920167782, %v2897
        %v2910 = vor.u32 %v2908, %v2909
        %v2911 = vshll.u32 920167782, %v2896
        %v2912 = vshrl.u32 1326507024, %v2897
        %v2913 = vor.u32 %v2911, %v2912
        %vm2914 = vcmp.lt.s32.totalorder %v2895, 1
        %vm2915 = vcmp.lt.s32.totalorder %v2895, 2
        %vm2916 = vcmp.lt.s32.totalorder %v2895, 3
        %vm2917 = vcmp.lt.s32.totalorder %v2895, 4
        %v2918 = vsel %vm2914, %v2898, %v2901
        %v2919 = vsel %vm2917, %v2907, 2102212464
        %v2920 = vsel %vm2916, %v2904, %v2919
        %v2921 = vsel %vm2915, %v2918, %v2920
        %v2922 = vsel %vm2914, %v2901, %v2904
        %v2923 = vsel %vm2917, %v2910, 920167782
        %v2924 = vsel %vm2916, %v2907, %v2923
        %v2925 = vsel %vm2915, %v2922, %v2924
        %v2926 = vsel %vm2914, %v2904, %v2907
        %v2927 = vsel %vm2917, %v2913, 1326507024
        %v2928 = vsel %vm2916, %v2910, %v2927
        %v2929 = vsel %vm2915, %v2926, %v2928
        %v2930 = vshll.u32 %v2890, 8
        %v2931 = vmul.u32.u64.compose %v2930, %v2929
        %v2932 = vextract.low.u32 %v2931
        %v2933 = vextract.high.u32 %v2931
        %v2934 = vmul.u32.u64.compose %v2930, %v2925
        %v2935 = vextract.low.u32 %v2934
        %v2936 = vextract.high.u32 %v2934
        %v2937 = vmul.u32 %v2930, %v2921
        %v2938 = vadd.s32 %v2933, %v2935
        %vm2939 = vc.u32 %v2933, %v2935
        %v2940 = vadd.s32 %v2936, 1
        %v2941 = vsel %vm2939, %v2940, %v2936
        %v2942 = vadd.s32 %v2937, %v2941
        %v2943 = vadd.s32 %v2942, 536870912
        %v2944 = vshrl.u32 %v2943, 30
        %v2945 = vshll.u32 %v2944, 30
        %v2946 = vsub.s32 %v2942, %v2945
        %vm2947 = vcmp.lt.s32.totalorder %v2946, 0
        %v2948 = vsub.s32 0, %v2946
        %v2949 = vsel %vm2947, %v2948, %v2946
        %v2950 = vclz %v2949
        %v2951 = vsub.s32 %v2950, 2
        %vm2952 = vcmp.gt.s32.totalorder 0, %v2951
        %v2953 = vsel %vm2952, 0, %v2951
        %v2954 = vsub.s32 32, %v2953
        %v2955 = vshll.u32 %v2946, %v2953
        %v2956 = vshrl.u32 %v2938, %v2954
        %v2957 = vor.u32 %v2955, %v2956
        %v2958 = vsub.s32 4294967266, %v2953
        %v2959 = vadd.s32 %v2958, 127
        %v2960 = vshll.u32 %v2959, 23
        %v2961 = vor.u32 4788187, %v2960
        %v2962 = vand.u32 2147483647, %v2961
        %v2964 = vcvt.s32.f32 %v2957
        %v2965 = vmul.f32 %v2964, %v2962
        %v2966 = vxor.u32 %v2965, 2147483648
        %v2967 = vsel %vm2884, %v2966, %v2965
        %v2968 = vsub.s32 4, %v2944
        %v2969 = vsel %vm2884, %v2968, %v2944
        %v2970 = vsel %vm2883, %v687, %v2967
        %v2971 = vsel %vm2883, 0, %v2969
        %v2972 = vcosq.f32.pop %v2970
        %v2973 = vsinq.f32.pop %v2970
        %vm2974 = vweird.f32 %v687
        %v2975 = vadd.s32 %v2971, 3
        %v2976 = vand.u32 %v2975, 3
        %vm2977 = vcmp.lt.s32.totalorder %v2976, 2
        %vm2978 = vcmp.eq.s32.totalorder %v2976, 0
        %v2979 = vxor.u32 %v2973, 2147483648
        %v2980 = vsel %vm2978, %v2972, %v2979
        %vm2981 = vcmp.eq.s32.totalorder %v2976, 2
        %v2982 = vxor.u32 %v2972, 2147483648
        %v2983 = vsel %vm2981, %v2982, %v2973
        %v2984 = vsel %vm2977, %v2980, %v2983
        %v2985 = vsel %vm2974, nan, %v2984
        %v2986 = vand.u32 2147483647, %v688
        %vm2987 = vcmp.le.f32.partialorder %v2986, 0.7853982
        %vm2988 = vcmp.lt.s32.totalorder %v688, 0
        %v2989 = vand.u32 %v688, 2139095040
        %v2990 = vshrl.u32 %v2989, 23
        %v2991 = vsub.s32 %v2990, 127
        %v2992 = vand.u32 2147483647, %v688
        %v2993 = vand.u32 %v2992, 8388607
        %v2994 = vor.u32 %v2993, 8388608
        %v2995 = vsub.s32 0, %v2994
        %v2996 = vadd.s32 %v2991, 1
        %vm2997 = vcmp.gt.s32.totalorder %v2996, 0
        %v2998 = vsel %vm2997, %v2996, 0
        %v2999 = vshrl.u32 %v2998, 5
        %v3000 = vand.u32 %v2998, 31
        %v3001 = vsub.s32 32, %v3000
        %v3002 = vshrl.u32 683565275, %v3001
        %v3003 = vshll.u32 683565275, %v3000
        %v3004 = vshrl.u32 2475754826, %v3001
        %v3005 = vor.u32 %v3003, %v3004
        %v3006 = vshll.u32 2475754826, %v3000
        %v3007 = vshrl.u32 2131351028, %v3001
        %v3008 = vor.u32 %v3006, %v3007
        %v3009 = vshll.u32 2131351028, %v3000
        %v3010 = vshrl.u32 2102212464, %v3001
        %v3011 = vor.u32 %v3009, %v3010
        %v3012 = vshll.u32 2102212464, %v3000
        %v3013 = vshrl.u32 920167782, %v3001
        %v3014 = vor.u32 %v3012, %v3013
        %v3015 = vshll.u32 920167782, %v3000
        %v3016 = vshrl.u32 1326507024, %v3001
        %v3017 = vor.u32 %v3015, %v3016
        %vm3018 = vcmp.lt.s32.totalorder %v2999, 1
        %vm3019 = vcmp.lt.s32.totalorder %v2999, 2
        %vm3020 = vcmp.lt.s32.totalorder %v2999, 3
        %vm3021 = vcmp.lt.s32.totalorder %v2999, 4
        %v3022 = vsel %vm3018, %v3002, %v3005
        %v3023 = vsel %vm3021, %v3011, 2102212464
        %v3024 = vsel %vm3020, %v3008, %v3023
        %v3025 = vsel %vm3019, %v3022, %v3024
        %v3026 = vsel %vm3018, %v3005, %v3008
        %v3027 = vsel %vm3021, %v3014, 920167782
        %v3028 = vsel %vm3020, %v3011, %v3027
        %v3029 = vsel %vm3019, %v3026, %v3028
        %v3030 = vsel %vm3018, %v3008, %v3011
        %v3031 = vsel %vm3021, %v3017, 1326507024
        %v3032 = vsel %vm3020, %v3014, %v3031
        %v3033 = vsel %vm3019, %v3030, %v3032
        %v3034 = vshll.u32 %v2994, 8
        %v3035 = vmul.u32.u64.compose %v3034, %v3033
        %v3036 = vextract.low.u32 %v3035
        %v3037 = vextract.high.u32 %v3035
        %v3038 = vmul.u32.u64.compose %v3034, %v3029
        %v3039 = vextract.low.u32 %v3038
        %v3040 = vextract.high.u32 %v3038
        %v3041 = vmul.u32 %v3034, %v3025
        %v3042 = vadd.s32 %v3037, %v3039
        %vm3043 = vc.u32 %v3037, %v3039
        %v3044 = vadd.s32 %v3040, 1
        %v3045 = vsel %vm3043, %v3044, %v3040
        %v3046 = vadd.s32 %v3041, %v3045
        %v3047 = vadd.s32 %v3046, 536870912
        %v3048 = vshrl.u32 %v3047, 30
        %v3049 = vshll.u32 %v3048, 30
        %v3050 = vsub.s32 %v3046, %v3049
        %vm3051 = vcmp.lt.s32.totalorder %v3050, 0
        %v3052 = vsub.s32 0, %v3050
        %v3053 = vsel %vm3051, %v3052, %v3050
        %v3054 = vclz %v3053
        %v3055 = vsub.s32 %v3054, 2
        %vm3056 = vcmp.gt.s32.totalorder 0, %v3055
        %v3057 = vsel %vm3056, 0, %v3055
        %v3058 = vsub.s32 32, %v3057
        %v3059 = vshll.u32 %v3050, %v3057
        %v3060 = vshrl.u32 %v3042, %v3058
        %v3061 = vor.u32 %v3059, %v3060
        %v3062 = vsub.s32 4294967266, %v3057
        %v3063 = vadd.s32 %v3062, 127
        %v3064 = vshll.u32 %v3063, 23
        %v3065 = vor.u32 4788187, %v3064
        %v3066 = vand.u32 2147483647, %v3065
        %v3068 = vcvt.s32.f32 %v3061
        %v3069 = vmul.f32 %v3068, %v3066
        %v3070 = vxor.u32 %v3069, 2147483648
        %v3071 = vsel %vm2988, %v3070, %v3069
        %v3072 = vsub.s32 4, %v3048
        %v3073 = vsel %vm2988, %v3072, %v3048
        %v3074 = vsel %vm2987, %v688, %v3071
        %v3075 = vsel %vm2987, 0, %v3073
        %v3076 = vcosq.f32.pop %v3074
        %v3077 = vsinq.f32.pop %v3074
        %vm3078 = vweird.f32 %v688
        %v3079 = vadd.s32 %v3075, 3
        %v3080 = vand.u32 %v3079, 3
        %vm3081 = vcmp.lt.s32.totalorder %v3080, 2
        %vm3082 = vcmp.eq.s32.totalorder %v3080, 0
        %v3083 = vxor.u32 %v3077, 2147483648
        %v3084 = vsel %vm3082, %v3076, %v3083
        %vm3085 = vcmp.eq.s32.totalorder %v3080, 2
        %v3086 = vxor.u32 %v3076, 2147483648
        %v3087 = vsel %vm3085, %v3086, %v3077
        %v3088 = vsel %vm3081, %v3084, %v3087
        %v3089 = vsel %vm3078, nan, %v3088
        %v3090 = vand.u32 2147483647, %v689
        %vm3091 = vcmp.le.f32.partialorder %v3090, 0.7853982
        %vm3092 = vcmp.lt.s32.totalorder %v689, 0
        %v3093 = vand.u32 %v689, 2139095040
        %v3094 = vshrl.u32 %v3093, 23
        %v3095 = vsub.s32 %v3094, 127
        %v3096 = vand.u32 2147483647, %v689
        %v3097 = vand.u32 %v3096, 8388607
        %v3098 = vor.u32 %v3097, 8388608
        %v3099 = vsub.s32 0, %v3098
        %v3100 = vadd.s32 %v3095, 1
        %vm3101 = vcmp.gt.s32.totalorder %v3100, 0
        %v3102 = vsel %vm3101, %v3100, 0
        %v3103 = vshrl.u32 %v3102, 5
        %v3104 = vand.u32 %v3102, 31
        %v3105 = vsub.s32 32, %v3104
        %v3106 = vshrl.u32 683565275, %v3105
        %v3107 = vshll.u32 683565275, %v3104
        %v3108 = vshrl.u32 2475754826, %v3105
        %v3109 = vor.u32 %v3107, %v3108
        %v3110 = vshll.u32 2475754826, %v3104
        %v3111 = vshrl.u32 2131351028, %v3105
        %v3112 = vor.u32 %v3110, %v3111
        %v3113 = vshll.u32 2131351028, %v3104
        %v3114 = vshrl.u32 2102212464, %v3105
        %v3115 = vor.u32 %v3113, %v3114
        %v3116 = vshll.u32 2102212464, %v3104
        %v3117 = vshrl.u32 920167782, %v3105
        %v3118 = vor.u32 %v3116, %v3117
        %v3119 = vshll.u32 920167782, %v3104
        %v3120 = vshrl.u32 1326507024, %v3105
        %v3121 = vor.u32 %v3119, %v3120
        %vm3122 = vcmp.lt.s32.totalorder %v3103, 1
        %vm3123 = vcmp.lt.s32.totalorder %v3103, 2
        %vm3124 = vcmp.lt.s32.totalorder %v3103, 3
        %vm3125 = vcmp.lt.s32.totalorder %v3103, 4
        %v3126 = vsel %vm3122, %v3106, %v3109
        %v3127 = vsel %vm3125, %v3115, 2102212464
        %v3128 = vsel %vm3124, %v3112, %v3127
        %v3129 = vsel %vm3123, %v3126, %v3128
        %v3130 = vsel %vm3122, %v3109, %v3112
        %v3131 = vsel %vm3125, %v3118, 920167782
        %v3132 = vsel %vm3124, %v3115, %v3131
        %v3133 = vsel %vm3123, %v3130, %v3132
        %v3134 = vsel %vm3122, %v3112, %v3115
        %v3135 = vsel %vm3125, %v3121, 1326507024
        %v3136 = vsel %vm3124, %v3118, %v3135
        %v3137 = vsel %vm3123, %v3134, %v3136
        %v3138 = vshll.u32 %v3098, 8
        %v3139 = vmul.u32.u64.compose %v3138, %v3137
        %v3140 = vextract.low.u32 %v3139
        %v3141 = vextract.high.u32 %v3139
        %v3142 = vmul.u32.u64.compose %v3138, %v3133
        %v3143 = vextract.low.u32 %v3142
        %v3144 = vextract.high.u32 %v3142
        %v3145 = vmul.u32 %v3138, %v3129
        %v3146 = vadd.s32 %v3141, %v3143
        %vm3147 = vc.u32 %v3141, %v3143
        %v3148 = vadd.s32 %v3144, 1
        %v3149 = vsel %vm3147, %v3148, %v3144
        %v3150 = vadd.s32 %v3145, %v3149
        %v3151 = vadd.s32 %v3150, 536870912
        %v3152 = vshrl.u32 %v3151, 30
        %v3153 = vshll.u32 %v3152, 30
        %v3154 = vsub.s32 %v3150, %v3153
        %vm3155 = vcmp.lt.s32.totalorder %v3154, 0
        %v3156 = vsub.s32 0, %v3154
        %v3157 = vsel %vm3155, %v3156, %v3154
        %v3158 = vclz %v3157
        %v3159 = vsub.s32 %v3158, 2
        %vm3160 = vcmp.gt.s32.totalorder 0, %v3159
        %v3161 = vsel %vm3160, 0, %v3159
        %v3162 = vsub.s32 32, %v3161
        %v3163 = vshll.u32 %v3154, %v3161
        %v3164 = vshrl.u32 %v3146, %v3162
        %v3165 = vor.u32 %v3163, %v3164
        %v3166 = vsub.s32 4294967266, %v3161
        %v3167 = vadd.s32 %v3166, 127
        %v3168 = vshll.u32 %v3167, 23
        %v3169 = vor.u32 4788187, %v3168
        %v3170 = vand.u32 2147483647, %v3169
        %v3172 = vcvt.s32.f32 %v3165
        %v3173 = vmul.f32 %v3172, %v3170
        %v3174 = vxor.u32 %v3173, 2147483648
        %v3175 = vsel %vm3092, %v3174, %v3173
        %v3176 = vsub.s32 4, %v3152
        %v3177 = vsel %vm3092, %v3176, %v3152
        %v3178 = vsel %vm3091, %v689, %v3175
        %v3179 = vsel %vm3091, 0, %v3177
        %v3180 = vcosq.f32.pop %v3178
        %v3181 = vsinq.f32.pop %v3178
        %vm3182 = vweird.f32 %v689
        %v3183 = vadd.s32 %v3179, 3
        %v3184 = vand.u32 %v3183, 3
        %vm3185 = vcmp.lt.s32.totalorder %v3184, 2
        %vm3186 = vcmp.eq.s32.totalorder %v3184, 0
        %v3187 = vxor.u32 %v3181, 2147483648
        %v3188 = vsel %vm3186, %v3180, %v3187
        %vm3189 = vcmp.eq.s32.totalorder %v3184, 2
        %v3190 = vxor.u32 %v3180, 2147483648
        %v3191 = vsel %vm3189, %v3190, %v3181
        %v3192 = vsel %vm3185, %v3188, %v3191
        %v3193 = vsel %vm3182, nan, %v3192
        %v3194 = vand.u32 2147483647, %v690
        %vm3195 = vcmp.le.f32.partialorder %v3194, 0.7853982
        %vm3196 = vcmp.lt.s32.totalorder %v690, 0
        %v3197 = vand.u32 %v690, 2139095040
        %v3198 = vshrl.u32 %v3197, 23
        %v3199 = vsub.s32 %v3198, 127
        %v3200 = vand.u32 2147483647, %v690
        %v3201 = vand.u32 %v3200, 8388607
        %v3202 = vor.u32 %v3201, 8388608
        %v3203 = vsub.s32 0, %v3202
        %v3204 = vadd.s32 %v3199, 1
        %vm3205 = vcmp.gt.s32.totalorder %v3204, 0
        %v3206 = vsel %vm3205, %v3204, 0
        %v3207 = vshrl.u32 %v3206, 5
        %v3208 = vand.u32 %v3206, 31
        %v3209 = vsub.s32 32, %v3208
        %v3210 = vshrl.u32 683565275, %v3209
        %v3211 = vshll.u32 683565275, %v3208
        %v3212 = vshrl.u32 2475754826, %v3209
        %v3213 = vor.u32 %v3211, %v3212
        %v3214 = vshll.u32 2475754826, %v3208
        %v3215 = vshrl.u32 2131351028, %v3209
        %v3216 = vor.u32 %v3214, %v3215
        %v3217 = vshll.u32 2131351028, %v3208
        %v3218 = vshrl.u32 2102212464, %v3209
        %v3219 = vor.u32 %v3217, %v3218
        %v3220 = vshll.u32 2102212464, %v3208
        %v3221 = vshrl.u32 920167782, %v3209
        %v3222 = vor.u32 %v3220, %v3221
        %v3223 = vshll.u32 920167782, %v3208
        %v3224 = vshrl.u32 1326507024, %v3209
        %v3225 = vor.u32 %v3223, %v3224
        %vm3226 = vcmp.lt.s32.totalorder %v3207, 1
        %vm3227 = vcmp.lt.s32.totalorder %v3207, 2
        %vm3228 = vcmp.lt.s32.totalorder %v3207, 3
        %vm3229 = vcmp.lt.s32.totalorder %v3207, 4
        %v3230 = vsel %vm3226, %v3210, %v3213
        %v3231 = vsel %vm3229, %v3219, 2102212464
        %v3232 = vsel %vm3228, %v3216, %v3231
        %v3233 = vsel %vm3227, %v3230, %v3232
        %v3234 = vsel %vm3226, %v3213, %v3216
        %v3235 = vsel %vm3229, %v3222, 920167782
        %v3236 = vsel %vm3228, %v3219, %v3235
        %v3237 = vsel %vm3227, %v3234, %v3236
        %v3238 = vsel %vm3226, %v3216, %v3219
        %v3239 = vsel %vm3229, %v3225, 1326507024
        %v3240 = vsel %vm3228, %v3222, %v3239
        %v3241 = vsel %vm3227, %v3238, %v3240
        %v3242 = vshll.u32 %v3202, 8
        %v3243 = vmul.u32.u64.compose %v3242, %v3241
        %v3244 = vextract.low.u32 %v3243
        %v3245 = vextract.high.u32 %v3243
        %v3246 = vmul.u32.u64.compose %v3242, %v3237
        %v3247 = vextract.low.u32 %v3246
        %v3248 = vextract.high.u32 %v3246
        %v3249 = vmul.u32 %v3242, %v3233
        %v3250 = vadd.s32 %v3245, %v3247
        %vm3251 = vc.u32 %v3245, %v3247
        %v3252 = vadd.s32 %v3248, 1
        %v3253 = vsel %vm3251, %v3252, %v3248
        %v3254 = vadd.s32 %v3249, %v3253
        %v3255 = vadd.s32 %v3254, 536870912
        %v3256 = vshrl.u32 %v3255, 30
        %v3257 = vshll.u32 %v3256, 30
        %v3258 = vsub.s32 %v3254, %v3257
        %vm3259 = vcmp.lt.s32.totalorder %v3258, 0
        %v3260 = vsub.s32 0, %v3258
        %v3261 = vsel %vm3259, %v3260, %v3258
        %v3262 = vclz %v3261
        %v3263 = vsub.s32 %v3262, 2
        %vm3264 = vcmp.gt.s32.totalorder 0, %v3263
        %v3265 = vsel %vm3264, 0, %v3263
        %v3266 = vsub.s32 32, %v3265
        %v3267 = vshll.u32 %v3258, %v3265
        %v3268 = vshrl.u32 %v3250, %v3266
        %v3269 = vor.u32 %v3267, %v3268
        %v3270 = vsub.s32 4294967266, %v3265
        %v3271 = vadd.s32 %v3270, 127
        %v3272 = vshll.u32 %v3271, 23
        %v3273 = vor.u32 4788187, %v3272
        %v3274 = vand.u32 2147483647, %v3273
        %v3276 = vcvt.s32.f32 %v3269
        %v3277 = vmul.f32 %v3276, %v3274
        %v3278 = vxor.u32 %v3277, 2147483648
        %v3279 = vsel %vm3196, %v3278, %v3277
        %v3280 = vsub.s32 4, %v3256
        %v3281 = vsel %vm3196, %v3280, %v3256
        %v3282 = vsel %vm3195, %v690, %v3279
        %v3283 = vsel %vm3195, 0, %v3281
        %v3284 = vcosq.f32.pop %v3282
        %v3285 = vsinq.f32.pop %v3282
        %vm3286 = vweird.f32 %v690
        %v3287 = vadd.s32 %v3283, 3
        %v3288 = vand.u32 %v3287, 3
        %vm3289 = vcmp.lt.s32.totalorder %v3288, 2
        %vm3290 = vcmp.eq.s32.totalorder %v3288, 0
        %v3291 = vxor.u32 %v3285, 2147483648
        %v3292 = vsel %vm3290, %v3284, %v3291
        %vm3293 = vcmp.eq.s32.totalorder %v3288, 2
        %v3294 = vxor.u32 %v3284, 2147483648
        %v3295 = vsel %vm3293, %v3294, %v3285
        %v3296 = vsel %vm3289, %v3292, %v3295
        %v3297 = vsel %vm3286, nan, %v3296
        %v3298 = vand.u32 2147483647, %v691
        %vm3299 = vcmp.le.f32.partialorder %v3298, 0.7853982
        %vm3300 = vcmp.lt.s32.totalorder %v691, 0
        %v3301 = vand.u32 %v691, 2139095040
        %v3302 = vshrl.u32 %v3301, 23
        %v3303 = vsub.s32 %v3302, 127
        %v3304 = vand.u32 2147483647, %v691
        %v3305 = vand.u32 %v3304, 8388607
        %v3306 = vor.u32 %v3305, 8388608
        %v3307 = vsub.s32 0, %v3306
        %v3308 = vadd.s32 %v3303, 1
        %vm3309 = vcmp.gt.s32.totalorder %v3308, 0
        %v3310 = vsel %vm3309, %v3308, 0
        %v3311 = vshrl.u32 %v3310, 5
        %v3312 = vand.u32 %v3310, 31
        %v3313 = vsub.s32 32, %v3312
        %v3314 = vshrl.u32 683565275, %v3313
        %v3315 = vshll.u32 683565275, %v3312
        %v3316 = vshrl.u32 2475754826, %v3313
        %v3317 = vor.u32 %v3315, %v3316
        %v3318 = vshll.u32 2475754826, %v3312
        %v3319 = vshrl.u32 2131351028, %v3313
        %v3320 = vor.u32 %v3318, %v3319
        %v3321 = vshll.u32 2131351028, %v3312
        %v3322 = vshrl.u32 2102212464, %v3313
        %v3323 = vor.u32 %v3321, %v3322
        %v3324 = vshll.u32 2102212464, %v3312
        %v3325 = vshrl.u32 920167782, %v3313
        %v3326 = vor.u32 %v3324, %v3325
        %v3327 = vshll.u32 920167782, %v3312
        %v3328 = vshrl.u32 1326507024, %v3313
        %v3329 = vor.u32 %v3327, %v3328
        %vm3330 = vcmp.lt.s32.totalorder %v3311, 1
        %vm3331 = vcmp.lt.s32.totalorder %v3311, 2
        %vm3332 = vcmp.lt.s32.totalorder %v3311, 3
        %vm3333 = vcmp.lt.s32.totalorder %v3311, 4
        %v3334 = vsel %vm3330, %v3314, %v3317
        %v3335 = vsel %vm3333, %v3323, 2102212464
        %v3336 = vsel %vm3332, %v3320, %v3335
        %v3337 = vsel %vm3331, %v3334, %v3336
        %v3338 = vsel %vm3330, %v3317, %v3320
        %v3339 = vsel %vm3333, %v3326, 920167782
        %v3340 = vsel %vm3332, %v3323, %v3339
        %v3341 = vsel %vm3331, %v3338, %v3340
        %v3342 = vsel %vm3330, %v3320, %v3323
        %v3343 = vsel %vm3333, %v3329, 1326507024
        %v3344 = vsel %vm3332, %v3326, %v3343
        %v3345 = vsel %vm3331, %v3342, %v3344
        %v3346 = vshll.u32 %v3306, 8
        %v3347 = vmul.u32.u64.compose %v3346, %v3345
        %v3348 = vextract.low.u32 %v3347
        %v3349 = vextract.high.u32 %v3347
        %v3350 = vmul.u32.u64.compose %v3346, %v3341
        %v3351 = vextract.low.u32 %v3350
        %v3352 = vextract.high.u32 %v3350
        %v3353 = vmul.u32 %v3346, %v3337
        %v3354 = vadd.s32 %v3349, %v3351
        %vm3355 = vc.u32 %v3349, %v3351
        %v3356 = vadd.s32 %v3352, 1
        %v3357 = vsel %vm3355, %v3356, %v3352
        %v3358 = vadd.s32 %v3353, %v3357
        %v3359 = vadd.s32 %v3358, 536870912
        %v3360 = vshrl.u32 %v3359, 30
        %v3361 = vshll.u32 %v3360, 30
        %v3362 = vsub.s32 %v3358, %v3361
        %vm3363 = vcmp.lt.s32.totalorder %v3362, 0
        %v3364 = vsub.s32 0, %v3362
        %v3365 = vsel %vm3363, %v3364, %v3362
        %v3366 = vclz %v3365
        %v3367 = vsub.s32 %v3366, 2
        %vm3368 = vcmp.gt.s32.totalorder 0, %v3367
        %v3369 = vsel %vm3368, 0, %v3367
        %v3370 = vsub.s32 32, %v3369
        %v3371 = vshll.u32 %v3362, %v3369
        %v3372 = vshrl.u32 %v3354, %v3370
        %v3373 = vor.u32 %v3371, %v3372
        %v3374 = vsub.s32 4294967266, %v3369
        %v3375 = vadd.s32 %v3374, 127
        %v3376 = vshll.u32 %v3375, 23
        %v3377 = vor.u32 4788187, %v3376
        %v3378 = vand.u32 2147483647, %v3377
        %v3380 = vcvt.s32.f32 %v3373
        %v3381 = vmul.f32 %v3380, %v3378
        %v3382 = vxor.u32 %v3381, 2147483648
        %v3383 = vsel %vm3300, %v3382, %v3381
        %v3384 = vsub.s32 4, %v3360
        %v3385 = vsel %vm3300, %v3384, %v3360
        %v3386 = vsel %vm3299, %v691, %v3383
        %v3387 = vsel %vm3299, 0, %v3385
        %v3388 = vcosq.f32.pop %v3386
        %v3389 = vsinq.f32.pop %v3386
        %vm3390 = vweird.f32 %v691
        %v3391 = vadd.s32 %v3387, 3
        %v3392 = vand.u32 %v3391, 3
        %vm3393 = vcmp.lt.s32.totalorder %v3392, 2
        %vm3394 = vcmp.eq.s32.totalorder %v3392, 0
        %v3395 = vxor.u32 %v3389, 2147483648
        %v3396 = vsel %vm3394, %v3388, %v3395
        %vm3397 = vcmp.eq.s32.totalorder %v3392, 2
        %v3398 = vxor.u32 %v3388, 2147483648
        %v3399 = vsel %vm3397, %v3398, %v3389
        %v3400 = vsel %vm3393, %v3396, %v3399
        %v3401 = vsel %vm3390, nan, %v3400
        %v3402 = vand.u32 2147483647, %v692
        %vm3403 = vcmp.le.f32.partialorder %v3402, 0.7853982
        %vm3404 = vcmp.lt.s32.totalorder %v692, 0
        %v3405 = vand.u32 %v692, 2139095040
        %v3406 = vshrl.u32 %v3405, 23
        %v3407 = vsub.s32 %v3406, 127
        %v3408 = vand.u32 2147483647, %v692
        %v3409 = vand.u32 %v3408, 8388607
        %v3410 = vor.u32 %v3409, 8388608
        %v3411 = vsub.s32 0, %v3410
        %v3412 = vadd.s32 %v3407, 1
        %vm3413 = vcmp.gt.s32.totalorder %v3412, 0
        %v3414 = vsel %vm3413, %v3412, 0
        %v3415 = vshrl.u32 %v3414, 5
        %v3416 = vand.u32 %v3414, 31
        %v3417 = vsub.s32 32, %v3416
        %v3418 = vshrl.u32 683565275, %v3417
        %v3419 = vshll.u32 683565275, %v3416
        %v3420 = vshrl.u32 2475754826, %v3417
        %v3421 = vor.u32 %v3419, %v3420
        %v3422 = vshll.u32 2475754826, %v3416
        %v3423 = vshrl.u32 2131351028, %v3417
        %v3424 = vor.u32 %v3422, %v3423
        %v3425 = vshll.u32 2131351028, %v3416
        %v3426 = vshrl.u32 2102212464, %v3417
        %v3427 = vor.u32 %v3425, %v3426
        %v3428 = vshll.u32 2102212464, %v3416
        %v3429 = vshrl.u32 920167782, %v3417
        %v3430 = vor.u32 %v3428, %v3429
        %v3431 = vshll.u32 920167782, %v3416
        %v3432 = vshrl.u32 1326507024, %v3417
        %v3433 = vor.u32 %v3431, %v3432
        %vm3434 = vcmp.lt.s32.totalorder %v3415, 1
        %vm3435 = vcmp.lt.s32.totalorder %v3415, 2
        %vm3436 = vcmp.lt.s32.totalorder %v3415, 3
        %vm3437 = vcmp.lt.s32.totalorder %v3415, 4
        %v3438 = vsel %vm3434, %v3418, %v3421
        %v3439 = vsel %vm3437, %v3427, 2102212464
        %v3440 = vsel %vm3436, %v3424, %v3439
        %v3441 = vsel %vm3435, %v3438, %v3440
        %v3442 = vsel %vm3434, %v3421, %v3424
        %v3443 = vsel %vm3437, %v3430, 920167782
        %v3444 = vsel %vm3436, %v3427, %v3443
        %v3445 = vsel %vm3435, %v3442, %v3444
        %v3446 = vsel %vm3434, %v3424, %v3427
        %v3447 = vsel %vm3437, %v3433, 1326507024
        %v3448 = vsel %vm3436, %v3430, %v3447
        %v3449 = vsel %vm3435, %v3446, %v3448
        %v3450 = vshll.u32 %v3410, 8
        %v3451 = vmul.u32.u64.compose %v3450, %v3449
        %v3452 = vextract.low.u32 %v3451
        %v3453 = vextract.high.u32 %v3451
        %v3454 = vmul.u32.u64.compose %v3450, %v3445
        %v3455 = vextract.low.u32 %v3454
        %v3456 = vextract.high.u32 %v3454
        %v3457 = vmul.u32 %v3450, %v3441
        %v3458 = vadd.s32 %v3453, %v3455
        %vm3459 = vc.u32 %v3453, %v3455
        %v3460 = vadd.s32 %v3456, 1
        %v3461 = vsel %vm3459, %v3460, %v3456
        %v3462 = vadd.s32 %v3457, %v3461
        %v3463 = vadd.s32 %v3462, 536870912
        %v3464 = vshrl.u32 %v3463, 30
        %v3465 = vshll.u32 %v3464, 30
        %v3466 = vsub.s32 %v3462, %v3465
        %vm3467 = vcmp.lt.s32.totalorder %v3466, 0
        %v3468 = vsub.s32 0, %v3466
        %v3469 = vsel %vm3467, %v3468, %v3466
        %v3470 = vclz %v3469
        %v3471 = vsub.s32 %v3470, 2
        %vm3472 = vcmp.gt.s32.totalorder 0, %v3471
        %v3473 = vsel %vm3472, 0, %v3471
        %v3474 = vsub.s32 32, %v3473
        %v3475 = vshll.u32 %v3466, %v3473
        %v3476 = vshrl.u32 %v3458, %v3474
        %v3477 = vor.u32 %v3475, %v3476
        %v3478 = vsub.s32 4294967266, %v3473
        %v3479 = vadd.s32 %v3478, 127
        %v3480 = vshll.u32 %v3479, 23
        %v3481 = vor.u32 4788187, %v3480
        %v3482 = vand.u32 2147483647, %v3481
        %v3484 = vcvt.s32.f32 %v3477
        %v3485 = vmul.f32 %v3484, %v3482
        %v3486 = vxor.u32 %v3485, 2147483648
        %v3487 = vsel %vm3404, %v3486, %v3485
        %v3488 = vsub.s32 4, %v3464
        %v3489 = vsel %vm3404, %v3488, %v3464
        %v3490 = vsel %vm3403, %v692, %v3487
        %v3491 = vsel %vm3403, 0, %v3489
        %v3492 = vcosq.f32.pop %v3490
        %v3493 = vsinq.f32.pop %v3490
        %vm3494 = vweird.f32 %v692
        %v3495 = vadd.s32 %v3491, 3
        %v3496 = vand.u32 %v3495, 3
        %vm3497 = vcmp.lt.s32.totalorder %v3496, 2
        %vm3498 = vcmp.eq.s32.totalorder %v3496, 0
        %v3499 = vxor.u32 %v3493, 2147483648
        %v3500 = vsel %vm3498, %v3492, %v3499
        %vm3501 = vcmp.eq.s32.totalorder %v3496, 2
        %v3502 = vxor.u32 %v3492, 2147483648
        %v3503 = vsel %vm3501, %v3502, %v3493
        %v3504 = vsel %vm3497, %v3500, %v3503
        %v3505 = vsel %vm3494, nan, %v3504
        %v3506 = vand.u32 2147483647, %v693
        %vm3507 = vcmp.le.f32.partialorder %v3506, 0.7853982
        %vm3508 = vcmp.lt.s32.totalorder %v693, 0
        %v3509 = vand.u32 %v693, 2139095040
        %v3510 = vshrl.u32 %v3509, 23
        %v3511 = vsub.s32 %v3510, 127
        %v3512 = vand.u32 2147483647, %v693
        %v3513 = vand.u32 %v3512, 8388607
        %v3514 = vor.u32 %v3513, 8388608
        %v3515 = vsub.s32 0, %v3514
        %v3516 = vadd.s32 %v3511, 1
        %vm3517 = vcmp.gt.s32.totalorder %v3516, 0
        %v3518 = vsel %vm3517, %v3516, 0
        %v3519 = vshrl.u32 %v3518, 5
        %v3520 = vand.u32 %v3518, 31
        %v3521 = vsub.s32 32, %v3520
        %v3522 = vshrl.u32 683565275, %v3521
        %v3523 = vshll.u32 683565275, %v3520
        %v3524 = vshrl.u32 2475754826, %v3521
        %v3525 = vor.u32 %v3523, %v3524
        %v3526 = vshll.u32 2475754826, %v3520
        %v3527 = vshrl.u32 2131351028, %v3521
        %v3528 = vor.u32 %v3526, %v3527
        %v3529 = vshll.u32 2131351028, %v3520
        %v3530 = vshrl.u32 2102212464, %v3521
        %v3531 = vor.u32 %v3529, %v3530
        %v3532 = vshll.u32 2102212464, %v3520
        %v3533 = vshrl.u32 920167782, %v3521
        %v3534 = vor.u32 %v3532, %v3533
        %v3535 = vshll.u32 920167782, %v3520
        %v3536 = vshrl.u32 1326507024, %v3521
        %v3537 = vor.u32 %v3535, %v3536
        %vm3538 = vcmp.lt.s32.totalorder %v3519, 1
        %vm3539 = vcmp.lt.s32.totalorder %v3519, 2
        %vm3540 = vcmp.lt.s32.totalorder %v3519, 3
        %vm3541 = vcmp.lt.s32.totalorder %v3519, 4
        %v3542 = vsel %vm3538, %v3522, %v3525
        %v3543 = vsel %vm3541, %v3531, 2102212464
        %v3544 = vsel %vm3540, %v3528, %v3543
        %v3545 = vsel %vm3539, %v3542, %v3544
        %v3546 = vsel %vm3538, %v3525, %v3528
        %v3547 = vsel %vm3541, %v3534, 920167782
        %v3548 = vsel %vm3540, %v3531, %v3547
        %v3549 = vsel %vm3539, %v3546, %v3548
        %v3550 = vsel %vm3538, %v3528, %v3531
        %v3551 = vsel %vm3541, %v3537, 1326507024
        %v3552 = vsel %vm3540, %v3534, %v3551
        %v3553 = vsel %vm3539, %v3550, %v3552
        %v3554 = vshll.u32 %v3514, 8
        %v3555 = vmul.u32.u64.compose %v3554, %v3553
        %v3556 = vextract.low.u32 %v3555
        %v3557 = vextract.high.u32 %v3555
        %v3558 = vmul.u32.u64.compose %v3554, %v3549
        %v3559 = vextract.low.u32 %v3558
        %v3560 = vextract.high.u32 %v3558
        %v3561 = vmul.u32 %v3554, %v3545
        %v3562 = vadd.s32 %v3557, %v3559
        %vm3563 = vc.u32 %v3557, %v3559
        %v3564 = vadd.s32 %v3560, 1
        %v3565 = vsel %vm3563, %v3564, %v3560
        %v3566 = vadd.s32 %v3561, %v3565
        %v3567 = vadd.s32 %v3566, 536870912
        %v3568 = vshrl.u32 %v3567, 30
        %v3569 = vshll.u32 %v3568, 30
        %v3570 = vsub.s32 %v3566, %v3569
        %vm3571 = vcmp.lt.s32.totalorder %v3570, 0
        %v3572 = vsub.s32 0, %v3570
        %v3573 = vsel %vm3571, %v3572, %v3570
        %v3574 = vclz %v3573
        %v3575 = vsub.s32 %v3574, 2
        %vm3576 = vcmp.gt.s32.totalorder 0, %v3575
        %v3577 = vsel %vm3576, 0, %v3575
        %v3578 = vsub.s32 32, %v3577
        %v3579 = vshll.u32 %v3570, %v3577
        %v3580 = vshrl.u32 %v3562, %v3578
        %v3581 = vor.u32 %v3579, %v3580
        %v3582 = vsub.s32 4294967266, %v3577
        %v3583 = vadd.s32 %v3582, 127
        %v3584 = vshll.u32 %v3583, 23
        %v3585 = vor.u32 4788187, %v3584
        %v3586 = vand.u32 2147483647, %v3585
        %v3588 = vcvt.s32.f32 %v3581
        %v3589 = vmul.f32 %v3588, %v3586
        %v3590 = vxor.u32 %v3589, 2147483648
        %v3591 = vsel %vm3508, %v3590, %v3589
        %v3592 = vsub.s32 4, %v3568
        %v3593 = vsel %vm3508, %v3592, %v3568
        %v3594 = vsel %vm3507, %v693, %v3591
        %v3595 = vsel %vm3507, 0, %v3593
        %v3596 = vcosq.f32.pop %v3594
        %v3597 = vsinq.f32.pop %v3594
        %vm3598 = vweird.f32 %v693
        %v3599 = vadd.s32 %v3595, 3
        %v3600 = vand.u32 %v3599, 3
        %vm3601 = vcmp.lt.s32.totalorder %v3600, 2
        %vm3602 = vcmp.eq.s32.totalorder %v3600, 0
        %v3603 = vxor.u32 %v3597, 2147483648
        %v3604 = vsel %vm3602, %v3596, %v3603
        %vm3605 = vcmp.eq.s32.totalorder %v3600, 2
        %v3606 = vxor.u32 %v3596, 2147483648
        %v3607 = vsel %vm3605, %v3606, %v3597
        %v3608 = vsel %vm3601, %v3604, %v3607
        %v3609 = vsel %vm3598, nan, %v3608
        %v3610 = vand.u32 2147483647, %v694
        %vm3611 = vcmp.le.f32.partialorder %v3610, 0.7853982
        %vm3612 = vcmp.lt.s32.totalorder %v694, 0
        %v3613 = vand.u32 %v694, 2139095040
        %v3614 = vshrl.u32 %v3613, 23
        %v3615 = vsub.s32 %v3614, 127
        %v3616 = vand.u32 2147483647, %v694
        %v3617 = vand.u32 %v3616, 8388607
        %v3618 = vor.u32 %v3617, 8388608
        %v3619 = vsub.s32 0, %v3618
        %v3620 = vadd.s32 %v3615, 1
        %vm3621 = vcmp.gt.s32.totalorder %v3620, 0
        %v3622 = vsel %vm3621, %v3620, 0
        %v3623 = vshrl.u32 %v3622, 5
        %v3624 = vand.u32 %v3622, 31
        %v3625 = vsub.s32 32, %v3624
        %v3626 = vshrl.u32 683565275, %v3625
        %v3627 = vshll.u32 683565275, %v3624
        %v3628 = vshrl.u32 2475754826, %v3625
        %v3629 = vor.u32 %v3627, %v3628
        %v3630 = vshll.u32 2475754826, %v3624
        %v3631 = vshrl.u32 2131351028, %v3625
        %v3632 = vor.u32 %v3630, %v3631
        %v3633 = vshll.u32 2131351028, %v3624
        %v3634 = vshrl.u32 2102212464, %v3625
        %v3635 = vor.u32 %v3633, %v3634
        %v3636 = vshll.u32 2102212464, %v3624
        %v3637 = vshrl.u32 920167782, %v3625
        %v3638 = vor.u32 %v3636, %v3637
        %v3639 = vshll.u32 920167782, %v3624
        %v3640 = vshrl.u32 1326507024, %v3625
        %v3641 = vor.u32 %v3639, %v3640
        %vm3642 = vcmp.lt.s32.totalorder %v3623, 1
        %vm3643 = vcmp.lt.s32.totalorder %v3623, 2
        %vm3644 = vcmp.lt.s32.totalorder %v3623, 3
        %vm3645 = vcmp.lt.s32.totalorder %v3623, 4
        %v3646 = vsel %vm3642, %v3626, %v3629
        %v3647 = vsel %vm3645, %v3635, 2102212464
        %v3648 = vsel %vm3644, %v3632, %v3647
        %v3649 = vsel %vm3643, %v3646, %v3648
        %v3650 = vsel %vm3642, %v3629, %v3632
        %v3651 = vsel %vm3645, %v3638, 920167782
        %v3652 = vsel %vm3644, %v3635, %v3651
        %v3653 = vsel %vm3643, %v3650, %v3652
        %v3654 = vsel %vm3642, %v3632, %v3635
        %v3655 = vsel %vm3645, %v3641, 1326507024
        %v3656 = vsel %vm3644, %v3638, %v3655
        %v3657 = vsel %vm3643, %v3654, %v3656
        %v3658 = vshll.u32 %v3618, 8
        %v3659 = vmul.u32.u64.compose %v3658, %v3657
        %v3660 = vextract.low.u32 %v3659
        %v3661 = vextract.high.u32 %v3659
        %v3662 = vmul.u32.u64.compose %v3658, %v3653
        %v3663 = vextract.low.u32 %v3662
        %v3664 = vextract.high.u32 %v3662
        %v3665 = vmul.u32 %v3658, %v3649
        %v3666 = vadd.s32 %v3661, %v3663
        %vm3667 = vc.u32 %v3661, %v3663
        %v3668 = vadd.s32 %v3664, 1
        %v3669 = vsel %vm3667, %v3668, %v3664
        %v3670 = vadd.s32 %v3665, %v3669
        %v3671 = vadd.s32 %v3670, 536870912
        %v3672 = vshrl.u32 %v3671, 30
        %v3673 = vshll.u32 %v3672, 30
        %v3674 = vsub.s32 %v3670, %v3673
        %vm3675 = vcmp.lt.s32.totalorder %v3674, 0
        %v3676 = vsub.s32 0, %v3674
        %v3677 = vsel %vm3675, %v3676, %v3674
        %v3678 = vclz %v3677
        %v3679 = vsub.s32 %v3678, 2
        %vm3680 = vcmp.gt.s32.totalorder 0, %v3679
        %v3681 = vsel %vm3680, 0, %v3679
        %v3682 = vsub.s32 32, %v3681
        %v3683 = vshll.u32 %v3674, %v3681
        %v3684 = vshrl.u32 %v3666, %v3682
        %v3685 = vor.u32 %v3683, %v3684
        %v3686 = vsub.s32 4294967266, %v3681
        %v3687 = vadd.s32 %v3686, 127
        %v3688 = vshll.u32 %v3687, 23
        %v3689 = vor.u32 4788187, %v3688
        %v3690 = vand.u32 2147483647, %v3689
        %v3692 = vcvt.s32.f32 %v3685
        %v3693 = vmul.f32 %v3692, %v3690
        %v3694 = vxor.u32 %v3693, 2147483648
        %v3695 = vsel %vm3612, %v3694, %v3693
        %v3696 = vsub.s32 4, %v3672
        %v3697 = vsel %vm3612, %v3696, %v3672
        %v3698 = vsel %vm3611, %v694, %v3695
        %v3699 = vsel %vm3611, 0, %v3697
        %v3700 = vcosq.f32.pop %v3698
        %v3701 = vsinq.f32.pop %v3698
        %vm3702 = vweird.f32 %v694
        %v3703 = vadd.s32 %v3699, 3
        %v3704 = vand.u32 %v3703, 3
        %vm3705 = vcmp.lt.s32.totalorder %v3704, 2
        %vm3706 = vcmp.eq.s32.totalorder %v3704, 0
        %v3707 = vxor.u32 %v3701, 2147483648
        %v3708 = vsel %vm3706, %v3700, %v3707
        %vm3709 = vcmp.eq.s32.totalorder %v3704, 2
        %v3710 = vxor.u32 %v3700, 2147483648
        %v3711 = vsel %vm3709, %v3710, %v3701
        %v3712 = vsel %vm3705, %v3708, %v3711
        %v3713 = vsel %vm3702, nan, %v3712
        %v3714 = vand.u32 2147483647, %v695
        %vm3715 = vcmp.le.f32.partialorder %v3714, 0.7853982
        %vm3716 = vcmp.lt.s32.totalorder %v695, 0
        %v3717 = vand.u32 %v695, 2139095040
        %v3718 = vshrl.u32 %v3717, 23
        %v3719 = vsub.s32 %v3718, 127
        %v3720 = vand.u32 2147483647, %v695
        %v3721 = vand.u32 %v3720, 8388607
        %v3722 = vor.u32 %v3721, 8388608
        %v3723 = vsub.s32 0, %v3722
        %v3724 = vadd.s32 %v3719, 1
        %vm3725 = vcmp.gt.s32.totalorder %v3724, 0
        %v3726 = vsel %vm3725, %v3724, 0
        %v3727 = vshrl.u32 %v3726, 5
        %v3728 = vand.u32 %v3726, 31
        %v3729 = vsub.s32 32, %v3728
        %v3730 = vshrl.u32 683565275, %v3729
        %v3731 = vshll.u32 683565275, %v3728
        %v3732 = vshrl.u32 2475754826, %v3729
        %v3733 = vor.u32 %v3731, %v3732
        %v3734 = vshll.u32 2475754826, %v3728
        %v3735 = vshrl.u32 2131351028, %v3729
        %v3736 = vor.u32 %v3734, %v3735
        %v3737 = vshll.u32 2131351028, %v3728
        %v3738 = vshrl.u32 2102212464, %v3729
        %v3739 = vor.u32 %v3737, %v3738
        %v3740 = vshll.u32 2102212464, %v3728
        %v3741 = vshrl.u32 920167782, %v3729
        %v3742 = vor.u32 %v3740, %v3741
        %v3743 = vshll.u32 920167782, %v3728
        %v3744 = vshrl.u32 1326507024, %v3729
        %v3745 = vor.u32 %v3743, %v3744
        %vm3746 = vcmp.lt.s32.totalorder %v3727, 1
        %vm3747 = vcmp.lt.s32.totalorder %v3727, 2
        %vm3748 = vcmp.lt.s32.totalorder %v3727, 3
        %vm3749 = vcmp.lt.s32.totalorder %v3727, 4
        %v3750 = vsel %vm3746, %v3730, %v3733
        %v3751 = vsel %vm3749, %v3739, 2102212464
        %v3752 = vsel %vm3748, %v3736, %v3751
        %v3753 = vsel %vm3747, %v3750, %v3752
        %v3754 = vsel %vm3746, %v3733, %v3736
        %v3755 = vsel %vm3749, %v3742, 920167782
        %v3756 = vsel %vm3748, %v3739, %v3755
        %v3757 = vsel %vm3747, %v3754, %v3756
        %v3758 = vsel %vm3746, %v3736, %v3739
        %v3759 = vsel %vm3749, %v3745, 1326507024
        %v3760 = vsel %vm3748, %v3742, %v3759
        %v3761 = vsel %vm3747, %v3758, %v3760
        %v3762 = vshll.u32 %v3722, 8
        %v3763 = vmul.u32.u64.compose %v3762, %v3761
        %v3764 = vextract.low.u32 %v3763
        %v3765 = vextract.high.u32 %v3763
        %v3766 = vmul.u32.u64.compose %v3762, %v3757
        %v3767 = vextract.low.u32 %v3766
        %v3768 = vextract.high.u32 %v3766
        %v3769 = vmul.u32 %v3762, %v3753
        %v3770 = vadd.s32 %v3765, %v3767
        %vm3771 = vc.u32 %v3765, %v3767
        %v3772 = vadd.s32 %v3768, 1
        %v3773 = vsel %vm3771, %v3772, %v3768
        %v3774 = vadd.s32 %v3769, %v3773
        %v3775 = vadd.s32 %v3774, 536870912
        %v3776 = vshrl.u32 %v3775, 30
        %v3777 = vshll.u32 %v3776, 30
        %v3778 = vsub.s32 %v3774, %v3777
        %vm3779 = vcmp.lt.s32.totalorder %v3778, 0
        %v3780 = vsub.s32 0, %v3778
        %v3781 = vsel %vm3779, %v3780, %v3778
        %v3782 = vclz %v3781
        %v3783 = vsub.s32 %v3782, 2
        %vm3784 = vcmp.gt.s32.totalorder 0, %v3783
        %v3785 = vsel %vm3784, 0, %v3783
        %v3786 = vsub.s32 32, %v3785
        %v3787 = vshll.u32 %v3778, %v3785
        %v3788 = vshrl.u32 %v3770, %v3786
        %v3789 = vor.u32 %v3787, %v3788
        %v3790 = vsub.s32 4294967266, %v3785
        %v3791 = vadd.s32 %v3790, 127
        %v3792 = vshll.u32 %v3791, 23
        %v3793 = vor.u32 4788187, %v3792
        %v3794 = vand.u32 2147483647, %v3793
        %v3796 = vcvt.s32.f32 %v3789
        %v3797 = vmul.f32 %v3796, %v3794
        %v3798 = vxor.u32 %v3797, 2147483648
        %v3799 = vsel %vm3716, %v3798, %v3797
        %v3800 = vsub.s32 4, %v3776
        %v3801 = vsel %vm3716, %v3800, %v3776
        %v3802 = vsel %vm3715, %v695, %v3799
        %v3803 = vsel %vm3715, 0, %v3801
        %v3804 = vcosq.f32.pop %v3802
        %v3805 = vsinq.f32.pop %v3802
        %vm3806 = vweird.f32 %v695
        %v3807 = vadd.s32 %v3803, 3
        %v3808 = vand.u32 %v3807, 3
        %vm3809 = vcmp.lt.s32.totalorder %v3808, 2
        %vm3810 = vcmp.eq.s32.totalorder %v3808, 0
        %v3811 = vxor.u32 %v3805, 2147483648
        %v3812 = vsel %vm3810, %v3804, %v3811
        %vm3813 = vcmp.eq.s32.totalorder %v3808, 2
        %v3814 = vxor.u32 %v3804, 2147483648
        %v3815 = vsel %vm3813, %v3814, %v3805
        %v3816 = vsel %vm3809, %v3812, %v3815
        %v3817 = vsel %vm3806, nan, %v3816
        %v3818 = vand.u32 2147483647, %v696
        %vm3819 = vcmp.le.f32.partialorder %v3818, 0.7853982
        %vm3820 = vcmp.lt.s32.totalorder %v696, 0
        %v3821 = vand.u32 %v696, 2139095040
        %v3822 = vshrl.u32 %v3821, 23
        %v3823 = vsub.s32 %v3822, 127
        %v3824 = vand.u32 2147483647, %v696
        %v3825 = vand.u32 %v3824, 8388607
        %v3826 = vor.u32 %v3825, 8388608
        %v3827 = vsub.s32 0, %v3826
        %v3828 = vadd.s32 %v3823, 1
        %vm3829 = vcmp.gt.s32.totalorder %v3828, 0
        %v3830 = vsel %vm3829, %v3828, 0
        %v3831 = vshrl.u32 %v3830, 5
        %v3832 = vand.u32 %v3830, 31
        %v3833 = vsub.s32 32, %v3832
        %v3834 = vshrl.u32 683565275, %v3833
        %v3835 = vshll.u32 683565275, %v3832
        %v3836 = vshrl.u32 2475754826, %v3833
        %v3837 = vor.u32 %v3835, %v3836
        %v3838 = vshll.u32 2475754826, %v3832
        %v3839 = vshrl.u32 2131351028, %v3833
        %v3840 = vor.u32 %v3838, %v3839
        %v3841 = vshll.u32 2131351028, %v3832
        %v3842 = vshrl.u32 2102212464, %v3833
        %v3843 = vor.u32 %v3841, %v3842
        %v3844 = vshll.u32 2102212464, %v3832
        %v3845 = vshrl.u32 920167782, %v3833
        %v3846 = vor.u32 %v3844, %v3845
        %v3847 = vshll.u32 920167782, %v3832
        %v3848 = vshrl.u32 1326507024, %v3833
        %v3849 = vor.u32 %v3847, %v3848
        %vm3850 = vcmp.lt.s32.totalorder %v3831, 1
        %vm3851 = vcmp.lt.s32.totalorder %v3831, 2
        %vm3852 = vcmp.lt.s32.totalorder %v3831, 3
        %vm3853 = vcmp.lt.s32.totalorder %v3831, 4
        %v3854 = vsel %vm3850, %v3834, %v3837
        %v3855 = vsel %vm3853, %v3843, 2102212464
        %v3856 = vsel %vm3852, %v3840, %v3855
        %v3857 = vsel %vm3851, %v3854, %v3856
        %v3858 = vsel %vm3850, %v3837, %v3840
        %v3859 = vsel %vm3853, %v3846, 920167782
        %v3860 = vsel %vm3852, %v3843, %v3859
        %v3861 = vsel %vm3851, %v3858, %v3860
        %v3862 = vsel %vm3850, %v3840, %v3843
        %v3863 = vsel %vm3853, %v3849, 1326507024
        %v3864 = vsel %vm3852, %v3846, %v3863
        %v3865 = vsel %vm3851, %v3862, %v3864
        %v3866 = vshll.u32 %v3826, 8
        %v3867 = vmul.u32.u64.compose %v3866, %v3865
        %v3868 = vextract.low.u32 %v3867
        %v3869 = vextract.high.u32 %v3867
        %v3870 = vmul.u32.u64.compose %v3866, %v3861
        %v3871 = vextract.low.u32 %v3870
        %v3872 = vextract.high.u32 %v3870
        %v3873 = vmul.u32 %v3866, %v3857
        %v3874 = vadd.s32 %v3869, %v3871
        %vm3875 = vc.u32 %v3869, %v3871
        %v3876 = vadd.s32 %v3872, 1
        %v3877 = vsel %vm3875, %v3876, %v3872
        %v3878 = vadd.s32 %v3873, %v3877
        %v3879 = vadd.s32 %v3878, 536870912
        %v3880 = vshrl.u32 %v3879, 30
        %v3881 = vshll.u32 %v3880, 30
        %v3882 = vsub.s32 %v3878, %v3881
        %vm3883 = vcmp.lt.s32.totalorder %v3882, 0
        %v3884 = vsub.s32 0, %v3882
        %v3885 = vsel %vm3883, %v3884, %v3882
        %v3886 = vclz %v3885
        %v3887 = vsub.s32 %v3886, 2
        %vm3888 = vcmp.gt.s32.totalorder 0, %v3887
        %v3889 = vsel %vm3888, 0, %v3887
        %v3890 = vsub.s32 32, %v3889
        %v3891 = vshll.u32 %v3882, %v3889
        %v3892 = vshrl.u32 %v3874, %v3890
        %v3893 = vor.u32 %v3891, %v3892
        %v3894 = vsub.s32 4294967266, %v3889
        %v3895 = vadd.s32 %v3894, 127
        %v3896 = vshll.u32 %v3895, 23
        %v3897 = vor.u32 4788187, %v3896
        %v3898 = vand.u32 2147483647, %v3897
        %v3900 = vcvt.s32.f32 %v3893
        %v3901 = vmul.f32 %v3900, %v3898
        %v3902 = vxor.u32 %v3901, 2147483648
        %v3903 = vsel %vm3820, %v3902, %v3901
        %v3904 = vsub.s32 4, %v3880
        %v3905 = vsel %vm3820, %v3904, %v3880
        %v3906 = vsel %vm3819, %v696, %v3903
        %v3907 = vsel %vm3819, 0, %v3905
        %v3908 = vcosq.f32.pop %v3906
        %v3909 = vsinq.f32.pop %v3906
        %vm3910 = vweird.f32 %v696
        %v3911 = vadd.s32 %v3907, 3
        %v3912 = vand.u32 %v3911, 3
        %vm3913 = vcmp.lt.s32.totalorder %v3912, 2
        %vm3914 = vcmp.eq.s32.totalorder %v3912, 0
        %v3915 = vxor.u32 %v3909, 2147483648
        %v3916 = vsel %vm3914, %v3908, %v3915
        %vm3917 = vcmp.eq.s32.totalorder %v3912, 2
        %v3918 = vxor.u32 %v3908, 2147483648
        %v3919 = vsel %vm3917, %v3918, %v3909
        %v3920 = vsel %vm3913, %v3916, %v3919
        %v3921 = vsel %vm3910, nan, %v3920
        %v3922 = vand.u32 2147483647, %v697
        %vm3923 = vcmp.le.f32.partialorder %v3922, 0.7853982
        %vm3924 = vcmp.lt.s32.totalorder %v697, 0
        %v3925 = vand.u32 %v697, 2139095040
        %v3926 = vshrl.u32 %v3925, 23
        %v3927 = vsub.s32 %v3926, 127
        %v3928 = vand.u32 2147483647, %v697
        %v3929 = vand.u32 %v3928, 8388607
        %v3930 = vor.u32 %v3929, 8388608
        %v3931 = vsub.s32 0, %v3930
        %v3932 = vadd.s32 %v3927, 1
        %vm3933 = vcmp.gt.s32.totalorder %v3932, 0
        %v3934 = vsel %vm3933, %v3932, 0
        %v3935 = vshrl.u32 %v3934, 5
        %v3936 = vand.u32 %v3934, 31
        %v3937 = vsub.s32 32, %v3936
        %v3938 = vshrl.u32 683565275, %v3937
        %v3939 = vshll.u32 683565275, %v3936
        %v3940 = vshrl.u32 2475754826, %v3937
        %v3941 = vor.u32 %v3939, %v3940
        %v3942 = vshll.u32 2475754826, %v3936
        %v3943 = vshrl.u32 2131351028, %v3937
        %v3944 = vor.u32 %v3942, %v3943
        %v3945 = vshll.u32 2131351028, %v3936
        %v3946 = vshrl.u32 2102212464, %v3937
        %v3947 = vor.u32 %v3945, %v3946
        %v3948 = vshll.u32 2102212464, %v3936
        %v3949 = vshrl.u32 920167782, %v3937
        %v3950 = vor.u32 %v3948, %v3949
        %v3951 = vshll.u32 920167782, %v3936
        %v3952 = vshrl.u32 1326507024, %v3937
        %v3953 = vor.u32 %v3951, %v3952
        %vm3954 = vcmp.lt.s32.totalorder %v3935, 1
        %vm3955 = vcmp.lt.s32.totalorder %v3935, 2
        %vm3956 = vcmp.lt.s32.totalorder %v3935, 3
        %vm3957 = vcmp.lt.s32.totalorder %v3935, 4
        %v3958 = vsel %vm3954, %v3938, %v3941
        %v3959 = vsel %vm3957, %v3947, 2102212464
        %v3960 = vsel %vm3956, %v3944, %v3959
        %v3961 = vsel %vm3955, %v3958, %v3960
        %v3962 = vsel %vm3954, %v3941, %v3944
        %v3963 = vsel %vm3957, %v3950, 920167782
        %v3964 = vsel %vm3956, %v3947, %v3963
        %v3965 = vsel %vm3955, %v3962, %v3964
        %v3966 = vsel %vm3954, %v3944, %v3947
        %v3967 = vsel %vm3957, %v3953, 1326507024
        %v3968 = vsel %vm3956, %v3950, %v3967
        %v3969 = vsel %vm3955, %v3966, %v3968
        %v3970 = vshll.u32 %v3930, 8
        %v3971 = vmul.u32.u64.compose %v3970, %v3969
        %v3972 = vextract.low.u32 %v3971
        %v3973 = vextract.high.u32 %v3971
        %v3974 = vmul.u32.u64.compose %v3970, %v3965
        %v3975 = vextract.low.u32 %v3974
        %v3976 = vextract.high.u32 %v3974
        %v3977 = vmul.u32 %v3970, %v3961
        %v3978 = vadd.s32 %v3973, %v3975
        %vm3979 = vc.u32 %v3973, %v3975
        %v3980 = vadd.s32 %v3976, 1
        %v3981 = vsel %vm3979, %v3980, %v3976
        %v3982 = vadd.s32 %v3977, %v3981
        %v3983 = vadd.s32 %v3982, 536870912
        %v3984 = vshrl.u32 %v3983, 30
        %v3985 = vshll.u32 %v3984, 30
        %v3986 = vsub.s32 %v3982, %v3985
        %vm3987 = vcmp.lt.s32.totalorder %v3986, 0
        %v3988 = vsub.s32 0, %v3986
        %v3989 = vsel %vm3987, %v3988, %v3986
        %v3990 = vclz %v3989
        %v3991 = vsub.s32 %v3990, 2
        %vm3992 = vcmp.gt.s32.totalorder 0, %v3991
        %v3993 = vsel %vm3992, 0, %v3991
        %v3994 = vsub.s32 32, %v3993
        %v3995 = vshll.u32 %v3986, %v3993
        %v3996 = vshrl.u32 %v3978, %v3994
        %v3997 = vor.u32 %v3995, %v3996
        %v3998 = vsub.s32 4294967266, %v3993
        %v3999 = vadd.s32 %v3998, 127
        %v4000 = vshll.u32 %v3999, 23
        %v4001 = vor.u32 4788187, %v4000
        %v4002 = vand.u32 2147483647, %v4001
        %v4004 = vcvt.s32.f32 %v3997
        %v4005 = vmul.f32 %v4004, %v4002
        %v4006 = vxor.u32 %v4005, 2147483648
        %v4007 = vsel %vm3924, %v4006, %v4005
        %v4008 = vsub.s32 4, %v3984
        %v4009 = vsel %vm3924, %v4008, %v3984
        %v4010 = vsel %vm3923, %v697, %v4007
        %v4011 = vsel %vm3923, 0, %v4009
        %v4012 = vcosq.f32.pop %v4010
        %v4013 = vsinq.f32.pop %v4010
        %vm4014 = vweird.f32 %v697
        %v4015 = vadd.s32 %v4011, 3
        %v4016 = vand.u32 %v4015, 3
        %vm4017 = vcmp.lt.s32.totalorder %v4016, 2
        %vm4018 = vcmp.eq.s32.totalorder %v4016, 0
        %v4019 = vxor.u32 %v4013, 2147483648
        %v4020 = vsel %vm4018, %v4012, %v4019
        %vm4021 = vcmp.eq.s32.totalorder %v4016, 2
        %v4022 = vxor.u32 %v4012, 2147483648
        %v4023 = vsel %vm4021, %v4022, %v4013
        %v4024 = vsel %vm4017, %v4020, %v4023
        %v4025 = vsel %vm4014, nan, %v4024
        %v4026 = vand.u32 2147483647, %v666
        %vm4027 = vcmp.le.f32.partialorder %v4026, 0.7853982
        %vm4028 = vcmp.lt.s32.totalorder %v666, 0
        %v4029 = vand.u32 %v666, 2139095040
        %v4030 = vshrl.u32 %v4029, 23
        %v4031 = vsub.s32 %v4030, 127
        %v4032 = vand.u32 2147483647, %v666
        %v4033 = vand.u32 %v4032, 8388607
        %v4034 = vor.u32 %v4033, 8388608
        %v4035 = vsub.s32 0, %v4034
        %v4036 = vadd.s32 %v4031, 1
        %vm4037 = vcmp.gt.s32.totalorder %v4036, 0
        %v4038 = vsel %vm4037, %v4036, 0
        %v4039 = vshrl.u32 %v4038, 5
        %v4040 = vand.u32 %v4038, 31
        %v4041 = vsub.s32 32, %v4040
        %v4042 = vshrl.u32 683565275, %v4041
        %v4043 = vshll.u32 683565275, %v4040
        %v4044 = vshrl.u32 2475754826, %v4041
        %v4045 = vor.u32 %v4043, %v4044
        %v4046 = vshll.u32 2475754826, %v4040
        %v4047 = vshrl.u32 2131351028, %v4041
        %v4048 = vor.u32 %v4046, %v4047
        %v4049 = vshll.u32 2131351028, %v4040
        %v4050 = vshrl.u32 2102212464, %v4041
        %v4051 = vor.u32 %v4049, %v4050
        %v4052 = vshll.u32 2102212464, %v4040
        %v4053 = vshrl.u32 920167782, %v4041
        %v4054 = vor.u32 %v4052, %v4053
        %v4055 = vshll.u32 920167782, %v4040
        %v4056 = vshrl.u32 1326507024, %v4041
        %v4057 = vor.u32 %v4055, %v4056
        %vm4058 = vcmp.lt.s32.totalorder %v4039, 1
        %vm4059 = vcmp.lt.s32.totalorder %v4039, 2
        %vm4060 = vcmp.lt.s32.totalorder %v4039, 3
        %vm4061 = vcmp.lt.s32.totalorder %v4039, 4
        %v4062 = vsel %vm4058, %v4042, %v4045
        %v4063 = vsel %vm4061, %v4051, 2102212464
        %v4064 = vsel %vm4060, %v4048, %v4063
        %v4065 = vsel %vm4059, %v4062, %v4064
        %v4066 = vsel %vm4058, %v4045, %v4048
        %v4067 = vsel %vm4061, %v4054, 920167782
        %v4068 = vsel %vm4060, %v4051, %v4067
        %v4069 = vsel %vm4059, %v4066, %v4068
        %v4070 = vsel %vm4058, %v4048, %v4051
        %v4071 = vsel %vm4061, %v4057, 1326507024
        %v4072 = vsel %vm4060, %v4054, %v4071
        %v4073 = vsel %vm4059, %v4070, %v4072
        %v4074 = vshll.u32 %v4034, 8
        %v4075 = vmul.u32.u64.compose %v4074, %v4073
        %v4076 = vextract.low.u32 %v4075
        %v4077 = vextract.high.u32 %v4075
        %v4078 = vmul.u32.u64.compose %v4074, %v4069
        %v4079 = vextract.low.u32 %v4078
        %v4080 = vextract.high.u32 %v4078
        %v4081 = vmul.u32 %v4074, %v4065
        %v4082 = vadd.s32 %v4077, %v4079
        %vm4083 = vc.u32 %v4077, %v4079
        %v4084 = vadd.s32 %v4080, 1
        %v4085 = vsel %vm4083, %v4084, %v4080
        %v4086 = vadd.s32 %v4081, %v4085
        %v4087 = vadd.s32 %v4086, 536870912
        %v4088 = vshrl.u32 %v4087, 30
        %v4089 = vshll.u32 %v4088, 30
        %v4090 = vsub.s32 %v4086, %v4089
        %vm4091 = vcmp.lt.s32.totalorder %v4090, 0
        %v4092 = vsub.s32 0, %v4090
        %v4093 = vsel %vm4091, %v4092, %v4090
        %v4094 = vclz %v4093
        %v4095 = vsub.s32 %v4094, 2
        %vm4096 = vcmp.gt.s32.totalorder 0, %v4095
        %v4097 = vsel %vm4096, 0, %v4095
        %v4098 = vsub.s32 32, %v4097
        %v4099 = vshll.u32 %v4090, %v4097
        %v4100 = vshrl.u32 %v4082, %v4098
        %v4101 = vor.u32 %v4099, %v4100
        %v4102 = vsub.s32 4294967266, %v4097
        %v4103 = vadd.s32 %v4102, 127
        %v4104 = vshll.u32 %v4103, 23
        %v4105 = vor.u32 4788187, %v4104
        %v4106 = vand.u32 2147483647, %v4105
        %v4108 = vcvt.s32.f32 %v4101
        %v4109 = vmul.f32 %v4108, %v4106
        %v4110 = vxor.u32 %v4109, 2147483648
        %v4111 = vsel %vm4028, %v4110, %v4109
        %v4112 = vsub.s32 4, %v4088
        %v4113 = vsel %vm4028, %v4112, %v4088
        %v4114 = vsel %vm4027, %v666, %v4111
        %v4115 = vsel %vm4027, 0, %v4113
        %v4116 = vcosq.f32.pop %v4114
        %v4117 = vsinq.f32.pop %v4114
        %vm4118 = vweird.f32 %v666
        %v4119 = vand.u32 %v4115, 3
        %vm4120 = vcmp.lt.s32.totalorder %v4119, 2
        %vm4121 = vcmp.eq.s32.totalorder %v4119, 0
        %v4122 = vxor.u32 %v4117, 2147483648
        %v4123 = vsel %vm4121, %v4116, %v4122
        %vm4124 = vcmp.eq.s32.totalorder %v4119, 2
        %v4125 = vxor.u32 %v4116, 2147483648
        %v4126 = vsel %vm4124, %v4125, %v4117
        %v4127 = vsel %vm4120, %v4123, %v4126
        %v4128 = vsel %vm4118, nan, %v4127
        %v4129 = vand.u32 2147483647, %v667
        %vm4130 = vcmp.le.f32.partialorder %v4129, 0.7853982
        %vm4131 = vcmp.lt.s32.totalorder %v667, 0
        %v4132 = vand.u32 %v667, 2139095040
        %v4133 = vshrl.u32 %v4132, 23
        %v4134 = vsub.s32 %v4133, 127
        %v4135 = vand.u32 2147483647, %v667
        %v4136 = vand.u32 %v4135, 8388607
        %v4137 = vor.u32 %v4136, 8388608
        %v4138 = vsub.s32 0, %v4137
        %v4139 = vadd.s32 %v4134, 1
        %vm4140 = vcmp.gt.s32.totalorder %v4139, 0
        %v4141 = vsel %vm4140, %v4139, 0
        %v4142 = vshrl.u32 %v4141, 5
        %v4143 = vand.u32 %v4141, 31
        %v4144 = vsub.s32 32, %v4143
        %v4145 = vshrl.u32 683565275, %v4144
        %v4146 = vshll.u32 683565275, %v4143
        %v4147 = vshrl.u32 2475754826, %v4144
        %v4148 = vor.u32 %v4146, %v4147
        %v4149 = vshll.u32 2475754826, %v4143
        %v4150 = vshrl.u32 2131351028, %v4144
        %v4151 = vor.u32 %v4149, %v4150
        %v4152 = vshll.u32 2131351028, %v4143
        %v4153 = vshrl.u32 2102212464, %v4144
        %v4154 = vor.u32 %v4152, %v4153
        %v4155 = vshll.u32 2102212464, %v4143
        %v4156 = vshrl.u32 920167782, %v4144
        %v4157 = vor.u32 %v4155, %v4156
        %v4158 = vshll.u32 920167782, %v4143
        %v4159 = vshrl.u32 1326507024, %v4144
        %v4160 = vor.u32 %v4158, %v4159
        %vm4161 = vcmp.lt.s32.totalorder %v4142, 1
        %vm4162 = vcmp.lt.s32.totalorder %v4142, 2
        %vm4163 = vcmp.lt.s32.totalorder %v4142, 3
        %vm4164 = vcmp.lt.s32.totalorder %v4142, 4
        %v4165 = vsel %vm4161, %v4145, %v4148
        %v4166 = vsel %vm4164, %v4154, 2102212464
        %v4167 = vsel %vm4163, %v4151, %v4166
        %v4168 = vsel %vm4162, %v4165, %v4167
        %v4169 = vsel %vm4161, %v4148, %v4151
        %v4170 = vsel %vm4164, %v4157, 920167782
        %v4171 = vsel %vm4163, %v4154, %v4170
        %v4172 = vsel %vm4162, %v4169, %v4171
        %v4173 = vsel %vm4161, %v4151, %v4154
        %v4174 = vsel %vm4164, %v4160, 1326507024
        %v4175 = vsel %vm4163, %v4157, %v4174
        %v4176 = vsel %vm4162, %v4173, %v4175
        %v4177 = vshll.u32 %v4137, 8
        %v4178 = vmul.u32.u64.compose %v4177, %v4176
        %v4179 = vextract.low.u32 %v4178
        %v4180 = vextract.high.u32 %v4178
        %v4181 = vmul.u32.u64.compose %v4177, %v4172
        %v4182 = vextract.low.u32 %v4181
        %v4183 = vextract.high.u32 %v4181
        %v4184 = vmul.u32 %v4177, %v4168
        %v4185 = vadd.s32 %v4180, %v4182
        %vm4186 = vc.u32 %v4180, %v4182
        %v4187 = vadd.s32 %v4183, 1
        %v4188 = vsel %vm4186, %v4187, %v4183
        %v4189 = vadd.s32 %v4184, %v4188
        %v4190 = vadd.s32 %v4189, 536870912
        %v4191 = vshrl.u32 %v4190, 30
        %v4192 = vshll.u32 %v4191, 30
        %v4193 = vsub.s32 %v4189, %v4192
        %vm4194 = vcmp.lt.s32.totalorder %v4193, 0
        %v4195 = vsub.s32 0, %v4193
        %v4196 = vsel %vm4194, %v4195, %v4193
        %v4197 = vclz %v4196
        %v4198 = vsub.s32 %v4197, 2
        %vm4199 = vcmp.gt.s32.totalorder 0, %v4198
        %v4200 = vsel %vm4199, 0, %v4198
        %v4201 = vsub.s32 32, %v4200
        %v4202 = vshll.u32 %v4193, %v4200
        %v4203 = vshrl.u32 %v4185, %v4201
        %v4204 = vor.u32 %v4202, %v4203
        %v4205 = vsub.s32 4294967266, %v4200
        %v4206 = vadd.s32 %v4205, 127
        %v4207 = vshll.u32 %v4206, 23
        %v4208 = vor.u32 4788187, %v4207
        %v4209 = vand.u32 2147483647, %v4208
        %v4211 = vcvt.s32.f32 %v4204
        %v4212 = vmul.f32 %v4211, %v4209
        %v4213 = vxor.u32 %v4212, 2147483648
        %v4214 = vsel %vm4131, %v4213, %v4212
        %v4215 = vsub.s32 4, %v4191
        %v4216 = vsel %vm4131, %v4215, %v4191
        %v4217 = vsel %vm4130, %v667, %v4214
        %v4218 = vsel %vm4130, 0, %v4216
        %v4219 = vcosq.f32.pop %v4217
        %v4220 = vsinq.f32.pop %v4217
        %vm4221 = vweird.f32 %v667
        %v4222 = vand.u32 %v4218, 3
        %vm4223 = vcmp.lt.s32.totalorder %v4222, 2
        %vm4224 = vcmp.eq.s32.totalorder %v4222, 0
        %v4225 = vxor.u32 %v4220, 2147483648
        %v4226 = vsel %vm4224, %v4219, %v4225
        %vm4227 = vcmp.eq.s32.totalorder %v4222, 2
        %v4228 = vxor.u32 %v4219, 2147483648
        %v4229 = vsel %vm4227, %v4228, %v4220
        %v4230 = vsel %vm4223, %v4226, %v4229
        %v4231 = vsel %vm4221, nan, %v4230
        %v4232 = vand.u32 2147483647, %v668
        %vm4233 = vcmp.le.f32.partialorder %v4232, 0.7853982
        %vm4234 = vcmp.lt.s32.totalorder %v668, 0
        %v4235 = vand.u32 %v668, 2139095040
        %v4236 = vshrl.u32 %v4235, 23
        %v4237 = vsub.s32 %v4236, 127
        %v4238 = vand.u32 2147483647, %v668
        %v4239 = vand.u32 %v4238, 8388607
        %v4240 = vor.u32 %v4239, 8388608
        %v4241 = vsub.s32 0, %v4240
        %v4242 = vadd.s32 %v4237, 1
        %vm4243 = vcmp.gt.s32.totalorder %v4242, 0
        %v4244 = vsel %vm4243, %v4242, 0
        %v4245 = vshrl.u32 %v4244, 5
        %v4246 = vand.u32 %v4244, 31
        %v4247 = vsub.s32 32, %v4246
        %v4248 = vshrl.u32 683565275, %v4247
        %v4249 = vshll.u32 683565275, %v4246
        %v4250 = vshrl.u32 2475754826, %v4247
        %v4251 = vor.u32 %v4249, %v4250
        %v4252 = vshll.u32 2475754826, %v4246
        %v4253 = vshrl.u32 2131351028, %v4247
        %v4254 = vor.u32 %v4252, %v4253
        %v4255 = vshll.u32 2131351028, %v4246
        %v4256 = vshrl.u32 2102212464, %v4247
        %v4257 = vor.u32 %v4255, %v4256
        %v4258 = vshll.u32 2102212464, %v4246
        %v4259 = vshrl.u32 920167782, %v4247
        %v4260 = vor.u32 %v4258, %v4259
        %v4261 = vshll.u32 920167782, %v4246
        %v4262 = vshrl.u32 1326507024, %v4247
        %v4263 = vor.u32 %v4261, %v4262
        %vm4264 = vcmp.lt.s32.totalorder %v4245, 1
        %vm4265 = vcmp.lt.s32.totalorder %v4245, 2
        %vm4266 = vcmp.lt.s32.totalorder %v4245, 3
        %vm4267 = vcmp.lt.s32.totalorder %v4245, 4
        %v4268 = vsel %vm4264, %v4248, %v4251
        %v4269 = vsel %vm4267, %v4257, 2102212464
        %v4270 = vsel %vm4266, %v4254, %v4269
        %v4271 = vsel %vm4265, %v4268, %v4270
        %v4272 = vsel %vm4264, %v4251, %v4254
        %v4273 = vsel %vm4267, %v4260, 920167782
        %v4274 = vsel %vm4266, %v4257, %v4273
        %v4275 = vsel %vm4265, %v4272, %v4274
        %v4276 = vsel %vm4264, %v4254, %v4257
        %v4277 = vsel %vm4267, %v4263, 1326507024
        %v4278 = vsel %vm4266, %v4260, %v4277
        %v4279 = vsel %vm4265, %v4276, %v4278
        %v4280 = vshll.u32 %v4240, 8
        %v4281 = vmul.u32.u64.compose %v4280, %v4279
        %v4282 = vextract.low.u32 %v4281
        %v4283 = vextract.high.u32 %v4281
        %v4284 = vmul.u32.u64.compose %v4280, %v4275
        %v4285 = vextract.low.u32 %v4284
        %v4286 = vextract.high.u32 %v4284
        %v4287 = vmul.u32 %v4280, %v4271
        %v4288 = vadd.s32 %v4283, %v4285
        %vm4289 = vc.u32 %v4283, %v4285
        %v4290 = vadd.s32 %v4286, 1
        %v4291 = vsel %vm4289, %v4290, %v4286
        %v4292 = vadd.s32 %v4287, %v4291
        %v4293 = vadd.s32 %v4292, 536870912
        %v4294 = vshrl.u32 %v4293, 30
        %v4295 = vshll.u32 %v4294, 30
        %v4296 = vsub.s32 %v4292, %v4295
        %vm4297 = vcmp.lt.s32.totalorder %v4296, 0
        %v4298 = vsub.s32 0, %v4296
        %v4299 = vsel %vm4297, %v4298, %v4296
        %v4300 = vclz %v4299
        %v4301 = vsub.s32 %v4300, 2
        %vm4302 = vcmp.gt.s32.totalorder 0, %v4301
        %v4303 = vsel %vm4302, 0, %v4301
        %v4304 = vsub.s32 32, %v4303
        %v4305 = vshll.u32 %v4296, %v4303
        %v4306 = vshrl.u32 %v4288, %v4304
        %v4307 = vor.u32 %v4305, %v4306
        %v4308 = vsub.s32 4294967266, %v4303
        %v4309 = vadd.s32 %v4308, 127
        %v4310 = vshll.u32 %v4309, 23
        %v4311 = vor.u32 4788187, %v4310
        %v4312 = vand.u32 2147483647, %v4311
        %v4314 = vcvt.s32.f32 %v4307
        %v4315 = vmul.f32 %v4314, %v4312
        %v4316 = vxor.u32 %v4315, 2147483648
        %v4317 = vsel %vm4234, %v4316, %v4315
        %v4318 = vsub.s32 4, %v4294
        %v4319 = vsel %vm4234, %v4318, %v4294
        %v4320 = vsel %vm4233, %v668, %v4317
        %v4321 = vsel %vm4233, 0, %v4319
        %v4322 = vcosq.f32.pop %v4320
        %v4323 = vsinq.f32.pop %v4320
        %vm4324 = vweird.f32 %v668
        %v4325 = vand.u32 %v4321, 3
        %vm4326 = vcmp.lt.s32.totalorder %v4325, 2
        %vm4327 = vcmp.eq.s32.totalorder %v4325, 0
        %v4328 = vxor.u32 %v4323, 2147483648
        %v4329 = vsel %vm4327, %v4322, %v4328
        %vm4330 = vcmp.eq.s32.totalorder %v4325, 2
        %v4331 = vxor.u32 %v4322, 2147483648
        %v4332 = vsel %vm4330, %v4331, %v4323
        %v4333 = vsel %vm4326, %v4329, %v4332
        %v4334 = vsel %vm4324, nan, %v4333
        %v4335 = vand.u32 2147483647, %v669
        %vm4336 = vcmp.le.f32.partialorder %v4335, 0.7853982
        %vm4337 = vcmp.lt.s32.totalorder %v669, 0
        %v4338 = vand.u32 %v669, 2139095040
        %v4339 = vshrl.u32 %v4338, 23
        %v4340 = vsub.s32 %v4339, 127
        %v4341 = vand.u32 2147483647, %v669
        %v4342 = vand.u32 %v4341, 8388607
        %v4343 = vor.u32 %v4342, 8388608
        %v4344 = vsub.s32 0, %v4343
        %v4345 = vadd.s32 %v4340, 1
        %vm4346 = vcmp.gt.s32.totalorder %v4345, 0
        %v4347 = vsel %vm4346, %v4345, 0
        %v4348 = vshrl.u32 %v4347, 5
        %v4349 = vand.u32 %v4347, 31
        %v4350 = vsub.s32 32, %v4349
        %v4351 = vshrl.u32 683565275, %v4350
        %v4352 = vshll.u32 683565275, %v4349
        %v4353 = vshrl.u32 2475754826, %v4350
        %v4354 = vor.u32 %v4352, %v4353
        %v4355 = vshll.u32 2475754826, %v4349
        %v4356 = vshrl.u32 2131351028, %v4350
        %v4357 = vor.u32 %v4355, %v4356
        %v4358 = vshll.u32 2131351028, %v4349
        %v4359 = vshrl.u32 2102212464, %v4350
        %v4360 = vor.u32 %v4358, %v4359
        %v4361 = vshll.u32 2102212464, %v4349
        %v4362 = vshrl.u32 920167782, %v4350
        %v4363 = vor.u32 %v4361, %v4362
        %v4364 = vshll.u32 920167782, %v4349
        %v4365 = vshrl.u32 1326507024, %v4350
        %v4366 = vor.u32 %v4364, %v4365
        %vm4367 = vcmp.lt.s32.totalorder %v4348, 1
        %vm4368 = vcmp.lt.s32.totalorder %v4348, 2
        %vm4369 = vcmp.lt.s32.totalorder %v4348, 3
        %vm4370 = vcmp.lt.s32.totalorder %v4348, 4
        %v4371 = vsel %vm4367, %v4351, %v4354
        %v4372 = vsel %vm4370, %v4360, 2102212464
        %v4373 = vsel %vm4369, %v4357, %v4372
        %v4374 = vsel %vm4368, %v4371, %v4373
        %v4375 = vsel %vm4367, %v4354, %v4357
        %v4376 = vsel %vm4370, %v4363, 920167782
        %v4377 = vsel %vm4369, %v4360, %v4376
        %v4378 = vsel %vm4368, %v4375, %v4377
        %v4379 = vsel %vm4367, %v4357, %v4360
        %v4380 = vsel %vm4370, %v4366, 1326507024
        %v4381 = vsel %vm4369, %v4363, %v4380
        %v4382 = vsel %vm4368, %v4379, %v4381
        %v4383 = vshll.u32 %v4343, 8
        %v4384 = vmul.u32.u64.compose %v4383, %v4382
        %v4385 = vextract.low.u32 %v4384
        %v4386 = vextract.high.u32 %v4384
        %v4387 = vmul.u32.u64.compose %v4383, %v4378
        %v4388 = vextract.low.u32 %v4387
        %v4389 = vextract.high.u32 %v4387
        %v4390 = vmul.u32 %v4383, %v4374
        %v4391 = vadd.s32 %v4386, %v4388
        %vm4392 = vc.u32 %v4386, %v4388
        %v4393 = vadd.s32 %v4389, 1
        %v4394 = vsel %vm4392, %v4393, %v4389
        %v4395 = vadd.s32 %v4390, %v4394
        %v4396 = vadd.s32 %v4395, 536870912
        %v4397 = vshrl.u32 %v4396, 30
        %v4398 = vshll.u32 %v4397, 30
        %v4399 = vsub.s32 %v4395, %v4398
        %vm4400 = vcmp.lt.s32.totalorder %v4399, 0
        %v4401 = vsub.s32 0, %v4399
        %v4402 = vsel %vm4400, %v4401, %v4399
        %v4403 = vclz %v4402
        %v4404 = vsub.s32 %v4403, 2
        %vm4405 = vcmp.gt.s32.totalorder 0, %v4404
        %v4406 = vsel %vm4405, 0, %v4404
        %v4407 = vsub.s32 32, %v4406
        %v4408 = vshll.u32 %v4399, %v4406
        %v4409 = vshrl.u32 %v4391, %v4407
        %v4410 = vor.u32 %v4408, %v4409
        %v4411 = vsub.s32 4294967266, %v4406
        %v4412 = vadd.s32 %v4411, 127
        %v4413 = vshll.u32 %v4412, 23
        %v4414 = vor.u32 4788187, %v4413
        %v4415 = vand.u32 2147483647, %v4414
        %v4417 = vcvt.s32.f32 %v4410
        %v4418 = vmul.f32 %v4417, %v4415
        %v4419 = vxor.u32 %v4418, 2147483648
        %v4420 = vsel %vm4337, %v4419, %v4418
        %v4421 = vsub.s32 4, %v4397
        %v4422 = vsel %vm4337, %v4421, %v4397
        %v4423 = vsel %vm4336, %v669, %v4420
        %v4424 = vsel %vm4336, 0, %v4422
        %v4425 = vcosq.f32.pop %v4423
        %v4426 = vsinq.f32.pop %v4423
        %vm4427 = vweird.f32 %v669
        %v4428 = vand.u32 %v4424, 3
        %vm4429 = vcmp.lt.s32.totalorder %v4428, 2
        %vm4430 = vcmp.eq.s32.totalorder %v4428, 0
        %v4431 = vxor.u32 %v4426, 2147483648
        %v4432 = vsel %vm4430, %v4425, %v4431
        %vm4433 = vcmp.eq.s32.totalorder %v4428, 2
        %v4434 = vxor.u32 %v4425, 2147483648
        %v4435 = vsel %vm4433, %v4434, %v4426
        %v4436 = vsel %vm4429, %v4432, %v4435
        %v4437 = vsel %vm4427, nan, %v4436
        %v4438 = vand.u32 2147483647, %v670
        %vm4439 = vcmp.le.f32.partialorder %v4438, 0.7853982
        %vm4440 = vcmp.lt.s32.totalorder %v670, 0
        %v4441 = vand.u32 %v670, 2139095040
        %v4442 = vshrl.u32 %v4441, 23
        %v4443 = vsub.s32 %v4442, 127
        %v4444 = vand.u32 2147483647, %v670
        %v4445 = vand.u32 %v4444, 8388607
        %v4446 = vor.u32 %v4445, 8388608
        %v4447 = vsub.s32 0, %v4446
        %v4448 = vadd.s32 %v4443, 1
        %vm4449 = vcmp.gt.s32.totalorder %v4448, 0
        %v4450 = vsel %vm4449, %v4448, 0
        %v4451 = vshrl.u32 %v4450, 5
        %v4452 = vand.u32 %v4450, 31
        %v4453 = vsub.s32 32, %v4452
        %v4454 = vshrl.u32 683565275, %v4453
        %v4455 = vshll.u32 683565275, %v4452
        %v4456 = vshrl.u32 2475754826, %v4453
        %v4457 = vor.u32 %v4455, %v4456
        %v4458 = vshll.u32 2475754826, %v4452
        %v4459 = vshrl.u32 2131351028, %v4453
        %v4460 = vor.u32 %v4458, %v4459
        %v4461 = vshll.u32 2131351028, %v4452
        %v4462 = vshrl.u32 2102212464, %v4453
        %v4463 = vor.u32 %v4461, %v4462
        %v4464 = vshll.u32 2102212464, %v4452
        %v4465 = vshrl.u32 920167782, %v4453
        %v4466 = vor.u32 %v4464, %v4465
        %v4467 = vshll.u32 920167782, %v4452
        %v4468 = vshrl.u32 1326507024, %v4453
        %v4469 = vor.u32 %v4467, %v4468
        %vm4470 = vcmp.lt.s32.totalorder %v4451, 1
        %vm4471 = vcmp.lt.s32.totalorder %v4451, 2
        %vm4472 = vcmp.lt.s32.totalorder %v4451, 3
        %vm4473 = vcmp.lt.s32.totalorder %v4451, 4
        %v4474 = vsel %vm4470, %v4454, %v4457
        %v4475 = vsel %vm4473, %v4463, 2102212464
        %v4476 = vsel %vm4472, %v4460, %v4475
        %v4477 = vsel %vm4471, %v4474, %v4476
        %v4478 = vsel %vm4470, %v4457, %v4460
        %v4479 = vsel %vm4473, %v4466, 920167782
        %v4480 = vsel %vm4472, %v4463, %v4479
        %v4481 = vsel %vm4471, %v4478, %v4480
        %v4482 = vsel %vm4470, %v4460, %v4463
        %v4483 = vsel %vm4473, %v4469, 1326507024
        %v4484 = vsel %vm4472, %v4466, %v4483
        %v4485 = vsel %vm4471, %v4482, %v4484
        %v4486 = vshll.u32 %v4446, 8
        %v4487 = vmul.u32.u64.compose %v4486, %v4485
        %v4488 = vextract.low.u32 %v4487
        %v4489 = vextract.high.u32 %v4487
        %v4490 = vmul.u32.u64.compose %v4486, %v4481
        %v4491 = vextract.low.u32 %v4490
        %v4492 = vextract.high.u32 %v4490
        %v4493 = vmul.u32 %v4486, %v4477
        %v4494 = vadd.s32 %v4489, %v4491
        %vm4495 = vc.u32 %v4489, %v4491
        %v4496 = vadd.s32 %v4492, 1
        %v4497 = vsel %vm4495, %v4496, %v4492
        %v4498 = vadd.s32 %v4493, %v4497
        %v4499 = vadd.s32 %v4498, 536870912
        %v4500 = vshrl.u32 %v4499, 30
        %v4501 = vshll.u32 %v4500, 30
        %v4502 = vsub.s32 %v4498, %v4501
        %vm4503 = vcmp.lt.s32.totalorder %v4502, 0
        %v4504 = vsub.s32 0, %v4502
        %v4505 = vsel %vm4503, %v4504, %v4502
        %v4506 = vclz %v4505
        %v4507 = vsub.s32 %v4506, 2
        %vm4508 = vcmp.gt.s32.totalorder 0, %v4507
        %v4509 = vsel %vm4508, 0, %v4507
        %v4510 = vsub.s32 32, %v4509
        %v4511 = vshll.u32 %v4502, %v4509
        %v4512 = vshrl.u32 %v4494, %v4510
        %v4513 = vor.u32 %v4511, %v4512
        %v4514 = vsub.s32 4294967266, %v4509
        %v4515 = vadd.s32 %v4514, 127
        %v4516 = vshll.u32 %v4515, 23
        %v4517 = vor.u32 4788187, %v4516
        %v4518 = vand.u32 2147483647, %v4517
        %v4520 = vcvt.s32.f32 %v4513
        %v4521 = vmul.f32 %v4520, %v4518
        %v4522 = vxor.u32 %v4521, 2147483648
        %v4523 = vsel %vm4440, %v4522, %v4521
        %v4524 = vsub.s32 4, %v4500
        %v4525 = vsel %vm4440, %v4524, %v4500
        %v4526 = vsel %vm4439, %v670, %v4523
        %v4527 = vsel %vm4439, 0, %v4525
        %v4528 = vcosq.f32.pop %v4526
        %v4529 = vsinq.f32.pop %v4526
        %vm4530 = vweird.f32 %v670
        %v4531 = vand.u32 %v4527, 3
        %vm4532 = vcmp.lt.s32.totalorder %v4531, 2
        %vm4533 = vcmp.eq.s32.totalorder %v4531, 0
        %v4534 = vxor.u32 %v4529, 2147483648
        %v4535 = vsel %vm4533, %v4528, %v4534
        %vm4536 = vcmp.eq.s32.totalorder %v4531, 2
        %v4537 = vxor.u32 %v4528, 2147483648
        %v4538 = vsel %vm4536, %v4537, %v4529
        %v4539 = vsel %vm4532, %v4535, %v4538
        %v4540 = vsel %vm4530, nan, %v4539
        %v4541 = vand.u32 2147483647, %v671
        %vm4542 = vcmp.le.f32.partialorder %v4541, 0.7853982
        %vm4543 = vcmp.lt.s32.totalorder %v671, 0
        %v4544 = vand.u32 %v671, 2139095040
        %v4545 = vshrl.u32 %v4544, 23
        %v4546 = vsub.s32 %v4545, 127
        %v4547 = vand.u32 2147483647, %v671
        %v4548 = vand.u32 %v4547, 8388607
        %v4549 = vor.u32 %v4548, 8388608
        %v4550 = vsub.s32 0, %v4549
        %v4551 = vadd.s32 %v4546, 1
        %vm4552 = vcmp.gt.s32.totalorder %v4551, 0
        %v4553 = vsel %vm4552, %v4551, 0
        %v4554 = vshrl.u32 %v4553, 5
        %v4555 = vand.u32 %v4553, 31
        %v4556 = vsub.s32 32, %v4555
        %v4557 = vshrl.u32 683565275, %v4556
        %v4558 = vshll.u32 683565275, %v4555
        %v4559 = vshrl.u32 2475754826, %v4556
        %v4560 = vor.u32 %v4558, %v4559
        %v4561 = vshll.u32 2475754826, %v4555
        %v4562 = vshrl.u32 2131351028, %v4556
        %v4563 = vor.u32 %v4561, %v4562
        %v4564 = vshll.u32 2131351028, %v4555
        %v4565 = vshrl.u32 2102212464, %v4556
        %v4566 = vor.u32 %v4564, %v4565
        %v4567 = vshll.u32 2102212464, %v4555
        %v4568 = vshrl.u32 920167782, %v4556
        %v4569 = vor.u32 %v4567, %v4568
        %v4570 = vshll.u32 920167782, %v4555
        %v4571 = vshrl.u32 1326507024, %v4556
        %v4572 = vor.u32 %v4570, %v4571
        %vm4573 = vcmp.lt.s32.totalorder %v4554, 1
        %vm4574 = vcmp.lt.s32.totalorder %v4554, 2
        %vm4575 = vcmp.lt.s32.totalorder %v4554, 3
        %vm4576 = vcmp.lt.s32.totalorder %v4554, 4
        %v4577 = vsel %vm4573, %v4557, %v4560
        %v4578 = vsel %vm4576, %v4566, 2102212464
        %v4579 = vsel %vm4575, %v4563, %v4578
        %v4580 = vsel %vm4574, %v4577, %v4579
        %v4581 = vsel %vm4573, %v4560, %v4563
        %v4582 = vsel %vm4576, %v4569, 920167782
        %v4583 = vsel %vm4575, %v4566, %v4582
        %v4584 = vsel %vm4574, %v4581, %v4583
        %v4585 = vsel %vm4573, %v4563, %v4566
        %v4586 = vsel %vm4576, %v4572, 1326507024
        %v4587 = vsel %vm4575, %v4569, %v4586
        %v4588 = vsel %vm4574, %v4585, %v4587
        %v4589 = vshll.u32 %v4549, 8
        %v4590 = vmul.u32.u64.compose %v4589, %v4588
        %v4591 = vextract.low.u32 %v4590
        %v4592 = vextract.high.u32 %v4590
        %v4593 = vmul.u32.u64.compose %v4589, %v4584
        %v4594 = vextract.low.u32 %v4593
        %v4595 = vextract.high.u32 %v4593
        %v4596 = vmul.u32 %v4589, %v4580
        %v4597 = vadd.s32 %v4592, %v4594
        %vm4598 = vc.u32 %v4592, %v4594
        %v4599 = vadd.s32 %v4595, 1
        %v4600 = vsel %vm4598, %v4599, %v4595
        %v4601 = vadd.s32 %v4596, %v4600
        %v4602 = vadd.s32 %v4601, 536870912
        %v4603 = vshrl.u32 %v4602, 30
        %v4604 = vshll.u32 %v4603, 30
        %v4605 = vsub.s32 %v4601, %v4604
        %vm4606 = vcmp.lt.s32.totalorder %v4605, 0
        %v4607 = vsub.s32 0, %v4605
        %v4608 = vsel %vm4606, %v4607, %v4605
        %v4609 = vclz %v4608
        %v4610 = vsub.s32 %v4609, 2
        %vm4611 = vcmp.gt.s32.totalorder 0, %v4610
        %v4612 = vsel %vm4611, 0, %v4610
        %v4613 = vsub.s32 32, %v4612
        %v4614 = vshll.u32 %v4605, %v4612
        %v4615 = vshrl.u32 %v4597, %v4613
        %v4616 = vor.u32 %v4614, %v4615
        %v4617 = vsub.s32 4294967266, %v4612
        %v4618 = vadd.s32 %v4617, 127
        %v4619 = vshll.u32 %v4618, 23
        %v4620 = vor.u32 4788187, %v4619
        %v4621 = vand.u32 2147483647, %v4620
        %v4623 = vcvt.s32.f32 %v4616
        %v4624 = vmul.f32 %v4623, %v4621
        %v4625 = vxor.u32 %v4624, 2147483648
        %v4626 = vsel %vm4543, %v4625, %v4624
        %v4627 = vsub.s32 4, %v4603
        %v4628 = vsel %vm4543, %v4627, %v4603
        %v4629 = vsel %vm4542, %v671, %v4626
        %v4630 = vsel %vm4542, 0, %v4628
        %v4631 = vcosq.f32.pop %v4629
        %v4632 = vsinq.f32.pop %v4629
        %vm4633 = vweird.f32 %v671
        %v4634 = vand.u32 %v4630, 3
        %vm4635 = vcmp.lt.s32.totalorder %v4634, 2
        %vm4636 = vcmp.eq.s32.totalorder %v4634, 0
        %v4637 = vxor.u32 %v4632, 2147483648
        %v4638 = vsel %vm4636, %v4631, %v4637
        %vm4639 = vcmp.eq.s32.totalorder %v4634, 2
        %v4640 = vxor.u32 %v4631, 2147483648
        %v4641 = vsel %vm4639, %v4640, %v4632
        %v4642 = vsel %vm4635, %v4638, %v4641
        %v4643 = vsel %vm4633, nan, %v4642
        %v4644 = vand.u32 2147483647, %v672
        %vm4645 = vcmp.le.f32.partialorder %v4644, 0.7853982
        %vm4646 = vcmp.lt.s32.totalorder %v672, 0
        %v4647 = vand.u32 %v672, 2139095040
        %v4648 = vshrl.u32 %v4647, 23
        %v4649 = vsub.s32 %v4648, 127
        %v4650 = vand.u32 2147483647, %v672
        %v4651 = vand.u32 %v4650, 8388607
        %v4652 = vor.u32 %v4651, 8388608
        %v4653 = vsub.s32 0, %v4652
        %v4654 = vadd.s32 %v4649, 1
        %vm4655 = vcmp.gt.s32.totalorder %v4654, 0
        %v4656 = vsel %vm4655, %v4654, 0
        %v4657 = vshrl.u32 %v4656, 5
        %v4658 = vand.u32 %v4656, 31
        %v4659 = vsub.s32 32, %v4658
        %v4660 = vshrl.u32 683565275, %v4659
        %v4661 = vshll.u32 683565275, %v4658
        %v4662 = vshrl.u32 2475754826, %v4659
        %v4663 = vor.u32 %v4661, %v4662
        %v4664 = vshll.u32 2475754826, %v4658
        %v4665 = vshrl.u32 2131351028, %v4659
        %v4666 = vor.u32 %v4664, %v4665
        %v4667 = vshll.u32 2131351028, %v4658
        %v4668 = vshrl.u32 2102212464, %v4659
        %v4669 = vor.u32 %v4667, %v4668
        %v4670 = vshll.u32 2102212464, %v4658
        %v4671 = vshrl.u32 920167782, %v4659
        %v4672 = vor.u32 %v4670, %v4671
        %v4673 = vshll.u32 920167782, %v4658
        %v4674 = vshrl.u32 1326507024, %v4659
        %v4675 = vor.u32 %v4673, %v4674
        %vm4676 = vcmp.lt.s32.totalorder %v4657, 1
        %vm4677 = vcmp.lt.s32.totalorder %v4657, 2
        %vm4678 = vcmp.lt.s32.totalorder %v4657, 3
        %vm4679 = vcmp.lt.s32.totalorder %v4657, 4
        %v4680 = vsel %vm4676, %v4660, %v4663
        %v4681 = vsel %vm4679, %v4669, 2102212464
        %v4682 = vsel %vm4678, %v4666, %v4681
        %v4683 = vsel %vm4677, %v4680, %v4682
        %v4684 = vsel %vm4676, %v4663, %v4666
        %v4685 = vsel %vm4679, %v4672, 920167782
        %v4686 = vsel %vm4678, %v4669, %v4685
        %v4687 = vsel %vm4677, %v4684, %v4686
        %v4688 = vsel %vm4676, %v4666, %v4669
        %v4689 = vsel %vm4679, %v4675, 1326507024
        %v4690 = vsel %vm4678, %v4672, %v4689
        %v4691 = vsel %vm4677, %v4688, %v4690
        %v4692 = vshll.u32 %v4652, 8
        %v4693 = vmul.u32.u64.compose %v4692, %v4691
        %v4694 = vextract.low.u32 %v4693
        %v4695 = vextract.high.u32 %v4693
        %v4696 = vmul.u32.u64.compose %v4692, %v4687
        %v4697 = vextract.low.u32 %v4696
        %v4698 = vextract.high.u32 %v4696
        %v4699 = vmul.u32 %v4692, %v4683
        %v4700 = vadd.s32 %v4695, %v4697
        %vm4701 = vc.u32 %v4695, %v4697
        %v4702 = vadd.s32 %v4698, 1
        %v4703 = vsel %vm4701, %v4702, %v4698
        %v4704 = vadd.s32 %v4699, %v4703
        %v4705 = vadd.s32 %v4704, 536870912
        %v4706 = vshrl.u32 %v4705, 30
        %v4707 = vshll.u32 %v4706, 30
        %v4708 = vsub.s32 %v4704, %v4707
        %vm4709 = vcmp.lt.s32.totalorder %v4708, 0
        %v4710 = vsub.s32 0, %v4708
        %v4711 = vsel %vm4709, %v4710, %v4708
        %v4712 = vclz %v4711
        %v4713 = vsub.s32 %v4712, 2
        %vm4714 = vcmp.gt.s32.totalorder 0, %v4713
        %v4715 = vsel %vm4714, 0, %v4713
        %v4716 = vsub.s32 32, %v4715
        %v4717 = vshll.u32 %v4708, %v4715
        %v4718 = vshrl.u32 %v4700, %v4716
        %v4719 = vor.u32 %v4717, %v4718
        %v4720 = vsub.s32 4294967266, %v4715
        %v4721 = vadd.s32 %v4720, 127
        %v4722 = vshll.u32 %v4721, 23
        %v4723 = vor.u32 4788187, %v4722
        %v4724 = vand.u32 2147483647, %v4723
        %v4726 = vcvt.s32.f32 %v4719
        %v4727 = vmul.f32 %v4726, %v4724
        %v4728 = vxor.u32 %v4727, 2147483648
        %v4729 = vsel %vm4646, %v4728, %v4727
        %v4730 = vsub.s32 4, %v4706
        %v4731 = vsel %vm4646, %v4730, %v4706
        %v4732 = vsel %vm4645, %v672, %v4729
        %v4733 = vsel %vm4645, 0, %v4731
        %v4734 = vcosq.f32.pop %v4732
        %v4735 = vsinq.f32.pop %v4732
        %vm4736 = vweird.f32 %v672
        %v4737 = vand.u32 %v4733, 3
        %vm4738 = vcmp.lt.s32.totalorder %v4737, 2
        %vm4739 = vcmp.eq.s32.totalorder %v4737, 0
        %v4740 = vxor.u32 %v4735, 2147483648
        %v4741 = vsel %vm4739, %v4734, %v4740
        %vm4742 = vcmp.eq.s32.totalorder %v4737, 2
        %v4743 = vxor.u32 %v4734, 2147483648
        %v4744 = vsel %vm4742, %v4743, %v4735
        %v4745 = vsel %vm4738, %v4741, %v4744
        %v4746 = vsel %vm4736, nan, %v4745
        %v4747 = vand.u32 2147483647, %v673
        %vm4748 = vcmp.le.f32.partialorder %v4747, 0.7853982
        %vm4749 = vcmp.lt.s32.totalorder %v673, 0
        %v4750 = vand.u32 %v673, 2139095040
        %v4751 = vshrl.u32 %v4750, 23
        %v4752 = vsub.s32 %v4751, 127
        %v4753 = vand.u32 2147483647, %v673
        %v4754 = vand.u32 %v4753, 8388607
        %v4755 = vor.u32 %v4754, 8388608
        %v4756 = vsub.s32 0, %v4755
        %v4757 = vadd.s32 %v4752, 1
        %vm4758 = vcmp.gt.s32.totalorder %v4757, 0
        %v4759 = vsel %vm4758, %v4757, 0
        %v4760 = vshrl.u32 %v4759, 5
        %v4761 = vand.u32 %v4759, 31
        %v4762 = vsub.s32 32, %v4761
        %v4763 = vshrl.u32 683565275, %v4762
        %v4764 = vshll.u32 683565275, %v4761
        %v4765 = vshrl.u32 2475754826, %v4762
        %v4766 = vor.u32 %v4764, %v4765
        %v4767 = vshll.u32 2475754826, %v4761
        %v4768 = vshrl.u32 2131351028, %v4762
        %v4769 = vor.u32 %v4767, %v4768
        %v4770 = vshll.u32 2131351028, %v4761
        %v4771 = vshrl.u32 2102212464, %v4762
        %v4772 = vor.u32 %v4770, %v4771
        %v4773 = vshll.u32 2102212464, %v4761
        %v4774 = vshrl.u32 920167782, %v4762
        %v4775 = vor.u32 %v4773, %v4774
        %v4776 = vshll.u32 920167782, %v4761
        %v4777 = vshrl.u32 1326507024, %v4762
        %v4778 = vor.u32 %v4776, %v4777
        %vm4779 = vcmp.lt.s32.totalorder %v4760, 1
        %vm4780 = vcmp.lt.s32.totalorder %v4760, 2
        %vm4781 = vcmp.lt.s32.totalorder %v4760, 3
        %vm4782 = vcmp.lt.s32.totalorder %v4760, 4
        %v4783 = vsel %vm4779, %v4763, %v4766
        %v4784 = vsel %vm4782, %v4772, 2102212464
        %v4785 = vsel %vm4781, %v4769, %v4784
        %v4786 = vsel %vm4780, %v4783, %v4785
        %v4787 = vsel %vm4779, %v4766, %v4769
        %v4788 = vsel %vm4782, %v4775, 920167782
        %v4789 = vsel %vm4781, %v4772, %v4788
        %v4790 = vsel %vm4780, %v4787, %v4789
        %v4791 = vsel %vm4779, %v4769, %v4772
        %v4792 = vsel %vm4782, %v4778, 1326507024
        %v4793 = vsel %vm4781, %v4775, %v4792
        %v4794 = vsel %vm4780, %v4791, %v4793
        %v4795 = vshll.u32 %v4755, 8
        %v4796 = vmul.u32.u64.compose %v4795, %v4794
        %v4797 = vextract.low.u32 %v4796
        %v4798 = vextract.high.u32 %v4796
        %v4799 = vmul.u32.u64.compose %v4795, %v4790
        %v4800 = vextract.low.u32 %v4799
        %v4801 = vextract.high.u32 %v4799
        %v4802 = vmul.u32 %v4795, %v4786
        %v4803 = vadd.s32 %v4798, %v4800
        %vm4804 = vc.u32 %v4798, %v4800
        %v4805 = vadd.s32 %v4801, 1
        %v4806 = vsel %vm4804, %v4805, %v4801
        %v4807 = vadd.s32 %v4802, %v4806
        %v4808 = vadd.s32 %v4807, 536870912
        %v4809 = vshrl.u32 %v4808, 30
        %v4810 = vshll.u32 %v4809, 30
        %v4811 = vsub.s32 %v4807, %v4810
        %vm4812 = vcmp.lt.s32.totalorder %v4811, 0
        %v4813 = vsub.s32 0, %v4811
        %v4814 = vsel %vm4812, %v4813, %v4811
        %v4815 = vclz %v4814
        %v4816 = vsub.s32 %v4815, 2
        %vm4817 = vcmp.gt.s32.totalorder 0, %v4816
        %v4818 = vsel %vm4817, 0, %v4816
        %v4819 = vsub.s32 32, %v4818
        %v4820 = vshll.u32 %v4811, %v4818
        %v4821 = vshrl.u32 %v4803, %v4819
        %v4822 = vor.u32 %v4820, %v4821
        %v4823 = vsub.s32 4294967266, %v4818
        %v4824 = vadd.s32 %v4823, 127
        %v4825 = vshll.u32 %v4824, 23
        %v4826 = vor.u32 4788187, %v4825
        %v4827 = vand.u32 2147483647, %v4826
        %v4829 = vcvt.s32.f32 %v4822
        %v4830 = vmul.f32 %v4829, %v4827
        %v4831 = vxor.u32 %v4830, 2147483648
        %v4832 = vsel %vm4749, %v4831, %v4830
        %v4833 = vsub.s32 4, %v4809
        %v4834 = vsel %vm4749, %v4833, %v4809
        %v4835 = vsel %vm4748, %v673, %v4832
        %v4836 = vsel %vm4748, 0, %v4834
        %v4837 = vcosq.f32.pop %v4835
        %v4838 = vsinq.f32.pop %v4835
        %vm4839 = vweird.f32 %v673
        %v4840 = vand.u32 %v4836, 3
        %vm4841 = vcmp.lt.s32.totalorder %v4840, 2
        %vm4842 = vcmp.eq.s32.totalorder %v4840, 0
        %v4843 = vxor.u32 %v4838, 2147483648
        %v4844 = vsel %vm4842, %v4837, %v4843
        %vm4845 = vcmp.eq.s32.totalorder %v4840, 2
        %v4846 = vxor.u32 %v4837, 2147483648
        %v4847 = vsel %vm4845, %v4846, %v4838
        %v4848 = vsel %vm4841, %v4844, %v4847
        %v4849 = vsel %vm4839, nan, %v4848
        %v4850 = vand.u32 2147483647, %v674
        %vm4851 = vcmp.le.f32.partialorder %v4850, 0.7853982
        %vm4852 = vcmp.lt.s32.totalorder %v674, 0
        %v4853 = vand.u32 %v674, 2139095040
        %v4854 = vshrl.u32 %v4853, 23
        %v4855 = vsub.s32 %v4854, 127
        %v4856 = vand.u32 2147483647, %v674
        %v4857 = vand.u32 %v4856, 8388607
        %v4858 = vor.u32 %v4857, 8388608
        %v4859 = vsub.s32 0, %v4858
        %v4860 = vadd.s32 %v4855, 1
        %vm4861 = vcmp.gt.s32.totalorder %v4860, 0
        %v4862 = vsel %vm4861, %v4860, 0
        %v4863 = vshrl.u32 %v4862, 5
        %v4864 = vand.u32 %v4862, 31
        %v4865 = vsub.s32 32, %v4864
        %v4866 = vshrl.u32 683565275, %v4865
        %v4867 = vshll.u32 683565275, %v4864
        %v4868 = vshrl.u32 2475754826, %v4865
        %v4869 = vor.u32 %v4867, %v4868
        %v4870 = vshll.u32 2475754826, %v4864
        %v4871 = vshrl.u32 2131351028, %v4865
        %v4872 = vor.u32 %v4870, %v4871
        %v4873 = vshll.u32 2131351028, %v4864
        %v4874 = vshrl.u32 2102212464, %v4865
        %v4875 = vor.u32 %v4873, %v4874
        %v4876 = vshll.u32 2102212464, %v4864
        %v4877 = vshrl.u32 920167782, %v4865
        %v4878 = vor.u32 %v4876, %v4877
        %v4879 = vshll.u32 920167782, %v4864
        %v4880 = vshrl.u32 1326507024, %v4865
        %v4881 = vor.u32 %v4879, %v4880
        %vm4882 = vcmp.lt.s32.totalorder %v4863, 1
        %vm4883 = vcmp.lt.s32.totalorder %v4863, 2
        %vm4884 = vcmp.lt.s32.totalorder %v4863, 3
        %vm4885 = vcmp.lt.s32.totalorder %v4863, 4
        %v4886 = vsel %vm4882, %v4866, %v4869
        %v4887 = vsel %vm4885, %v4875, 2102212464
        %v4888 = vsel %vm4884, %v4872, %v4887
        %v4889 = vsel %vm4883, %v4886, %v4888
        %v4890 = vsel %vm4882, %v4869, %v4872
        %v4891 = vsel %vm4885, %v4878, 920167782
        %v4892 = vsel %vm4884, %v4875, %v4891
        %v4893 = vsel %vm4883, %v4890, %v4892
        %v4894 = vsel %vm4882, %v4872, %v4875
        %v4895 = vsel %vm4885, %v4881, 1326507024
        %v4896 = vsel %vm4884, %v4878, %v4895
        %v4897 = vsel %vm4883, %v4894, %v4896
        %v4898 = vshll.u32 %v4858, 8
        %v4899 = vmul.u32.u64.compose %v4898, %v4897
        %v4900 = vextract.low.u32 %v4899
        %v4901 = vextract.high.u32 %v4899
        %v4902 = vmul.u32.u64.compose %v4898, %v4893
        %v4903 = vextract.low.u32 %v4902
        %v4904 = vextract.high.u32 %v4902
        %v4905 = vmul.u32 %v4898, %v4889
        %v4906 = vadd.s32 %v4901, %v4903
        %vm4907 = vc.u32 %v4901, %v4903
        %v4908 = vadd.s32 %v4904, 1
        %v4909 = vsel %vm4907, %v4908, %v4904
        %v4910 = vadd.s32 %v4905, %v4909
        %v4911 = vadd.s32 %v4910, 536870912
        %v4912 = vshrl.u32 %v4911, 30
        %v4913 = vshll.u32 %v4912, 30
        %v4914 = vsub.s32 %v4910, %v4913
        %vm4915 = vcmp.lt.s32.totalorder %v4914, 0
        %v4916 = vsub.s32 0, %v4914
        %v4917 = vsel %vm4915, %v4916, %v4914
        %v4918 = vclz %v4917
        %v4919 = vsub.s32 %v4918, 2
        %vm4920 = vcmp.gt.s32.totalorder 0, %v4919
        %v4921 = vsel %vm4920, 0, %v4919
        %v4922 = vsub.s32 32, %v4921
        %v4923 = vshll.u32 %v4914, %v4921
        %v4924 = vshrl.u32 %v4906, %v4922
        %v4925 = vor.u32 %v4923, %v4924
        %v4926 = vsub.s32 4294967266, %v4921
        %v4927 = vadd.s32 %v4926, 127
        %v4928 = vshll.u32 %v4927, 23
        %v4929 = vor.u32 4788187, %v4928
        %v4930 = vand.u32 2147483647, %v4929
        %v4932 = vcvt.s32.f32 %v4925
        %v4933 = vmul.f32 %v4932, %v4930
        %v4934 = vxor.u32 %v4933, 2147483648
        %v4935 = vsel %vm4852, %v4934, %v4933
        %v4936 = vsub.s32 4, %v4912
        %v4937 = vsel %vm4852, %v4936, %v4912
        %v4938 = vsel %vm4851, %v674, %v4935
        %v4939 = vsel %vm4851, 0, %v4937
        %v4940 = vcosq.f32.pop %v4938
        %v4941 = vsinq.f32.pop %v4938
        %vm4942 = vweird.f32 %v674
        %v4943 = vand.u32 %v4939, 3
        %vm4944 = vcmp.lt.s32.totalorder %v4943, 2
        %vm4945 = vcmp.eq.s32.totalorder %v4943, 0
        %v4946 = vxor.u32 %v4941, 2147483648
        %v4947 = vsel %vm4945, %v4940, %v4946
        %vm4948 = vcmp.eq.s32.totalorder %v4943, 2
        %v4949 = vxor.u32 %v4940, 2147483648
        %v4950 = vsel %vm4948, %v4949, %v4941
        %v4951 = vsel %vm4944, %v4947, %v4950
        %v4952 = vsel %vm4942, nan, %v4951
        %v4953 = vand.u32 2147483647, %v675
        %vm4954 = vcmp.le.f32.partialorder %v4953, 0.7853982
        %vm4955 = vcmp.lt.s32.totalorder %v675, 0
        %v4956 = vand.u32 %v675, 2139095040
        %v4957 = vshrl.u32 %v4956, 23
        %v4958 = vsub.s32 %v4957, 127
        %v4959 = vand.u32 2147483647, %v675
        %v4960 = vand.u32 %v4959, 8388607
        %v4961 = vor.u32 %v4960, 8388608
        %v4962 = vsub.s32 0, %v4961
        %v4963 = vadd.s32 %v4958, 1
        %vm4964 = vcmp.gt.s32.totalorder %v4963, 0
        %v4965 = vsel %vm4964, %v4963, 0
        %v4966 = vshrl.u32 %v4965, 5
        %v4967 = vand.u32 %v4965, 31
        %v4968 = vsub.s32 32, %v4967
        %v4969 = vshrl.u32 683565275, %v4968
        %v4970 = vshll.u32 683565275, %v4967
        %v4971 = vshrl.u32 2475754826, %v4968
        %v4972 = vor.u32 %v4970, %v4971
        %v4973 = vshll.u32 2475754826, %v4967
        %v4974 = vshrl.u32 2131351028, %v4968
        %v4975 = vor.u32 %v4973, %v4974
        %v4976 = vshll.u32 2131351028, %v4967
        %v4977 = vshrl.u32 2102212464, %v4968
        %v4978 = vor.u32 %v4976, %v4977
        %v4979 = vshll.u32 2102212464, %v4967
        %v4980 = vshrl.u32 920167782, %v4968
        %v4981 = vor.u32 %v4979, %v4980
        %v4982 = vshll.u32 920167782, %v4967
        %v4983 = vshrl.u32 1326507024, %v4968
        %v4984 = vor.u32 %v4982, %v4983
        %vm4985 = vcmp.lt.s32.totalorder %v4966, 1
        %vm4986 = vcmp.lt.s32.totalorder %v4966, 2
        %vm4987 = vcmp.lt.s32.totalorder %v4966, 3
        %vm4988 = vcmp.lt.s32.totalorder %v4966, 4
        %v4989 = vsel %vm4985, %v4969, %v4972
        %v4990 = vsel %vm4988, %v4978, 2102212464
        %v4991 = vsel %vm4987, %v4975, %v4990
        %v4992 = vsel %vm4986, %v4989, %v4991
        %v4993 = vsel %vm4985, %v4972, %v4975
        %v4994 = vsel %vm4988, %v4981, 920167782
        %v4995 = vsel %vm4987, %v4978, %v4994
        %v4996 = vsel %vm4986, %v4993, %v4995
        %v4997 = vsel %vm4985, %v4975, %v4978
        %v4998 = vsel %vm4988, %v4984, 1326507024
        %v4999 = vsel %vm4987, %v4981, %v4998
        %v5000 = vsel %vm4986, %v4997, %v4999
        %v5001 = vshll.u32 %v4961, 8
        %v5002 = vmul.u32.u64.compose %v5001, %v5000
        %v5003 = vextract.low.u32 %v5002
        %v5004 = vextract.high.u32 %v5002
        %v5005 = vmul.u32.u64.compose %v5001, %v4996
        %v5006 = vextract.low.u32 %v5005
        %v5007 = vextract.high.u32 %v5005
        %v5008 = vmul.u32 %v5001, %v4992
        %v5009 = vadd.s32 %v5004, %v5006
        %vm5010 = vc.u32 %v5004, %v5006
        %v5011 = vadd.s32 %v5007, 1
        %v5012 = vsel %vm5010, %v5011, %v5007
        %v5013 = vadd.s32 %v5008, %v5012
        %v5014 = vadd.s32 %v5013, 536870912
        %v5015 = vshrl.u32 %v5014, 30
        %v5016 = vshll.u32 %v5015, 30
        %v5017 = vsub.s32 %v5013, %v5016
        %vm5018 = vcmp.lt.s32.totalorder %v5017, 0
        %v5019 = vsub.s32 0, %v5017
        %v5020 = vsel %vm5018, %v5019, %v5017
        %v5021 = vclz %v5020
        %v5022 = vsub.s32 %v5021, 2
        %vm5023 = vcmp.gt.s32.totalorder 0, %v5022
        %v5024 = vsel %vm5023, 0, %v5022
        %v5025 = vsub.s32 32, %v5024
        %v5026 = vshll.u32 %v5017, %v5024
        %v5027 = vshrl.u32 %v5009, %v5025
        %v5028 = vor.u32 %v5026, %v5027
        %v5029 = vsub.s32 4294967266, %v5024
        %v5030 = vadd.s32 %v5029, 127
        %v5031 = vshll.u32 %v5030, 23
        %v5032 = vor.u32 4788187, %v5031
        %v5033 = vand.u32 2147483647, %v5032
        %v5035 = vcvt.s32.f32 %v5028
        %v5036 = vmul.f32 %v5035, %v5033
        %v5037 = vxor.u32 %v5036, 2147483648
        %v5038 = vsel %vm4955, %v5037, %v5036
        %v5039 = vsub.s32 4, %v5015
        %v5040 = vsel %vm4955, %v5039, %v5015
        %v5041 = vsel %vm4954, %v675, %v5038
        %v5042 = vsel %vm4954, 0, %v5040
        %v5043 = vcosq.f32.pop %v5041
        %v5044 = vsinq.f32.pop %v5041
        %vm5045 = vweird.f32 %v675
        %v5046 = vand.u32 %v5042, 3
        %vm5047 = vcmp.lt.s32.totalorder %v5046, 2
        %vm5048 = vcmp.eq.s32.totalorder %v5046, 0
        %v5049 = vxor.u32 %v5044, 2147483648
        %v5050 = vsel %vm5048, %v5043, %v5049
        %vm5051 = vcmp.eq.s32.totalorder %v5046, 2
        %v5052 = vxor.u32 %v5043, 2147483648
        %v5053 = vsel %vm5051, %v5052, %v5044
        %v5054 = vsel %vm5047, %v5050, %v5053
        %v5055 = vsel %vm5045, nan, %v5054
        %v5056 = vand.u32 2147483647, %v676
        %vm5057 = vcmp.le.f32.partialorder %v5056, 0.7853982
        %vm5058 = vcmp.lt.s32.totalorder %v676, 0
        %v5059 = vand.u32 %v676, 2139095040
        %v5060 = vshrl.u32 %v5059, 23
        %v5061 = vsub.s32 %v5060, 127
        %v5062 = vand.u32 2147483647, %v676
        %v5063 = vand.u32 %v5062, 8388607
        %v5064 = vor.u32 %v5063, 8388608
        %v5065 = vsub.s32 0, %v5064
        %v5066 = vadd.s32 %v5061, 1
        %vm5067 = vcmp.gt.s32.totalorder %v5066, 0
        %v5068 = vsel %vm5067, %v5066, 0
        %v5069 = vshrl.u32 %v5068, 5
        %v5070 = vand.u32 %v5068, 31
        %v5071 = vsub.s32 32, %v5070
        %v5072 = vshrl.u32 683565275, %v5071
        %v5073 = vshll.u32 683565275, %v5070
        %v5074 = vshrl.u32 2475754826, %v5071
        %v5075 = vor.u32 %v5073, %v5074
        %v5076 = vshll.u32 2475754826, %v5070
        %v5077 = vshrl.u32 2131351028, %v5071
        %v5078 = vor.u32 %v5076, %v5077
        %v5079 = vshll.u32 2131351028, %v5070
        %v5080 = vshrl.u32 2102212464, %v5071
        %v5081 = vor.u32 %v5079, %v5080
        %v5082 = vshll.u32 2102212464, %v5070
        %v5083 = vshrl.u32 920167782, %v5071
        %v5084 = vor.u32 %v5082, %v5083
        %v5085 = vshll.u32 920167782, %v5070
        %v5086 = vshrl.u32 1326507024, %v5071
        %v5087 = vor.u32 %v5085, %v5086
        %vm5088 = vcmp.lt.s32.totalorder %v5069, 1
        %vm5089 = vcmp.lt.s32.totalorder %v5069, 2
        %vm5090 = vcmp.lt.s32.totalorder %v5069, 3
        %vm5091 = vcmp.lt.s32.totalorder %v5069, 4
        %v5092 = vsel %vm5088, %v5072, %v5075
        %v5093 = vsel %vm5091, %v5081, 2102212464
        %v5094 = vsel %vm5090, %v5078, %v5093
        %v5095 = vsel %vm5089, %v5092, %v5094
        %v5096 = vsel %vm5088, %v5075, %v5078
        %v5097 = vsel %vm5091, %v5084, 920167782
        %v5098 = vsel %vm5090, %v5081, %v5097
        %v5099 = vsel %vm5089, %v5096, %v5098
        %v5100 = vsel %vm5088, %v5078, %v5081
        %v5101 = vsel %vm5091, %v5087, 1326507024
        %v5102 = vsel %vm5090, %v5084, %v5101
        %v5103 = vsel %vm5089, %v5100, %v5102
        %v5104 = vshll.u32 %v5064, 8
        %v5105 = vmul.u32.u64.compose %v5104, %v5103
        %v5106 = vextract.low.u32 %v5105
        %v5107 = vextract.high.u32 %v5105
        %v5108 = vmul.u32.u64.compose %v5104, %v5099
        %v5109 = vextract.low.u32 %v5108
        %v5110 = vextract.high.u32 %v5108
        %v5111 = vmul.u32 %v5104, %v5095
        %v5112 = vadd.s32 %v5107, %v5109
        %vm5113 = vc.u32 %v5107, %v5109
        %v5114 = vadd.s32 %v5110, 1
        %v5115 = vsel %vm5113, %v5114, %v5110
        %v5116 = vadd.s32 %v5111, %v5115
        %v5117 = vadd.s32 %v5116, 536870912
        %v5118 = vshrl.u32 %v5117, 30
        %v5119 = vshll.u32 %v5118, 30
        %v5120 = vsub.s32 %v5116, %v5119
        %vm5121 = vcmp.lt.s32.totalorder %v5120, 0
        %v5122 = vsub.s32 0, %v5120
        %v5123 = vsel %vm5121, %v5122, %v5120
        %v5124 = vclz %v5123
        %v5125 = vsub.s32 %v5124, 2
        %vm5126 = vcmp.gt.s32.totalorder 0, %v5125
        %v5127 = vsel %vm5126, 0, %v5125
        %v5128 = vsub.s32 32, %v5127
        %v5129 = vshll.u32 %v5120, %v5127
        %v5130 = vshrl.u32 %v5112, %v5128
        %v5131 = vor.u32 %v5129, %v5130
        %v5132 = vsub.s32 4294967266, %v5127
        %v5133 = vadd.s32 %v5132, 127
        %v5134 = vshll.u32 %v5133, 23
        %v5135 = vor.u32 4788187, %v5134
        %v5136 = vand.u32 2147483647, %v5135
        %v5138 = vcvt.s32.f32 %v5131
        %v5139 = vmul.f32 %v5138, %v5136
        %v5140 = vxor.u32 %v5139, 2147483648
        %v5141 = vsel %vm5058, %v5140, %v5139
        %v5142 = vsub.s32 4, %v5118
        %v5143 = vsel %vm5058, %v5142, %v5118
        %v5144 = vsel %vm5057, %v676, %v5141
        %v5145 = vsel %vm5057, 0, %v5143
        %v5146 = vcosq.f32.pop %v5144
        %v5147 = vsinq.f32.pop %v5144
        %vm5148 = vweird.f32 %v676
        %v5149 = vand.u32 %v5145, 3
        %vm5150 = vcmp.lt.s32.totalorder %v5149, 2
        %vm5151 = vcmp.eq.s32.totalorder %v5149, 0
        %v5152 = vxor.u32 %v5147, 2147483648
        %v5153 = vsel %vm5151, %v5146, %v5152
        %vm5154 = vcmp.eq.s32.totalorder %v5149, 2
        %v5155 = vxor.u32 %v5146, 2147483648
        %v5156 = vsel %vm5154, %v5155, %v5147
        %v5157 = vsel %vm5150, %v5153, %v5156
        %v5158 = vsel %vm5148, nan, %v5157
        %v5159 = vand.u32 2147483647, %v677
        %vm5160 = vcmp.le.f32.partialorder %v5159, 0.7853982
        %vm5161 = vcmp.lt.s32.totalorder %v677, 0
        %v5162 = vand.u32 %v677, 2139095040
        %v5163 = vshrl.u32 %v5162, 23
        %v5164 = vsub.s32 %v5163, 127
        %v5165 = vand.u32 2147483647, %v677
        %v5166 = vand.u32 %v5165, 8388607
        %v5167 = vor.u32 %v5166, 8388608
        %v5168 = vsub.s32 0, %v5167
        %v5169 = vadd.s32 %v5164, 1
        %vm5170 = vcmp.gt.s32.totalorder %v5169, 0
        %v5171 = vsel %vm5170, %v5169, 0
        %v5172 = vshrl.u32 %v5171, 5
        %v5173 = vand.u32 %v5171, 31
        %v5174 = vsub.s32 32, %v5173
        %v5175 = vshrl.u32 683565275, %v5174
        %v5176 = vshll.u32 683565275, %v5173
        %v5177 = vshrl.u32 2475754826, %v5174
        %v5178 = vor.u32 %v5176, %v5177
        %v5179 = vshll.u32 2475754826, %v5173
        %v5180 = vshrl.u32 2131351028, %v5174
        %v5181 = vor.u32 %v5179, %v5180
        %v5182 = vshll.u32 2131351028, %v5173
        %v5183 = vshrl.u32 2102212464, %v5174
        %v5184 = vor.u32 %v5182, %v5183
        %v5185 = vshll.u32 2102212464, %v5173
        %v5186 = vshrl.u32 920167782, %v5174
        %v5187 = vor.u32 %v5185, %v5186
        %v5188 = vshll.u32 920167782, %v5173
        %v5189 = vshrl.u32 1326507024, %v5174
        %v5190 = vor.u32 %v5188, %v5189
        %vm5191 = vcmp.lt.s32.totalorder %v5172, 1
        %vm5192 = vcmp.lt.s32.totalorder %v5172, 2
        %vm5193 = vcmp.lt.s32.totalorder %v5172, 3
        %vm5194 = vcmp.lt.s32.totalorder %v5172, 4
        %v5195 = vsel %vm5191, %v5175, %v5178
        %v5196 = vsel %vm5194, %v5184, 2102212464
        %v5197 = vsel %vm5193, %v5181, %v5196
        %v5198 = vsel %vm5192, %v5195, %v5197
        %v5199 = vsel %vm5191, %v5178, %v5181
        %v5200 = vsel %vm5194, %v5187, 920167782
        %v5201 = vsel %vm5193, %v5184, %v5200
        %v5202 = vsel %vm5192, %v5199, %v5201
        %v5203 = vsel %vm5191, %v5181, %v5184
        %v5204 = vsel %vm5194, %v5190, 1326507024
        %v5205 = vsel %vm5193, %v5187, %v5204
        %v5206 = vsel %vm5192, %v5203, %v5205
        %v5207 = vshll.u32 %v5167, 8
        %v5208 = vmul.u32.u64.compose %v5207, %v5206
        %v5209 = vextract.low.u32 %v5208
        %v5210 = vextract.high.u32 %v5208
        %v5211 = vmul.u32.u64.compose %v5207, %v5202
        %v5212 = vextract.low.u32 %v5211
        %v5213 = vextract.high.u32 %v5211
        %v5214 = vmul.u32 %v5207, %v5198
        %v5215 = vadd.s32 %v5210, %v5212
        %vm5216 = vc.u32 %v5210, %v5212
        %v5217 = vadd.s32 %v5213, 1
        %v5218 = vsel %vm5216, %v5217, %v5213
        %v5219 = vadd.s32 %v5214, %v5218
        %v5220 = vadd.s32 %v5219, 536870912
        %v5221 = vshrl.u32 %v5220, 30
        %v5222 = vshll.u32 %v5221, 30
        %v5223 = vsub.s32 %v5219, %v5222
        %vm5224 = vcmp.lt.s32.totalorder %v5223, 0
        %v5225 = vsub.s32 0, %v5223
        %v5226 = vsel %vm5224, %v5225, %v5223
        %v5227 = vclz %v5226
        %v5228 = vsub.s32 %v5227, 2
        %vm5229 = vcmp.gt.s32.totalorder 0, %v5228
        %v5230 = vsel %vm5229, 0, %v5228
        %v5231 = vsub.s32 32, %v5230
        %v5232 = vshll.u32 %v5223, %v5230
        %v5233 = vshrl.u32 %v5215, %v5231
        %v5234 = vor.u32 %v5232, %v5233
        %v5235 = vsub.s32 4294967266, %v5230
        %v5236 = vadd.s32 %v5235, 127
        %v5237 = vshll.u32 %v5236, 23
        %v5238 = vor.u32 4788187, %v5237
        %v5239 = vand.u32 2147483647, %v5238
        %v5241 = vcvt.s32.f32 %v5234
        %v5242 = vmul.f32 %v5241, %v5239
        %v5243 = vxor.u32 %v5242, 2147483648
        %v5244 = vsel %vm5161, %v5243, %v5242
        %v5245 = vsub.s32 4, %v5221
        %v5246 = vsel %vm5161, %v5245, %v5221
        %v5247 = vsel %vm5160, %v677, %v5244
        %v5248 = vsel %vm5160, 0, %v5246
        %v5249 = vcosq.f32.pop %v5247
        %v5250 = vsinq.f32.pop %v5247
        %vm5251 = vweird.f32 %v677
        %v5252 = vand.u32 %v5248, 3
        %vm5253 = vcmp.lt.s32.totalorder %v5252, 2
        %vm5254 = vcmp.eq.s32.totalorder %v5252, 0
        %v5255 = vxor.u32 %v5250, 2147483648
        %v5256 = vsel %vm5254, %v5249, %v5255
        %vm5257 = vcmp.eq.s32.totalorder %v5252, 2
        %v5258 = vxor.u32 %v5249, 2147483648
        %v5259 = vsel %vm5257, %v5258, %v5250
        %v5260 = vsel %vm5253, %v5256, %v5259
        %v5261 = vsel %vm5251, nan, %v5260
        %v5262 = vand.u32 2147483647, %v678
        %vm5263 = vcmp.le.f32.partialorder %v5262, 0.7853982
        %vm5264 = vcmp.lt.s32.totalorder %v678, 0
        %v5265 = vand.u32 %v678, 2139095040
        %v5266 = vshrl.u32 %v5265, 23
        %v5267 = vsub.s32 %v5266, 127
        %v5268 = vand.u32 2147483647, %v678
        %v5269 = vand.u32 %v5268, 8388607
        %v5270 = vor.u32 %v5269, 8388608
        %v5271 = vsub.s32 0, %v5270
        %v5272 = vadd.s32 %v5267, 1
        %vm5273 = vcmp.gt.s32.totalorder %v5272, 0
        %v5274 = vsel %vm5273, %v5272, 0
        %v5275 = vshrl.u32 %v5274, 5
        %v5276 = vand.u32 %v5274, 31
        %v5277 = vsub.s32 32, %v5276
        %v5278 = vshrl.u32 683565275, %v5277
        %v5279 = vshll.u32 683565275, %v5276
        %v5280 = vshrl.u32 2475754826, %v5277
        %v5281 = vor.u32 %v5279, %v5280
        %v5282 = vshll.u32 2475754826, %v5276
        %v5283 = vshrl.u32 2131351028, %v5277
        %v5284 = vor.u32 %v5282, %v5283
        %v5285 = vshll.u32 2131351028, %v5276
        %v5286 = vshrl.u32 2102212464, %v5277
        %v5287 = vor.u32 %v5285, %v5286
        %v5288 = vshll.u32 2102212464, %v5276
        %v5289 = vshrl.u32 920167782, %v5277
        %v5290 = vor.u32 %v5288, %v5289
        %v5291 = vshll.u32 920167782, %v5276
        %v5292 = vshrl.u32 1326507024, %v5277
        %v5293 = vor.u32 %v5291, %v5292
        %vm5294 = vcmp.lt.s32.totalorder %v5275, 1
        %vm5295 = vcmp.lt.s32.totalorder %v5275, 2
        %vm5296 = vcmp.lt.s32.totalorder %v5275, 3
        %vm5297 = vcmp.lt.s32.totalorder %v5275, 4
        %v5298 = vsel %vm5294, %v5278, %v5281
        %v5299 = vsel %vm5297, %v5287, 2102212464
        %v5300 = vsel %vm5296, %v5284, %v5299
        %v5301 = vsel %vm5295, %v5298, %v5300
        %v5302 = vsel %vm5294, %v5281, %v5284
        %v5303 = vsel %vm5297, %v5290, 920167782
        %v5304 = vsel %vm5296, %v5287, %v5303
        %v5305 = vsel %vm5295, %v5302, %v5304
        %v5306 = vsel %vm5294, %v5284, %v5287
        %v5307 = vsel %vm5297, %v5293, 1326507024
        %v5308 = vsel %vm5296, %v5290, %v5307
        %v5309 = vsel %vm5295, %v5306, %v5308
        %v5310 = vshll.u32 %v5270, 8
        %v5311 = vmul.u32.u64.compose %v5310, %v5309
        %v5312 = vextract.low.u32 %v5311
        %v5313 = vextract.high.u32 %v5311
        %v5314 = vmul.u32.u64.compose %v5310, %v5305
        %v5315 = vextract.low.u32 %v5314
        %v5316 = vextract.high.u32 %v5314
        %v5317 = vmul.u32 %v5310, %v5301
        %v5318 = vadd.s32 %v5313, %v5315
        %vm5319 = vc.u32 %v5313, %v5315
        %v5320 = vadd.s32 %v5316, 1
        %v5321 = vsel %vm5319, %v5320, %v5316
        %v5322 = vadd.s32 %v5317, %v5321
        %v5323 = vadd.s32 %v5322, 536870912
        %v5324 = vshrl.u32 %v5323, 30
        %v5325 = vshll.u32 %v5324, 30
        %v5326 = vsub.s32 %v5322, %v5325
        %vm5327 = vcmp.lt.s32.totalorder %v5326, 0
        %v5328 = vsub.s32 0, %v5326
        %v5329 = vsel %vm5327, %v5328, %v5326
        %v5330 = vclz %v5329
        %v5331 = vsub.s32 %v5330, 2
        %vm5332 = vcmp.gt.s32.totalorder 0, %v5331
        %v5333 = vsel %vm5332, 0, %v5331
        %v5334 = vsub.s32 32, %v5333
        %v5335 = vshll.u32 %v5326, %v5333
        %v5336 = vshrl.u32 %v5318, %v5334
        %v5337 = vor.u32 %v5335, %v5336
        %v5338 = vsub.s32 4294967266, %v5333
        %v5339 = vadd.s32 %v5338, 127
        %v5340 = vshll.u32 %v5339, 23
        %v5341 = vor.u32 4788187, %v5340
        %v5342 = vand.u32 2147483647, %v5341
        %v5344 = vcvt.s32.f32 %v5337
        %v5345 = vmul.f32 %v5344, %v5342
        %v5346 = vxor.u32 %v5345, 2147483648
        %v5347 = vsel %vm5264, %v5346, %v5345
        %v5348 = vsub.s32 4, %v5324
        %v5349 = vsel %vm5264, %v5348, %v5324
        %v5350 = vsel %vm5263, %v678, %v5347
        %v5351 = vsel %vm5263, 0, %v5349
        %v5352 = vcosq.f32.pop %v5350
        %v5353 = vsinq.f32.pop %v5350
        %vm5354 = vweird.f32 %v678
        %v5355 = vand.u32 %v5351, 3
        %vm5356 = vcmp.lt.s32.totalorder %v5355, 2
        %vm5357 = vcmp.eq.s32.totalorder %v5355, 0
        %v5358 = vxor.u32 %v5353, 2147483648
        %v5359 = vsel %vm5357, %v5352, %v5358
        %vm5360 = vcmp.eq.s32.totalorder %v5355, 2
        %v5361 = vxor.u32 %v5352, 2147483648
        %v5362 = vsel %vm5360, %v5361, %v5353
        %v5363 = vsel %vm5356, %v5359, %v5362
        %v5364 = vsel %vm5354, nan, %v5363
        %v5365 = vand.u32 2147483647, %v679
        %vm5366 = vcmp.le.f32.partialorder %v5365, 0.7853982
        %vm5367 = vcmp.lt.s32.totalorder %v679, 0
        %v5368 = vand.u32 %v679, 2139095040
        %v5369 = vshrl.u32 %v5368, 23
        %v5370 = vsub.s32 %v5369, 127
        %v5371 = vand.u32 2147483647, %v679
        %v5372 = vand.u32 %v5371, 8388607
        %v5373 = vor.u32 %v5372, 8388608
        %v5374 = vsub.s32 0, %v5373
        %v5375 = vadd.s32 %v5370, 1
        %vm5376 = vcmp.gt.s32.totalorder %v5375, 0
        %v5377 = vsel %vm5376, %v5375, 0
        %v5378 = vshrl.u32 %v5377, 5
        %v5379 = vand.u32 %v5377, 31
        %v5380 = vsub.s32 32, %v5379
        %v5381 = vshrl.u32 683565275, %v5380
        %v5382 = vshll.u32 683565275, %v5379
        %v5383 = vshrl.u32 2475754826, %v5380
        %v5384 = vor.u32 %v5382, %v5383
        %v5385 = vshll.u32 2475754826, %v5379
        %v5386 = vshrl.u32 2131351028, %v5380
        %v5387 = vor.u32 %v5385, %v5386
        %v5388 = vshll.u32 2131351028, %v5379
        %v5389 = vshrl.u32 2102212464, %v5380
        %v5390 = vor.u32 %v5388, %v5389
        %v5391 = vshll.u32 2102212464, %v5379
        %v5392 = vshrl.u32 920167782, %v5380
        %v5393 = vor.u32 %v5391, %v5392
        %v5394 = vshll.u32 920167782, %v5379
        %v5395 = vshrl.u32 1326507024, %v5380
        %v5396 = vor.u32 %v5394, %v5395
        %vm5397 = vcmp.lt.s32.totalorder %v5378, 1
        %vm5398 = vcmp.lt.s32.totalorder %v5378, 2
        %vm5399 = vcmp.lt.s32.totalorder %v5378, 3
        %vm5400 = vcmp.lt.s32.totalorder %v5378, 4
        %v5401 = vsel %vm5397, %v5381, %v5384
        %v5402 = vsel %vm5400, %v5390, 2102212464
        %v5403 = vsel %vm5399, %v5387, %v5402
        %v5404 = vsel %vm5398, %v5401, %v5403
        %v5405 = vsel %vm5397, %v5384, %v5387
        %v5406 = vsel %vm5400, %v5393, 920167782
        %v5407 = vsel %vm5399, %v5390, %v5406
        %v5408 = vsel %vm5398, %v5405, %v5407
        %v5409 = vsel %vm5397, %v5387, %v5390
        %v5410 = vsel %vm5400, %v5396, 1326507024
        %v5411 = vsel %vm5399, %v5393, %v5410
        %v5412 = vsel %vm5398, %v5409, %v5411
        %v5413 = vshll.u32 %v5373, 8
        %v5414 = vmul.u32.u64.compose %v5413, %v5412
        %v5415 = vextract.low.u32 %v5414
        %v5416 = vextract.high.u32 %v5414
        %v5417 = vmul.u32.u64.compose %v5413, %v5408
        %v5418 = vextract.low.u32 %v5417
        %v5419 = vextract.high.u32 %v5417
        %v5420 = vmul.u32 %v5413, %v5404
        %v5421 = vadd.s32 %v5416, %v5418
        %vm5422 = vc.u32 %v5416, %v5418
        %v5423 = vadd.s32 %v5419, 1
        %v5424 = vsel %vm5422, %v5423, %v5419
        %v5425 = vadd.s32 %v5420, %v5424
        %v5426 = vadd.s32 %v5425, 536870912
        %v5427 = vshrl.u32 %v5426, 30
        %v5428 = vshll.u32 %v5427, 30
        %v5429 = vsub.s32 %v5425, %v5428
        %vm5430 = vcmp.lt.s32.totalorder %v5429, 0
        %v5431 = vsub.s32 0, %v5429
        %v5432 = vsel %vm5430, %v5431, %v5429
        %v5433 = vclz %v5432
        %v5434 = vsub.s32 %v5433, 2
        %vm5435 = vcmp.gt.s32.totalorder 0, %v5434
        %v5436 = vsel %vm5435, 0, %v5434
        %v5437 = vsub.s32 32, %v5436
        %v5438 = vshll.u32 %v5429, %v5436
        %v5439 = vshrl.u32 %v5421, %v5437
        %v5440 = vor.u32 %v5438, %v5439
        %v5441 = vsub.s32 4294967266, %v5436
        %v5442 = vadd.s32 %v5441, 127
        %v5443 = vshll.u32 %v5442, 23
        %v5444 = vor.u32 4788187, %v5443
        %v5445 = vand.u32 2147483647, %v5444
        %v5447 = vcvt.s32.f32 %v5440
        %v5448 = vmul.f32 %v5447, %v5445
        %v5449 = vxor.u32 %v5448, 2147483648
        %v5450 = vsel %vm5367, %v5449, %v5448
        %v5451 = vsub.s32 4, %v5427
        %v5452 = vsel %vm5367, %v5451, %v5427
        %v5453 = vsel %vm5366, %v679, %v5450
        %v5454 = vsel %vm5366, 0, %v5452
        %v5455 = vcosq.f32.pop %v5453
        %v5456 = vsinq.f32.pop %v5453
        %vm5457 = vweird.f32 %v679
        %v5458 = vand.u32 %v5454, 3
        %vm5459 = vcmp.lt.s32.totalorder %v5458, 2
        %vm5460 = vcmp.eq.s32.totalorder %v5458, 0
        %v5461 = vxor.u32 %v5456, 2147483648
        %v5462 = vsel %vm5460, %v5455, %v5461
        %vm5463 = vcmp.eq.s32.totalorder %v5458, 2
        %v5464 = vxor.u32 %v5455, 2147483648
        %v5465 = vsel %vm5463, %v5464, %v5456
        %v5466 = vsel %vm5459, %v5462, %v5465
        %v5467 = vsel %vm5457, nan, %v5466
        %v5468 = vand.u32 2147483647, %v680
        %vm5469 = vcmp.le.f32.partialorder %v5468, 0.7853982
        %vm5470 = vcmp.lt.s32.totalorder %v680, 0
        %v5471 = vand.u32 %v680, 2139095040
        %v5472 = vshrl.u32 %v5471, 23
        %v5473 = vsub.s32 %v5472, 127
        %v5474 = vand.u32 2147483647, %v680
        %v5475 = vand.u32 %v5474, 8388607
        %v5476 = vor.u32 %v5475, 8388608
        %v5477 = vsub.s32 0, %v5476
        %v5478 = vadd.s32 %v5473, 1
        %vm5479 = vcmp.gt.s32.totalorder %v5478, 0
        %v5480 = vsel %vm5479, %v5478, 0
        %v5481 = vshrl.u32 %v5480, 5
        %v5482 = vand.u32 %v5480, 31
        %v5483 = vsub.s32 32, %v5482
        %v5484 = vshrl.u32 683565275, %v5483
        %v5485 = vshll.u32 683565275, %v5482
        %v5486 = vshrl.u32 2475754826, %v5483
        %v5487 = vor.u32 %v5485, %v5486
        %v5488 = vshll.u32 2475754826, %v5482
        %v5489 = vshrl.u32 2131351028, %v5483
        %v5490 = vor.u32 %v5488, %v5489
        %v5491 = vshll.u32 2131351028, %v5482
        %v5492 = vshrl.u32 2102212464, %v5483
        %v5493 = vor.u32 %v5491, %v5492
        %v5494 = vshll.u32 2102212464, %v5482
        %v5495 = vshrl.u32 920167782, %v5483
        %v5496 = vor.u32 %v5494, %v5495
        %v5497 = vshll.u32 920167782, %v5482
        %v5498 = vshrl.u32 1326507024, %v5483
        %v5499 = vor.u32 %v5497, %v5498
        %vm5500 = vcmp.lt.s32.totalorder %v5481, 1
        %vm5501 = vcmp.lt.s32.totalorder %v5481, 2
        %vm5502 = vcmp.lt.s32.totalorder %v5481, 3
        %vm5503 = vcmp.lt.s32.totalorder %v5481, 4
        %v5504 = vsel %vm5500, %v5484, %v5487
        %v5505 = vsel %vm5503, %v5493, 2102212464
        %v5506 = vsel %vm5502, %v5490, %v5505
        %v5507 = vsel %vm5501, %v5504, %v5506
        %v5508 = vsel %vm5500, %v5487, %v5490
        %v5509 = vsel %vm5503, %v5496, 920167782
        %v5510 = vsel %vm5502, %v5493, %v5509
        %v5511 = vsel %vm5501, %v5508, %v5510
        %v5512 = vsel %vm5500, %v5490, %v5493
        %v5513 = vsel %vm5503, %v5499, 1326507024
        %v5514 = vsel %vm5502, %v5496, %v5513
        %v5515 = vsel %vm5501, %v5512, %v5514
        %v5516 = vshll.u32 %v5476, 8
        %v5517 = vmul.u32.u64.compose %v5516, %v5515
        %v5518 = vextract.low.u32 %v5517
        %v5519 = vextract.high.u32 %v5517
        %v5520 = vmul.u32.u64.compose %v5516, %v5511
        %v5521 = vextract.low.u32 %v5520
        %v5522 = vextract.high.u32 %v5520
        %v5523 = vmul.u32 %v5516, %v5507
        %v5524 = vadd.s32 %v5519, %v5521
        %vm5525 = vc.u32 %v5519, %v5521
        %v5526 = vadd.s32 %v5522, 1
        %v5527 = vsel %vm5525, %v5526, %v5522
        %v5528 = vadd.s32 %v5523, %v5527
        %v5529 = vadd.s32 %v5528, 536870912
        %v5530 = vshrl.u32 %v5529, 30
        %v5531 = vshll.u32 %v5530, 30
        %v5532 = vsub.s32 %v5528, %v5531
        %vm5533 = vcmp.lt.s32.totalorder %v5532, 0
        %v5534 = vsub.s32 0, %v5532
        %v5535 = vsel %vm5533, %v5534, %v5532
        %v5536 = vclz %v5535
        %v5537 = vsub.s32 %v5536, 2
        %vm5538 = vcmp.gt.s32.totalorder 0, %v5537
        %v5539 = vsel %vm5538, 0, %v5537
        %v5540 = vsub.s32 32, %v5539
        %v5541 = vshll.u32 %v5532, %v5539
        %v5542 = vshrl.u32 %v5524, %v5540
        %v5543 = vor.u32 %v5541, %v5542
        %v5544 = vsub.s32 4294967266, %v5539
        %v5545 = vadd.s32 %v5544, 127
        %v5546 = vshll.u32 %v5545, 23
        %v5547 = vor.u32 4788187, %v5546
        %v5548 = vand.u32 2147483647, %v5547
        %v5550 = vcvt.s32.f32 %v5543
        %v5551 = vmul.f32 %v5550, %v5548
        %v5552 = vxor.u32 %v5551, 2147483648
        %v5553 = vsel %vm5470, %v5552, %v5551
        %v5554 = vsub.s32 4, %v5530
        %v5555 = vsel %vm5470, %v5554, %v5530
        %v5556 = vsel %vm5469, %v680, %v5553
        %v5557 = vsel %vm5469, 0, %v5555
        %v5558 = vcosq.f32.pop %v5556
        %v5559 = vsinq.f32.pop %v5556
        %vm5560 = vweird.f32 %v680
        %v5561 = vand.u32 %v5557, 3
        %vm5562 = vcmp.lt.s32.totalorder %v5561, 2
        %vm5563 = vcmp.eq.s32.totalorder %v5561, 0
        %v5564 = vxor.u32 %v5559, 2147483648
        %v5565 = vsel %vm5563, %v5558, %v5564
        %vm5566 = vcmp.eq.s32.totalorder %v5561, 2
        %v5567 = vxor.u32 %v5558, 2147483648
        %v5568 = vsel %vm5566, %v5567, %v5559
        %v5569 = vsel %vm5562, %v5565, %v5568
        %v5570 = vsel %vm5560, nan, %v5569
        %v5571 = vand.u32 2147483647, %v681
        %vm5572 = vcmp.le.f32.partialorder %v5571, 0.7853982
        %vm5573 = vcmp.lt.s32.totalorder %v681, 0
        %v5574 = vand.u32 %v681, 2139095040
        %v5575 = vshrl.u32 %v5574, 23
        %v5576 = vsub.s32 %v5575, 127
        %v5577 = vand.u32 2147483647, %v681
        %v5578 = vand.u32 %v5577, 8388607
        %v5579 = vor.u32 %v5578, 8388608
        %v5580 = vsub.s32 0, %v5579
        %v5581 = vadd.s32 %v5576, 1
        %vm5582 = vcmp.gt.s32.totalorder %v5581, 0
        %v5583 = vsel %vm5582, %v5581, 0
        %v5584 = vshrl.u32 %v5583, 5
        %v5585 = vand.u32 %v5583, 31
        %v5586 = vsub.s32 32, %v5585
        %v5587 = vshrl.u32 683565275, %v5586
        %v5588 = vshll.u32 683565275, %v5585
        %v5589 = vshrl.u32 2475754826, %v5586
        %v5590 = vor.u32 %v5588, %v5589
        %v5591 = vshll.u32 2475754826, %v5585
        %v5592 = vshrl.u32 2131351028, %v5586
        %v5593 = vor.u32 %v5591, %v5592
        %v5594 = vshll.u32 2131351028, %v5585
        %v5595 = vshrl.u32 2102212464, %v5586
        %v5596 = vor.u32 %v5594, %v5595
        %v5597 = vshll.u32 2102212464, %v5585
        %v5598 = vshrl.u32 920167782, %v5586
        %v5599 = vor.u32 %v5597, %v5598
        %v5600 = vshll.u32 920167782, %v5585
        %v5601 = vshrl.u32 1326507024, %v5586
        %v5602 = vor.u32 %v5600, %v5601
        %vm5603 = vcmp.lt.s32.totalorder %v5584, 1
        %vm5604 = vcmp.lt.s32.totalorder %v5584, 2
        %vm5605 = vcmp.lt.s32.totalorder %v5584, 3
        %vm5606 = vcmp.lt.s32.totalorder %v5584, 4
        %v5607 = vsel %vm5603, %v5587, %v5590
        %v5608 = vsel %vm5606, %v5596, 2102212464
        %v5609 = vsel %vm5605, %v5593, %v5608
        %v5610 = vsel %vm5604, %v5607, %v5609
        %v5611 = vsel %vm5603, %v5590, %v5593
        %v5612 = vsel %vm5606, %v5599, 920167782
        %v5613 = vsel %vm5605, %v5596, %v5612
        %v5614 = vsel %vm5604, %v5611, %v5613
        %v5615 = vsel %vm5603, %v5593, %v5596
        %v5616 = vsel %vm5606, %v5602, 1326507024
        %v5617 = vsel %vm5605, %v5599, %v5616
        %v5618 = vsel %vm5604, %v5615, %v5617
        %v5619 = vshll.u32 %v5579, 8
        %v5620 = vmul.u32.u64.compose %v5619, %v5618
        %v5621 = vextract.low.u32 %v5620
        %v5622 = vextract.high.u32 %v5620
        %v5623 = vmul.u32.u64.compose %v5619, %v5614
        %v5624 = vextract.low.u32 %v5623
        %v5625 = vextract.high.u32 %v5623
        %v5626 = vmul.u32 %v5619, %v5610
        %v5627 = vadd.s32 %v5622, %v5624
        %vm5628 = vc.u32 %v5622, %v5624
        %v5629 = vadd.s32 %v5625, 1
        %v5630 = vsel %vm5628, %v5629, %v5625
        %v5631 = vadd.s32 %v5626, %v5630
        %v5632 = vadd.s32 %v5631, 536870912
        %v5633 = vshrl.u32 %v5632, 30
        %v5634 = vshll.u32 %v5633, 30
        %v5635 = vsub.s32 %v5631, %v5634
        %vm5636 = vcmp.lt.s32.totalorder %v5635, 0
        %v5637 = vsub.s32 0, %v5635
        %v5638 = vsel %vm5636, %v5637, %v5635
        %v5639 = vclz %v5638
        %v5640 = vsub.s32 %v5639, 2
        %vm5641 = vcmp.gt.s32.totalorder 0, %v5640
        %v5642 = vsel %vm5641, 0, %v5640
        %v5643 = vsub.s32 32, %v5642
        %v5644 = vshll.u32 %v5635, %v5642
        %v5645 = vshrl.u32 %v5627, %v5643
        %v5646 = vor.u32 %v5644, %v5645
        %v5647 = vsub.s32 4294967266, %v5642
        %v5648 = vadd.s32 %v5647, 127
        %v5649 = vshll.u32 %v5648, 23
        %v5650 = vor.u32 4788187, %v5649
        %v5651 = vand.u32 2147483647, %v5650
        %v5653 = vcvt.s32.f32 %v5646
        %v5654 = vmul.f32 %v5653, %v5651
        %v5655 = vxor.u32 %v5654, 2147483648
        %v5656 = vsel %vm5573, %v5655, %v5654
        %v5657 = vsub.s32 4, %v5633
        %v5658 = vsel %vm5573, %v5657, %v5633
        %v5659 = vsel %vm5572, %v681, %v5656
        %v5660 = vsel %vm5572, 0, %v5658
        %v5661 = vcosq.f32.pop %v5659
        %v5662 = vsinq.f32.pop %v5659
        %vm5663 = vweird.f32 %v681
        %v5664 = vand.u32 %v5660, 3
        %vm5665 = vcmp.lt.s32.totalorder %v5664, 2
        %vm5666 = vcmp.eq.s32.totalorder %v5664, 0
        %v5667 = vxor.u32 %v5662, 2147483648
        %v5668 = vsel %vm5666, %v5661, %v5667
        %vm5669 = vcmp.eq.s32.totalorder %v5664, 2
        %v5670 = vxor.u32 %v5661, 2147483648
        %v5671 = vsel %vm5669, %v5670, %v5662
        %v5672 = vsel %vm5665, %v5668, %v5671
        %v5673 = vsel %vm5663, nan, %v5672
        %v5674 = vand.u32 2147483647, %v682
        %vm5675 = vcmp.le.f32.partialorder %v5674, 0.7853982
        %vm5676 = vcmp.lt.s32.totalorder %v682, 0
        %v5677 = vand.u32 %v682, 2139095040
        %v5678 = vshrl.u32 %v5677, 23
        %v5679 = vsub.s32 %v5678, 127
        %v5680 = vand.u32 2147483647, %v682
        %v5681 = vand.u32 %v5680, 8388607
        %v5682 = vor.u32 %v5681, 8388608
        %v5683 = vsub.s32 0, %v5682
        %v5684 = vadd.s32 %v5679, 1
        %vm5685 = vcmp.gt.s32.totalorder %v5684, 0
        %v5686 = vsel %vm5685, %v5684, 0
        %v5687 = vshrl.u32 %v5686, 5
        %v5688 = vand.u32 %v5686, 31
        %v5689 = vsub.s32 32, %v5688
        %v5690 = vshrl.u32 683565275, %v5689
        %v5691 = vshll.u32 683565275, %v5688
        %v5692 = vshrl.u32 2475754826, %v5689
        %v5693 = vor.u32 %v5691, %v5692
        %v5694 = vshll.u32 2475754826, %v5688
        %v5695 = vshrl.u32 2131351028, %v5689
        %v5696 = vor.u32 %v5694, %v5695
        %v5697 = vshll.u32 2131351028, %v5688
        %v5698 = vshrl.u32 2102212464, %v5689
        %v5699 = vor.u32 %v5697, %v5698
        %v5700 = vshll.u32 2102212464, %v5688
        %v5701 = vshrl.u32 920167782, %v5689
        %v5702 = vor.u32 %v5700, %v5701
        %v5703 = vshll.u32 920167782, %v5688
        %v5704 = vshrl.u32 1326507024, %v5689
        %v5705 = vor.u32 %v5703, %v5704
        %vm5706 = vcmp.lt.s32.totalorder %v5687, 1
        %vm5707 = vcmp.lt.s32.totalorder %v5687, 2
        %vm5708 = vcmp.lt.s32.totalorder %v5687, 3
        %vm5709 = vcmp.lt.s32.totalorder %v5687, 4
        %v5710 = vsel %vm5706, %v5690, %v5693
        %v5711 = vsel %vm5709, %v5699, 2102212464
        %v5712 = vsel %vm5708, %v5696, %v5711
        %v5713 = vsel %vm5707, %v5710, %v5712
        %v5714 = vsel %vm5706, %v5693, %v5696
        %v5715 = vsel %vm5709, %v5702, 920167782
        %v5716 = vsel %vm5708, %v5699, %v5715
        %v5717 = vsel %vm5707, %v5714, %v5716
        %v5718 = vsel %vm5706, %v5696, %v5699
        %v5719 = vsel %vm5709, %v5705, 1326507024
        %v5720 = vsel %vm5708, %v5702, %v5719
        %v5721 = vsel %vm5707, %v5718, %v5720
        %v5722 = vshll.u32 %v5682, 8
        %v5723 = vmul.u32.u64.compose %v5722, %v5721
        %v5724 = vextract.low.u32 %v5723
        %v5725 = vextract.high.u32 %v5723
        %v5726 = vmul.u32.u64.compose %v5722, %v5717
        %v5727 = vextract.low.u32 %v5726
        %v5728 = vextract.high.u32 %v5726
        %v5729 = vmul.u32 %v5722, %v5713
        %v5730 = vadd.s32 %v5725, %v5727
        %vm5731 = vc.u32 %v5725, %v5727
        %v5732 = vadd.s32 %v5728, 1
        %v5733 = vsel %vm5731, %v5732, %v5728
        %v5734 = vadd.s32 %v5729, %v5733
        %v5735 = vadd.s32 %v5734, 536870912
        %v5736 = vshrl.u32 %v5735, 30
        %v5737 = vshll.u32 %v5736, 30
        %v5738 = vsub.s32 %v5734, %v5737
        %vm5739 = vcmp.lt.s32.totalorder %v5738, 0
        %v5740 = vsub.s32 0, %v5738
        %v5741 = vsel %vm5739, %v5740, %v5738
        %v5742 = vclz %v5741
        %v5743 = vsub.s32 %v5742, 2
        %vm5744 = vcmp.gt.s32.totalorder 0, %v5743
        %v5745 = vsel %vm5744, 0, %v5743
        %v5746 = vsub.s32 32, %v5745
        %v5747 = vshll.u32 %v5738, %v5745
        %v5748 = vshrl.u32 %v5730, %v5746
        %v5749 = vor.u32 %v5747, %v5748
        %v5750 = vsub.s32 4294967266, %v5745
        %v5751 = vadd.s32 %v5750, 127
        %v5752 = vshll.u32 %v5751, 23
        %v5753 = vor.u32 4788187, %v5752
        %v5754 = vand.u32 2147483647, %v5753
        %v5756 = vcvt.s32.f32 %v5749
        %v5757 = vmul.f32 %v5756, %v5754
        %v5758 = vxor.u32 %v5757, 2147483648
        %v5759 = vsel %vm5676, %v5758, %v5757
        %v5760 = vsub.s32 4, %v5736
        %v5761 = vsel %vm5676, %v5760, %v5736
        %v5762 = vsel %vm5675, %v682, %v5759
        %v5763 = vsel %vm5675, 0, %v5761
        %v5764 = vcosq.f32.pop %v5762
        %v5765 = vsinq.f32.pop %v5762
        %vm5766 = vweird.f32 %v682
        %v5767 = vand.u32 %v5763, 3
        %vm5768 = vcmp.lt.s32.totalorder %v5767, 2
        %vm5769 = vcmp.eq.s32.totalorder %v5767, 0
        %v5770 = vxor.u32 %v5765, 2147483648
        %v5771 = vsel %vm5769, %v5764, %v5770
        %vm5772 = vcmp.eq.s32.totalorder %v5767, 2
        %v5773 = vxor.u32 %v5764, 2147483648
        %v5774 = vsel %vm5772, %v5773, %v5765
        %v5775 = vsel %vm5768, %v5771, %v5774
        %v5776 = vsel %vm5766, nan, %v5775
        %v5777 = vand.u32 2147483647, %v683
        %vm5778 = vcmp.le.f32.partialorder %v5777, 0.7853982
        %vm5779 = vcmp.lt.s32.totalorder %v683, 0
        %v5780 = vand.u32 %v683, 2139095040
        %v5781 = vshrl.u32 %v5780, 23
        %v5782 = vsub.s32 %v5781, 127
        %v5783 = vand.u32 2147483647, %v683
        %v5784 = vand.u32 %v5783, 8388607
        %v5785 = vor.u32 %v5784, 8388608
        %v5786 = vsub.s32 0, %v5785
        %v5787 = vadd.s32 %v5782, 1
        %vm5788 = vcmp.gt.s32.totalorder %v5787, 0
        %v5789 = vsel %vm5788, %v5787, 0
        %v5790 = vshrl.u32 %v5789, 5
        %v5791 = vand.u32 %v5789, 31
        %v5792 = vsub.s32 32, %v5791
        %v5793 = vshrl.u32 683565275, %v5792
        %v5794 = vshll.u32 683565275, %v5791
        %v5795 = vshrl.u32 2475754826, %v5792
        %v5796 = vor.u32 %v5794, %v5795
        %v5797 = vshll.u32 2475754826, %v5791
        %v5798 = vshrl.u32 2131351028, %v5792
        %v5799 = vor.u32 %v5797, %v5798
        %v5800 = vshll.u32 2131351028, %v5791
        %v5801 = vshrl.u32 2102212464, %v5792
        %v5802 = vor.u32 %v5800, %v5801
        %v5803 = vshll.u32 2102212464, %v5791
        %v5804 = vshrl.u32 920167782, %v5792
        %v5805 = vor.u32 %v5803, %v5804
        %v5806 = vshll.u32 920167782, %v5791
        %v5807 = vshrl.u32 1326507024, %v5792
        %v5808 = vor.u32 %v5806, %v5807
        %vm5809 = vcmp.lt.s32.totalorder %v5790, 1
        %vm5810 = vcmp.lt.s32.totalorder %v5790, 2
        %vm5811 = vcmp.lt.s32.totalorder %v5790, 3
        %vm5812 = vcmp.lt.s32.totalorder %v5790, 4
        %v5813 = vsel %vm5809, %v5793, %v5796
        %v5814 = vsel %vm5812, %v5802, 2102212464
        %v5815 = vsel %vm5811, %v5799, %v5814
        %v5816 = vsel %vm5810, %v5813, %v5815
        %v5817 = vsel %vm5809, %v5796, %v5799
        %v5818 = vsel %vm5812, %v5805, 920167782
        %v5819 = vsel %vm5811, %v5802, %v5818
        %v5820 = vsel %vm5810, %v5817, %v5819
        %v5821 = vsel %vm5809, %v5799, %v5802
        %v5822 = vsel %vm5812, %v5808, 1326507024
        %v5823 = vsel %vm5811, %v5805, %v5822
        %v5824 = vsel %vm5810, %v5821, %v5823
        %v5825 = vshll.u32 %v5785, 8
        %v5826 = vmul.u32.u64.compose %v5825, %v5824
        %v5827 = vextract.low.u32 %v5826
        %v5828 = vextract.high.u32 %v5826
        %v5829 = vmul.u32.u64.compose %v5825, %v5820
        %v5830 = vextract.low.u32 %v5829
        %v5831 = vextract.high.u32 %v5829
        %v5832 = vmul.u32 %v5825, %v5816
        %v5833 = vadd.s32 %v5828, %v5830
        %vm5834 = vc.u32 %v5828, %v5830
        %v5835 = vadd.s32 %v5831, 1
        %v5836 = vsel %vm5834, %v5835, %v5831
        %v5837 = vadd.s32 %v5832, %v5836
        %v5838 = vadd.s32 %v5837, 536870912
        %v5839 = vshrl.u32 %v5838, 30
        %v5840 = vshll.u32 %v5839, 30
        %v5841 = vsub.s32 %v5837, %v5840
        %vm5842 = vcmp.lt.s32.totalorder %v5841, 0
        %v5843 = vsub.s32 0, %v5841
        %v5844 = vsel %vm5842, %v5843, %v5841
        %v5845 = vclz %v5844
        %v5846 = vsub.s32 %v5845, 2
        %vm5847 = vcmp.gt.s32.totalorder 0, %v5846
        %v5848 = vsel %vm5847, 0, %v5846
        %v5849 = vsub.s32 32, %v5848
        %v5850 = vshll.u32 %v5841, %v5848
        %v5851 = vshrl.u32 %v5833, %v5849
        %v5852 = vor.u32 %v5850, %v5851
        %v5853 = vsub.s32 4294967266, %v5848
        %v5854 = vadd.s32 %v5853, 127
        %v5855 = vshll.u32 %v5854, 23
        %v5856 = vor.u32 4788187, %v5855
        %v5857 = vand.u32 2147483647, %v5856
        %v5859 = vcvt.s32.f32 %v5852
        %v5860 = vmul.f32 %v5859, %v5857
        %v5861 = vxor.u32 %v5860, 2147483648
        %v5862 = vsel %vm5779, %v5861, %v5860
        %v5863 = vsub.s32 4, %v5839
        %v5864 = vsel %vm5779, %v5863, %v5839
        %v5865 = vsel %vm5778, %v683, %v5862
        %v5866 = vsel %vm5778, 0, %v5864
        %v5867 = vcosq.f32.pop %v5865
        %v5868 = vsinq.f32.pop %v5865
        %vm5869 = vweird.f32 %v683
        %v5870 = vand.u32 %v5866, 3
        %vm5871 = vcmp.lt.s32.totalorder %v5870, 2
        %vm5872 = vcmp.eq.s32.totalorder %v5870, 0
        %v5873 = vxor.u32 %v5868, 2147483648
        %v5874 = vsel %vm5872, %v5867, %v5873
        %vm5875 = vcmp.eq.s32.totalorder %v5870, 2
        %v5876 = vxor.u32 %v5867, 2147483648
        %v5877 = vsel %vm5875, %v5876, %v5868
        %v5878 = vsel %vm5871, %v5874, %v5877
        %v5879 = vsel %vm5869, nan, %v5878
        %v5880 = vand.u32 2147483647, %v684
        %vm5881 = vcmp.le.f32.partialorder %v5880, 0.7853982
        %vm5882 = vcmp.lt.s32.totalorder %v684, 0
        %v5883 = vand.u32 %v684, 2139095040
        %v5884 = vshrl.u32 %v5883, 23
        %v5885 = vsub.s32 %v5884, 127
        %v5886 = vand.u32 2147483647, %v684
        %v5887 = vand.u32 %v5886, 8388607
        %v5888 = vor.u32 %v5887, 8388608
        %v5889 = vsub.s32 0, %v5888
        %v5890 = vadd.s32 %v5885, 1
        %vm5891 = vcmp.gt.s32.totalorder %v5890, 0
        %v5892 = vsel %vm5891, %v5890, 0
        %v5893 = vshrl.u32 %v5892, 5
        %v5894 = vand.u32 %v5892, 31
        %v5895 = vsub.s32 32, %v5894
        %v5896 = vshrl.u32 683565275, %v5895
        %v5897 = vshll.u32 683565275, %v5894
        %v5898 = vshrl.u32 2475754826, %v5895
        %v5899 = vor.u32 %v5897, %v5898
        %v5900 = vshll.u32 2475754826, %v5894
        %v5901 = vshrl.u32 2131351028, %v5895
        %v5902 = vor.u32 %v5900, %v5901
        %v5903 = vshll.u32 2131351028, %v5894
        %v5904 = vshrl.u32 2102212464, %v5895
        %v5905 = vor.u32 %v5903, %v5904
        %v5906 = vshll.u32 2102212464, %v5894
        %v5907 = vshrl.u32 920167782, %v5895
        %v5908 = vor.u32 %v5906, %v5907
        %v5909 = vshll.u32 920167782, %v5894
        %v5910 = vshrl.u32 1326507024, %v5895
        %v5911 = vor.u32 %v5909, %v5910
        %vm5912 = vcmp.lt.s32.totalorder %v5893, 1
        %vm5913 = vcmp.lt.s32.totalorder %v5893, 2
        %vm5914 = vcmp.lt.s32.totalorder %v5893, 3
        %vm5915 = vcmp.lt.s32.totalorder %v5893, 4
        %v5916 = vsel %vm5912, %v5896, %v5899
        %v5917 = vsel %vm5915, %v5905, 2102212464
        %v5918 = vsel %vm5914, %v5902, %v5917
        %v5919 = vsel %vm5913, %v5916, %v5918
        %v5920 = vsel %vm5912, %v5899, %v5902
        %v5921 = vsel %vm5915, %v5908, 920167782
        %v5922 = vsel %vm5914, %v5905, %v5921
        %v5923 = vsel %vm5913, %v5920, %v5922
        %v5924 = vsel %vm5912, %v5902, %v5905
        %v5925 = vsel %vm5915, %v5911, 1326507024
        %v5926 = vsel %vm5914, %v5908, %v5925
        %v5927 = vsel %vm5913, %v5924, %v5926
        %v5928 = vshll.u32 %v5888, 8
        %v5929 = vmul.u32.u64.compose %v5928, %v5927
        %v5930 = vextract.low.u32 %v5929
        %v5931 = vextract.high.u32 %v5929
        %v5932 = vmul.u32.u64.compose %v5928, %v5923
        %v5933 = vextract.low.u32 %v5932
        %v5934 = vextract.high.u32 %v5932
        %v5935 = vmul.u32 %v5928, %v5919
        %v5936 = vadd.s32 %v5931, %v5933
        %vm5937 = vc.u32 %v5931, %v5933
        %v5938 = vadd.s32 %v5934, 1
        %v5939 = vsel %vm5937, %v5938, %v5934
        %v5940 = vadd.s32 %v5935, %v5939
        %v5941 = vadd.s32 %v5940, 536870912
        %v5942 = vshrl.u32 %v5941, 30
        %v5943 = vshll.u32 %v5942, 30
        %v5944 = vsub.s32 %v5940, %v5943
        %vm5945 = vcmp.lt.s32.totalorder %v5944, 0
        %v5946 = vsub.s32 0, %v5944
        %v5947 = vsel %vm5945, %v5946, %v5944
        %v5948 = vclz %v5947
        %v5949 = vsub.s32 %v5948, 2
        %vm5950 = vcmp.gt.s32.totalorder 0, %v5949
        %v5951 = vsel %vm5950, 0, %v5949
        %v5952 = vsub.s32 32, %v5951
        %v5953 = vshll.u32 %v5944, %v5951
        %v5954 = vshrl.u32 %v5936, %v5952
        %v5955 = vor.u32 %v5953, %v5954
        %v5956 = vsub.s32 4294967266, %v5951
        %v5957 = vadd.s32 %v5956, 127
        %v5958 = vshll.u32 %v5957, 23
        %v5959 = vor.u32 4788187, %v5958
        %v5960 = vand.u32 2147483647, %v5959
        %v5962 = vcvt.s32.f32 %v5955
        %v5963 = vmul.f32 %v5962, %v5960
        %v5964 = vxor.u32 %v5963, 2147483648
        %v5965 = vsel %vm5882, %v5964, %v5963
        %v5966 = vsub.s32 4, %v5942
        %v5967 = vsel %vm5882, %v5966, %v5942
        %v5968 = vsel %vm5881, %v684, %v5965
        %v5969 = vsel %vm5881, 0, %v5967
        %v5970 = vcosq.f32.pop %v5968
        %v5971 = vsinq.f32.pop %v5968
        %vm5972 = vweird.f32 %v684
        %v5973 = vand.u32 %v5969, 3
        %vm5974 = vcmp.lt.s32.totalorder %v5973, 2
        %vm5975 = vcmp.eq.s32.totalorder %v5973, 0
        %v5976 = vxor.u32 %v5971, 2147483648
        %v5977 = vsel %vm5975, %v5970, %v5976
        %vm5978 = vcmp.eq.s32.totalorder %v5973, 2
        %v5979 = vxor.u32 %v5970, 2147483648
        %v5980 = vsel %vm5978, %v5979, %v5971
        %v5981 = vsel %vm5974, %v5977, %v5980
        %v5982 = vsel %vm5972, nan, %v5981
        %v5983 = vand.u32 2147483647, %v685
        %vm5984 = vcmp.le.f32.partialorder %v5983, 0.7853982
        %vm5985 = vcmp.lt.s32.totalorder %v685, 0
        %v5986 = vand.u32 %v685, 2139095040
        %v5987 = vshrl.u32 %v5986, 23
        %v5988 = vsub.s32 %v5987, 127
        %v5989 = vand.u32 2147483647, %v685
        %v5990 = vand.u32 %v5989, 8388607
        %v5991 = vor.u32 %v5990, 8388608
        %v5992 = vsub.s32 0, %v5991
        %v5993 = vadd.s32 %v5988, 1
        %vm5994 = vcmp.gt.s32.totalorder %v5993, 0
        %v5995 = vsel %vm5994, %v5993, 0
        %v5996 = vshrl.u32 %v5995, 5
        %v5997 = vand.u32 %v5995, 31
        %v5998 = vsub.s32 32, %v5997
        %v5999 = vshrl.u32 683565275, %v5998
        %v6000 = vshll.u32 683565275, %v5997
        %v6001 = vshrl.u32 2475754826, %v5998
        %v6002 = vor.u32 %v6000, %v6001
        %v6003 = vshll.u32 2475754826, %v5997
        %v6004 = vshrl.u32 2131351028, %v5998
        %v6005 = vor.u32 %v6003, %v6004
        %v6006 = vshll.u32 2131351028, %v5997
        %v6007 = vshrl.u32 2102212464, %v5998
        %v6008 = vor.u32 %v6006, %v6007
        %v6009 = vshll.u32 2102212464, %v5997
        %v6010 = vshrl.u32 920167782, %v5998
        %v6011 = vor.u32 %v6009, %v6010
        %v6012 = vshll.u32 920167782, %v5997
        %v6013 = vshrl.u32 1326507024, %v5998
        %v6014 = vor.u32 %v6012, %v6013
        %vm6015 = vcmp.lt.s32.totalorder %v5996, 1
        %vm6016 = vcmp.lt.s32.totalorder %v5996, 2
        %vm6017 = vcmp.lt.s32.totalorder %v5996, 3
        %vm6018 = vcmp.lt.s32.totalorder %v5996, 4
        %v6019 = vsel %vm6015, %v5999, %v6002
        %v6020 = vsel %vm6018, %v6008, 2102212464
        %v6021 = vsel %vm6017, %v6005, %v6020
        %v6022 = vsel %vm6016, %v6019, %v6021
        %v6023 = vsel %vm6015, %v6002, %v6005
        %v6024 = vsel %vm6018, %v6011, 920167782
        %v6025 = vsel %vm6017, %v6008, %v6024
        %v6026 = vsel %vm6016, %v6023, %v6025
        %v6027 = vsel %vm6015, %v6005, %v6008
        %v6028 = vsel %vm6018, %v6014, 1326507024
        %v6029 = vsel %vm6017, %v6011, %v6028
        %v6030 = vsel %vm6016, %v6027, %v6029
        %v6031 = vshll.u32 %v5991, 8
        %v6032 = vmul.u32.u64.compose %v6031, %v6030
        %v6033 = vextract.low.u32 %v6032
        %v6034 = vextract.high.u32 %v6032
        %v6035 = vmul.u32.u64.compose %v6031, %v6026
        %v6036 = vextract.low.u32 %v6035
        %v6037 = vextract.high.u32 %v6035
        %v6038 = vmul.u32 %v6031, %v6022
        %v6039 = vadd.s32 %v6034, %v6036
        %vm6040 = vc.u32 %v6034, %v6036
        %v6041 = vadd.s32 %v6037, 1
        %v6042 = vsel %vm6040, %v6041, %v6037
        %v6043 = vadd.s32 %v6038, %v6042
        %v6044 = vadd.s32 %v6043, 536870912
        %v6045 = vshrl.u32 %v6044, 30
        %v6046 = vshll.u32 %v6045, 30
        %v6047 = vsub.s32 %v6043, %v6046
        %vm6048 = vcmp.lt.s32.totalorder %v6047, 0
        %v6049 = vsub.s32 0, %v6047
        %v6050 = vsel %vm6048, %v6049, %v6047
        %v6051 = vclz %v6050
        %v6052 = vsub.s32 %v6051, 2
        %vm6053 = vcmp.gt.s32.totalorder 0, %v6052
        %v6054 = vsel %vm6053, 0, %v6052
        %v6055 = vsub.s32 32, %v6054
        %v6056 = vshll.u32 %v6047, %v6054
        %v6057 = vshrl.u32 %v6039, %v6055
        %v6058 = vor.u32 %v6056, %v6057
        %v6059 = vsub.s32 4294967266, %v6054
        %v6060 = vadd.s32 %v6059, 127
        %v6061 = vshll.u32 %v6060, 23
        %v6062 = vor.u32 4788187, %v6061
        %v6063 = vand.u32 2147483647, %v6062
        %v6065 = vcvt.s32.f32 %v6058
        %v6066 = vmul.f32 %v6065, %v6063
        %v6067 = vxor.u32 %v6066, 2147483648
        %v6068 = vsel %vm5985, %v6067, %v6066
        %v6069 = vsub.s32 4, %v6045
        %v6070 = vsel %vm5985, %v6069, %v6045
        %v6071 = vsel %vm5984, %v685, %v6068
        %v6072 = vsel %vm5984, 0, %v6070
        %v6073 = vcosq.f32.pop %v6071
        %v6074 = vsinq.f32.pop %v6071
        %vm6075 = vweird.f32 %v685
        %v6076 = vand.u32 %v6072, 3
        %vm6077 = vcmp.lt.s32.totalorder %v6076, 2
        %vm6078 = vcmp.eq.s32.totalorder %v6076, 0
        %v6079 = vxor.u32 %v6074, 2147483648
        %v6080 = vsel %vm6078, %v6073, %v6079
        %vm6081 = vcmp.eq.s32.totalorder %v6076, 2
        %v6082 = vxor.u32 %v6073, 2147483648
        %v6083 = vsel %vm6081, %v6082, %v6074
        %v6084 = vsel %vm6077, %v6080, %v6083
        %v6085 = vsel %vm6075, nan, %v6084
        %v6086 = vand.u32 2147483647, %v686
        %vm6087 = vcmp.le.f32.partialorder %v6086, 0.7853982
        %vm6088 = vcmp.lt.s32.totalorder %v686, 0
        %v6089 = vand.u32 %v686, 2139095040
        %v6090 = vshrl.u32 %v6089, 23
        %v6091 = vsub.s32 %v6090, 127
        %v6092 = vand.u32 2147483647, %v686
        %v6093 = vand.u32 %v6092, 8388607
        %v6094 = vor.u32 %v6093, 8388608
        %v6095 = vsub.s32 0, %v6094
        %v6096 = vadd.s32 %v6091, 1
        %vm6097 = vcmp.gt.s32.totalorder %v6096, 0
        %v6098 = vsel %vm6097, %v6096, 0
        %v6099 = vshrl.u32 %v6098, 5
        %v6100 = vand.u32 %v6098, 31
        %v6101 = vsub.s32 32, %v6100
        %v6102 = vshrl.u32 683565275, %v6101
        %v6103 = vshll.u32 683565275, %v6100
        %v6104 = vshrl.u32 2475754826, %v6101
        %v6105 = vor.u32 %v6103, %v6104
        %v6106 = vshll.u32 2475754826, %v6100
        %v6107 = vshrl.u32 2131351028, %v6101
        %v6108 = vor.u32 %v6106, %v6107
        %v6109 = vshll.u32 2131351028, %v6100
        %v6110 = vshrl.u32 2102212464, %v6101
        %v6111 = vor.u32 %v6109, %v6110
        %v6112 = vshll.u32 2102212464, %v6100
        %v6113 = vshrl.u32 920167782, %v6101
        %v6114 = vor.u32 %v6112, %v6113
        %v6115 = vshll.u32 920167782, %v6100
        %v6116 = vshrl.u32 1326507024, %v6101
        %v6117 = vor.u32 %v6115, %v6116
        %vm6118 = vcmp.lt.s32.totalorder %v6099, 1
        %vm6119 = vcmp.lt.s32.totalorder %v6099, 2
        %vm6120 = vcmp.lt.s32.totalorder %v6099, 3
        %vm6121 = vcmp.lt.s32.totalorder %v6099, 4
        %v6122 = vsel %vm6118, %v6102, %v6105
        %v6123 = vsel %vm6121, %v6111, 2102212464
        %v6124 = vsel %vm6120, %v6108, %v6123
        %v6125 = vsel %vm6119, %v6122, %v6124
        %v6126 = vsel %vm6118, %v6105, %v6108
        %v6127 = vsel %vm6121, %v6114, 920167782
        %v6128 = vsel %vm6120, %v6111, %v6127
        %v6129 = vsel %vm6119, %v6126, %v6128
        %v6130 = vsel %vm6118, %v6108, %v6111
        %v6131 = vsel %vm6121, %v6117, 1326507024
        %v6132 = vsel %vm6120, %v6114, %v6131
        %v6133 = vsel %vm6119, %v6130, %v6132
        %v6134 = vshll.u32 %v6094, 8
        %v6135 = vmul.u32.u64.compose %v6134, %v6133
        %v6136 = vextract.low.u32 %v6135
        %v6137 = vextract.high.u32 %v6135
        %v6138 = vmul.u32.u64.compose %v6134, %v6129
        %v6139 = vextract.low.u32 %v6138
        %v6140 = vextract.high.u32 %v6138
        %v6141 = vmul.u32 %v6134, %v6125
        %v6142 = vadd.s32 %v6137, %v6139
        %vm6143 = vc.u32 %v6137, %v6139
        %v6144 = vadd.s32 %v6140, 1
        %v6145 = vsel %vm6143, %v6144, %v6140
        %v6146 = vadd.s32 %v6141, %v6145
        %v6147 = vadd.s32 %v6146, 536870912
        %v6148 = vshrl.u32 %v6147, 30
        %v6149 = vshll.u32 %v6148, 30
        %v6150 = vsub.s32 %v6146, %v6149
        %vm6151 = vcmp.lt.s32.totalorder %v6150, 0
        %v6152 = vsub.s32 0, %v6150
        %v6153 = vsel %vm6151, %v6152, %v6150
        %v6154 = vclz %v6153
        %v6155 = vsub.s32 %v6154, 2
        %vm6156 = vcmp.gt.s32.totalorder 0, %v6155
        %v6157 = vsel %vm6156, 0, %v6155
        %v6158 = vsub.s32 32, %v6157
        %v6159 = vshll.u32 %v6150, %v6157
        %v6160 = vshrl.u32 %v6142, %v6158
        %v6161 = vor.u32 %v6159, %v6160
        %v6162 = vsub.s32 4294967266, %v6157
        %v6163 = vadd.s32 %v6162, 127
        %v6164 = vshll.u32 %v6163, 23
        %v6165 = vor.u32 4788187, %v6164
        %v6166 = vand.u32 2147483647, %v6165
        %v6168 = vcvt.s32.f32 %v6161
        %v6169 = vmul.f32 %v6168, %v6166
        %v6170 = vxor.u32 %v6169, 2147483648
        %v6171 = vsel %vm6088, %v6170, %v6169
        %v6172 = vsub.s32 4, %v6148
        %v6173 = vsel %vm6088, %v6172, %v6148
        %v6174 = vsel %vm6087, %v686, %v6171
        %v6175 = vsel %vm6087, 0, %v6173
        %v6176 = vcosq.f32.pop %v6174
        %v6177 = vsinq.f32.pop %v6174
        %vm6178 = vweird.f32 %v686
        %v6179 = vand.u32 %v6175, 3
        %vm6180 = vcmp.lt.s32.totalorder %v6179, 2
        %vm6181 = vcmp.eq.s32.totalorder %v6179, 0
        %v6182 = vxor.u32 %v6177, 2147483648
        %v6183 = vsel %vm6181, %v6176, %v6182
        %vm6184 = vcmp.eq.s32.totalorder %v6179, 2
        %v6185 = vxor.u32 %v6176, 2147483648
        %v6186 = vsel %vm6184, %v6185, %v6177
        %v6187 = vsel %vm6180, %v6183, %v6186
        %v6188 = vsel %vm6178, nan, %v6187
        %v6189 = vand.u32 2147483647, %v687
        %vm6190 = vcmp.le.f32.partialorder %v6189, 0.7853982
        %vm6191 = vcmp.lt.s32.totalorder %v687, 0
        %v6192 = vand.u32 %v687, 2139095040
        %v6193 = vshrl.u32 %v6192, 23
        %v6194 = vsub.s32 %v6193, 127
        %v6195 = vand.u32 2147483647, %v687
        %v6196 = vand.u32 %v6195, 8388607
        %v6197 = vor.u32 %v6196, 8388608
        %v6198 = vsub.s32 0, %v6197
        %v6199 = vadd.s32 %v6194, 1
        %vm6200 = vcmp.gt.s32.totalorder %v6199, 0
        %v6201 = vsel %vm6200, %v6199, 0
        %v6202 = vshrl.u32 %v6201, 5
        %v6203 = vand.u32 %v6201, 31
        %v6204 = vsub.s32 32, %v6203
        %v6205 = vshrl.u32 683565275, %v6204
        %v6206 = vshll.u32 683565275, %v6203
        %v6207 = vshrl.u32 2475754826, %v6204
        %v6208 = vor.u32 %v6206, %v6207
        %v6209 = vshll.u32 2475754826, %v6203
        %v6210 = vshrl.u32 2131351028, %v6204
        %v6211 = vor.u32 %v6209, %v6210
        %v6212 = vshll.u32 2131351028, %v6203
        %v6213 = vshrl.u32 2102212464, %v6204
        %v6214 = vor.u32 %v6212, %v6213
        %v6215 = vshll.u32 2102212464, %v6203
        %v6216 = vshrl.u32 920167782, %v6204
        %v6217 = vor.u32 %v6215, %v6216
        %v6218 = vshll.u32 920167782, %v6203
        %v6219 = vshrl.u32 1326507024, %v6204
        %v6220 = vor.u32 %v6218, %v6219
        %vm6221 = vcmp.lt.s32.totalorder %v6202, 1
        %vm6222 = vcmp.lt.s32.totalorder %v6202, 2
        %vm6223 = vcmp.lt.s32.totalorder %v6202, 3
        %vm6224 = vcmp.lt.s32.totalorder %v6202, 4
        %v6225 = vsel %vm6221, %v6205, %v6208
        %v6226 = vsel %vm6224, %v6214, 2102212464
        %v6227 = vsel %vm6223, %v6211, %v6226
        %v6228 = vsel %vm6222, %v6225, %v6227
        %v6229 = vsel %vm6221, %v6208, %v6211
        %v6230 = vsel %vm6224, %v6217, 920167782
        %v6231 = vsel %vm6223, %v6214, %v6230
        %v6232 = vsel %vm6222, %v6229, %v6231
        %v6233 = vsel %vm6221, %v6211, %v6214
        %v6234 = vsel %vm6224, %v6220, 1326507024
        %v6235 = vsel %vm6223, %v6217, %v6234
        %v6236 = vsel %vm6222, %v6233, %v6235
        %v6237 = vshll.u32 %v6197, 8
        %v6238 = vmul.u32.u64.compose %v6237, %v6236
        %v6239 = vextract.low.u32 %v6238
        %v6240 = vextract.high.u32 %v6238
        %v6241 = vmul.u32.u64.compose %v6237, %v6232
        %v6242 = vextract.low.u32 %v6241
        %v6243 = vextract.high.u32 %v6241
        %v6244 = vmul.u32 %v6237, %v6228
        %v6245 = vadd.s32 %v6240, %v6242
        %vm6246 = vc.u32 %v6240, %v6242
        %v6247 = vadd.s32 %v6243, 1
        %v6248 = vsel %vm6246, %v6247, %v6243
        %v6249 = vadd.s32 %v6244, %v6248
        %v6250 = vadd.s32 %v6249, 536870912
        %v6251 = vshrl.u32 %v6250, 30
        %v6252 = vshll.u32 %v6251, 30
        %v6253 = vsub.s32 %v6249, %v6252
        %vm6254 = vcmp.lt.s32.totalorder %v6253, 0
        %v6255 = vsub.s32 0, %v6253
        %v6256 = vsel %vm6254, %v6255, %v6253
        %v6257 = vclz %v6256
        %v6258 = vsub.s32 %v6257, 2
        %vm6259 = vcmp.gt.s32.totalorder 0, %v6258
        %v6260 = vsel %vm6259, 0, %v6258
        %v6261 = vsub.s32 32, %v6260
        %v6262 = vshll.u32 %v6253, %v6260
        %v6263 = vshrl.u32 %v6245, %v6261
        %v6264 = vor.u32 %v6262, %v6263
        %v6265 = vsub.s32 4294967266, %v6260
        %v6266 = vadd.s32 %v6265, 127
        %v6267 = vshll.u32 %v6266, 23
        %v6268 = vor.u32 4788187, %v6267
        %v6269 = vand.u32 2147483647, %v6268
        %v6271 = vcvt.s32.f32 %v6264
        %v6272 = vmul.f32 %v6271, %v6269
        %v6273 = vxor.u32 %v6272, 2147483648
        %v6274 = vsel %vm6191, %v6273, %v6272
        %v6275 = vsub.s32 4, %v6251
        %v6276 = vsel %vm6191, %v6275, %v6251
        %v6277 = vsel %vm6190, %v687, %v6274
        %v6278 = vsel %vm6190, 0, %v6276
        %v6279 = vcosq.f32.pop %v6277
        %v6280 = vsinq.f32.pop %v6277
        %vm6281 = vweird.f32 %v687
        %v6282 = vand.u32 %v6278, 3
        %vm6283 = vcmp.lt.s32.totalorder %v6282, 2
        %vm6284 = vcmp.eq.s32.totalorder %v6282, 0
        %v6285 = vxor.u32 %v6280, 2147483648
        %v6286 = vsel %vm6284, %v6279, %v6285
        %vm6287 = vcmp.eq.s32.totalorder %v6282, 2
        %v6288 = vxor.u32 %v6279, 2147483648
        %v6289 = vsel %vm6287, %v6288, %v6280
        %v6290 = vsel %vm6283, %v6286, %v6289
        %v6291 = vsel %vm6281, nan, %v6290
        %v6292 = vand.u32 2147483647, %v688
        %vm6293 = vcmp.le.f32.partialorder %v6292, 0.7853982
        %vm6294 = vcmp.lt.s32.totalorder %v688, 0
        %v6295 = vand.u32 %v688, 2139095040
        %v6296 = vshrl.u32 %v6295, 23
        %v6297 = vsub.s32 %v6296, 127
        %v6298 = vand.u32 2147483647, %v688
        %v6299 = vand.u32 %v6298, 8388607
        %v6300 = vor.u32 %v6299, 8388608
        %v6301 = vsub.s32 0, %v6300
        %v6302 = vadd.s32 %v6297, 1
        %vm6303 = vcmp.gt.s32.totalorder %v6302, 0
        %v6304 = vsel %vm6303, %v6302, 0
        %v6305 = vshrl.u32 %v6304, 5
        %v6306 = vand.u32 %v6304, 31
        %v6307 = vsub.s32 32, %v6306
        %v6308 = vshrl.u32 683565275, %v6307
        %v6309 = vshll.u32 683565275, %v6306
        %v6310 = vshrl.u32 2475754826, %v6307
        %v6311 = vor.u32 %v6309, %v6310
        %v6312 = vshll.u32 2475754826, %v6306
        %v6313 = vshrl.u32 2131351028, %v6307
        %v6314 = vor.u32 %v6312, %v6313
        %v6315 = vshll.u32 2131351028, %v6306
        %v6316 = vshrl.u32 2102212464, %v6307
        %v6317 = vor.u32 %v6315, %v6316
        %v6318 = vshll.u32 2102212464, %v6306
        %v6319 = vshrl.u32 920167782, %v6307
        %v6320 = vor.u32 %v6318, %v6319
        %v6321 = vshll.u32 920167782, %v6306
        %v6322 = vshrl.u32 1326507024, %v6307
        %v6323 = vor.u32 %v6321, %v6322
        %vm6324 = vcmp.lt.s32.totalorder %v6305, 1
        %vm6325 = vcmp.lt.s32.totalorder %v6305, 2
        %vm6326 = vcmp.lt.s32.totalorder %v6305, 3
        %vm6327 = vcmp.lt.s32.totalorder %v6305, 4
        %v6328 = vsel %vm6324, %v6308, %v6311
        %v6329 = vsel %vm6327, %v6317, 2102212464
        %v6330 = vsel %vm6326, %v6314, %v6329
        %v6331 = vsel %vm6325, %v6328, %v6330
        %v6332 = vsel %vm6324, %v6311, %v6314
        %v6333 = vsel %vm6327, %v6320, 920167782
        %v6334 = vsel %vm6326, %v6317, %v6333
        %v6335 = vsel %vm6325, %v6332, %v6334
        %v6336 = vsel %vm6324, %v6314, %v6317
        %v6337 = vsel %vm6327, %v6323, 1326507024
        %v6338 = vsel %vm6326, %v6320, %v6337
        %v6339 = vsel %vm6325, %v6336, %v6338
        %v6340 = vshll.u32 %v6300, 8
        %v6341 = vmul.u32.u64.compose %v6340, %v6339
        %v6342 = vextract.low.u32 %v6341
        %v6343 = vextract.high.u32 %v6341
        %v6344 = vmul.u32.u64.compose %v6340, %v6335
        %v6345 = vextract.low.u32 %v6344
        %v6346 = vextract.high.u32 %v6344
        %v6347 = vmul.u32 %v6340, %v6331
        %v6348 = vadd.s32 %v6343, %v6345
        %vm6349 = vc.u32 %v6343, %v6345
        %v6350 = vadd.s32 %v6346, 1
        %v6351 = vsel %vm6349, %v6350, %v6346
        %v6352 = vadd.s32 %v6347, %v6351
        %v6353 = vadd.s32 %v6352, 536870912
        %v6354 = vshrl.u32 %v6353, 30
        %v6355 = vshll.u32 %v6354, 30
        %v6356 = vsub.s32 %v6352, %v6355
        %vm6357 = vcmp.lt.s32.totalorder %v6356, 0
        %v6358 = vsub.s32 0, %v6356
        %v6359 = vsel %vm6357, %v6358, %v6356
        %v6360 = vclz %v6359
        %v6361 = vsub.s32 %v6360, 2
        %vm6362 = vcmp.gt.s32.totalorder 0, %v6361
        %v6363 = vsel %vm6362, 0, %v6361
        %v6364 = vsub.s32 32, %v6363
        %v6365 = vshll.u32 %v6356, %v6363
        %v6366 = vshrl.u32 %v6348, %v6364
        %v6367 = vor.u32 %v6365, %v6366
        %v6368 = vsub.s32 4294967266, %v6363
        %v6369 = vadd.s32 %v6368, 127
        %v6370 = vshll.u32 %v6369, 23
        %v6371 = vor.u32 4788187, %v6370
        %v6372 = vand.u32 2147483647, %v6371
        %v6374 = vcvt.s32.f32 %v6367
        %v6375 = vmul.f32 %v6374, %v6372
        %v6376 = vxor.u32 %v6375, 2147483648
        %v6377 = vsel %vm6294, %v6376, %v6375
        %v6378 = vsub.s32 4, %v6354
        %v6379 = vsel %vm6294, %v6378, %v6354
        %v6380 = vsel %vm6293, %v688, %v6377
        %v6381 = vsel %vm6293, 0, %v6379
        %v6382 = vcosq.f32.pop %v6380
        %v6383 = vsinq.f32.pop %v6380
        %vm6384 = vweird.f32 %v688
        %v6385 = vand.u32 %v6381, 3
        %vm6386 = vcmp.lt.s32.totalorder %v6385, 2
        %vm6387 = vcmp.eq.s32.totalorder %v6385, 0
        %v6388 = vxor.u32 %v6383, 2147483648
        %v6389 = vsel %vm6387, %v6382, %v6388
        %vm6390 = vcmp.eq.s32.totalorder %v6385, 2
        %v6391 = vxor.u32 %v6382, 2147483648
        %v6392 = vsel %vm6390, %v6391, %v6383
        %v6393 = vsel %vm6386, %v6389, %v6392
        %v6394 = vsel %vm6384, nan, %v6393
        %v6395 = vand.u32 2147483647, %v689
        %vm6396 = vcmp.le.f32.partialorder %v6395, 0.7853982
        %vm6397 = vcmp.lt.s32.totalorder %v689, 0
        %v6398 = vand.u32 %v689, 2139095040
        %v6399 = vshrl.u32 %v6398, 23
        %v6400 = vsub.s32 %v6399, 127
        %v6401 = vand.u32 2147483647, %v689
        %v6402 = vand.u32 %v6401, 8388607
        %v6403 = vor.u32 %v6402, 8388608
        %v6404 = vsub.s32 0, %v6403
        %v6405 = vadd.s32 %v6400, 1
        %vm6406 = vcmp.gt.s32.totalorder %v6405, 0
        %v6407 = vsel %vm6406, %v6405, 0
        %v6408 = vshrl.u32 %v6407, 5
        %v6409 = vand.u32 %v6407, 31
        %v6410 = vsub.s32 32, %v6409
        %v6411 = vshrl.u32 683565275, %v6410
        %v6412 = vshll.u32 683565275, %v6409
        %v6413 = vshrl.u32 2475754826, %v6410
        %v6414 = vor.u32 %v6412, %v6413
        %v6415 = vshll.u32 2475754826, %v6409
        %v6416 = vshrl.u32 2131351028, %v6410
        %v6417 = vor.u32 %v6415, %v6416
        %v6418 = vshll.u32 2131351028, %v6409
        %v6419 = vshrl.u32 2102212464, %v6410
        %v6420 = vor.u32 %v6418, %v6419
        %v6421 = vshll.u32 2102212464, %v6409
        %v6422 = vshrl.u32 920167782, %v6410
        %v6423 = vor.u32 %v6421, %v6422
        %v6424 = vshll.u32 920167782, %v6409
        %v6425 = vshrl.u32 1326507024, %v6410
        %v6426 = vor.u32 %v6424, %v6425
        %vm6427 = vcmp.lt.s32.totalorder %v6408, 1
        %vm6428 = vcmp.lt.s32.totalorder %v6408, 2
        %vm6429 = vcmp.lt.s32.totalorder %v6408, 3
        %vm6430 = vcmp.lt.s32.totalorder %v6408, 4
        %v6431 = vsel %vm6427, %v6411, %v6414
        %v6432 = vsel %vm6430, %v6420, 2102212464
        %v6433 = vsel %vm6429, %v6417, %v6432
        %v6434 = vsel %vm6428, %v6431, %v6433
        %v6435 = vsel %vm6427, %v6414, %v6417
        %v6436 = vsel %vm6430, %v6423, 920167782
        %v6437 = vsel %vm6429, %v6420, %v6436
        %v6438 = vsel %vm6428, %v6435, %v6437
        %v6439 = vsel %vm6427, %v6417, %v6420
        %v6440 = vsel %vm6430, %v6426, 1326507024
        %v6441 = vsel %vm6429, %v6423, %v6440
        %v6442 = vsel %vm6428, %v6439, %v6441
        %v6443 = vshll.u32 %v6403, 8
        %v6444 = vmul.u32.u64.compose %v6443, %v6442
        %v6445 = vextract.low.u32 %v6444
        %v6446 = vextract.high.u32 %v6444
        %v6447 = vmul.u32.u64.compose %v6443, %v6438
        %v6448 = vextract.low.u32 %v6447
        %v6449 = vextract.high.u32 %v6447
        %v6450 = vmul.u32 %v6443, %v6434
        %v6451 = vadd.s32 %v6446, %v6448
        %vm6452 = vc.u32 %v6446, %v6448
        %v6453 = vadd.s32 %v6449, 1
        %v6454 = vsel %vm6452, %v6453, %v6449
        %v6455 = vadd.s32 %v6450, %v6454
        %v6456 = vadd.s32 %v6455, 536870912
        %v6457 = vshrl.u32 %v6456, 30
        %v6458 = vshll.u32 %v6457, 30
        %v6459 = vsub.s32 %v6455, %v6458
        %vm6460 = vcmp.lt.s32.totalorder %v6459, 0
        %v6461 = vsub.s32 0, %v6459
        %v6462 = vsel %vm6460, %v6461, %v6459
        %v6463 = vclz %v6462
        %v6464 = vsub.s32 %v6463, 2
        %vm6465 = vcmp.gt.s32.totalorder 0, %v6464
        %v6466 = vsel %vm6465, 0, %v6464
        %v6467 = vsub.s32 32, %v6466
        %v6468 = vshll.u32 %v6459, %v6466
        %v6469 = vshrl.u32 %v6451, %v6467
        %v6470 = vor.u32 %v6468, %v6469
        %v6471 = vsub.s32 4294967266, %v6466
        %v6472 = vadd.s32 %v6471, 127
        %v6473 = vshll.u32 %v6472, 23
        %v6474 = vor.u32 4788187, %v6473
        %v6475 = vand.u32 2147483647, %v6474
        %v6477 = vcvt.s32.f32 %v6470
        %v6478 = vmul.f32 %v6477, %v6475
        %v6479 = vxor.u32 %v6478, 2147483648
        %v6480 = vsel %vm6397, %v6479, %v6478
        %v6481 = vsub.s32 4, %v6457
        %v6482 = vsel %vm6397, %v6481, %v6457
        %v6483 = vsel %vm6396, %v689, %v6480
        %v6484 = vsel %vm6396, 0, %v6482
        %v6485 = vcosq.f32.pop %v6483
        %v6486 = vsinq.f32.pop %v6483
        %vm6487 = vweird.f32 %v689
        %v6488 = vand.u32 %v6484, 3
        %vm6489 = vcmp.lt.s32.totalorder %v6488, 2
        %vm6490 = vcmp.eq.s32.totalorder %v6488, 0
        %v6491 = vxor.u32 %v6486, 2147483648
        %v6492 = vsel %vm6490, %v6485, %v6491
        %vm6493 = vcmp.eq.s32.totalorder %v6488, 2
        %v6494 = vxor.u32 %v6485, 2147483648
        %v6495 = vsel %vm6493, %v6494, %v6486
        %v6496 = vsel %vm6489, %v6492, %v6495
        %v6497 = vsel %vm6487, nan, %v6496
        %v6498 = vand.u32 2147483647, %v690
        %vm6499 = vcmp.le.f32.partialorder %v6498, 0.7853982
        %vm6500 = vcmp.lt.s32.totalorder %v690, 0
        %v6501 = vand.u32 %v690, 2139095040
        %v6502 = vshrl.u32 %v6501, 23
        %v6503 = vsub.s32 %v6502, 127
        %v6504 = vand.u32 2147483647, %v690
        %v6505 = vand.u32 %v6504, 8388607
        %v6506 = vor.u32 %v6505, 8388608
        %v6507 = vsub.s32 0, %v6506
        %v6508 = vadd.s32 %v6503, 1
        %vm6509 = vcmp.gt.s32.totalorder %v6508, 0
        %v6510 = vsel %vm6509, %v6508, 0
        %v6511 = vshrl.u32 %v6510, 5
        %v6512 = vand.u32 %v6510, 31
        %v6513 = vsub.s32 32, %v6512
        %v6514 = vshrl.u32 683565275, %v6513
        %v6515 = vshll.u32 683565275, %v6512
        %v6516 = vshrl.u32 2475754826, %v6513
        %v6517 = vor.u32 %v6515, %v6516
        %v6518 = vshll.u32 2475754826, %v6512
        %v6519 = vshrl.u32 2131351028, %v6513
        %v6520 = vor.u32 %v6518, %v6519
        %v6521 = vshll.u32 2131351028, %v6512
        %v6522 = vshrl.u32 2102212464, %v6513
        %v6523 = vor.u32 %v6521, %v6522
        %v6524 = vshll.u32 2102212464, %v6512
        %v6525 = vshrl.u32 920167782, %v6513
        %v6526 = vor.u32 %v6524, %v6525
        %v6527 = vshll.u32 920167782, %v6512
        %v6528 = vshrl.u32 1326507024, %v6513
        %v6529 = vor.u32 %v6527, %v6528
        %vm6530 = vcmp.lt.s32.totalorder %v6511, 1
        %vm6531 = vcmp.lt.s32.totalorder %v6511, 2
        %vm6532 = vcmp.lt.s32.totalorder %v6511, 3
        %vm6533 = vcmp.lt.s32.totalorder %v6511, 4
        %v6534 = vsel %vm6530, %v6514, %v6517
        %v6535 = vsel %vm6533, %v6523, 2102212464
        %v6536 = vsel %vm6532, %v6520, %v6535
        %v6537 = vsel %vm6531, %v6534, %v6536
        %v6538 = vsel %vm6530, %v6517, %v6520
        %v6539 = vsel %vm6533, %v6526, 920167782
        %v6540 = vsel %vm6532, %v6523, %v6539
        %v6541 = vsel %vm6531, %v6538, %v6540
        %v6542 = vsel %vm6530, %v6520, %v6523
        %v6543 = vsel %vm6533, %v6529, 1326507024
        %v6544 = vsel %vm6532, %v6526, %v6543
        %v6545 = vsel %vm6531, %v6542, %v6544
        %v6546 = vshll.u32 %v6506, 8
        %v6547 = vmul.u32.u64.compose %v6546, %v6545
        %v6548 = vextract.low.u32 %v6547
        %v6549 = vextract.high.u32 %v6547
        %v6550 = vmul.u32.u64.compose %v6546, %v6541
        %v6551 = vextract.low.u32 %v6550
        %v6552 = vextract.high.u32 %v6550
        %v6553 = vmul.u32 %v6546, %v6537
        %v6554 = vadd.s32 %v6549, %v6551
        %vm6555 = vc.u32 %v6549, %v6551
        %v6556 = vadd.s32 %v6552, 1
        %v6557 = vsel %vm6555, %v6556, %v6552
        %v6558 = vadd.s32 %v6553, %v6557
        %v6559 = vadd.s32 %v6558, 536870912
        %v6560 = vshrl.u32 %v6559, 30
        %v6561 = vshll.u32 %v6560, 30
        %v6562 = vsub.s32 %v6558, %v6561
        %vm6563 = vcmp.lt.s32.totalorder %v6562, 0
        %v6564 = vsub.s32 0, %v6562
        %v6565 = vsel %vm6563, %v6564, %v6562
        %v6566 = vclz %v6565
        %v6567 = vsub.s32 %v6566, 2
        %vm6568 = vcmp.gt.s32.totalorder 0, %v6567
        %v6569 = vsel %vm6568, 0, %v6567
        %v6570 = vsub.s32 32, %v6569
        %v6571 = vshll.u32 %v6562, %v6569
        %v6572 = vshrl.u32 %v6554, %v6570
        %v6573 = vor.u32 %v6571, %v6572
        %v6574 = vsub.s32 4294967266, %v6569
        %v6575 = vadd.s32 %v6574, 127
        %v6576 = vshll.u32 %v6575, 23
        %v6577 = vor.u32 4788187, %v6576
        %v6578 = vand.u32 2147483647, %v6577
        %v6580 = vcvt.s32.f32 %v6573
        %v6581 = vmul.f32 %v6580, %v6578
        %v6582 = vxor.u32 %v6581, 2147483648
        %v6583 = vsel %vm6500, %v6582, %v6581
        %v6584 = vsub.s32 4, %v6560
        %v6585 = vsel %vm6500, %v6584, %v6560
        %v6586 = vsel %vm6499, %v690, %v6583
        %v6587 = vsel %vm6499, 0, %v6585
        %v6588 = vcosq.f32.pop %v6586
        %v6589 = vsinq.f32.pop %v6586
        %vm6590 = vweird.f32 %v690
        %v6591 = vand.u32 %v6587, 3
        %vm6592 = vcmp.lt.s32.totalorder %v6591, 2
        %vm6593 = vcmp.eq.s32.totalorder %v6591, 0
        %v6594 = vxor.u32 %v6589, 2147483648
        %v6595 = vsel %vm6593, %v6588, %v6594
        %vm6596 = vcmp.eq.s32.totalorder %v6591, 2
        %v6597 = vxor.u32 %v6588, 2147483648
        %v6598 = vsel %vm6596, %v6597, %v6589
        %v6599 = vsel %vm6592, %v6595, %v6598
        %v6600 = vsel %vm6590, nan, %v6599
        %v6601 = vand.u32 2147483647, %v691
        %vm6602 = vcmp.le.f32.partialorder %v6601, 0.7853982
        %vm6603 = vcmp.lt.s32.totalorder %v691, 0
        %v6604 = vand.u32 %v691, 2139095040
        %v6605 = vshrl.u32 %v6604, 23
        %v6606 = vsub.s32 %v6605, 127
        %v6607 = vand.u32 2147483647, %v691
        %v6608 = vand.u32 %v6607, 8388607
        %v6609 = vor.u32 %v6608, 8388608
        %v6610 = vsub.s32 0, %v6609
        %v6611 = vadd.s32 %v6606, 1
        %vm6612 = vcmp.gt.s32.totalorder %v6611, 0
        %v6613 = vsel %vm6612, %v6611, 0
        %v6614 = vshrl.u32 %v6613, 5
        %v6615 = vand.u32 %v6613, 31
        %v6616 = vsub.s32 32, %v6615
        %v6617 = vshrl.u32 683565275, %v6616
        %v6618 = vshll.u32 683565275, %v6615
        %v6619 = vshrl.u32 2475754826, %v6616
        %v6620 = vor.u32 %v6618, %v6619
        %v6621 = vshll.u32 2475754826, %v6615
        %v6622 = vshrl.u32 2131351028, %v6616
        %v6623 = vor.u32 %v6621, %v6622
        %v6624 = vshll.u32 2131351028, %v6615
        %v6625 = vshrl.u32 2102212464, %v6616
        %v6626 = vor.u32 %v6624, %v6625
        %v6627 = vshll.u32 2102212464, %v6615
        %v6628 = vshrl.u32 920167782, %v6616
        %v6629 = vor.u32 %v6627, %v6628
        %v6630 = vshll.u32 920167782, %v6615
        %v6631 = vshrl.u32 1326507024, %v6616
        %v6632 = vor.u32 %v6630, %v6631
        %vm6633 = vcmp.lt.s32.totalorder %v6614, 1
        %vm6634 = vcmp.lt.s32.totalorder %v6614, 2
        %vm6635 = vcmp.lt.s32.totalorder %v6614, 3
        %vm6636 = vcmp.lt.s32.totalorder %v6614, 4
        %v6637 = vsel %vm6633, %v6617, %v6620
        %v6638 = vsel %vm6636, %v6626, 2102212464
        %v6639 = vsel %vm6635, %v6623, %v6638
        %v6640 = vsel %vm6634, %v6637, %v6639
        %v6641 = vsel %vm6633, %v6620, %v6623
        %v6642 = vsel %vm6636, %v6629, 920167782
        %v6643 = vsel %vm6635, %v6626, %v6642
        %v6644 = vsel %vm6634, %v6641, %v6643
        %v6645 = vsel %vm6633, %v6623, %v6626
        %v6646 = vsel %vm6636, %v6632, 1326507024
        %v6647 = vsel %vm6635, %v6629, %v6646
        %v6648 = vsel %vm6634, %v6645, %v6647
        %v6649 = vshll.u32 %v6609, 8
        %v6650 = vmul.u32.u64.compose %v6649, %v6648
        %v6651 = vextract.low.u32 %v6650
        %v6652 = vextract.high.u32 %v6650
        %v6653 = vmul.u32.u64.compose %v6649, %v6644
        %v6654 = vextract.low.u32 %v6653
        %v6655 = vextract.high.u32 %v6653
        %v6656 = vmul.u32 %v6649, %v6640
        %v6657 = vadd.s32 %v6652, %v6654
        %vm6658 = vc.u32 %v6652, %v6654
        %v6659 = vadd.s32 %v6655, 1
        %v6660 = vsel %vm6658, %v6659, %v6655
        %v6661 = vadd.s32 %v6656, %v6660
        %v6662 = vadd.s32 %v6661, 536870912
        %v6663 = vshrl.u32 %v6662, 30
        %v6664 = vshll.u32 %v6663, 30
        %v6665 = vsub.s32 %v6661, %v6664
        %vm6666 = vcmp.lt.s32.totalorder %v6665, 0
        %v6667 = vsub.s32 0, %v6665
        %v6668 = vsel %vm6666, %v6667, %v6665
        %v6669 = vclz %v6668
        %v6670 = vsub.s32 %v6669, 2
        %vm6671 = vcmp.gt.s32.totalorder 0, %v6670
        %v6672 = vsel %vm6671, 0, %v6670
        %v6673 = vsub.s32 32, %v6672
        %v6674 = vshll.u32 %v6665, %v6672
        %v6675 = vshrl.u32 %v6657, %v6673
        %v6676 = vor.u32 %v6674, %v6675
        %v6677 = vsub.s32 4294967266, %v6672
        %v6678 = vadd.s32 %v6677, 127
        %v6679 = vshll.u32 %v6678, 23
        %v6680 = vor.u32 4788187, %v6679
        %v6681 = vand.u32 2147483647, %v6680
        %v6683 = vcvt.s32.f32 %v6676
        %v6684 = vmul.f32 %v6683, %v6681
        %v6685 = vxor.u32 %v6684, 2147483648
        %v6686 = vsel %vm6603, %v6685, %v6684
        %v6687 = vsub.s32 4, %v6663
        %v6688 = vsel %vm6603, %v6687, %v6663
        %v6689 = vsel %vm6602, %v691, %v6686
        %v6690 = vsel %vm6602, 0, %v6688
        %v6691 = vcosq.f32.pop %v6689
        %v6692 = vsinq.f32.pop %v6689
        %vm6693 = vweird.f32 %v691
        %v6694 = vand.u32 %v6690, 3
        %vm6695 = vcmp.lt.s32.totalorder %v6694, 2
        %vm6696 = vcmp.eq.s32.totalorder %v6694, 0
        %v6697 = vxor.u32 %v6692, 2147483648
        %v6698 = vsel %vm6696, %v6691, %v6697
        %vm6699 = vcmp.eq.s32.totalorder %v6694, 2
        %v6700 = vxor.u32 %v6691, 2147483648
        %v6701 = vsel %vm6699, %v6700, %v6692
        %v6702 = vsel %vm6695, %v6698, %v6701
        %v6703 = vsel %vm6693, nan, %v6702
        %v6704 = vand.u32 2147483647, %v692
        %vm6705 = vcmp.le.f32.partialorder %v6704, 0.7853982
        %vm6706 = vcmp.lt.s32.totalorder %v692, 0
        %v6707 = vand.u32 %v692, 2139095040
        %v6708 = vshrl.u32 %v6707, 23
        %v6709 = vsub.s32 %v6708, 127
        %v6710 = vand.u32 2147483647, %v692
        %v6711 = vand.u32 %v6710, 8388607
        %v6712 = vor.u32 %v6711, 8388608
        %v6713 = vsub.s32 0, %v6712
        %v6714 = vadd.s32 %v6709, 1
        %vm6715 = vcmp.gt.s32.totalorder %v6714, 0
        %v6716 = vsel %vm6715, %v6714, 0
        %v6717 = vshrl.u32 %v6716, 5
        %v6718 = vand.u32 %v6716, 31
        %v6719 = vsub.s32 32, %v6718
        %v6720 = vshrl.u32 683565275, %v6719
        %v6721 = vshll.u32 683565275, %v6718
        %v6722 = vshrl.u32 2475754826, %v6719
        %v6723 = vor.u32 %v6721, %v6722
        %v6724 = vshll.u32 2475754826, %v6718
        %v6725 = vshrl.u32 2131351028, %v6719
        %v6726 = vor.u32 %v6724, %v6725
        %v6727 = vshll.u32 2131351028, %v6718
        %v6728 = vshrl.u32 2102212464, %v6719
        %v6729 = vor.u32 %v6727, %v6728
        %v6730 = vshll.u32 2102212464, %v6718
        %v6731 = vshrl.u32 920167782, %v6719
        %v6732 = vor.u32 %v6730, %v6731
        %v6733 = vshll.u32 920167782, %v6718
        %v6734 = vshrl.u32 1326507024, %v6719
        %v6735 = vor.u32 %v6733, %v6734
        %vm6736 = vcmp.lt.s32.totalorder %v6717, 1
        %vm6737 = vcmp.lt.s32.totalorder %v6717, 2
        %vm6738 = vcmp.lt.s32.totalorder %v6717, 3
        %vm6739 = vcmp.lt.s32.totalorder %v6717, 4
        %v6740 = vsel %vm6736, %v6720, %v6723
        %v6741 = vsel %vm6739, %v6729, 2102212464
        %v6742 = vsel %vm6738, %v6726, %v6741
        %v6743 = vsel %vm6737, %v6740, %v6742
        %v6744 = vsel %vm6736, %v6723, %v6726
        %v6745 = vsel %vm6739, %v6732, 920167782
        %v6746 = vsel %vm6738, %v6729, %v6745
        %v6747 = vsel %vm6737, %v6744, %v6746
        %v6748 = vsel %vm6736, %v6726, %v6729
        %v6749 = vsel %vm6739, %v6735, 1326507024
        %v6750 = vsel %vm6738, %v6732, %v6749
        %v6751 = vsel %vm6737, %v6748, %v6750
        %v6752 = vshll.u32 %v6712, 8
        %v6753 = vmul.u32.u64.compose %v6752, %v6751
        %v6754 = vextract.low.u32 %v6753
        %v6755 = vextract.high.u32 %v6753
        %v6756 = vmul.u32.u64.compose %v6752, %v6747
        %v6757 = vextract.low.u32 %v6756
        %v6758 = vextract.high.u32 %v6756
        %v6759 = vmul.u32 %v6752, %v6743
        %v6760 = vadd.s32 %v6755, %v6757
        %vm6761 = vc.u32 %v6755, %v6757
        %v6762 = vadd.s32 %v6758, 1
        %v6763 = vsel %vm6761, %v6762, %v6758
        %v6764 = vadd.s32 %v6759, %v6763
        %v6765 = vadd.s32 %v6764, 536870912
        %v6766 = vshrl.u32 %v6765, 30
        %v6767 = vshll.u32 %v6766, 30
        %v6768 = vsub.s32 %v6764, %v6767
        %vm6769 = vcmp.lt.s32.totalorder %v6768, 0
        %v6770 = vsub.s32 0, %v6768
        %v6771 = vsel %vm6769, %v6770, %v6768
        %v6772 = vclz %v6771
        %v6773 = vsub.s32 %v6772, 2
        %vm6774 = vcmp.gt.s32.totalorder 0, %v6773
        %v6775 = vsel %vm6774, 0, %v6773
        %v6776 = vsub.s32 32, %v6775
        %v6777 = vshll.u32 %v6768, %v6775
        %v6778 = vshrl.u32 %v6760, %v6776
        %v6779 = vor.u32 %v6777, %v6778
        %v6780 = vsub.s32 4294967266, %v6775
        %v6781 = vadd.s32 %v6780, 127
        %v6782 = vshll.u32 %v6781, 23
        %v6783 = vor.u32 4788187, %v6782
        %v6784 = vand.u32 2147483647, %v6783
        %v6786 = vcvt.s32.f32 %v6779
        %v6787 = vmul.f32 %v6786, %v6784
        %v6788 = vxor.u32 %v6787, 2147483648
        %v6789 = vsel %vm6706, %v6788, %v6787
        %v6790 = vsub.s32 4, %v6766
        %v6791 = vsel %vm6706, %v6790, %v6766
        %v6792 = vsel %vm6705, %v692, %v6789
        %v6793 = vsel %vm6705, 0, %v6791
        %v6794 = vcosq.f32.pop %v6792
        %v6795 = vsinq.f32.pop %v6792
        %vm6796 = vweird.f32 %v692
        %v6797 = vand.u32 %v6793, 3
        %vm6798 = vcmp.lt.s32.totalorder %v6797, 2
        %vm6799 = vcmp.eq.s32.totalorder %v6797, 0
        %v6800 = vxor.u32 %v6795, 2147483648
        %v6801 = vsel %vm6799, %v6794, %v6800
        %vm6802 = vcmp.eq.s32.totalorder %v6797, 2
        %v6803 = vxor.u32 %v6794, 2147483648
        %v6804 = vsel %vm6802, %v6803, %v6795
        %v6805 = vsel %vm6798, %v6801, %v6804
        %v6806 = vsel %vm6796, nan, %v6805
        %v6807 = vand.u32 2147483647, %v693
        %vm6808 = vcmp.le.f32.partialorder %v6807, 0.7853982
        %vm6809 = vcmp.lt.s32.totalorder %v693, 0
        %v6810 = vand.u32 %v693, 2139095040
        %v6811 = vshrl.u32 %v6810, 23
        %v6812 = vsub.s32 %v6811, 127
        %v6813 = vand.u32 2147483647, %v693
        %v6814 = vand.u32 %v6813, 8388607
        %v6815 = vor.u32 %v6814, 8388608
        %v6816 = vsub.s32 0, %v6815
        %v6817 = vadd.s32 %v6812, 1
        %vm6818 = vcmp.gt.s32.totalorder %v6817, 0
        %v6819 = vsel %vm6818, %v6817, 0
        %v6820 = vshrl.u32 %v6819, 5
        %v6821 = vand.u32 %v6819, 31
        %v6822 = vsub.s32 32, %v6821
        %v6823 = vshrl.u32 683565275, %v6822
        %v6824 = vshll.u32 683565275, %v6821
        %v6825 = vshrl.u32 2475754826, %v6822
        %v6826 = vor.u32 %v6824, %v6825
        %v6827 = vshll.u32 2475754826, %v6821
        %v6828 = vshrl.u32 2131351028, %v6822
        %v6829 = vor.u32 %v6827, %v6828
        %v6830 = vshll.u32 2131351028, %v6821
        %v6831 = vshrl.u32 2102212464, %v6822
        %v6832 = vor.u32 %v6830, %v6831
        %v6833 = vshll.u32 2102212464, %v6821
        %v6834 = vshrl.u32 920167782, %v6822
        %v6835 = vor.u32 %v6833, %v6834
        %v6836 = vshll.u32 920167782, %v6821
        %v6837 = vshrl.u32 1326507024, %v6822
        %v6838 = vor.u32 %v6836, %v6837
        %vm6839 = vcmp.lt.s32.totalorder %v6820, 1
        %vm6840 = vcmp.lt.s32.totalorder %v6820, 2
        %vm6841 = vcmp.lt.s32.totalorder %v6820, 3
        %vm6842 = vcmp.lt.s32.totalorder %v6820, 4
        %v6843 = vsel %vm6839, %v6823, %v6826
        %v6844 = vsel %vm6842, %v6832, 2102212464
        %v6845 = vsel %vm6841, %v6829, %v6844
        %v6846 = vsel %vm6840, %v6843, %v6845
        %v6847 = vsel %vm6839, %v6826, %v6829
        %v6848 = vsel %vm6842, %v6835, 920167782
        %v6849 = vsel %vm6841, %v6832, %v6848
        %v6850 = vsel %vm6840, %v6847, %v6849
        %v6851 = vsel %vm6839, %v6829, %v6832
        %v6852 = vsel %vm6842, %v6838, 1326507024
        %v6853 = vsel %vm6841, %v6835, %v6852
        %v6854 = vsel %vm6840, %v6851, %v6853
        %v6855 = vshll.u32 %v6815, 8
        %v6856 = vmul.u32.u64.compose %v6855, %v6854
        %v6857 = vextract.low.u32 %v6856
        %v6858 = vextract.high.u32 %v6856
        %v6859 = vmul.u32.u64.compose %v6855, %v6850
        %v6860 = vextract.low.u32 %v6859
        %v6861 = vextract.high.u32 %v6859
        %v6862 = vmul.u32 %v6855, %v6846
        %v6863 = vadd.s32 %v6858, %v6860
        %vm6864 = vc.u32 %v6858, %v6860
        %v6865 = vadd.s32 %v6861, 1
        %v6866 = vsel %vm6864, %v6865, %v6861
        %v6867 = vadd.s32 %v6862, %v6866
        %v6868 = vadd.s32 %v6867, 536870912
        %v6869 = vshrl.u32 %v6868, 30
        %v6870 = vshll.u32 %v6869, 30
        %v6871 = vsub.s32 %v6867, %v6870
        %vm6872 = vcmp.lt.s32.totalorder %v6871, 0
        %v6873 = vsub.s32 0, %v6871
        %v6874 = vsel %vm6872, %v6873, %v6871
        %v6875 = vclz %v6874
        %v6876 = vsub.s32 %v6875, 2
        %vm6877 = vcmp.gt.s32.totalorder 0, %v6876
        %v6878 = vsel %vm6877, 0, %v6876
        %v6879 = vsub.s32 32, %v6878
        %v6880 = vshll.u32 %v6871, %v6878
        %v6881 = vshrl.u32 %v6863, %v6879
        %v6882 = vor.u32 %v6880, %v6881
        %v6883 = vsub.s32 4294967266, %v6878
        %v6884 = vadd.s32 %v6883, 127
        %v6885 = vshll.u32 %v6884, 23
        %v6886 = vor.u32 4788187, %v6885
        %v6887 = vand.u32 2147483647, %v6886
        %v6889 = vcvt.s32.f32 %v6882
        %v6890 = vmul.f32 %v6889, %v6887
        %v6891 = vxor.u32 %v6890, 2147483648
        %v6892 = vsel %vm6809, %v6891, %v6890
        %v6893 = vsub.s32 4, %v6869
        %v6894 = vsel %vm6809, %v6893, %v6869
        %v6895 = vsel %vm6808, %v693, %v6892
        %v6896 = vsel %vm6808, 0, %v6894
        %v6897 = vcosq.f32.pop %v6895
        %v6898 = vsinq.f32.pop %v6895
        %vm6899 = vweird.f32 %v693
        %v6900 = vand.u32 %v6896, 3
        %vm6901 = vcmp.lt.s32.totalorder %v6900, 2
        %vm6902 = vcmp.eq.s32.totalorder %v6900, 0
        %v6903 = vxor.u32 %v6898, 2147483648
        %v6904 = vsel %vm6902, %v6897, %v6903
        %vm6905 = vcmp.eq.s32.totalorder %v6900, 2
        %v6906 = vxor.u32 %v6897, 2147483648
        %v6907 = vsel %vm6905, %v6906, %v6898
        %v6908 = vsel %vm6901, %v6904, %v6907
        %v6909 = vsel %vm6899, nan, %v6908
        %v6910 = vand.u32 2147483647, %v694
        %vm6911 = vcmp.le.f32.partialorder %v6910, 0.7853982
        %vm6912 = vcmp.lt.s32.totalorder %v694, 0
        %v6913 = vand.u32 %v694, 2139095040
        %v6914 = vshrl.u32 %v6913, 23
        %v6915 = vsub.s32 %v6914, 127
        %v6916 = vand.u32 2147483647, %v694
        %v6917 = vand.u32 %v6916, 8388607
        %v6918 = vor.u32 %v6917, 8388608
        %v6919 = vsub.s32 0, %v6918
        %v6920 = vadd.s32 %v6915, 1
        %vm6921 = vcmp.gt.s32.totalorder %v6920, 0
        %v6922 = vsel %vm6921, %v6920, 0
        %v6923 = vshrl.u32 %v6922, 5
        %v6924 = vand.u32 %v6922, 31
        %v6925 = vsub.s32 32, %v6924
        %v6926 = vshrl.u32 683565275, %v6925
        %v6927 = vshll.u32 683565275, %v6924
        %v6928 = vshrl.u32 2475754826, %v6925
        %v6929 = vor.u32 %v6927, %v6928
        %v6930 = vshll.u32 2475754826, %v6924
        %v6931 = vshrl.u32 2131351028, %v6925
        %v6932 = vor.u32 %v6930, %v6931
        %v6933 = vshll.u32 2131351028, %v6924
        %v6934 = vshrl.u32 2102212464, %v6925
        %v6935 = vor.u32 %v6933, %v6934
        %v6936 = vshll.u32 2102212464, %v6924
        %v6937 = vshrl.u32 920167782, %v6925
        %v6938 = vor.u32 %v6936, %v6937
        %v6939 = vshll.u32 920167782, %v6924
        %v6940 = vshrl.u32 1326507024, %v6925
        %v6941 = vor.u32 %v6939, %v6940
        %vm6942 = vcmp.lt.s32.totalorder %v6923, 1
        %vm6943 = vcmp.lt.s32.totalorder %v6923, 2
        %vm6944 = vcmp.lt.s32.totalorder %v6923, 3
        %vm6945 = vcmp.lt.s32.totalorder %v6923, 4
        %v6946 = vsel %vm6942, %v6926, %v6929
        %v6947 = vsel %vm6945, %v6935, 2102212464
        %v6948 = vsel %vm6944, %v6932, %v6947
        %v6949 = vsel %vm6943, %v6946, %v6948
        %v6950 = vsel %vm6942, %v6929, %v6932
        %v6951 = vsel %vm6945, %v6938, 920167782
        %v6952 = vsel %vm6944, %v6935, %v6951
        %v6953 = vsel %vm6943, %v6950, %v6952
        %v6954 = vsel %vm6942, %v6932, %v6935
        %v6955 = vsel %vm6945, %v6941, 1326507024
        %v6956 = vsel %vm6944, %v6938, %v6955
        %v6957 = vsel %vm6943, %v6954, %v6956
        %v6958 = vshll.u32 %v6918, 8
        %v6959 = vmul.u32.u64.compose %v6958, %v6957
        %v6960 = vextract.low.u32 %v6959
        %v6961 = vextract.high.u32 %v6959
        %v6962 = vmul.u32.u64.compose %v6958, %v6953
        %v6963 = vextract.low.u32 %v6962
        %v6964 = vextract.high.u32 %v6962
        %v6965 = vmul.u32 %v6958, %v6949
        %v6966 = vadd.s32 %v6961, %v6963
        %vm6967 = vc.u32 %v6961, %v6963
        %v6968 = vadd.s32 %v6964, 1
        %v6969 = vsel %vm6967, %v6968, %v6964
        %v6970 = vadd.s32 %v6965, %v6969
        %v6971 = vadd.s32 %v6970, 536870912
        %v6972 = vshrl.u32 %v6971, 30
        %v6973 = vshll.u32 %v6972, 30
        %v6974 = vsub.s32 %v6970, %v6973
        %vm6975 = vcmp.lt.s32.totalorder %v6974, 0
        %v6976 = vsub.s32 0, %v6974
        %v6977 = vsel %vm6975, %v6976, %v6974
        %v6978 = vclz %v6977
        %v6979 = vsub.s32 %v6978, 2
        %vm6980 = vcmp.gt.s32.totalorder 0, %v6979
        %v6981 = vsel %vm6980, 0, %v6979
        %v6982 = vsub.s32 32, %v6981
        %v6983 = vshll.u32 %v6974, %v6981
        %v6984 = vshrl.u32 %v6966, %v6982
        %v6985 = vor.u32 %v6983, %v6984
        %v6986 = vsub.s32 4294967266, %v6981
        %v6987 = vadd.s32 %v6986, 127
        %v6988 = vshll.u32 %v6987, 23
        %v6989 = vor.u32 4788187, %v6988
        %v6990 = vand.u32 2147483647, %v6989
        %v6992 = vcvt.s32.f32 %v6985
        %v6993 = vmul.f32 %v6992, %v6990
        %v6994 = vxor.u32 %v6993, 2147483648
        %v6995 = vsel %vm6912, %v6994, %v6993
        %v6996 = vsub.s32 4, %v6972
        %v6997 = vsel %vm6912, %v6996, %v6972
        %v6998 = vsel %vm6911, %v694, %v6995
        %v6999 = vsel %vm6911, 0, %v6997
        %v7000 = vcosq.f32.pop %v6998
        %v7001 = vsinq.f32.pop %v6998
        %vm7002 = vweird.f32 %v694
        %v7003 = vand.u32 %v6999, 3
        %vm7004 = vcmp.lt.s32.totalorder %v7003, 2
        %vm7005 = vcmp.eq.s32.totalorder %v7003, 0
        %v7006 = vxor.u32 %v7001, 2147483648
        %v7007 = vsel %vm7005, %v7000, %v7006
        %vm7008 = vcmp.eq.s32.totalorder %v7003, 2
        %v7009 = vxor.u32 %v7000, 2147483648
        %v7010 = vsel %vm7008, %v7009, %v7001
        %v7011 = vsel %vm7004, %v7007, %v7010
        %v7012 = vsel %vm7002, nan, %v7011
        %v7013 = vand.u32 2147483647, %v695
        %vm7014 = vcmp.le.f32.partialorder %v7013, 0.7853982
        %vm7015 = vcmp.lt.s32.totalorder %v695, 0
        %v7016 = vand.u32 %v695, 2139095040
        %v7017 = vshrl.u32 %v7016, 23
        %v7018 = vsub.s32 %v7017, 127
        %v7019 = vand.u32 2147483647, %v695
        %v7020 = vand.u32 %v7019, 8388607
        %v7021 = vor.u32 %v7020, 8388608
        %v7022 = vsub.s32 0, %v7021
        %v7023 = vadd.s32 %v7018, 1
        %vm7024 = vcmp.gt.s32.totalorder %v7023, 0
        %v7025 = vsel %vm7024, %v7023, 0
        %v7026 = vshrl.u32 %v7025, 5
        %v7027 = vand.u32 %v7025, 31
        %v7028 = vsub.s32 32, %v7027
        %v7029 = vshrl.u32 683565275, %v7028
        %v7030 = vshll.u32 683565275, %v7027
        %v7031 = vshrl.u32 2475754826, %v7028
        %v7032 = vor.u32 %v7030, %v7031
        %v7033 = vshll.u32 2475754826, %v7027
        %v7034 = vshrl.u32 2131351028, %v7028
        %v7035 = vor.u32 %v7033, %v7034
        %v7036 = vshll.u32 2131351028, %v7027
        %v7037 = vshrl.u32 2102212464, %v7028
        %v7038 = vor.u32 %v7036, %v7037
        %v7039 = vshll.u32 2102212464, %v7027
        %v7040 = vshrl.u32 920167782, %v7028
        %v7041 = vor.u32 %v7039, %v7040
        %v7042 = vshll.u32 920167782, %v7027
        %v7043 = vshrl.u32 1326507024, %v7028
        %v7044 = vor.u32 %v7042, %v7043
        %vm7045 = vcmp.lt.s32.totalorder %v7026, 1
        %vm7046 = vcmp.lt.s32.totalorder %v7026, 2
        %vm7047 = vcmp.lt.s32.totalorder %v7026, 3
        %vm7048 = vcmp.lt.s32.totalorder %v7026, 4
        %v7049 = vsel %vm7045, %v7029, %v7032
        %v7050 = vsel %vm7048, %v7038, 2102212464
        %v7051 = vsel %vm7047, %v7035, %v7050
        %v7052 = vsel %vm7046, %v7049, %v7051
        %v7053 = vsel %vm7045, %v7032, %v7035
        %v7054 = vsel %vm7048, %v7041, 920167782
        %v7055 = vsel %vm7047, %v7038, %v7054
        %v7056 = vsel %vm7046, %v7053, %v7055
        %v7057 = vsel %vm7045, %v7035, %v7038
        %v7058 = vsel %vm7048, %v7044, 1326507024
        %v7059 = vsel %vm7047, %v7041, %v7058
        %v7060 = vsel %vm7046, %v7057, %v7059
        %v7061 = vshll.u32 %v7021, 8
        %v7062 = vmul.u32.u64.compose %v7061, %v7060
        %v7063 = vextract.low.u32 %v7062
        %v7064 = vextract.high.u32 %v7062
        %v7065 = vmul.u32.u64.compose %v7061, %v7056
        %v7066 = vextract.low.u32 %v7065
        %v7067 = vextract.high.u32 %v7065
        %v7068 = vmul.u32 %v7061, %v7052
        %v7069 = vadd.s32 %v7064, %v7066
        %vm7070 = vc.u32 %v7064, %v7066
        %v7071 = vadd.s32 %v7067, 1
        %v7072 = vsel %vm7070, %v7071, %v7067
        %v7073 = vadd.s32 %v7068, %v7072
        %v7074 = vadd.s32 %v7073, 536870912
        %v7075 = vshrl.u32 %v7074, 30
        %v7076 = vshll.u32 %v7075, 30
        %v7077 = vsub.s32 %v7073, %v7076
        %vm7078 = vcmp.lt.s32.totalorder %v7077, 0
        %v7079 = vsub.s32 0, %v7077
        %v7080 = vsel %vm7078, %v7079, %v7077
        %v7081 = vclz %v7080
        %v7082 = vsub.s32 %v7081, 2
        %vm7083 = vcmp.gt.s32.totalorder 0, %v7082
        %v7084 = vsel %vm7083, 0, %v7082
        %v7085 = vsub.s32 32, %v7084
        %v7086 = vshll.u32 %v7077, %v7084
        %v7087 = vshrl.u32 %v7069, %v7085
        %v7088 = vor.u32 %v7086, %v7087
        %v7089 = vsub.s32 4294967266, %v7084
        %v7090 = vadd.s32 %v7089, 127
        %v7091 = vshll.u32 %v7090, 23
        %v7092 = vor.u32 4788187, %v7091
        %v7093 = vand.u32 2147483647, %v7092
        %v7095 = vcvt.s32.f32 %v7088
        %v7096 = vmul.f32 %v7095, %v7093
        %v7097 = vxor.u32 %v7096, 2147483648
        %v7098 = vsel %vm7015, %v7097, %v7096
        %v7099 = vsub.s32 4, %v7075
        %v7100 = vsel %vm7015, %v7099, %v7075
        %v7101 = vsel %vm7014, %v695, %v7098
        %v7102 = vsel %vm7014, 0, %v7100
        %v7103 = vcosq.f32.pop %v7101
        %v7104 = vsinq.f32.pop %v7101
        %vm7105 = vweird.f32 %v695
        %v7106 = vand.u32 %v7102, 3
        %vm7107 = vcmp.lt.s32.totalorder %v7106, 2
        %vm7108 = vcmp.eq.s32.totalorder %v7106, 0
        %v7109 = vxor.u32 %v7104, 2147483648
        %v7110 = vsel %vm7108, %v7103, %v7109
        %vm7111 = vcmp.eq.s32.totalorder %v7106, 2
        %v7112 = vxor.u32 %v7103, 2147483648
        %v7113 = vsel %vm7111, %v7112, %v7104
        %v7114 = vsel %vm7107, %v7110, %v7113
        %v7115 = vsel %vm7105, nan, %v7114
        %v7116 = vand.u32 2147483647, %v696
        %vm7117 = vcmp.le.f32.partialorder %v7116, 0.7853982
        %vm7118 = vcmp.lt.s32.totalorder %v696, 0
        %v7119 = vand.u32 %v696, 2139095040
        %v7120 = vshrl.u32 %v7119, 23
        %v7121 = vsub.s32 %v7120, 127
        %v7122 = vand.u32 2147483647, %v696
        %v7123 = vand.u32 %v7122, 8388607
        %v7124 = vor.u32 %v7123, 8388608
        %v7125 = vsub.s32 0, %v7124
        %v7126 = vadd.s32 %v7121, 1
        %vm7127 = vcmp.gt.s32.totalorder %v7126, 0
        %v7128 = vsel %vm7127, %v7126, 0
        %v7129 = vshrl.u32 %v7128, 5
        %v7130 = vand.u32 %v7128, 31
        %v7131 = vsub.s32 32, %v7130
        %v7132 = vshrl.u32 683565275, %v7131
        %v7133 = vshll.u32 683565275, %v7130
        %v7134 = vshrl.u32 2475754826, %v7131
        %v7135 = vor.u32 %v7133, %v7134
        %v7136 = vshll.u32 2475754826, %v7130
        %v7137 = vshrl.u32 2131351028, %v7131
        %v7138 = vor.u32 %v7136, %v7137
        %v7139 = vshll.u32 2131351028, %v7130
        %v7140 = vshrl.u32 2102212464, %v7131
        %v7141 = vor.u32 %v7139, %v7140
        %v7142 = vshll.u32 2102212464, %v7130
        %v7143 = vshrl.u32 920167782, %v7131
        %v7144 = vor.u32 %v7142, %v7143
        %v7145 = vshll.u32 920167782, %v7130
        %v7146 = vshrl.u32 1326507024, %v7131
        %v7147 = vor.u32 %v7145, %v7146
        %vm7148 = vcmp.lt.s32.totalorder %v7129, 1
        %vm7149 = vcmp.lt.s32.totalorder %v7129, 2
        %vm7150 = vcmp.lt.s32.totalorder %v7129, 3
        %vm7151 = vcmp.lt.s32.totalorder %v7129, 4
        %v7152 = vsel %vm7148, %v7132, %v7135
        %v7153 = vsel %vm7151, %v7141, 2102212464
        %v7154 = vsel %vm7150, %v7138, %v7153
        %v7155 = vsel %vm7149, %v7152, %v7154
        %v7156 = vsel %vm7148, %v7135, %v7138
        %v7157 = vsel %vm7151, %v7144, 920167782
        %v7158 = vsel %vm7150, %v7141, %v7157
        %v7159 = vsel %vm7149, %v7156, %v7158
        %v7160 = vsel %vm7148, %v7138, %v7141
        %v7161 = vsel %vm7151, %v7147, 1326507024
        %v7162 = vsel %vm7150, %v7144, %v7161
        %v7163 = vsel %vm7149, %v7160, %v7162
        %v7164 = vshll.u32 %v7124, 8
        %v7165 = vmul.u32.u64.compose %v7164, %v7163
        %v7166 = vextract.low.u32 %v7165
        %v7167 = vextract.high.u32 %v7165
        %v7168 = vmul.u32.u64.compose %v7164, %v7159
        %v7169 = vextract.low.u32 %v7168
        %v7170 = vextract.high.u32 %v7168
        %v7171 = vmul.u32 %v7164, %v7155
        %v7172 = vadd.s32 %v7167, %v7169
        %vm7173 = vc.u32 %v7167, %v7169
        %v7174 = vadd.s32 %v7170, 1
        %v7175 = vsel %vm7173, %v7174, %v7170
        %v7176 = vadd.s32 %v7171, %v7175
        %v7177 = vadd.s32 %v7176, 536870912
        %v7178 = vshrl.u32 %v7177, 30
        %v7179 = vshll.u32 %v7178, 30
        %v7180 = vsub.s32 %v7176, %v7179
        %vm7181 = vcmp.lt.s32.totalorder %v7180, 0
        %v7182 = vsub.s32 0, %v7180
        %v7183 = vsel %vm7181, %v7182, %v7180
        %v7184 = vclz %v7183
        %v7185 = vsub.s32 %v7184, 2
        %vm7186 = vcmp.gt.s32.totalorder 0, %v7185
        %v7187 = vsel %vm7186, 0, %v7185
        %v7188 = vsub.s32 32, %v7187
        %v7189 = vshll.u32 %v7180, %v7187
        %v7190 = vshrl.u32 %v7172, %v7188
        %v7191 = vor.u32 %v7189, %v7190
        %v7192 = vsub.s32 4294967266, %v7187
        %v7193 = vadd.s32 %v7192, 127
        %v7194 = vshll.u32 %v7193, 23
        %v7195 = vor.u32 4788187, %v7194
        %v7196 = vand.u32 2147483647, %v7195
        %v7198 = vcvt.s32.f32 %v7191
        %v7199 = vmul.f32 %v7198, %v7196
        %v7200 = vxor.u32 %v7199, 2147483648
        %v7201 = vsel %vm7118, %v7200, %v7199
        %v7202 = vsub.s32 4, %v7178
        %v7203 = vsel %vm7118, %v7202, %v7178
        %v7204 = vsel %vm7117, %v696, %v7201
        %v7205 = vsel %vm7117, 0, %v7203
        %v7206 = vcosq.f32.pop %v7204
        %v7207 = vsinq.f32.pop %v7204
        %vm7208 = vweird.f32 %v696
        %v7209 = vand.u32 %v7205, 3
        %vm7210 = vcmp.lt.s32.totalorder %v7209, 2
        %vm7211 = vcmp.eq.s32.totalorder %v7209, 0
        %v7212 = vxor.u32 %v7207, 2147483648
        %v7213 = vsel %vm7211, %v7206, %v7212
        %vm7214 = vcmp.eq.s32.totalorder %v7209, 2
        %v7215 = vxor.u32 %v7206, 2147483648
        %v7216 = vsel %vm7214, %v7215, %v7207
        %v7217 = vsel %vm7210, %v7213, %v7216
        %v7218 = vsel %vm7208, nan, %v7217
        %v7219 = vand.u32 2147483647, %v697
        %vm7220 = vcmp.le.f32.partialorder %v7219, 0.7853982
        %vm7221 = vcmp.lt.s32.totalorder %v697, 0
        %v7222 = vand.u32 %v697, 2139095040
        %v7223 = vshrl.u32 %v7222, 23
        %v7224 = vsub.s32 %v7223, 127
        %v7225 = vand.u32 2147483647, %v697
        %v7226 = vand.u32 %v7225, 8388607
        %v7227 = vor.u32 %v7226, 8388608
        %v7228 = vsub.s32 0, %v7227
        %v7229 = vadd.s32 %v7224, 1
        %vm7230 = vcmp.gt.s32.totalorder %v7229, 0
        %v7231 = vsel %vm7230, %v7229, 0
        %v7232 = vshrl.u32 %v7231, 5
        %v7233 = vand.u32 %v7231, 31
        %v7234 = vsub.s32 32, %v7233
        %v7235 = vshrl.u32 683565275, %v7234
        %v7236 = vshll.u32 683565275, %v7233
        %v7237 = vshrl.u32 2475754826, %v7234
        %v7238 = vor.u32 %v7236, %v7237
        %v7239 = vshll.u32 2475754826, %v7233
        %v7240 = vshrl.u32 2131351028, %v7234
        %v7241 = vor.u32 %v7239, %v7240
        %v7242 = vshll.u32 2131351028, %v7233
        %v7243 = vshrl.u32 2102212464, %v7234
        %v7244 = vor.u32 %v7242, %v7243
        %v7245 = vshll.u32 2102212464, %v7233
        %v7246 = vshrl.u32 920167782, %v7234
        %v7247 = vor.u32 %v7245, %v7246
        %v7248 = vshll.u32 920167782, %v7233
        %v7249 = vshrl.u32 1326507024, %v7234
        %v7250 = vor.u32 %v7248, %v7249
        %vm7251 = vcmp.lt.s32.totalorder %v7232, 1
        %vm7252 = vcmp.lt.s32.totalorder %v7232, 2
        %vm7253 = vcmp.lt.s32.totalorder %v7232, 3
        %vm7254 = vcmp.lt.s32.totalorder %v7232, 4
        %v7255 = vsel %vm7251, %v7235, %v7238
        %v7256 = vsel %vm7254, %v7244, 2102212464
        %v7257 = vsel %vm7253, %v7241, %v7256
        %v7258 = vsel %vm7252, %v7255, %v7257
        %v7259 = vsel %vm7251, %v7238, %v7241
        %v7260 = vsel %vm7254, %v7247, 920167782
        %v7261 = vsel %vm7253, %v7244, %v7260
        %v7262 = vsel %vm7252, %v7259, %v7261
        %v7263 = vsel %vm7251, %v7241, %v7244
        %v7264 = vsel %vm7254, %v7250, 1326507024
        %v7265 = vsel %vm7253, %v7247, %v7264
        %v7266 = vsel %vm7252, %v7263, %v7265
        %v7267 = vshll.u32 %v7227, 8
        %v7268 = vmul.u32.u64.compose %v7267, %v7266
        %v7269 = vextract.low.u32 %v7268
        %v7270 = vextract.high.u32 %v7268
        %v7271 = vmul.u32.u64.compose %v7267, %v7262
        %v7272 = vextract.low.u32 %v7271
        %v7273 = vextract.high.u32 %v7271
        %v7274 = vmul.u32 %v7267, %v7258
        %v7275 = vadd.s32 %v7270, %v7272
        %vm7276 = vc.u32 %v7270, %v7272
        %v7277 = vadd.s32 %v7273, 1
        %v7278 = vsel %vm7276, %v7277, %v7273
        %v7279 = vadd.s32 %v7274, %v7278
        %v7280 = vadd.s32 %v7279, 536870912
        %v7281 = vshrl.u32 %v7280, 30
        %v7282 = vshll.u32 %v7281, 30
        %v7283 = vsub.s32 %v7279, %v7282
        %vm7284 = vcmp.lt.s32.totalorder %v7283, 0
        %v7285 = vsub.s32 0, %v7283
        %v7286 = vsel %vm7284, %v7285, %v7283
        %v7287 = vclz %v7286
        %v7288 = vsub.s32 %v7287, 2
        %vm7289 = vcmp.gt.s32.totalorder 0, %v7288
        %v7290 = vsel %vm7289, 0, %v7288
        %v7291 = vsub.s32 32, %v7290
        %v7292 = vshll.u32 %v7283, %v7290
        %v7293 = vshrl.u32 %v7275, %v7291
        %v7294 = vor.u32 %v7292, %v7293
        %v7295 = vsub.s32 4294967266, %v7290
        %v7296 = vadd.s32 %v7295, 127
        %v7297 = vshll.u32 %v7296, 23
        %v7298 = vor.u32 4788187, %v7297
        %v7299 = vand.u32 2147483647, %v7298
        %v7301 = vcvt.s32.f32 %v7294
        %v7302 = vmul.f32 %v7301, %v7299
        %v7303 = vxor.u32 %v7302, 2147483648
        %v7304 = vsel %vm7221, %v7303, %v7302
        %v7305 = vsub.s32 4, %v7281
        %v7306 = vsel %vm7221, %v7305, %v7281
        %v7307 = vsel %vm7220, %v697, %v7304
        %v7308 = vsel %vm7220, 0, %v7306
        %v7309 = vcosq.f32.pop %v7307
        %v7310 = vsinq.f32.pop %v7307
        %vm7311 = vweird.f32 %v697
        %v7312 = vand.u32 %v7308, 3
        %vm7313 = vcmp.lt.s32.totalorder %v7312, 2
        %vm7314 = vcmp.eq.s32.totalorder %v7312, 0
        %v7315 = vxor.u32 %v7310, 2147483648
        %v7316 = vsel %vm7314, %v7309, %v7315
        %vm7317 = vcmp.eq.s32.totalorder %v7312, 2
        %v7318 = vxor.u32 %v7309, 2147483648
        %v7319 = vsel %vm7317, %v7318, %v7310
        %v7320 = vsel %vm7313, %v7316, %v7319
        %v7321 = vsel %vm7311, nan, %v7320
        %v7322 = vld [vmem:[%s429] sm:$0xff]
        %v7323 = vld [vmem:[%s429 + $0x8] sm:$0xff]
        %v7324 = vld [vmem:[%s429 + $0x10] sm:$0xff]
        %v7325 = vld [vmem:[%s429 + $0x18] sm:$0xff]
        %v7326 = vld [vmem:[%s429 + $0x20] sm:$0xff]
        %v7327 = vld [vmem:[%s429 + $0x28] sm:$0xff]
        %v7328 = vld [vmem:[%s429 + $0x30] sm:$0xff]
        %v7329 = vld [vmem:[%s429 + $0x38] sm:$0xff]
        %v7330 = vld [vmem:[%s429 + $0x40] sm:$0xff]
        %v7331 = vld [vmem:[%s429 + $0x48] sm:$0xff]
        %v7332 = vld [vmem:[%s429 + $0x50] sm:$0xff]
        %v7333 = vld [vmem:[%s429 + $0x58] sm:$0xff]
        %v7334 = vld [vmem:[%s429 + $0x60] sm:$0xff]
        %v7335 = vld [vmem:[%s429 + $0x68] sm:$0xff]
        %v7336 = vld [vmem:[%s429 + $0x70] sm:$0xff]
        %v7337 = vld [vmem:[%s429 + $0x78] sm:$0xff]
        %v7338 = vld [vmem:[%s429 + $0x80] sm:$0xff]
        %v7339 = vld [vmem:[%s429 + $0x88] sm:$0xff]
        %v7340 = vld [vmem:[%s429 + $0x90] sm:$0xff]
        %v7341 = vld [vmem:[%s429 + $0x98] sm:$0xff]
        %v7342 = vld [vmem:[%s429 + $0xa0] sm:$0xff]
        %v7343 = vld [vmem:[%s429 + $0xa8] sm:$0xff]
        %v7344 = vld [vmem:[%s429 + $0xb0] sm:$0xff]
        %v7345 = vld [vmem:[%s429 + $0xb8] sm:$0xff]
        %v7346 = vld [vmem:[%s429 + $0xc0] sm:$0xff]
        %v7347 = vld [vmem:[%s429 + $0xc8] sm:$0xff]
        %v7348 = vld [vmem:[%s429 + $0xd0] sm:$0xff]
        %v7349 = vld [vmem:[%s429 + $0xd8] sm:$0xff]
        %v7350 = vld [vmem:[%s429 + $0xe0] sm:$0xff]
        %v7351 = vld [vmem:[%s429 + $0xe8] sm:$0xff]
        %v7352 = vld [vmem:[%s429 + $0xf0] sm:$0xff]
        %v7353 = vld [vmem:[%s429 + $0xf8] sm:$0xff]
        %v7354 = vld [vmem:[%s429 + $0x100] sm:$0xff]
        %v7355 = vld [vmem:[%s429 + $0x108] sm:$0xff]
        %v7356 = vld [vmem:[%s429 + $0x110] sm:$0xff]
        %v7357 = vld [vmem:[%s429 + $0x118] sm:$0xff]
        %v7358 = vld [vmem:[%s429 + $0x120] sm:$0xff]
        %v7359 = vld [vmem:[%s429 + $0x128] sm:$0xff]
        %v7360 = vld [vmem:[%s429 + $0x130] sm:$0xff]
        %v7361 = vld [vmem:[%s429 + $0x138] sm:$0xff]
        %v7362 = vld [vmem:[%s429 + $0x140] sm:$0xff]
        %v7363 = vld [vmem:[%s429 + $0x148] sm:$0xff]
        %v7364 = vld [vmem:[%s429 + $0x150] sm:$0xff]
        %v7365 = vld [vmem:[%s429 + $0x158] sm:$0xff]
        %v7366 = vld [vmem:[%s429 + $0x160] sm:$0xff]
        %v7367 = vld [vmem:[%s429 + $0x168] sm:$0xff]
        %v7368 = vld [vmem:[%s429 + $0x170] sm:$0xff]
        %v7369 = vld [vmem:[%s429 + $0x178] sm:$0xff]
        %v7370 = vld [vmem:[%s429 + $0x180] sm:$0xff]
        %v7371 = vld [vmem:[%s429 + $0x188] sm:$0xff]
        %v7372 = vld [vmem:[%s429 + $0x190] sm:$0xff]
        %v7373 = vld [vmem:[%s429 + $0x198] sm:$0xff]
        %v7374 = vld [vmem:[%s429 + $0x1a0] sm:$0xff]
        %v7375 = vld [vmem:[%s429 + $0x1a8] sm:$0xff]
        %v7376 = vld [vmem:[%s429 + $0x1b0] sm:$0xff]
        %v7377 = vld [vmem:[%s429 + $0x1b8] sm:$0xff]
        %v7378 = vld [vmem:[%s429 + $0x1c0] sm:$0xff]
        %v7379 = vld [vmem:[%s429 + $0x1c8] sm:$0xff]
        %v7380 = vld [vmem:[%s429 + $0x1d0] sm:$0xff]
        %v7381 = vld [vmem:[%s429 + $0x1d8] sm:$0xff]
        %v7382 = vld [vmem:[%s429 + $0x1e0] sm:$0xff]
        %v7383 = vld [vmem:[%s429 + $0x1e8] sm:$0xff]
        %v7384 = vld [vmem:[%s429 + $0x1f0] sm:$0xff]
        %v7385 = vld [vmem:[%s429 + $0x1f8] sm:$0xff]
        %v7386 = vld [vmem:[%s429 + $0x200] sm:$0xff]
        %v7387 = vld [vmem:[%s429 + $0x208] sm:$0xff]
        %v7388 = vld [vmem:[%s429 + $0x210] sm:$0xff]
        %v7389 = vld [vmem:[%s429 + $0x218] sm:$0xff]
        %v7390 = vld [vmem:[%s429 + $0x220] sm:$0xff]
        %v7391 = vld [vmem:[%s429 + $0x228] sm:$0xff]
        %v7392 = vld [vmem:[%s429 + $0x230] sm:$0xff]
        %v7393 = vld [vmem:[%s429 + $0x238] sm:$0xff]
        %v7394 = vld [vmem:[%s429 + $0x240] sm:$0xff]
        %v7395 = vld [vmem:[%s429 + $0x248] sm:$0xff]
        %v7396 = vld [vmem:[%s429 + $0x250] sm:$0xff]
        %v7397 = vld [vmem:[%s429 + $0x258] sm:$0xff]
        %v7398 = vld [vmem:[%s429 + $0x260] sm:$0xff]
        %v7399 = vld [vmem:[%s429 + $0x268] sm:$0xff]
        %v7400 = vld [vmem:[%s429 + $0x270] sm:$0xff]
        %v7401 = vld [vmem:[%s429 + $0x278] sm:$0xff]
        %v7402 = vld [vmem:[%s429 + $0x280] sm:$0xff]
        %v7403 = vld [vmem:[%s429 + $0x288] sm:$0xff]
        %v7404 = vld [vmem:[%s429 + $0x290] sm:$0xff]
        %v7405 = vld [vmem:[%s429 + $0x298] sm:$0xff]
        %v7406 = vld [vmem:[%s429 + $0x2a0] sm:$0xff]
        %v7407 = vld [vmem:[%s429 + $0x2a8] sm:$0xff]
        %v7408 = vld [vmem:[%s429 + $0x2b0] sm:$0xff]
        %v7409 = vld [vmem:[%s429 + $0x2b8] sm:$0xff]
        %v7410 = vld [vmem:[%s429 + $0x2c0] sm:$0xff]
        %v7411 = vld [vmem:[%s429 + $0x2c8] sm:$0xff]
        %v7412 = vld [vmem:[%s429 + $0x2d0] sm:$0xff]
        %v7413 = vld [vmem:[%s429 + $0x2d8] sm:$0xff]
        %v7414 = vld [vmem:[%s429 + $0x2e0] sm:$0xff]
        %v7415 = vld [vmem:[%s429 + $0x2e8] sm:$0xff]
        %v7416 = vld [vmem:[%s429 + $0x2f0] sm:$0xff]
        %v7417 = vld [vmem:[%s429 + $0x2f8] sm:$0xff]
        %v7418 = vld [vmem:[%s429 + $0x300] sm:$0xff]
        %v7419 = vld [vmem:[%s429 + $0x308] sm:$0xff]
        %v7420 = vld [vmem:[%s429 + $0x310] sm:$0xff]
        %v7421 = vld [vmem:[%s429 + $0x318] sm:$0xff]
        %v7422 = vld [vmem:[%s429 + $0x320] sm:$0xff]
        %v7423 = vld [vmem:[%s429 + $0x328] sm:$0xff]
        %v7424 = vld [vmem:[%s429 + $0x330] sm:$0xff]
        %v7425 = vld [vmem:[%s429 + $0x338] sm:$0xff]
        %v7426 = vld [vmem:[%s429 + $0x340] sm:$0xff]
        %v7427 = vld [vmem:[%s429 + $0x348] sm:$0xff]
        %v7428 = vld [vmem:[%s429 + $0x350] sm:$0xff]
        %v7429 = vld [vmem:[%s429 + $0x358] sm:$0xff]
        %v7430 = vld [vmem:[%s429 + $0x360] sm:$0xff]
        %v7431 = vld [vmem:[%s429 + $0x368] sm:$0xff]
        %v7432 = vld [vmem:[%s429 + $0x370] sm:$0xff]
        %v7433 = vld [vmem:[%s429 + $0x378] sm:$0xff]
        %v7434 = vld [vmem:[%s429 + $0x380] sm:$0xff]
        %v7435 = vld [vmem:[%s429 + $0x388] sm:$0xff]
        %v7436 = vld [vmem:[%s429 + $0x390] sm:$0xff]
        %v7437 = vld [vmem:[%s429 + $0x398] sm:$0xff]
        %v7438 = vld [vmem:[%s429 + $0x3a0] sm:$0xff]
        %v7439 = vld [vmem:[%s429 + $0x3a8] sm:$0xff]
        %v7440 = vld [vmem:[%s429 + $0x3b0] sm:$0xff]
        %v7441 = vld [vmem:[%s429 + $0x3b8] sm:$0xff]
        %v7442 = vld [vmem:[%s429 + $0x3c0] sm:$0xff]
        %v7443 = vld [vmem:[%s429 + $0x3c8] sm:$0xff]
        %v7444 = vld [vmem:[%s429 + $0x3d0] sm:$0xff]
        %v7445 = vld [vmem:[%s429 + $0x3d8] sm:$0xff]
        %v7446 = vld [vmem:[%s429 + $0x3e0] sm:$0xff]
        %v7447 = vld [vmem:[%s429 + $0x3e8] sm:$0xff]
        %v7448 = vld [vmem:[%s429 + $0x3f0] sm:$0xff]
        %v7449 = vld [vmem:[%s429 + $0x3f8] sm:$0xff]
        %v7450 = vadd.f32 %v7322, %v801
        %v7451 = vadd.f32 %v7323, %v905
        %v7452 = vadd.f32 %v7324, %v1009
        %v7453 = vadd.f32 %v7325, %v1113
        %v7454 = vadd.f32 %v7326, %v1217
        %v7455 = vadd.f32 %v7327, %v1321
        %v7456 = vadd.f32 %v7328, %v1425
        %v7457 = vadd.f32 %v7329, %v1529
        %v7458 = vadd.f32 %v7330, %v1633
        %v7459 = vadd.f32 %v7331, %v1737
        %v7460 = vadd.f32 %v7332, %v1841
        %v7461 = vadd.f32 %v7333, %v1945
        %v7462 = vadd.f32 %v7334, %v2049
        %v7463 = vadd.f32 %v7335, %v2153
        %v7464 = vadd.f32 %v7336, %v2257
        %v7465 = vadd.f32 %v7337, %v2361
        %v7466 = vadd.f32 %v7338, %v2465
        %v7467 = vadd.f32 %v7339, %v2569
        %v7468 = vadd.f32 %v7340, %v2673
        %v7469 = vadd.f32 %v7341, %v2777
        %v7470 = vadd.f32 %v7342, %v2881
        %v7471 = vadd.f32 %v7343, %v2985
        %v7472 = vadd.f32 %v7344, %v3089
        %v7473 = vadd.f32 %v7345, %v3193
        %v7474 = vadd.f32 %v7346, %v3297
        %v7475 = vadd.f32 %v7347, %v3401
        %v7476 = vadd.f32 %v7348, %v3505
        %v7477 = vadd.f32 %v7349, %v3609
        %v7478 = vadd.f32 %v7350, %v3713
        %v7479 = vadd.f32 %v7351, %v3817
        %v7480 = vadd.f32 %v7352, %v3921
        %v7481 = vadd.f32 %v7353, %v4025
        %v7482 = vadd.f32 %v7354, %v4128
        %v7483 = vadd.f32 %v7355, %v4231
        %v7484 = vadd.f32 %v7356, %v4334
        %v7485 = vadd.f32 %v7357, %v4437
        %v7486 = vadd.f32 %v7358, %v4540
        %v7487 = vadd.f32 %v7359, %v4643
        %v7488 = vadd.f32 %v7360, %v4746
        %v7489 = vadd.f32 %v7361, %v4849
        %v7490 = vadd.f32 %v7362, %v4952
        %v7491 = vadd.f32 %v7363, %v5055
        %v7492 = vadd.f32 %v7364, %v5158
        %v7493 = vadd.f32 %v7365, %v5261
        %v7494 = vadd.f32 %v7366, %v5364
        %v7495 = vadd.f32 %v7367, %v5467
        %v7496 = vadd.f32 %v7368, %v5570
        %v7497 = vadd.f32 %v7369, %v5673
        %v7498 = vadd.f32 %v7370, %v5776
        %v7499 = vadd.f32 %v7371, %v5879
        %v7500 = vadd.f32 %v7372, %v5982
        %v7501 = vadd.f32 %v7373, %v6085
        %v7502 = vadd.f32 %v7374, %v6188
        %v7503 = vadd.f32 %v7375, %v6291
        %v7504 = vadd.f32 %v7376, %v6394
        %v7505 = vadd.f32 %v7377, %v6497
        %v7506 = vadd.f32 %v7378, %v6600
        %v7507 = vadd.f32 %v7379, %v6703
        %v7508 = vadd.f32 %v7380, %v6806
        %v7509 = vadd.f32 %v7381, %v6909
        %v7510 = vadd.f32 %v7382, %v7012
        %v7511 = vadd.f32 %v7383, %v7115
        %v7512 = vadd.f32 %v7384, %v7218
        %v7513 = vadd.f32 %v7385, %v7321
        %v7514 = vadd.f32 %v7386, %v801
        %v7515 = vadd.f32 %v7387, %v905
        %v7516 = vadd.f32 %v7388, %v1009
        %v7517 = vadd.f32 %v7389, %v1113
        %v7518 = vadd.f32 %v7390, %v1217
        %v7519 = vadd.f32 %v7391, %v1321
        %v7520 = vadd.f32 %v7392, %v1425
        %v7521 = vadd.f32 %v7393, %v1529
        %v7522 = vadd.f32 %v7394, %v1633
        %v7523 = vadd.f32 %v7395, %v1737
        %v7524 = vadd.f32 %v7396, %v1841
        %v7525 = vadd.f32 %v7397, %v1945
        %v7526 = vadd.f32 %v7398, %v2049
        %v7527 = vadd.f32 %v7399, %v2153
        %v7528 = vadd.f32 %v7400, %v2257
        %v7529 = vadd.f32 %v7401, %v2361
        %v7530 = vadd.f32 %v7402, %v2465
        %v7531 = vadd.f32 %v7403, %v2569
        %v7532 = vadd.f32 %v7404, %v2673
        %v7533 = vadd.f32 %v7405, %v2777
        %v7534 = vadd.f32 %v7406, %v2881
        %v7535 = vadd.f32 %v7407, %v2985
        %v7536 = vadd.f32 %v7408, %v3089
        %v7537 = vadd.f32 %v7409, %v3193
        %v7538 = vadd.f32 %v7410, %v3297
        %v7539 = vadd.f32 %v7411, %v3401
        %v7540 = vadd.f32 %v7412, %v3505
        %v7541 = vadd.f32 %v7413, %v3609
        %v7542 = vadd.f32 %v7414, %v3713
        %v7543 = vadd.f32 %v7415, %v3817
        %v7544 = vadd.f32 %v7416, %v3921
        %v7545 = vadd.f32 %v7417, %v4025
        %v7546 = vadd.f32 %v7418, %v4128
        %v7547 = vadd.f32 %v7419, %v4231
        %v7548 = vadd.f32 %v7420, %v4334
        %v7549 = vadd.f32 %v7421, %v4437
        %v7550 = vadd.f32 %v7422, %v4540
        %v7551 = vadd.f32 %v7423, %v4643
        %v7552 = vadd.f32 %v7424, %v4746
        %v7553 = vadd.f32 %v7425, %v4849
        %v7554 = vadd.f32 %v7426, %v4952
        %v7555 = vadd.f32 %v7427, %v5055
        %v7556 = vadd.f32 %v7428, %v5158
        %v7557 = vadd.f32 %v7429, %v5261
        %v7558 = vadd.f32 %v7430, %v5364
        %v7559 = vadd.f32 %v7431, %v5467
        %v7560 = vadd.f32 %v7432, %v5570
        %v7561 = vadd.f32 %v7433, %v5673
        %v7562 = vadd.f32 %v7434, %v5776
        %v7563 = vadd.f32 %v7435, %v5879
        %v7564 = vadd.f32 %v7436, %v5982
        %v7565 = vadd.f32 %v7437, %v6085
        %v7566 = vadd.f32 %v7438, %v6188
        %v7567 = vadd.f32 %v7439, %v6291
        %v7568 = vadd.f32 %v7440, %v6394
        %v7569 = vadd.f32 %v7441, %v6497
        %v7570 = vadd.f32 %v7442, %v6600
        %v7571 = vadd.f32 %v7443, %v6703
        %v7572 = vadd.f32 %v7444, %v6806
        %v7573 = vadd.f32 %v7445, %v6909
        %v7574 = vadd.f32 %v7446, %v7012
        %v7575 = vadd.f32 %v7447, %v7115
        %v7576 = vadd.f32 %v7448, %v7218
        %v7577 = vadd.f32 %v7449, %v7321
        %7578 = vst [vmem:[%s452] sm:$0xff] %v7450
        %7579 = vst [vmem:[%s452 + $0x8] sm:$0xff] %v7451
        %7580 = vst [vmem:[%s452 + $0x10] sm:$0xff] %v7452
        %7581 = vst [vmem:[%s452 + $0x18] sm:$0xff] %v7453
        %7582 = vst [vmem:[%s452 + $0x20] sm:$0xff] %v7454
        %7583 = vst [vmem:[%s452 + $0x28] sm:$0xff] %v7455
        %7584 = vst [vmem:[%s452 + $0x30] sm:$0xff] %v7456
        %7585 = vst [vmem:[%s452 + $0x38] sm:$0xff] %v7457
        %7586 = vst [vmem:[%s452 + $0x40] sm:$0xff] %v7458
        %7587 = vst [vmem:[%s452 + $0x48] sm:$0xff] %v7459
        %7588 = vst [vmem:[%s452 + $0x50] sm:$0xff] %v7460
        %7589 = vst [vmem:[%s452 + $0x58] sm:$0xff] %v7461
        %7590 = vst [vmem:[%s452 + $0x60] sm:$0xff] %v7462
        %7591 = vst [vmem:[%s452 + $0x68] sm:$0xff] %v7463
        %7592 = vst [vmem:[%s452 + $0x70] sm:$0xff] %v7464
        %7593 = vst [vmem:[%s452 + $0x78] sm:$0xff] %v7465
        %7594 = vst [vmem:[%s452 + $0x80] sm:$0xff] %v7466
        %7595 = vst [vmem:[%s452 + $0x88] sm:$0xff] %v7467
        %7596 = vst [vmem:[%s452 + $0x90] sm:$0xff] %v7468
        %7597 = vst [vmem:[%s452 + $0x98] sm:$0xff] %v7469
        %7598 = vst [vmem:[%s452 + $0xa0] sm:$0xff] %v7470
        %7599 = vst [vmem:[%s452 + $0xa8] sm:$0xff] %v7471
        %7600 = vst [vmem:[%s452 + $0xb0] sm:$0xff] %v7472
        %7601 = vst [vmem:[%s452 + $0xb8] sm:$0xff] %v7473
        %7602 = vst [vmem:[%s452 + $0xc0] sm:$0xff] %v7474
        %7603 = vst [vmem:[%s452 + $0xc8] sm:$0xff] %v7475
        %7604 = vst [vmem:[%s452 + $0xd0] sm:$0xff] %v7476
        %7605 = vst [vmem:[%s452 + $0xd8] sm:$0xff] %v7477
        %7606 = vst [vmem:[%s452 + $0xe0] sm:$0xff] %v7478
        %7607 = vst [vmem:[%s452 + $0xe8] sm:$0xff] %v7479
        %7608 = vst [vmem:[%s452 + $0xf0] sm:$0xff] %v7480
        %7609 = vst [vmem:[%s452 + $0xf8] sm:$0xff] %v7481
        %7610 = vst [vmem:[%s452 + $0x100] sm:$0xff] %v7482
        %7611 = vst [vmem:[%s452 + $0x108] sm:$0xff] %v7483
        %7612 = vst [vmem:[%s452 + $0x110] sm:$0xff] %v7484
        %7613 = vst [vmem:[%s452 + $0x118] sm:$0xff] %v7485
        %7614 = vst [vmem:[%s452 + $0x120] sm:$0xff] %v7486
        %7615 = vst [vmem:[%s452 + $0x128] sm:$0xff] %v7487
        %7616 = vst [vmem:[%s452 + $0x130] sm:$0xff] %v7488
        %7617 = vst [vmem:[%s452 + $0x138] sm:$0xff] %v7489
        %7618 = vst [vmem:[%s452 + $0x140] sm:$0xff] %v7490
        %7619 = vst [vmem:[%s452 + $0x148] sm:$0xff] %v7491
        %7620 = vst [vmem:[%s452 + $0x150] sm:$0xff] %v7492
        %7621 = vst [vmem:[%s452 + $0x158] sm:$0xff] %v7493
        %7622 = vst [vmem:[%s452 + $0x160] sm:$0xff] %v7494
        %7623 = vst [vmem:[%s452 + $0x168] sm:$0xff] %v7495
        %7624 = vst [vmem:[%s452 + $0x170] sm:$0xff] %v7496
        %7625 = vst [vmem:[%s452 + $0x178] sm:$0xff] %v7497
        %7626 = vst [vmem:[%s452 + $0x180] sm:$0xff] %v7498
        %7627 = vst [vmem:[%s452 + $0x188] sm:$0xff] %v7499
        %7628 = vst [vmem:[%s452 + $0x190] sm:$0xff] %v7500
        %7629 = vst [vmem:[%s452 + $0x198] sm:$0xff] %v7501
        %7630 = vst [vmem:[%s452 + $0x1a0] sm:$0xff] %v7502
        %7631 = vst [vmem:[%s452 + $0x1a8] sm:$0xff] %v7503
        %7632 = vst [vmem:[%s452 + $0x1b0] sm:$0xff] %v7504
        %7633 = vst [vmem:[%s452 + $0x1b8] sm:$0xff] %v7505
        %7634 = vst [vmem:[%s452 + $0x1c0] sm:$0xff] %v7506
        %7635 = vst [vmem:[%s452 + $0x1c8] sm:$0xff] %v7507
        %7636 = vst [vmem:[%s452 + $0x1d0] sm:$0xff] %v7508
        %7637 = vst [vmem:[%s452 + $0x1d8] sm:$0xff] %v7509
        %7638 = vst [vmem:[%s452 + $0x1e0] sm:$0xff] %v7510
        %7639 = vst [vmem:[%s452 + $0x1e8] sm:$0xff] %v7511
        %7640 = vst [vmem:[%s452 + $0x1f0] sm:$0xff] %v7512
        %7641 = vst [vmem:[%s452 + $0x1f8] sm:$0xff] %v7513
        %7642 = vst [vmem:[%s452 + $0x200] sm:$0xff] %v7514
        %7643 = vst [vmem:[%s452 + $0x208] sm:$0xff] %v7515
        %7644 = vst [vmem:[%s452 + $0x210] sm:$0xff] %v7516
        %7645 = vst [vmem:[%s452 + $0x218] sm:$0xff] %v7517
        %7646 = vst [vmem:[%s452 + $0x220] sm:$0xff] %v7518
        %7647 = vst [vmem:[%s452 + $0x228] sm:$0xff] %v7519
        %7648 = vst [vmem:[%s452 + $0x230] sm:$0xff] %v7520
        %7649 = vst [vmem:[%s452 + $0x238] sm:$0xff] %v7521
        %7650 = vst [vmem:[%s452 + $0x240] sm:$0xff] %v7522
        %7651 = vst [vmem:[%s452 + $0x248] sm:$0xff] %v7523
        %7652 = vst [vmem:[%s452 + $0x250] sm:$0xff] %v7524
        %7653 = vst [vmem:[%s452 + $0x258] sm:$0xff] %v7525
        %7654 = vst [vmem:[%s452 + $0x260] sm:$0xff] %v7526
        %7655 = vst [vmem:[%s452 + $0x268] sm:$0xff] %v7527
        %7656 = vst [vmem:[%s452 + $0x270] sm:$0xff] %v7528
        %7657 = vst [vmem:[%s452 + $0x278] sm:$0xff] %v7529
        %7658 = vst [vmem:[%s452 + $0x280] sm:$0xff] %v7530
        %7659 = vst [vmem:[%s452 + $0x288] sm:$0xff] %v7531
        %7660 = vst [vmem:[%s452 + $0x290] sm:$0xff] %v7532
        %7661 = vst [vmem:[%s452 + $0x298] sm:$0xff] %v7533
        %7662 = vst [vmem:[%s452 + $0x2a0] sm:$0xff] %v7534
        %7663 = vst [vmem:[%s452 + $0x2a8] sm:$0xff] %v7535
        %7664 = vst [vmem:[%s452 + $0x2b0] sm:$0xff] %v7536
        %7665 = vst [vmem:[%s452 + $0x2b8] sm:$0xff] %v7537
        %7666 = vst [vmem:[%s452 + $0x2c0] sm:$0xff] %v7538
        %7667 = vst [vmem:[%s452 + $0x2c8] sm:$0xff] %v7539
        %7668 = vst [vmem:[%s452 + $0x2d0] sm:$0xff] %v7540
        %7669 = vst [vmem:[%s452 + $0x2d8] sm:$0xff] %v7541
        %7670 = vst [vmem:[%s452 + $0x2e0] sm:$0xff] %v7542
        %7671 = vst [vmem:[%s452 + $0x2e8] sm:$0xff] %v7543
        %7672 = vst [vmem:[%s452 + $0x2f0] sm:$0xff] %v7544
        %7673 = vst [vmem:[%s452 + $0x2f8] sm:$0xff] %v7545
        %7674 = vst [vmem:[%s452 + $0x300] sm:$0xff] %v7546
        %7675 = vst [vmem:[%s452 + $0x308] sm:$0xff] %v7547
        %7676 = vst [vmem:[%s452 + $0x310] sm:$0xff] %v7548
        %7677 = vst [vmem:[%s452 + $0x318] sm:$0xff] %v7549
        %7678 = vst [vmem:[%s452 + $0x320] sm:$0xff] %v7550
        %7679 = vst [vmem:[%s452 + $0x328] sm:$0xff] %v7551
        %7680 = vst [vmem:[%s452 + $0x330] sm:$0xff] %v7552
        %7681 = vst [vmem:[%s452 + $0x338] sm:$0xff] %v7553
        %7682 = vst [vmem:[%s452 + $0x340] sm:$0xff] %v7554
        %7683 = vst [vmem:[%s452 + $0x348] sm:$0xff] %v7555
        %7684 = vst [vmem:[%s452 + $0x350] sm:$0xff] %v7556
        %7685 = vst [vmem:[%s452 + $0x358] sm:$0xff] %v7557
        %7686 = vst [vmem:[%s452 + $0x360] sm:$0xff] %v7558
        %7687 = vst [vmem:[%s452 + $0x368] sm:$0xff] %v7559
        %7688 = vst [vmem:[%s452 + $0x370] sm:$0xff] %v7560
        %7689 = vst [vmem:[%s452 + $0x378] sm:$0xff] %v7561
        %7690 = vst [vmem:[%s452 + $0x380] sm:$0xff] %v7562
        %7691 = vst [vmem:[%s452 + $0x388] sm:$0xff] %v7563
        %7692 = vst [vmem:[%s452 + $0x390] sm:$0xff] %v7564
        %7693 = vst [vmem:[%s452 + $0x398] sm:$0xff] %v7565
        %7694 = vst [vmem:[%s452 + $0x3a0] sm:$0xff] %v7566
        %7695 = vst [vmem:[%s452 + $0x3a8] sm:$0xff] %v7567
        %7696 = vst [vmem:[%s452 + $0x3b0] sm:$0xff] %v7568
        %7697 = vst [vmem:[%s452 + $0x3b8] sm:$0xff] %v7569
        %7698 = vst [vmem:[%s452 + $0x3c0] sm:$0xff] %v7570
        %7699 = vst [vmem:[%s452 + $0x3c8] sm:$0xff] %v7571
        %7700 = vst [vmem:[%s452 + $0x3d0] sm:$0xff] %v7572
        %7701 = vst [vmem:[%s452 + $0x3d8] sm:$0xff] %v7573
        %7702 = vst [vmem:[%s452 + $0x3e0] sm:$0xff] %v7574
        %7703 = vst [vmem:[%s452 + $0x3e8] sm:$0xff] %v7575
        %7704 = vst [vmem:[%s452 + $0x3f0] sm:$0xff] %v7576
        %7705 = vst [vmem:[%s452 + $0x3f8] sm:$0xff] %v7577
        %s7706 = sand.u32 %s95, 1
        %s7707 = sand.u32 %s95, 1
        %s7708 = smul.addr %s7707, 1024
        %s7709 = scalar_lea.vmem [#allocation3], %s7708
        // Predicated region
        $region56: #{ppe_forward.1} parent=50 // pred_check
          %p7710 = pneg %p105
        $region57: #{ppe_forward.1} parent=50 // pred_check_branch
          %7712 = sbr.rel (%p7710) target = $region59
        $region58: #{ppe_forward.1} parent=50 // pred_region
          %s7713 = smul.u32 32, %s14
          %s7714 = smul.addr %s7713, 8
          %s7715 = scalar_lea.vmem %s3, %s7714
          // Predicated region
          $region60: #{ppe_forward.1} parent=58 // pred_check
            _
          $region61: #{ppe_forward.1} parent=58 // pred_check_branch
            %7717 = sbr.rel (0) target = $region63
          $region62: #{ppe_forward.1} parent=58 // pred_region
            // Predicated region
            $region64: #{ppe_forward.1} parent=62 // pred_check
              _
            $region65: #{ppe_forward.1} parent=62 // pred_check_branch
              %7719 = sbr.rel (0) target = $region67
            $region66: #{ppe_forward.1} parent=62 // pred_region
              loop: start=0, step=1, limit=1
              $region68: #{ppe_forward.1} parent=66 // loop_pre_header
                _
              $region69: #{ppe_forward.1} parent=66 // loop_header
                %s7721 = sphi 0, %s7725
                %p7722 = scmp.ge.s32.totalorder %s7721, 1
                %s7726 = sphi %s7709, %s7709
                %s7727 = sphi %s7715, %s7715
              $region70: #{ppe_forward.1} parent=66 // loop_header_branch
                %7724 = sbr.rel (%p7722) target = $region74
              $region71: #{ppe_forward.1} parent=66 // loop_body
                %v7728 = vld [vmem:[%s7726] sm:$0xff]
                %7729 = vst [vmem:[%s7727] sm:$0xff] %v7728
                %v7730 = vld [vmem:[%s7726 + $0x8] sm:$0xff]
                %7731 = vst [vmem:[%s7727 + $0x8] sm:$0xff] %v7730
                %v7732 = vld [vmem:[%s7726 + $0x10] sm:$0xff]
                %7733 = vst [vmem:[%s7727 + $0x10] sm:$0xff] %v7732
                %v7734 = vld [vmem:[%s7726 + $0x18] sm:$0xff]
                %7735 = vst [vmem:[%s7727 + $0x18] sm:$0xff] %v7734
                %v7736 = vld [vmem:[%s7726 + $0x20] sm:$0xff]
                %7737 = vst [vmem:[%s7727 + $0x20] sm:$0xff] %v7736
                %v7738 = vld [vmem:[%s7726 + $0x28] sm:$0xff]
                %7739 = vst [vmem:[%s7727 + $0x28] sm:$0xff] %v7738
                %v7740 = vld [vmem:[%s7726 + $0x30] sm:$0xff]
                %7741 = vst [vmem:[%s7727 + $0x30] sm:$0xff] %v7740
                %v7742 = vld [vmem:[%s7726 + $0x38] sm:$0xff]
                %7743 = vst [vmem:[%s7727 + $0x38] sm:$0xff] %v7742
                %v7744 = vld [vmem:[%s7726 + $0x40] sm:$0xff]
                %7745 = vst [vmem:[%s7727 + $0x40] sm:$0xff] %v7744
                %v7746 = vld [vmem:[%s7726 + $0x48] sm:$0xff]
                %7747 = vst [vmem:[%s7727 + $0x48] sm:$0xff] %v7746
                %v7748 = vld [vmem:[%s7726 + $0x50] sm:$0xff]
                %7749 = vst [vmem:[%s7727 + $0x50] sm:$0xff] %v7748
                %v7750 = vld [vmem:[%s7726 + $0x58] sm:$0xff]
                %7751 = vst [vmem:[%s7727 + $0x58] sm:$0xff] %v7750
                %v7752 = vld [vmem:[%s7726 + $0x60] sm:$0xff]
                %7753 = vst [vmem:[%s7727 + $0x60] sm:$0xff] %v7752
                %v7754 = vld [vmem:[%s7726 + $0x68] sm:$0xff]
                %7755 = vst [vmem:[%s7727 + $0x68] sm:$0xff] %v7754
                %v7756 = vld [vmem:[%s7726 + $0x70] sm:$0xff]
                %7757 = vst [vmem:[%s7727 + $0x70] sm:$0xff] %v7756
                %v7758 = vld [vmem:[%s7726 + $0x78] sm:$0xff]
                %7759 = vst [vmem:[%s7727 + $0x78] sm:$0xff] %v7758
                %v7760 = vld [vmem:[%s7726 + $0x80] sm:$0xff]
                %7761 = vst [vmem:[%s7727 + $0x80] sm:$0xff] %v7760
                %v7762 = vld [vmem:[%s7726 + $0x88] sm:$0xff]
                %7763 = vst [vmem:[%s7727 + $0x88] sm:$0xff] %v7762
                %v7764 = vld [vmem:[%s7726 + $0x90] sm:$0xff]
                %7765 = vst [vmem:[%s7727 + $0x90] sm:$0xff] %v7764
                %v7766 = vld [vmem:[%s7726 + $0x98] sm:$0xff]
                %7767 = vst [vmem:[%s7727 + $0x98] sm:$0xff] %v7766
                %v7768 = vld [vmem:[%s7726 + $0xa0] sm:$0xff]
                %7769 = vst [vmem:[%s7727 + $0xa0] sm:$0xff] %v7768
                %v7770 = vld [vmem:[%s7726 + $0xa8] sm:$0xff]
                %7771 = vst [vmem:[%s7727 + $0xa8] sm:$0xff] %v7770
                %v7772 = vld [vmem:[%s7726 + $0xb0] sm:$0xff]
                %7773 = vst [vmem:[%s7727 + $0xb0] sm:$0xff] %v7772
                %v7774 = vld [vmem:[%s7726 + $0xb8] sm:$0xff]
                %7775 = vst [vmem:[%s7727 + $0xb8] sm:$0xff] %v7774
                %v7776 = vld [vmem:[%s7726 + $0xc0] sm:$0xff]
                %7777 = vst [vmem:[%s7727 + $0xc0] sm:$0xff] %v7776
                %v7778 = vld [vmem:[%s7726 + $0xc8] sm:$0xff]
                %7779 = vst [vmem:[%s7727 + $0xc8] sm:$0xff] %v7778
                %v7780 = vld [vmem:[%s7726 + $0xd0] sm:$0xff]
                %7781 = vst [vmem:[%s7727 + $0xd0] sm:$0xff] %v7780
                %v7782 = vld [vmem:[%s7726 + $0xd8] sm:$0xff]
                %7783 = vst [vmem:[%s7727 + $0xd8] sm:$0xff] %v7782
                %v7784 = vld [vmem:[%s7726 + $0xe0] sm:$0xff]
                %7785 = vst [vmem:[%s7727 + $0xe0] sm:$0xff] %v7784
                %v7786 = vld [vmem:[%s7726 + $0xe8] sm:$0xff]
                %7787 = vst [vmem:[%s7727 + $0xe8] sm:$0xff] %v7786
                %v7788 = vld [vmem:[%s7726 + $0xf0] sm:$0xff]
                %7789 = vst [vmem:[%s7727 + $0xf0] sm:$0xff] %v7788
                %v7790 = vld [vmem:[%s7726 + $0xf8] sm:$0xff]
                %7791 = vst [vmem:[%s7727 + $0xf8] sm:$0xff] %v7790
                %v7792 = vld [vmem:[%s7726 + $0x100] sm:$0xff]
                %7793 = vst [vmem:[%s7727 + $0x200] sm:$0xff] %v7792
                %v7794 = vld [vmem:[%s7726 + $0x108] sm:$0xff]
                %7795 = vst [vmem:[%s7727 + $0x208] sm:$0xff] %v7794
                %v7796 = vld [vmem:[%s7726 + $0x110] sm:$0xff]
                %7797 = vst [vmem:[%s7727 + $0x210] sm:$0xff] %v7796
                %v7798 = vld [vmem:[%s7726 + $0x118] sm:$0xff]
                %7799 = vst [vmem:[%s7727 + $0x218] sm:$0xff] %v7798
                %v7800 = vld [vmem:[%s7726 + $0x120] sm:$0xff]
                %7801 = vst [vmem:[%s7727 + $0x220] sm:$0xff] %v7800
                %v7802 = vld [vmem:[%s7726 + $0x128] sm:$0xff]
                %7803 = vst [vmem:[%s7727 + $0x228] sm:$0xff] %v7802
                %v7804 = vld [vmem:[%s7726 + $0x130] sm:$0xff]
                %7805 = vst [vmem:[%s7727 + $0x230] sm:$0xff] %v7804
                %v7806 = vld [vmem:[%s7726 + $0x138] sm:$0xff]
                %7807 = vst [vmem:[%s7727 + $0x238] sm:$0xff] %v7806
                %v7808 = vld [vmem:[%s7726 + $0x140] sm:$0xff]
                %7809 = vst [vmem:[%s7727 + $0x240] sm:$0xff] %v7808
                %v7810 = vld [vmem:[%s7726 + $0x148] sm:$0xff]
                %7811 = vst [vmem:[%s7727 + $0x248] sm:$0xff] %v7810
                %v7812 = vld [vmem:[%s7726 + $0x150] sm:$0xff]
                %7813 = vst [vmem:[%s7727 + $0x250] sm:$0xff] %v7812
                %v7814 = vld [vmem:[%s7726 + $0x158] sm:$0xff]
                %7815 = vst [vmem:[%s7727 + $0x258] sm:$0xff] %v7814
                %v7816 = vld [vmem:[%s7726 + $0x160] sm:$0xff]
                %7817 = vst [vmem:[%s7727 + $0x260] sm:$0xff] %v7816
                %v7818 = vld [vmem:[%s7726 + $0x168] sm:$0xff]
                %7819 = vst [vmem:[%s7727 + $0x268] sm:$0xff] %v7818
                %v7820 = vld [vmem:[%s7726 + $0x170] sm:$0xff]
                %7821 = vst [vmem:[%s7727 + $0x270] sm:$0xff] %v7820
                %v7822 = vld [vmem:[%s7726 + $0x178] sm:$0xff]
                %7823 = vst [vmem:[%s7727 + $0x278] sm:$0xff] %v7822
                %v7824 = vld [vmem:[%s7726 + $0x180] sm:$0xff]
                %7825 = vst [vmem:[%s7727 + $0x280] sm:$0xff] %v7824
                %v7826 = vld [vmem:[%s7726 + $0x188] sm:$0xff]
                %7827 = vst [vmem:[%s7727 + $0x288] sm:$0xff] %v7826
                %v7828 = vld [vmem:[%s7726 + $0x190] sm:$0xff]
                %7829 = vst [vmem:[%s7727 + $0x290] sm:$0xff] %v7828
                %v7830 = vld [vmem:[%s7726 + $0x198] sm:$0xff]
                %7831 = vst [vmem:[%s7727 + $0x298] sm:$0xff] %v7830
                %v7832 = vld [vmem:[%s7726 + $0x1a0] sm:$0xff]
                %7833 = vst [vmem:[%s7727 + $0x2a0] sm:$0xff] %v7832
                %v7834 = vld [vmem:[%s7726 + $0x1a8] sm:$0xff]
                %7835 = vst [vmem:[%s7727 + $0x2a8] sm:$0xff] %v7834
                %v7836 = vld [vmem:[%s7726 + $0x1b0] sm:$0xff]
                %7837 = vst [vmem:[%s7727 + $0x2b0] sm:$0xff] %v7836
                %v7838 = vld [vmem:[%s7726 + $0x1b8] sm:$0xff]
                %7839 = vst [vmem:[%s7727 + $0x2b8] sm:$0xff] %v7838
                %v7840 = vld [vmem:[%s7726 + $0x1c0] sm:$0xff]
                %7841 = vst [vmem:[%s7727 + $0x2c0] sm:$0xff] %v7840
                %v7842 = vld [vmem:[%s7726 + $0x1c8] sm:$0xff]
                %7843 = vst [vmem:[%s7727 + $0x2c8] sm:$0xff] %v7842
                %v7844 = vld [vmem:[%s7726 + $0x1d0] sm:$0xff]
                %7845 = vst [vmem:[%s7727 + $0x2d0] sm:$0xff] %v7844
                %v7846 = vld [vmem:[%s7726 + $0x1d8] sm:$0xff]
                %7847 = vst [vmem:[%s7727 + $0x2d8] sm:$0xff] %v7846
                %v7848 = vld [vmem:[%s7726 + $0x1e0] sm:$0xff]
                %7849 = vst [vmem:[%s7727 + $0x2e0] sm:$0xff] %v7848
                %v7850 = vld [vmem:[%s7726 + $0x1e8] sm:$0xff]
                %7851 = vst [vmem:[%s7727 + $0x2e8] sm:$0xff] %v7850
                %v7852 = vld [vmem:[%s7726 + $0x1f0] sm:$0xff]
                %7853 = vst [vmem:[%s7727 + $0x2f0] sm:$0xff] %v7852
                %v7854 = vld [vmem:[%s7726 + $0x1f8] sm:$0xff]
                %7855 = vst [vmem:[%s7727 + $0x2f8] sm:$0xff] %v7854
                %v7856 = vld [vmem:[%s7726 + $0x200] sm:$0xff]
                %7857 = vst [vmem:[%s7727 + $0x400] sm:$0xff] %v7856
                %v7858 = vld [vmem:[%s7726 + $0x208] sm:$0xff]
                %7859 = vst [vmem:[%s7727 + $0x408] sm:$0xff] %v7858
                %v7860 = vld [vmem:[%s7726 + $0x210] sm:$0xff]
                %7861 = vst [vmem:[%s7727 + $0x410] sm:$0xff] %v7860
                %v7862 = vld [vmem:[%s7726 + $0x218] sm:$0xff]
                %7863 = vst [vmem:[%s7727 + $0x418] sm:$0xff] %v7862
                %v7864 = vld [vmem:[%s7726 + $0x220] sm:$0xff]
                %7865 = vst [vmem:[%s7727 + $0x420] sm:$0xff] %v7864
                %v7866 = vld [vmem:[%s7726 + $0x228] sm:$0xff]
                %7867 = vst [vmem:[%s7727 + $0x428] sm:$0xff] %v7866
                %v7868 = vld [vmem:[%s7726 + $0x230] sm:$0xff]
                %7869 = vst [vmem:[%s7727 + $0x430] sm:$0xff] %v7868
                %v7870 = vld [vmem:[%s7726 + $0x238] sm:$0xff]
                %7871 = vst [vmem:[%s7727 + $0x438] sm:$0xff] %v7870
                %v7872 = vld [vmem:[%s7726 + $0x240] sm:$0xff]
                %7873 = vst [vmem:[%s7727 + $0x440] sm:$0xff] %v7872
                %v7874 = vld [vmem:[%s7726 + $0x248] sm:$0xff]
                %7875 = vst [vmem:[%s7727 + $0x448] sm:$0xff] %v7874
                %v7876 = vld [vmem:[%s7726 + $0x250] sm:$0xff]
                %7877 = vst [vmem:[%s7727 + $0x450] sm:$0xff] %v7876
                %v7878 = vld [vmem:[%s7726 + $0x258] sm:$0xff]
                %7879 = vst [vmem:[%s7727 + $0x458] sm:$0xff] %v7878
                %v7880 = vld [vmem:[%s7726 + $0x260] sm:$0xff]
                %7881 = vst [vmem:[%s7727 + $0x460] sm:$0xff] %v7880
                %v7882 = vld [vmem:[%s7726 + $0x268] sm:$0xff]
                %7883 = vst [vmem:[%s7727 + $0x468] sm:$0xff] %v7882
                %v7884 = vld [vmem:[%s7726 + $0x270] sm:$0xff]
                %7885 = vst [vmem:[%s7727 + $0x470] sm:$0xff] %v7884
                %v7886 = vld [vmem:[%s7726 + $0x278] sm:$0xff]
                %7887 = vst [vmem:[%s7727 + $0x478] sm:$0xff] %v7886
                %v7888 = vld [vmem:[%s7726 + $0x280] sm:$0xff]
                %7889 = vst [vmem:[%s7727 + $0x480] sm:$0xff] %v7888
                %v7890 = vld [vmem:[%s7726 + $0x288] sm:$0xff]
                %7891 = vst [vmem:[%s7727 + $0x488] sm:$0xff] %v7890
                %v7892 = vld [vmem:[%s7726 + $0x290] sm:$0xff]
                %7893 = vst [vmem:[%s7727 + $0x490] sm:$0xff] %v7892
                %v7894 = vld [vmem:[%s7726 + $0x298] sm:$0xff]
                %7895 = vst [vmem:[%s7727 + $0x498] sm:$0xff] %v7894
                %v7896 = vld [vmem:[%s7726 + $0x2a0] sm:$0xff]
                %7897 = vst [vmem:[%s7727 + $0x4a0] sm:$0xff] %v7896
                %v7898 = vld [vmem:[%s7726 + $0x2a8] sm:$0xff]
                %7899 = vst [vmem:[%s7727 + $0x4a8] sm:$0xff] %v7898
                %v7900 = vld [vmem:[%s7726 + $0x2b0] sm:$0xff]
                %7901 = vst [vmem:[%s7727 + $0x4b0] sm:$0xff] %v7900
                %v7902 = vld [vmem:[%s7726 + $0x2b8] sm:$0xff]
                %7903 = vst [vmem:[%s7727 + $0x4b8] sm:$0xff] %v7902
                %v7904 = vld [vmem:[%s7726 + $0x2c0] sm:$0xff]
                %7905 = vst [vmem:[%s7727 + $0x4c0] sm:$0xff] %v7904
                %v7906 = vld [vmem:[%s7726 + $0x2c8] sm:$0xff]
                %7907 = vst [vmem:[%s7727 + $0x4c8] sm:$0xff] %v7906
                %v7908 = vld [vmem:[%s7726 + $0x2d0] sm:$0xff]
                %7909 = vst [vmem:[%s7727 + $0x4d0] sm:$0xff] %v7908
                %v7910 = vld [vmem:[%s7726 + $0x2d8] sm:$0xff]
                %7911 = vst [vmem:[%s7727 + $0x4d8] sm:$0xff] %v7910
                %v7912 = vld [vmem:[%s7726 + $0x2e0] sm:$0xff]
                %7913 = vst [vmem:[%s7727 + $0x4e0] sm:$0xff] %v7912
                %v7914 = vld [vmem:[%s7726 + $0x2e8] sm:$0xff]
                %7915 = vst [vmem:[%s7727 + $0x4e8] sm:$0xff] %v7914
                %v7916 = vld [vmem:[%s7726 + $0x2f0] sm:$0xff]
                %7917 = vst [vmem:[%s7727 + $0x4f0] sm:$0xff] %v7916
                %v7918 = vld [vmem:[%s7726 + $0x2f8] sm:$0xff]
                %7919 = vst [vmem:[%s7727 + $0x4f8] sm:$0xff] %v7918
                %v7920 = vld [vmem:[%s7726 + $0x300] sm:$0xff]
                %7921 = vst [vmem:[%s7727 + $0x600] sm:$0xff] %v7920
                %v7922 = vld [vmem:[%s7726 + $0x308] sm:$0xff]
                %7923 = vst [vmem:[%s7727 + $0x608] sm:$0xff] %v7922
                %v7924 = vld [vmem:[%s7726 + $0x310] sm:$0xff]
                %7925 = vst [vmem:[%s7727 + $0x610] sm:$0xff] %v7924
                %v7926 = vld [vmem:[%s7726 + $0x318] sm:$0xff]
                %7927 = vst [vmem:[%s7727 + $0x618] sm:$0xff] %v7926
                %v7928 = vld [vmem:[%s7726 + $0x320] sm:$0xff]
                %7929 = vst [vmem:[%s7727 + $0x620] sm:$0xff] %v7928
                %v7930 = vld [vmem:[%s7726 + $0x328] sm:$0xff]
                %7931 = vst [vmem:[%s7727 + $0x628] sm:$0xff] %v7930
                %v7932 = vld [vmem:[%s7726 + $0x330] sm:$0xff]
                %7933 = vst [vmem:[%s7727 + $0x630] sm:$0xff] %v7932
                %v7934 = vld [vmem:[%s7726 + $0x338] sm:$0xff]
                %7935 = vst [vmem:[%s7727 + $0x638] sm:$0xff] %v7934
                %v7936 = vld [vmem:[%s7726 + $0x340] sm:$0xff]
                %7937 = vst [vmem:[%s7727 + $0x640] sm:$0xff] %v7936
                %v7938 = vld [vmem:[%s7726 + $0x348] sm:$0xff]
                %7939 = vst [vmem:[%s7727 + $0x648] sm:$0xff] %v7938
                %v7940 = vld [vmem:[%s7726 + $0x350] sm:$0xff]
                %7941 = vst [vmem:[%s7727 + $0x650] sm:$0xff] %v7940
                %v7942 = vld [vmem:[%s7726 + $0x358] sm:$0xff]
                %7943 = vst [vmem:[%s7727 + $0x658] sm:$0xff] %v7942
                %v7944 = vld [vmem:[%s7726 + $0x360] sm:$0xff]
                %7945 = vst [vmem:[%s7727 + $0x660] sm:$0xff] %v7944
                %v7946 = vld [vmem:[%s7726 + $0x368] sm:$0xff]
                %7947 = vst [vmem:[%s7727 + $0x668] sm:$0xff] %v7946
                %v7948 = vld [vmem:[%s7726 + $0x370] sm:$0xff]
                %7949 = vst [vmem:[%s7727 + $0x670] sm:$0xff] %v7948
                %v7950 = vld [vmem:[%s7726 + $0x378] sm:$0xff]
                %7951 = vst [vmem:[%s7727 + $0x678] sm:$0xff] %v7950
                %v7952 = vld [vmem:[%s7726 + $0x380] sm:$0xff]
                %7953 = vst [vmem:[%s7727 + $0x680] sm:$0xff] %v7952
                %v7954 = vld [vmem:[%s7726 + $0x388] sm:$0xff]
                %7955 = vst [vmem:[%s7727 + $0x688] sm:$0xff] %v7954
                %v7956 = vld [vmem:[%s7726 + $0x390] sm:$0xff]
                %7957 = vst [vmem:[%s7727 + $0x690] sm:$0xff] %v7956
                %v7958 = vld [vmem:[%s7726 + $0x398] sm:$0xff]
                %7959 = vst [vmem:[%s7727 + $0x698] sm:$0xff] %v7958
                %v7960 = vld [vmem:[%s7726 + $0x3a0] sm:$0xff]
                %7961 = vst [vmem:[%s7727 + $0x6a0] sm:$0xff] %v7960
                %v7962 = vld [vmem:[%s7726 + $0x3a8] sm:$0xff]
                %7963 = vst [vmem:[%s7727 + $0x6a8] sm:$0xff] %v7962
                %v7964 = vld [vmem:[%s7726 + $0x3b0] sm:$0xff]
                %7965 = vst [vmem:[%s7727 + $0x6b0] sm:$0xff] %v7964
                %v7966 = vld [vmem:[%s7726 + $0x3b8] sm:$0xff]
                %7967 = vst [vmem:[%s7727 + $0x6b8] sm:$0xff] %v7966
                %v7968 = vld [vmem:[%s7726 + $0x3c0] sm:$0xff]
                %7969 = vst [vmem:[%s7727 + $0x6c0] sm:$0xff] %v7968
                %v7970 = vld [vmem:[%s7726 + $0x3c8] sm:$0xff]
                %7971 = vst [vmem:[%s7727 + $0x6c8] sm:$0xff] %v7970
                %v7972 = vld [vmem:[%s7726 + $0x3d0] sm:$0xff]
                %7973 = vst [vmem:[%s7727 + $0x6d0] sm:$0xff] %v7972
                %v7974 = vld [vmem:[%s7726 + $0x3d8] sm:$0xff]
                %7975 = vst [vmem:[%s7727 + $0x6d8] sm:$0xff] %v7974
                %v7976 = vld [vmem:[%s7726 + $0x3e0] sm:$0xff]
                %7977 = vst [vmem:[%s7727 + $0x6e0] sm:$0xff] %v7976
                %v7978 = vld [vmem:[%s7726 + $0x3e8] sm:$0xff]
                %7979 = vst [vmem:[%s7727 + $0x6e8] sm:$0xff] %v7978
                %v7980 = vld [vmem:[%s7726 + $0x3f0] sm:$0xff]
                %7981 = vst [vmem:[%s7727 + $0x6f0] sm:$0xff] %v7980
                %v7982 = vld [vmem:[%s7726 + $0x3f8] sm:$0xff]
                %7983 = vst [vmem:[%s7727 + $0x6f8] sm:$0xff] %v7982
              $region72: #{ppe_forward.1} parent=66 // loop_footer
                %s7725 = sadd.s32 1, %s7721
              $region73: #{ppe_forward.1} parent=66 // loop_footer_branch
                %7720 = sbr.rel target = $region69
              $region74: #{ppe_forward.1} parent=66 // loop_exit
                _
            $region67: #{ppe_forward.1} parent=62 // pred_fallthru
              _
            // Predicated region
            $region75: #{ppe_forward.1} parent=62 // pred_check
              _
            $region76: #{ppe_forward.1} parent=62 // pred_check_branch
              %7985 = sbr.rel target = $region78
            $region77: #{ppe_forward.1} parent=62 // pred_region
              _
            $region78: #{ppe_forward.1} parent=62 // pred_fallthru
              _
          $region63: #{ppe_forward.1} parent=58 // pred_fallthru
            _
          %7986 = vnop
        $region59: #{ppe_forward.1} parent=50 // pred_fallthru
          _
      $region51: #{ppe_forward.1} parent=5 // pred_fallthru
        _
      %p7987 = scmp.le.s32.totalorder 2, %s9
      // Predicated region
      $region79: #{ppe_forward.1} parent=5 // pred_check
        %p7988 = pneg %p7987
      $region80: #{ppe_forward.1} parent=5 // pred_check_branch
        %7990 = sbr.rel (%p7988) target = $region82
      $region81: #{ppe_forward.1} parent=5 // pred_region
        %s7991 = ssub.s32 %s9, 2
        // Predicated region
        $region83: #{ppe_forward.1} parent=81 // pred_check
          %p7992 = pneg %p111
        $region84: #{ppe_forward.1} parent=81 // pred_check_branch
          %7994 = sbr.rel (%p7992) target = $region86
        $region85: #{ppe_forward.1} parent=81 // pred_region
          %s7995 = sand.u32 %s96, 1
          %s7996 = sand.u32 %s96, 1
          %s7997 = smul.addr %s7996, 1024
          %s7998 = scalar_lea.vmem [#allocation3], %s7997
        $region86: #{ppe_forward.1} parent=81 // pred_fallthru
          _
      $region82: #{ppe_forward.1} parent=5 // pred_fallthru
        _
    $region6: #{ppe_forward.1} parent=1 // loop_footer
      %s13 = sadd.s32 1, %s9
    $region7: #{ppe_forward.1} parent=1 // loop_footer_branch
      %8 = sbr.rel target = $region3
    $region8: #{ppe_forward.1} parent=1 // loop_exit
      _

</llo_original>
